<compile_context>
chip_gen: v6e
topology: v6e:2x2x1
jax: 0.10.0
libtpu: 0.0.40
codegen_flags: <defaults>
</compile_context>

<pallas_src>
import functools

import jax
import jax.numpy as jnp
from jax.experimental import pallas as pl
from jax.experimental.pallas import tpu as pltpu


# ----------------------------------------------------------------------------
# Pallas kernel: grouped GEMM + bias + optional ReLU (BN scale pre-folded).
# ----------------------------------------------------------------------------
def _gemm_bias_act_kernel(a_ref, b_ref, c_ref, o_ref, *, relu):
    # a_ref: (TM, K) bf16   b_ref: (K, N) bf16   c_ref: (1, N) f32   o_ref: (TM, N) f32
    acc = jnp.dot(a_ref[...], b_ref[...], preferred_element_type=jnp.float32)
    y = acc + c_ref[...]
    if relu:
        y = jnp.maximum(y, 0.0)
    o_ref[...] = y.astype(o_ref.dtype)


def grouped_gemm_bias_act(a, w, bias, *, relu, tm=512):
    """out[g] = act(a[g] @ w[g] + bias[g]).

    a: (G, M, K) bf16, w: (G, K, N) bf16, bias: (G, 1, N) f32 -> (G, M, N) f32.
    Grid is (G, cdiv(M, tm)); both axes are parallel.  A ragged last M block is
    handled by Pallas (out-of-bounds rows are discarded on store), so no
    explicit row padding / slicing is needed.
    """
    G, M, K = a.shape
    _, _, N = w.shape
    if M <= tm:
        tm = M                      # single full-extent block (no 8-row constraint)
    assert tm == M or tm % 8 == 0
    grid = (G, pl.cdiv(M, tm))

    flops = 2 * G * M * K * N
    bytes_accessed = a.size * 2 + w.size * 2 + bias.size * 4 + G * M * N * 4

    return pl.pallas_call(
        functools.partial(_gemm_bias_act_kernel, relu=relu),
        out_shape=jax.ShapeDtypeStruct((G, M, N), jnp.float32),
        grid=grid,
        in_specs=[
            pl.BlockSpec((None, tm, K), lambda g, i: (g, i, 0)),
            pl.BlockSpec((None, K, N), lambda g, i: (g, 0, 0)),
            pl.BlockSpec((None, 1, N), lambda g, i: (g, 0, 0)),
        ],
        out_specs=pl.BlockSpec((None, tm, N), lambda g, i: (g, i, 0)),
        compiler_params=pltpu.CompilerParams(
            dimension_semantics=("parallel", "parallel")),
        cost_estimate=pl.CostEstimate(
            flops=flops, transcendentals=0, bytes_accessed=bytes_accessed),
    )(a, w, bias)


# ----------------------------------------------------------------------------
# Plain-JAX glue (patch extraction, maxpool, layer plumbing)
# ----------------------------------------------------------------------------
def _extract_patches(x, k, stride):
    """x: (N,H,W,C) -> (N,Ho,Wo,k*k,C) via static strided slices."""
    N, H, W, C = x.shape
    Ho = (H - k) // stride + 1
    Wo = (W - k) // stride + 1
    cols = []
    for i in range(k):
        for j in range(k):
            cols.append(
                jax.lax.slice(
                    x,
                    (0, i, j, 0),
                    (N, i + stride * (Ho - 1) + 1, j + stride * (Wo - 1) + 1, C),
                    (1, stride, stride, 1)))
    return jnp.stack(cols, axis=3), Ho, Wo


def conv_bn_act(x, w, bias, *, k, stride, groups, cg_in, relu, tm=512):
    """Grouped conv + folded-BN bias + optional ReLU via the Pallas GEMM.

    x: (N,H,W,Cin_stored) (may carry zero-padded lanes past groups*cg_in);
    w: (G, k*k*cg_in, Np) bf16 (BN scale folded in); bias: (G, 1, Np) f32.
    Returns (N, Ho, Wo, G*Np) f32.
    """
    n = x.shape[0]
    xh = x.astype(jnp.bfloat16)                             # half the im2col HBM traffic
    patches, Ho, Wo = _extract_patches(xh, k, stride)       # (N,Ho,Wo,k*k,C)
    M = n * Ho * Wo
    a = jnp.stack(
        [patches[..., g * cg_in:(g + 1) * cg_in].reshape(M, k * k * cg_in)
         for g in range(groups)], axis=0)                   # (G, M, K) bf16
    out = grouped_gemm_bias_act(a, w, bias, relu=relu, tm=tm)   # (G, M, Np) f32
    out = jnp.transpose(out, (1, 0, 2)).reshape(n, Ho, Wo, groups * w.shape[-1])
    return out


def maxpool2d(x, *, k=3, stride=2):
    """MaxPool(k, stride) as fused XLA elementwise max over k*k strided slices
    (per perf review: avoids the 9x patch materialization and a pallas launch)."""
    N, H, W, C = x.shape
    Ho = (H - k) // stride + 1
    Wo = (W - k) // stride + 1
    out = None
    for i in range(k):
        for j in range(k):
            s = jax.lax.slice(
                x, (0, i, j, 0),
                (N, i + stride * (Ho - 1) + 1, j + stride * (Wo - 1) + 1, C),
                (1, stride, stride, 1))
            out = s if out is None else jnp.maximum(out, s)
    return out


# ----------------------------------------------------------------------------
# Parameter construction (deterministic, synthetic; eval-mode BN folded)
# ----------------------------------------------------------------------------
def init_layer(key, k, cin, cout, groups, with_bn, *, cout_g_pad=None, cin_g_pad=None):
    """Returns W: (G, k*k*cin_g_pad, cout_g_pad) bf16 (BN scale folded in),
               B: (G, 1, cout_g_pad) f32.
    Padded weight rows/cols and bias entries are zero, so padded output channels
    are exactly zero and padded input channels contribute nothing."""
    cg_in = cin // groups
    cg_out = cout // groups
    cin_g_pad = cin_g_pad or cg_in
    cout_g_pad = cout_g_pad or cg_out
    ks = jax.random.split(key, 6)
    w = jax.random.normal(ks[0], (groups, k, k, cg_in, cg_out), jnp.float32) * 0.05
    b = jax.random.normal(ks[1], (cout,), jnp.float32) * 0.05
    if with_bn:
        eps = 1e-6  # matches _BatchNorm2d(eps=1e-06)
        gamma = 1.0 + 0.1 * jax.random.normal(ks[2], (cout,), jnp.float32)
        beta = 0.1 * jax.random.normal(ks[3], (cout,), jnp.float32)
        mean = 0.1 * jax.random.normal(ks[4], (cout,), jnp.float32)
        var = 1.0 + 0.1 * jnp.abs(jax.random.normal(ks[5], (cout,), jnp.float32))
        scale = gamma / jnp.sqrt(var + eps)
        bias = beta + (b - mean) * scale
    else:
        scale = jnp.ones((cout,), jnp.float32)
        bias = b

    w_g, b_g = [], []
    for g in range(groups):
        sg = scale[g * cg_out:(g + 1) * cg_out]
        wg = w[g] * sg                                       # fold BN scale into weights
        wg = jnp.pad(wg, ((0, 0), (0, 0),
                          (0, cin_g_pad - cg_in), (0, cout_g_pad - cg_out)))
        w_g.append(wg.reshape(k * k * cin_g_pad, cout_g_pad))
        b_g.append(jnp.pad(bias[g * cg_out:(g + 1) * cg_out],
                           (0, cout_g_pad - cg_out)))
    W = jnp.stack(w_g, axis=0).astype(jnp.bfloat16)          # (G, K, Np)
    B = jnp.stack(b_g, axis=0).reshape(groups, 1, cout_g_pad)  # (G, 1, Np) f32
    return W, B


# ----------------------------------------------------------------------------
# Full forward pass (mirrors CNNL4.forward)
# ----------------------------------------------------------------------------
def cnnl4_forward(x_nchw, params):
    x = jnp.transpose(x_nchw, (0, 2, 3, 1))   # NCHW -> NHWC

    W1, B1 = params["conv1"]
    x = conv_bn_act(x, W1, B1, k=11, stride=2, groups=1, cg_in=3, relu=True, tm=512)
    x = maxpool2d(x, k=3, stride=2)           # padded channels (96:128) stay 0

    W2, B2 = params["conv2"]                  # group slicing reads only the 96 real channels
    x = conv_bn_act(x, W2, B2, k=5, stride=1, groups=2, cg_in=48, relu=True)
    x = maxpool2d(x, k=3, stride=2)

    W4, B4 = params["conv4"]
    x = conv_bn_act(x, W4, B4, k=3, stride=1, groups=2, cg_in=128, relu=True)

    W5, B5 = params["conv5"]
    # conv4's per-group zero padding (192->256) is consumed here against
    # zero-padded weight rows, making conv5's per-group K = 2304 (18*128).
    x = conv_bn_act(x, W5, B5, k=3, stride=1, groups=2, cg_in=256, relu=False)

    return jnp.transpose(x, (0, 3, 1, 2))     # NHWC -> NCHW (real 256 channels)


if __name__ == "__main__":
    key = jax.random.PRNGKey(0)
    k_x, k1, k2, k4, k5 = jax.random.split(key, 5)

    # Smallest "nice" input that survives the receptive field: 87x87 -> 3x3 output.
    x = jax.random.normal(k_x, (2, 3, 87, 87), jnp.float32)

    params = {
        "conv1": init_layer(k1, 11, 3, 96, groups=1, with_bn=True, cout_g_pad=128),
        "conv2": init_layer(k2, 5, 96, 256, groups=2, with_bn=True),
        "conv4": init_layer(k4, 3, 256, 384, groups=2, with_bn=True, cout_g_pad=256),
        "conv5": init_layer(k5, 3, 384, 256, groups=2, with_bn=False, cin_g_pad=256),
    }

    fwd = jax.jit(cnnl4_forward)
    out = jax.block_until_ready(fwd(x, params))

    assert out.shape == (2, 256, 3, 3), out.shape
    assert out.dtype == jnp.float32
    assert bool(jnp.all(jnp.isfinite(out)))
    print("KERNEL_OK")
</pallas_src>

<mosaic_0001>
module attributes {stable_mosaic.version = 11 : i64} {
  func.func @_gemm_bias_act_kernel(%arg0: i32, %arg1: i32, %arg2: memref<1x512x363xbf16, #tpu.memory_space<vmem>>, %arg3: memref<1x363x128xbf16, #tpu.memory_space<vmem>>, %arg4: memref<1x1x128xf32, #tpu.memory_space<vmem>>, %arg5: memref<1x512x128xf32, #tpu.memory_space<vmem>>) attributes {dimension_semantics = [#tpu.dimension_semantics<parallel>, #tpu.dimension_semantics<parallel>], iteration_bounds = array<i64: 1, 6>, scalar_prefetch = 0 : i64, scratch_operands = 0 : i64, tpu.core_type = #tpu.core_type<tc>, window_params = [{transform_indices = @transform_0, window_bounds = array<i64: 1, 512, 363>}, {transform_indices = @transform_1, window_bounds = array<i64: 1, 363, 128>}, {transform_indices = @transform_2, window_bounds = array<i64: 1, 1, 128>}, {transform_indices = @transform_3, window_bounds = array<i64: 1, 512, 128>}]} {
    %c0 = arith.constant 0 : index
    %c0_0 = arith.constant 0 : index
    %c0_1 = arith.constant 0 : index
    %0 = vector.load %arg2[%c0, %c0_0, %c0_1] : memref<1x512x363xbf16, #tpu.memory_space<vmem>>, vector<1x512x363xbf16>
    %1 = vector.shape_cast %0 : vector<1x512x363xbf16> to vector<512x363xbf16>
    %c0_2 = arith.constant 0 : index
    %c0_3 = arith.constant 0 : index
    %c0_4 = arith.constant 0 : index
    %2 = vector.load %arg3[%c0_2, %c0_3, %c0_4] : memref<1x363x128xbf16, #tpu.memory_space<vmem>>, vector<1x363x128xbf16>
    %3 = vector.shape_cast %2 : vector<1x363x128xbf16> to vector<363x128xbf16>
    %cst = arith.constant dense<0.000000e+00> : vector<512x128xf32>
    %4 = tpu.matmul %1, %3, %cst {dimension_numbers = #tpu.dot_dimension_numbers<[1], [0], [0], [1], [0, 0, 1, 1], [], []>} : vector<512x363xbf16>, vector<363x128xbf16>, vector<512x128xf32> -> vector<512x128xf32>
    %c0_5 = arith.constant 0 : index
    %c0_6 = arith.constant 0 : index
    %c0_7 = arith.constant 0 : index
    %5 = vector.load %arg4[%c0_5, %c0_6, %c0_7] : memref<1x1x128xf32, #tpu.memory_space<vmem>>, vector<1x1x128xf32>
    %6 = vector.shape_cast %5 : vector<1x1x128xf32> to vector<1x128xf32>
    %7 = vector.broadcast %6 : vector<1x128xf32> to vector<512x128xf32>
    %8 = arith.addf %4, %7 : vector<512x128xf32>
    %cst_8 = arith.constant 0.000000e+00 : f32
    %9 = vector.broadcast %cst_8 : f32 to vector<512x128xf32>
    %10 = arith.maximumf %8, %9 : vector<512x128xf32>
    %c0_9 = arith.constant 0 : index
    %c0_10 = arith.constant 0 : index
    %c0_11 = arith.constant 0 : index
    %11 = vector.load %arg5[%c0_9, %c0_10, %c0_11] : memref<1x512x128xf32, #tpu.memory_space<vmem>>, vector<1x512x128xf32>
    %12 = vector.shape_cast %11 : vector<1x512x128xf32> to vector<512x128xf32>
    %13 = vector.shape_cast %10 : vector<512x128xf32> to vector<1x512x128xf32>
    tpu.vector_store %arg5[%c0_9, %c0_10, %c0_11], %13 {strides = array<i32>} : memref<1x512x128xf32, #tpu.memory_space<vmem>>, vector<1x512x128xf32>,
    return
  }
  func.func @transform_0(%arg0: i32, %arg1: i32) -> (i32, i32, i32) {
    %c0_i32 = arith.constant 0 : i32
    %c0_i32_0 = arith.constant 0 : i32
    return %arg0, %arg1, %c0_i32 : i32, i32, i32
  }
  func.func @transform_1(%arg0: i32, %arg1: i32) -> (i32, i32, i32) {
    %c0_i32 = arith.constant 0 : i32
    %c0_i32_0 = arith.constant 0 : i32
    %c0_i32_1 = arith.constant 0 : i32
    return %arg0, %c0_i32, %c0_i32_0 : i32, i32, i32
  }
  func.func @transform_2(%arg0: i32, %arg1: i32) -> (i32, i32, i32) {
    %c0_i32 = arith.constant 0 : i32
    %c0_i32_0 = arith.constant 0 : i32
    %c0_i32_1 = arith.constant 0 : i32
    return %arg0, %c0_i32, %c0_i32_0 : i32, i32, i32
  }
  func.func @transform_3(%arg0: i32, %arg1: i32) -> (i32, i32, i32) {
    %c0_i32 = arith.constant 0 : i32
    %c0_i32_0 = arith.constant 0 : i32
    return %arg0, %arg1, %c0_i32 : i32, i32, i32
  }
}

module attributes {stable_mosaic.version = 11 : i64} {
  func.func @_gemm_bias_act_kernel(%arg0: i32, %arg1: i32, %arg2: memref<1x450x1200xbf16, #tpu.memory_space<vmem>>, %arg3: memref<1x1200x128xbf16, #tpu.memory_space<vmem>>, %arg4: memref<1x1x128xf32, #tpu.memory_space<vmem>>, %arg5: memref<1x450x128xf32, #tpu.memory_space<vmem>>) attributes {dimension_semantics = [#tpu.dimension_semantics<parallel>, #tpu.dimension_semantics<parallel>], iteration_bounds = array<i64: 2, 1>, scalar_prefetch = 0 : i64, scratch_operands = 0 : i64, tpu.core_type = #tpu.core_type<tc>, window_params = [{transform_indices = @transform_0, window_bounds = array<i64: 1, 450, 1200>}, {transform_indices = @transform_1, window_bounds = array<i64: 1, 1200, 128>}, {transform_indices = @transform_2, window_bounds = array<i64: 1, 1, 128>}, {transform_indices = @transform_3, window_bounds = array<i64: 1, 450, 128>}]} {
    %c0 = arith.constant 0 : index
    %c0_0 = arith.constant 0 : index
    %c0_1 = arith.constant 0 : index
    %0 = vector.load %arg2[%c0, %c0_0, %c0_1] : memref<1x450x1200xbf16, #tpu.memory_space<vmem>>, vector<1x450x1200xbf16>
    %1 = vector.shape_cast %0 : vector<1x450x1200xbf16> to vector<450x1200xbf16>
    %c0_2 = arith.constant 0 : index
    %c0_3 = arith.constant 0 : index
    %c0_4 = arith.constant 0 : index
    %2 = vector.load %arg3[%c0_2, %c0_3, %c0_4] : memref<1x1200x128xbf16, #tpu.memory_space<vmem>>, vector<1x1200x128xbf16>
    %3 = vector.shape_cast %2 : vector<1x1200x128xbf16> to vector<1200x128xbf16>
    %cst = arith.constant dense<0.000000e+00> : vector<450x128xf32>
    %4 = tpu.matmul %1, %3, %cst {dimension_numbers = #tpu.dot_dimension_numbers<[1], [0], [0], [1], [0, 0, 1, 1], [], []>} : vector<450x1200xbf16>, vector<1200x128xbf16>, vector<450x128xf32> -> vector<450x128xf32>
    %c0_5 = arith.constant 0 : index
    %c0_6 = arith.constant 0 : index
    %c0_7 = arith.constant 0 : index
    %5 = vector.load %arg4[%c0_5, %c0_6, %c0_7] : memref<1x1x128xf32, #tpu.memory_space<vmem>>, vector<1x1x128xf32>
    %6 = vector.shape_cast %5 : vector<1x1x128xf32> to vector<1x128xf32>
    %7 = vector.broadcast %6 : vector<1x128xf32> to vector<450x128xf32>
    %8 = arith.addf %4, %7 : vector<450x128xf32>
    %cst_8 = arith.constant 0.000000e+00 : f32
    %9 = vector.broadcast %cst_8 : f32 to vector<450x128xf32>
    %10 = arith.maximumf %8, %9 : vector<450x128xf32>
    %c0_9 = arith.constant 0 : index
    %c0_10 = arith.constant 0 : index
    %c0_11 = arith.constant 0 : index
    %11 = vector.load %arg5[%c0_9, %c0_10, %c0_11] : memref<1x450x128xf32, #tpu.memory_space<vmem>>, vector<1x450x128xf32>
    %12 = vector.shape_cast %11 : vector<1x450x128xf32> to vector<450x128xf32>
    %13 = vector.shape_cast %10 : vector<450x128xf32> to vector<1x450x128xf32>
    tpu.vector_store %arg5[%c0_9, %c0_10, %c0_11], %13 {strides = array<i32>} : memref<1x450x128xf32, #tpu.memory_space<vmem>>, vector<1x450x128xf32>,
    return
  }
  func.func @transform_0(%arg0: i32, %arg1: i32) -> (i32, i32, i32) {
    %c0_i32 = arith.constant 0 : i32
    %c0_i32_0 = arith.constant 0 : i32
    return %arg0, %arg1, %c0_i32 : i32, i32, i32
  }
  func.func @transform_1(%arg0: i32, %arg1: i32) -> (i32, i32, i32) {
    %c0_i32 = arith.constant 0 : i32
    %c0_i32_0 = arith.constant 0 : i32
    %c0_i32_1 = arith.constant 0 : i32
    return %arg0, %c0_i32, %c0_i32_0 : i32, i32, i32
  }
  func.func @transform_2(%arg0: i32, %arg1: i32) -> (i32, i32, i32) {
    %c0_i32 = arith.constant 0 : i32
    %c0_i32_0 = arith.constant 0 : i32
    %c0_i32_1 = arith.constant 0 : i32
    return %arg0, %c0_i32, %c0_i32_0 : i32, i32, i32
  }
  func.func @transform_3(%arg0: i32, %arg1: i32) -> (i32, i32, i32) {
    %c0_i32 = arith.constant 0 : i32
    %c0_i32_0 = arith.constant 0 : i32
    return %arg0, %arg1, %c0_i32 : i32, i32, i32
  }
}

module attributes {stable_mosaic.version = 11 : i64} {
  func.func @_gemm_bias_act_kernel(%arg0: i32, %arg1: i32, %arg2: memref<1x50x1152xbf16, #tpu.memory_space<vmem>>, %arg3: memref<1x1152x256xbf16, #tpu.memory_space<vmem>>, %arg4: memref<1x1x256xf32, #tpu.memory_space<vmem>>, %arg5: memref<1x50x256xf32, #tpu.memory_space<vmem>>) attributes {dimension_semantics = [#tpu.dimension_semantics<parallel>, #tpu.dimension_semantics<parallel>], iteration_bounds = array<i64: 2, 1>, scalar_prefetch = 0 : i64, scratch_operands = 0 : i64, tpu.core_type = #tpu.core_type<tc>, window_params = [{transform_indices = @transform_0, window_bounds = array<i64: 1, 50, 1152>}, {transform_indices = @transform_1, window_bounds = array<i64: 1, 1152, 256>}, {transform_indices = @transform_2, window_bounds = array<i64: 1, 1, 256>}, {transform_indices = @transform_3, window_bounds = array<i64: 1, 50, 256>}]} {
    %c0 = arith.constant 0 : index
    %c0_0 = arith.constant 0 : index
    %c0_1 = arith.constant 0 : index
    %0 = vector.load %arg2[%c0, %c0_0, %c0_1] : memref<1x50x1152xbf16, #tpu.memory_space<vmem>>, vector<1x50x1152xbf16>
    %1 = vector.shape_cast %0 : vector<1x50x1152xbf16> to vector<50x1152xbf16>
    %c0_2 = arith.constant 0 : index
    %c0_3 = arith.constant 0 : index
    %c0_4 = arith.constant 0 : index
    %2 = vector.load %arg3[%c0_2, %c0_3, %c0_4] : memref<1x1152x256xbf16, #tpu.memory_space<vmem>>, vector<1x1152x256xbf16>
    %3 = vector.shape_cast %2 : vector<1x1152x256xbf16> to vector<1152x256xbf16>
    %cst = arith.constant dense<0.000000e+00> : vector<50x256xf32>
    %4 = tpu.matmul %1, %3, %cst {dimension_numbers = #tpu.dot_dimension_numbers<[1], [0], [0], [1], [0, 0, 1, 1], [], []>} : vector<50x1152xbf16>, vector<1152x256xbf16>, vector<50x256xf32> -> vector<50x256xf32>
    %c0_5 = arith.constant 0 : index
    %c0_6 = arith.constant 0 : index
    %c0_7 = arith.constant 0 : index
    %5 = vector.load %arg4[%c0_5, %c0_6, %c0_7] : memref<1x1x256xf32, #tpu.memory_space<vmem>>, vector<1x1x256xf32>
    %6 = vector.shape_cast %5 : vector<1x1x256xf32> to vector<1x256xf32>
    %7 = vector.broadcast %6 : vector<1x256xf32> to vector<50x256xf32>
    %8 = arith.addf %4, %7 : vector<50x256xf32>
    %cst_8 = arith.constant 0.000000e+00 : f32
    %9 = vector.broadcast %cst_8 : f32 to vector<50x256xf32>
    %10 = arith.maximumf %8, %9 : vector<50x256xf32>
    %c0_9 = arith.constant 0 : index
    %c0_10 = arith.constant 0 : index
    %c0_11 = arith.constant 0 : index
    %11 = vector.load %arg5[%c0_9, %c0_10, %c0_11] : memref<1x50x256xf32, #tpu.memory_space<vmem>>, vector<1x50x256xf32>
    %12 = vector.shape_cast %11 : vector<1x50x256xf32> to vector<50x256xf32>
    %13 = vector.shape_cast %10 : vector<50x256xf32> to vector<1x50x256xf32>
    tpu.vector_store %arg5[%c0_9, %c0_10, %c0_11], %13 {strides = array<i32>} : memref<1x50x256xf32, #tpu.memory_space<vmem>>, vector<1x50x256xf32>,
    return
  }
  func.func @transform_0(%arg0: i32, %arg1: i32) -> (i32, i32, i32) {
    %c0_i32 = arith.constant 0 : i32
    %c0_i32_0 = arith.constant 0 : i32
    return %arg0, %arg1, %c0_i32 : i32, i32, i32
  }
  func.func @transform_1(%arg0: i32, %arg1: i32) -> (i32, i32, i32) {
    %c0_i32 = arith.constant 0 : i32
    %c0_i32_0 = arith.constant 0 : i32
    %c0_i32_1 = arith.constant 0 : i32
    return %arg0, %c0_i32, %c0_i32_0 : i32, i32, i32
  }
  func.func @transform_2(%arg0: i32, %arg1: i32) -> (i32, i32, i32) {
    %c0_i32 = arith.constant 0 : i32
    %c0_i32_0 = arith.constant 0 : i32
    %c0_i32_1 = arith.constant 0 : i32
    return %arg0, %c0_i32, %c0_i32_0 : i32, i32, i32
  }
  func.func @transform_3(%arg0: i32, %arg1: i32) -> (i32, i32, i32) {
    %c0_i32 = arith.constant 0 : i32
    %c0_i32_0 = arith.constant 0 : i32
    return %arg0, %arg1, %c0_i32 : i32, i32, i32
  }
}

module attributes {stable_mosaic.version = 11 : i64} {
  func.func @_gemm_bias_act_kernel(%arg0: i32, %arg1: i32, %arg2: memref<1x18x2304xbf16, #tpu.memory_space<vmem>>, %arg3: memref<1x2304x128xbf16, #tpu.memory_space<vmem>>, %arg4: memref<1x1x128xf32, #tpu.memory_space<vmem>>, %arg5: memref<1x18x128xf32, #tpu.memory_space<vmem>>) attributes {dimension_semantics = [#tpu.dimension_semantics<parallel>, #tpu.dimension_semantics<parallel>], iteration_bounds = array<i64: 2, 1>, scalar_prefetch = 0 : i64, scratch_operands = 0 : i64, tpu.core_type = #tpu.core_type<tc>, window_params = [{transform_indices = @transform_0, window_bounds = array<i64: 1, 18, 2304>}, {transform_indices = @transform_1, window_bounds = array<i64: 1, 2304, 128>}, {transform_indices = @transform_2, window_bounds = array<i64: 1, 1, 128>}, {transform_indices = @transform_3, window_bounds = array<i64: 1, 18, 128>}]} {
    %c0 = arith.constant 0 : index
    %c0_0 = arith.constant 0 : index
    %c0_1 = arith.constant 0 : index
    %0 = vector.load %arg2[%c0, %c0_0, %c0_1] : memref<1x18x2304xbf16, #tpu.memory_space<vmem>>, vector<1x18x2304xbf16>
    %1 = vector.shape_cast %0 : vector<1x18x2304xbf16> to vector<18x2304xbf16>
    %c0_2 = arith.constant 0 : index
    %c0_3 = arith.constant 0 : index
    %c0_4 = arith.constant 0 : index
    %2 = vector.load %arg3[%c0_2, %c0_3, %c0_4] : memref<1x2304x128xbf16, #tpu.memory_space<vmem>>, vector<1x2304x128xbf16>
    %3 = vector.shape_cast %2 : vector<1x2304x128xbf16> to vector<2304x128xbf16>
    %cst = arith.constant dense<0.000000e+00> : vector<18x128xf32>
    %4 = tpu.matmul %1, %3, %cst {dimension_numbers = #tpu.dot_dimension_numbers<[1], [0], [0], [1], [0, 0, 1, 1], [], []>} : vector<18x2304xbf16>, vector<2304x128xbf16>, vector<18x128xf32> -> vector<18x128xf32>
    %c0_5 = arith.constant 0 : index
    %c0_6 = arith.constant 0 : index
    %c0_7 = arith.constant 0 : index
    %5 = vector.load %arg4[%c0_5, %c0_6, %c0_7] : memref<1x1x128xf32, #tpu.memory_space<vmem>>, vector<1x1x128xf32>
    %6 = vector.shape_cast %5 : vector<1x1x128xf32> to vector<1x128xf32>
    %7 = vector.broadcast %6 : vector<1x128xf32> to vector<18x128xf32>
    %8 = arith.addf %4, %7 : vector<18x128xf32>
    %c0_8 = arith.constant 0 : index
    %c0_9 = arith.constant 0 : index
    %c0_10 = arith.constant 0 : index
    %9 = vector.load %arg5[%c0_8, %c0_9, %c0_10] : memref<1x18x128xf32, #tpu.memory_space<vmem>>, vector<1x18x128xf32>
    %10 = vector.shape_cast %9 : vector<1x18x128xf32> to vector<18x128xf32>
    %11 = vector.shape_cast %8 : vector<18x128xf32> to vector<1x18x128xf32>
    tpu.vector_store %arg5[%c0_8, %c0_9, %c0_10], %11 {strides = array<i32>} : memref<1x18x128xf32, #tpu.memory_space<vmem>>, vector<1x18x128xf32>,
    return
  }
  func.func @transform_0(%arg0: i32, %arg1: i32) -> (i32, i32, i32) {
    %c0_i32 = arith.constant 0 : i32
    %c0_i32_0 = arith.constant 0 : i32
    return %arg0, %arg1, %c0_i32 : i32, i32, i32
  }
  func.func @transform_1(%arg0: i32, %arg1: i32) -> (i32, i32, i32) {
    %c0_i32 = arith.constant 0 : i32
    %c0_i32_0 = arith.constant 0 : i32
    %c0_i32_1 = arith.constant 0 : i32
    return %arg0, %c0_i32, %c0_i32_0 : i32, i32, i32
  }
  func.func @transform_2(%arg0: i32, %arg1: i32) -> (i32, i32, i32) {
    %c0_i32 = arith.constant 0 : i32
    %c0_i32_0 = arith.constant 0 : i32
    %c0_i32_1 = arith.constant 0 : i32
    return %arg0, %c0_i32, %c0_i32_0 : i32, i32, i32
  }
  func.func @transform_3(%arg0: i32, %arg1: i32) -> (i32, i32, i32) {
    %c0_i32 = arith.constant 0 : i32
    %c0_i32_0 = arith.constant 0 : i32
    return %arg0, %arg1, %c0_i32 : i32, i32, i32
  }
}

</mosaic_0001>

<llo_original>
// kernel: cnnl4_forward.4
$region0: #{cnnl4_forward.4}
  #allocation0 [shape = 'u32[]', space=smem, size = 0x4, offset = 0x4, fixed_abs, tag = 'smem constant byte address 0x4 - core index']
  #allocation1 [shape = 'u32[144,128]{1,0:T(1,128)}', space=vmem, size = 0x12000, scoped, tag = 'internal scratch']
  %s0 = inlined_call_operand.vmem [shape: bf16[1,3042,363], index: 0, kind: input, shape index: {}]
  %s1 = inlined_call_operand.vmem [shape: bf16[1,363,128], index: 1, kind: input, shape index: {}]
  %s2 = inlined_call_operand.vmem [shape: f32[1,1,128], index: 2, kind: input, shape index: {}]
  %s3 = inlined_call_operand.vmem [shape: f32[1,3042,128], index: 3, kind: output, shape index: {}]
  %s4 = sld [smem:[#allocation0]]
  $region93: #{cnnl4_forward.4} parent=0
    _
  %s6 = ssub.s32 1, %s4
  %s7 = scalar_select 0, %s6, %s4
  $region1: #{cnnl4_forward.4} parent=0
    #allocation2 [shape = 'u8[524288]{0}', space=vmem, size = 0x80000, scoped, tag = 'output window, operand 0']
    loop: start=0, step=1, limit=8
    $region2: #{cnnl4_forward.4} parent=1 // loop_pre_header
      _
    $region3: #{cnnl4_forward.4} parent=1 // loop_header
      %s9 = sphi 0, %s13
      %p10 = scmp.ge.s32.totalorder %s9, 8
      %s16 = sphi 0, %s28
      %s17 = sphi 0, %s24
      %s18 = sphi 0, %s16
      %s19 = sphi 0, %s17
      %s20 = sphi 0, %s18
      %s21 = sphi 0, %s19
      %s33 = sphi 0, %s35
      %s36 = sphi 0, %s33
      %s37 = sphi 0, %s36
      %s53 = sphi 0, %s37
      %s59 = sphi 0, %s61
      %s62 = sphi 0, %s59
      %s63 = sphi 0, %s62
      %s79 = sphi 0, %s63
      %s85 = sphi 0, %s87
      %s88 = sphi 0, %s85
      %s89 = sphi 0, %s88
      %s105 = sphi 0, %s89
      %s113 = sphi 0, %s115
      %s116 = sphi 0, %s113
      %s117 = sphi 0, %s116
      %s133 = sphi 0, %s117
    $region4: #{cnnl4_forward.4} parent=1 // loop_header_branch
      %12 = sbr.rel (%p10) target = $region8
    $region5: #{cnnl4_forward.4} parent=1 // loop_body
      %s14 = ssub.s32 %s9, 1
      %s15 = ssub.s32 %s9, 2
      %s22 = sadd.s32 1, %s17
      %p23 = scmp.ge.s32.totalorder %s22, 6
      %s24 = scalar_select %p23, 0, %s22
      %s25 = sadd.s32 1, %s16
      %s26 = scalar_select %p23, %s25, %s16
      %p27 = scmp.ge.s32.totalorder %s26, 1
      %s28 = scalar_select %p27, 0, %s26
      %s29 = ssub.s32 %s16, %s28
      %s30 = ssub.s32 %s17, %s24
      %s31 = sor.u32 %s29, %s30
      %p32 = scmp.eq.s32.totalorder %s31, 0
      %s34 = sadd.s32 %s33, 1
      %s35 = scalar_select %p32, %s33, %s34
      %p38 = pneg %p32
      %p39 = scmp.eq.s32.totalorder %s9, 5
      %p40 = por %p38, %p39
      %p41 = scmp.ne.s32.totalorder %s33, %s36
      %p42 = scmp.eq.s32.totalorder %s9, 0
      %p43 = por %p41, %p42
      %p44 = scmp.ne.s32.totalorder %s33, %s36
      %p45 = scmp.eq.s32.totalorder %s14, 5
      %p46 = por %p44, %p45
      %p47 = scmp.ne.s32.totalorder %s36, %s37
      %p48 = scmp.eq.s32.totalorder %s14, 0
      %p49 = por %p47, %p48
      %p50 = scmp.ne.s32.totalorder %s36, %s37
      %p51 = scmp.eq.s32.totalorder %s15, 5
      %p52 = por %p50, %p51
      %p54 = scmp.ne.s32.totalorder %s37, %s53
      %p55 = scmp.eq.s32.totalorder %s15, 0
      %p56 = por %p54, %p55
      %s57 = ssub.s32 %s16, %s28
      %p58 = scmp.eq.s32.totalorder %s57, 0
      %s60 = sadd.s32 %s59, 1
      %s61 = scalar_select %p58, %s59, %s60
      %p64 = pneg %p58
      %p65 = scmp.eq.s32.totalorder %s9, 5
      %p66 = por %p64, %p65
      %p67 = scmp.ne.s32.totalorder %s59, %s62
      %p68 = scmp.eq.s32.totalorder %s9, 0
      %p69 = por %p67, %p68
      %p70 = scmp.ne.s32.totalorder %s59, %s62
      %p71 = scmp.eq.s32.totalorder %s14, 5
      %p72 = por %p70, %p71
      %p73 = scmp.ne.s32.totalorder %s62, %s63
      %p74 = scmp.eq.s32.totalorder %s14, 0
      %p75 = por %p73, %p74
      %p76 = scmp.ne.s32.totalorder %s62, %s63
      %p77 = scmp.eq.s32.totalorder %s15, 5
      %p78 = por %p76, %p77
      %p80 = scmp.ne.s32.totalorder %s63, %s79
      %p81 = scmp.eq.s32.totalorder %s15, 0
      %p82 = por %p80, %p81
      %s83 = ssub.s32 %s16, %s28
      %p84 = scmp.eq.s32.totalorder %s83, 0
      %s86 = sadd.s32 %s85, 1
      %s87 = scalar_select %p84, %s85, %s86
      %p90 = pneg %p84
      %p91 = scmp.eq.s32.totalorder %s9, 5
      %p92 = por %p90, %p91
      %p93 = scmp.ne.s32.totalorder %s85, %s88
      %p94 = scmp.eq.s32.totalorder %s9, 0
      %p95 = por %p93, %p94
      %p96 = scmp.ne.s32.totalorder %s85, %s88
      %p97 = scmp.eq.s32.totalorder %s14, 5
      %p98 = por %p96, %p97
      %p99 = scmp.ne.s32.totalorder %s88, %s89
      %p100 = scmp.eq.s32.totalorder %s14, 0
      %p101 = por %p99, %p100
      %p102 = scmp.ne.s32.totalorder %s88, %s89
      %p103 = scmp.eq.s32.totalorder %s15, 5
      %p104 = por %p102, %p103
      %p106 = scmp.ne.s32.totalorder %s89, %s105
      %p107 = scmp.eq.s32.totalorder %s15, 0
      %p108 = por %p106, %p107
      %s109 = ssub.s32 %s16, %s28
      %s110 = ssub.s32 %s17, %s24
      %s111 = sor.u32 %s109, %s110
      %p112 = scmp.eq.s32.totalorder %s111, 0
      %s114 = sadd.s32 %s113, 1
      %s115 = scalar_select %p112, %s113, %s114
      %p118 = pneg %p112
      %p119 = scmp.eq.s32.totalorder %s9, 5
      %p120 = por %p118, %p119
      %p121 = scmp.ne.s32.totalorder %s113, %s116
      %p122 = scmp.eq.s32.totalorder %s9, 0
      %p123 = por %p121, %p122
      %p124 = scmp.ne.s32.totalorder %s113, %s116
      %p125 = scmp.eq.s32.totalorder %s14, 5
      %p126 = por %p124, %p125
      %p127 = scmp.ne.s32.totalorder %s116, %s117
      %p128 = scmp.eq.s32.totalorder %s14, 0
      %p129 = por %p127, %p128
      %p130 = scmp.ne.s32.totalorder %s116, %s117
      %p131 = scmp.eq.s32.totalorder %s15, 5
      %p132 = por %p130, %p131
      %p134 = scmp.ne.s32.totalorder %s117, %s133
      %p135 = scmp.eq.s32.totalorder %s15, 0
      %p136 = por %p134, %p135
      %p137 = scmp.le.s32.totalorder 1, %s9
      %p138 = scmp.lt.s32.totalorder %s9, 7
      %p139 = pnand %p137, %p138
      %p140 = pneg %p139
      // Predicated region
      $region9: #{cnnl4_forward.4} parent=5 // pred_check
        _
      $region10: #{cnnl4_forward.4} parent=5 // pred_check_branch
        %142 = sbr.rel (%p139) target = $region12
      $region11: #{cnnl4_forward.4} parent=5 // pred_region
        %s143 = ssub.s32 %s9, 1
        // Predicated region
        $region13: #{cnnl4_forward.4} parent=11 // pred_check
          %p144 = pneg %p75
        $region14: #{cnnl4_forward.4} parent=11 // pred_check_branch
          %146 = sbr.rel (%p144) target = $region16
        $region15: #{cnnl4_forward.4} parent=11 // pred_region
          %p147 = scmp.lt.s32.totalorder %s18, 0
          %s148 = scalar_select %p147, %s18, 0
          %s149 = smul.addr %s148, 46
          %s150 = smul.addr %s149, 4
          %s151 = scalar_lea.vmem %s1, %s150
        $region16: #{cnnl4_forward.4} parent=11 // pred_fallthru
          _
        // Predicated region
        $region17: #{cnnl4_forward.4} parent=11 // pred_check
          %p152 = pneg %p101
        $region18: #{cnnl4_forward.4} parent=11 // pred_check_branch
          %154 = sbr.rel (%p152) target = $region20
        $region19: #{cnnl4_forward.4} parent=11 // pred_region
          %p155 = scmp.lt.s32.totalorder %s18, 0
          %s156 = scalar_select %p155, %s18, 0
          %s157 = scalar_lea.vmem %s2, %s156
        $region20: #{cnnl4_forward.4} parent=11 // pred_fallthru
          _
      $region12: #{cnnl4_forward.4} parent=5 // pred_fallthru
        _
      %p158 = scmp.lt.s32.totalorder %s9, 6
      // Predicated region
      $region21: #{cnnl4_forward.4} parent=5 // pred_check
        %p159 = pneg %p158
      $region22: #{cnnl4_forward.4} parent=5 // pred_check_branch
        %161 = sbr.rel (%p159) target = $region24
      $region23: #{cnnl4_forward.4} parent=5 // pred_region
        // Predicated region
        $region25: #{cnnl4_forward.4} parent=23 // pred_check
          %p162 = pneg %p43
        $region26: #{cnnl4_forward.4} parent=23 // pred_check_branch
          %164 = sbr.rel (%p162) target = $region28
        $region27: #{cnnl4_forward.4} parent=23 // pred_region
          %s165 = smul.u32 64, %s17
          %s166 = ssub.s32 381, %s165
          %p167 = scmp.lt.s32.totalorder %s166, 64
          %s168 = scalar_select %p167, %s166, 64
          %s169 = smul.u32 64, %s168
          %s170 = smul.u32 %s169, 3
          %p171 = scmp.lt.s32.totalorder %s16, 0
          %s172 = scalar_select %p171, %s16, 0
          %p173 = scmp.lt.s32.totalorder %s165, 380
          %s174 = scalar_select %p173, %s165, 380
          %s175 = smul.addr %s174, 3
          %s176 = smul.addr %s172, 1143
          %s177 = sadd.s32 %s175, %s176
          %s178 = smul.addr %s177, 4
          %s179 = scalar_lea.vmem %s0, %s178
          %s180 = smul.u32 64, %s17
          %s181 = ssub.s32 381, %s180
          %p182 = scmp.lt.s32.totalorder %s181, 64
          %s183 = scalar_select %p182, %s181, 64
          %s184 = smul.u32 64, %s183
          %s185 = smul.u32 %s184, 3
        $region28: #{cnnl4_forward.4} parent=23 // pred_fallthru
          _
      $region24: #{cnnl4_forward.4} parent=5 // pred_fallthru
        _
      %p186 = scmp.le.s32.totalorder 1, %s9
      %p187 = scmp.lt.s32.totalorder %s9, 7
      %p188 = pnand %p186, %p187
      %p189 = pneg %p188
      // Predicated region
      $region29: #{cnnl4_forward.4} parent=5 // pred_check
        _
      $region30: #{cnnl4_forward.4} parent=5 // pred_check_branch
        %191 = sbr.rel (%p188) target = $region32
      $region31: #{cnnl4_forward.4} parent=5 // pred_region
        %s192 = ssub.s32 %s9, 1
        %s193 = smul.u32 64, %s19
        %s194 = ssub.s32 381, %s193
        %p195 = scmp.lt.s32.totalorder %s194, 64
        %s196 = scalar_select %p195, %s194, 64
        %s197 = smul.u32 64, %s196
        %s198 = smul.u32 %s197, 3
        %p199 = scmp.lt.s32.totalorder %s18, 0
        %s200 = scalar_select %p199, %s18, 0
        %p201 = scmp.lt.s32.totalorder %s193, 380
        %s202 = scalar_select %p201, %s193, 380
        %s203 = smul.addr %s202, 3
        %s204 = smul.addr %s200, 1143
        %s205 = sadd.s32 %s203, %s204
        %s206 = smul.addr %s205, 4
        %s207 = scalar_lea.vmem %s0, %s206
        %p208 = pneg %p49
        %p209 = pneg %p46
        %p210 = scmp.lt.s32.totalorder %s18, 0
        %s211 = scalar_select %p210, %s18, 0
        %s212 = smul.addr %s211, 46
        %s213 = smul.addr %s212, 4
        %s214 = scalar_lea.vmem %s1, %s213
        %p215 = pneg %p75
        %p216 = pneg %p72
        %p217 = scmp.lt.s32.totalorder %s18, 0
        %s218 = scalar_select %p217, %s18, 0
        %s219 = scalar_lea.vmem %s2, %s218
        %p220 = pneg %p101
        %p221 = pneg %p98
        %p222 = pneg %p129
        %p223 = pneg %p126
        %s224 = sand.u32 %s116, 1
        %s225 = sand.u32 %s116, 1
        %s226 = smul.addr %s225, 512
        %s227 = scalar_lea.vmem [#allocation2], %s226
        %s228 = smul.u32 64, %s19
        %s229 = ssub.s32 381, %s228
        %p230 = scmp.lt.s32.totalorder %s229, 64
        %s231 = scalar_select %p230, %s229, 64
        %s232 = smul.u32 64, %s231
        %s233 = smul.u32 %s232, 3
        %p234 = scmp.lt.s32.totalorder %s18, 0
        %s235 = scalar_select %p234, %s18, 0
        %p236 = scmp.lt.s32.totalorder %s228, 380
        %s237 = scalar_select %p236, %s228, 380
        %s238 = smul.addr %s237, 3
        %s239 = smul.addr %s235, 1143
        %s240 = sadd.s32 %s238, %s239
        %s241 = smul.addr %s240, 4
        %s242 = scalar_lea.vmem %s0, %s241
        %s243 = smul.u32 64, %s19
        %s244 = ssub.s32 381, %s243
        %p245 = scmp.lt.s32.totalorder %s244, 64
        %s246 = scalar_select %p245, %s244, 64
        %s247 = smul.u32 64, %s246
        %s248 = smul.u32 %s247, 3
        %p249 = scmp.lt.s32.totalorder %s18, 0
        %s250 = scalar_select %p249, %s18, 0
        %s251 = smul.addr %s250, 46
        %s252 = smul.addr %s251, 4
        %s253 = scalar_lea.vmem %s1, %s252
        %p254 = scmp.lt.s32.totalorder %s18, 0
        %s255 = scalar_select %p254, %s18, 0
        %s256 = scalar_lea.vmem %s2, %s255
        %s257 = smul.u32 64, %s19
        %s258 = ssub.s32 381, %s257
        %p259 = scmp.lt.s32.totalorder %s258, 64
        %s260 = scalar_select %p259, %s258, 64
        %s261 = smul.u32 128, %s260
        %v263 = vld [vmem:[%s242] sm:$0xff]
        %v264 = vld [vmem:[%s242 + $0x8] sm:$0xf]
        %v265 = vld [vmem:[%s242 + $0xc] sm:$0xff]
        %v266 = vld [vmem:[%s242 + $0x14] sm:$0xf]
        %v267 = vld [vmem:[%s242 + $0x18] sm:$0xff]
        %v268 = vld [vmem:[%s242 + $0x20] sm:$0xf]
        %v269 = vld [vmem:[%s242 + $0x24] sm:$0xff]
        %v270 = vld [vmem:[%s242 + $0x2c] sm:$0xf]
        %v271 = vld [vmem:[%s242 + $0x30] sm:$0xff]
        %v272 = vld [vmem:[%s242 + $0x38] sm:$0xf]
        %v273 = vld [vmem:[%s242 + $0x3c] sm:$0xff]
        %v274 = vld [vmem:[%s242 + $0x44] sm:$0xf]
        %v275 = vld [vmem:[%s242 + $0x48] sm:$0xff]
        %v276 = vld [vmem:[%s242 + $0x50] sm:$0xf]
        %v277 = vld [vmem:[%s242 + $0x54] sm:$0xff]
        %v278 = vld [vmem:[%s242 + $0x5c] sm:$0xf]
        %v279 = vld [vmem:[%s242 + $0x60] sm:$0xff]
        %v280 = vld [vmem:[%s242 + $0x68] sm:$0xf]
        %v281 = vld [vmem:[%s242 + $0x6c] sm:$0xff]
        %v282 = vld [vmem:[%s242 + $0x74] sm:$0xf]
        %v283 = vld [vmem:[%s242 + $0x78] sm:$0xff]
        %v284 = vld [vmem:[%s242 + $0x80] sm:$0xf]
        %v285 = vld [vmem:[%s242 + $0x84] sm:$0xff]
        %v286 = vld [vmem:[%s242 + $0x8c] sm:$0xf]
        %v287 = vld [vmem:[%s242 + $0x90] sm:$0xff]
        %v288 = vld [vmem:[%s242 + $0x98] sm:$0xf]
        %v289 = vld [vmem:[%s242 + $0x9c] sm:$0xff]
        %v290 = vld [vmem:[%s242 + $0xa4] sm:$0xf]
        %v291 = vld [vmem:[%s242 + $0xa8] sm:$0xff]
        %v292 = vld [vmem:[%s242 + $0xb0] sm:$0xf]
        %v293 = vld [vmem:[%s242 + $0xb4] sm:$0xff]
        %v294 = vld [vmem:[%s242 + $0xbc] sm:$0xf]
        %v295 = vld [vmem:[%s242 + $0xc0] sm:$0xff]
        %v296 = vld [vmem:[%s242 + $0xc8] sm:$0xf]
        %v297 = vld [vmem:[%s242 + $0xcc] sm:$0xff]
        %v298 = vld [vmem:[%s242 + $0xd4] sm:$0xf]
        %v299 = vld [vmem:[%s242 + $0xd8] sm:$0xff]
        %v300 = vld [vmem:[%s242 + $0xe0] sm:$0xf]
        %v301 = vld [vmem:[%s242 + $0xe4] sm:$0xff]
        %v302 = vld [vmem:[%s242 + $0xec] sm:$0xf]
        %v303 = vld [vmem:[%s242 + $0xf0] sm:$0xff]
        %v304 = vld [vmem:[%s242 + $0xf8] sm:$0xf]
        %v305 = vld [vmem:[%s242 + $0xfc] sm:$0xff]
        %v306 = vld [vmem:[%s242 + $0x104] sm:$0xf]
        %v307 = vld [vmem:[%s242 + $0x108] sm:$0xff]
        %v308 = vld [vmem:[%s242 + $0x110] sm:$0xf]
        %v309 = vld [vmem:[%s242 + $0x114] sm:$0xff]
        %v310 = vld [vmem:[%s242 + $0x11c] sm:$0xf]
        %v311 = vld [vmem:[%s242 + $0x120] sm:$0xff]
        %v312 = vld [vmem:[%s242 + $0x128] sm:$0xf]
        %v313 = vld [vmem:[%s242 + $0x12c] sm:$0xff]
        %v314 = vld [vmem:[%s242 + $0x134] sm:$0xf]
        %v315 = vld [vmem:[%s242 + $0x138] sm:$0xff]
        %v316 = vld [vmem:[%s242 + $0x140] sm:$0xf]
        %v317 = vld [vmem:[%s242 + $0x144] sm:$0xff]
        %v318 = vld [vmem:[%s242 + $0x14c] sm:$0xf]
        %v319 = vld [vmem:[%s242 + $0x150] sm:$0xff]
        %v320 = vld [vmem:[%s242 + $0x158] sm:$0xf]
        %v321 = vld [vmem:[%s242 + $0x15c] sm:$0xff]
        %v322 = vld [vmem:[%s242 + $0x164] sm:$0xf]
        %v323 = vld [vmem:[%s242 + $0x168] sm:$0xff]
        %v324 = vld [vmem:[%s242 + $0x170] sm:$0xf]
        %v325 = vld [vmem:[%s242 + $0x174] sm:$0xff]
        %v326 = vld [vmem:[%s242 + $0x17c] sm:$0xf]
        %v327 = vld [vmem:[%s242 + $0x180] sm:$0xff]
        %v328 = vld [vmem:[%s242 + $0x188] sm:$0xf]
        %v329 = vld [vmem:[%s242 + $0x18c] sm:$0xff]
        %v330 = vld [vmem:[%s242 + $0x194] sm:$0xf]
        %v331 = vld [vmem:[%s242 + $0x198] sm:$0xff]
        %v332 = vld [vmem:[%s242 + $0x1a0] sm:$0xf]
        %v333 = vld [vmem:[%s242 + $0x1a4] sm:$0xff]
        %v334 = vld [vmem:[%s242 + $0x1ac] sm:$0xf]
        %v335 = vld [vmem:[%s242 + $0x1b0] sm:$0xff]
        %v336 = vld [vmem:[%s242 + $0x1b8] sm:$0xf]
        %v337 = vld [vmem:[%s242 + $0x1bc] sm:$0xff]
        %v338 = vld [vmem:[%s242 + $0x1c4] sm:$0xf]
        %v339 = vld [vmem:[%s242 + $0x1c8] sm:$0xff]
        %v340 = vld [vmem:[%s242 + $0x1d0] sm:$0xf]
        %v341 = vld [vmem:[%s242 + $0x1d4] sm:$0xff]
        %v342 = vld [vmem:[%s242 + $0x1dc] sm:$0xf]
        %v343 = vld [vmem:[%s242 + $0x1e0] sm:$0xff]
        %v344 = vld [vmem:[%s242 + $0x1e8] sm:$0xf]
        %v345 = vld [vmem:[%s242 + $0x1ec] sm:$0xff]
        %v346 = vld [vmem:[%s242 + $0x1f4] sm:$0xf]
        %v347 = vld [vmem:[%s242 + $0x1f8] sm:$0xff]
        %v348 = vld [vmem:[%s242 + $0x200] sm:$0xf]
        %v349 = vld [vmem:[%s242 + $0x204] sm:$0xff]
        %v350 = vld [vmem:[%s242 + $0x20c] sm:$0xf]
        %v351 = vld [vmem:[%s242 + $0x210] sm:$0xff]
        %v352 = vld [vmem:[%s242 + $0x218] sm:$0xf]
        %v353 = vld [vmem:[%s242 + $0x21c] sm:$0xff]
        %v354 = vld [vmem:[%s242 + $0x224] sm:$0xf]
        %v355 = vld [vmem:[%s242 + $0x228] sm:$0xff]
        %v356 = vld [vmem:[%s242 + $0x230] sm:$0xf]
        %v357 = vld [vmem:[%s242 + $0x234] sm:$0xff]
        %v358 = vld [vmem:[%s242 + $0x23c] sm:$0xf]
        %v359 = vld [vmem:[%s242 + $0x240] sm:$0xff]
        %v360 = vld [vmem:[%s242 + $0x248] sm:$0xf]
        %v361 = vld [vmem:[%s242 + $0x24c] sm:$0xff]
        %v362 = vld [vmem:[%s242 + $0x254] sm:$0xf]
        %v363 = vld [vmem:[%s242 + $0x258] sm:$0xff]
        %v364 = vld [vmem:[%s242 + $0x260] sm:$0xf]
        %v365 = vld [vmem:[%s242 + $0x264] sm:$0xff]
        %v366 = vld [vmem:[%s242 + $0x26c] sm:$0xf]
        %v367 = vld [vmem:[%s242 + $0x270] sm:$0xff]
        %v368 = vld [vmem:[%s242 + $0x278] sm:$0xf]
        %v369 = vld [vmem:[%s242 + $0x27c] sm:$0xff]
        %v370 = vld [vmem:[%s242 + $0x284] sm:$0xf]
        %v371 = vld [vmem:[%s242 + $0x288] sm:$0xff]
        %v372 = vld [vmem:[%s242 + $0x290] sm:$0xf]
        %v373 = vld [vmem:[%s242 + $0x294] sm:$0xff]
        %v374 = vld [vmem:[%s242 + $0x29c] sm:$0xf]
        %v375 = vld [vmem:[%s242 + $0x2a0] sm:$0xff]
        %v376 = vld [vmem:[%s242 + $0x2a8] sm:$0xf]
        %v377 = vld [vmem:[%s242 + $0x2ac] sm:$0xff]
        %v378 = vld [vmem:[%s242 + $0x2b4] sm:$0xf]
        %v379 = vld [vmem:[%s242 + $0x2b8] sm:$0xff]
        %v380 = vld [vmem:[%s242 + $0x2c0] sm:$0xf]
        %v381 = vld [vmem:[%s242 + $0x2c4] sm:$0xff]
        %v382 = vld [vmem:[%s242 + $0x2cc] sm:$0xf]
        %v383 = vld [vmem:[%s242 + $0x2d0] sm:$0xff]
        %v384 = vld [vmem:[%s242 + $0x2d8] sm:$0xf]
        %v385 = vld [vmem:[%s242 + $0x2dc] sm:$0xff]
        %v386 = vld [vmem:[%s242 + $0x2e4] sm:$0xf]
        %v387 = vld [vmem:[%s242 + $0x2e8] sm:$0xff]
        %v388 = vld [vmem:[%s242 + $0x2f0] sm:$0xf]
        %v389 = vld [vmem:[%s242 + $0x2f4] sm:$0xff]
        %v390 = vld [vmem:[%s242 + $0x2fc] sm:$0xf]
        %v391 = vld [vmem:[%s253] sm:$0xf]
        %v392 = vld [vmem:[%s253 + $0x4] sm:$0xf]
        %v393 = vld [vmem:[%s253 + $0x8] sm:$0xf]
        %v394 = vld [vmem:[%s253 + $0xc] sm:$0xf]
        %v395 = vld [vmem:[%s253 + $0x10] sm:$0xf]
        %v396 = vld [vmem:[%s253 + $0x14] sm:$0xf]
        %v397 = vld [vmem:[%s253 + $0x18] sm:$0xf]
        %v398 = vld [vmem:[%s253 + $0x1c] sm:$0xf]
        %v399 = vld [vmem:[%s253 + $0x20] sm:$0xf]
        %v400 = vld [vmem:[%s253 + $0x24] sm:$0xf]
        %v401 = vld [vmem:[%s253 + $0x28] sm:$0xf]
        %v402 = vld [vmem:[%s253 + $0x2c] sm:$0xf]
        %v403 = vld [vmem:[%s253 + $0x30] sm:$0xf]
        %v404 = vld [vmem:[%s253 + $0x34] sm:$0xf]
        %v405 = vld [vmem:[%s253 + $0x38] sm:$0xf]
        %v406 = vld [vmem:[%s253 + $0x3c] sm:$0xf]
        %v407 = vld [vmem:[%s253 + $0x40] sm:$0xf]
        %v408 = vld [vmem:[%s253 + $0x44] sm:$0xf]
        %v409 = vld [vmem:[%s253 + $0x48] sm:$0xf]
        %v410 = vld [vmem:[%s253 + $0x4c] sm:$0xf]
        %v411 = vld [vmem:[%s253 + $0x50] sm:$0xf]
        %v412 = vld [vmem:[%s253 + $0x54] sm:$0xf]
        %v413 = vld [vmem:[%s253 + $0x58] sm:$0xf]
        %v414 = vld [vmem:[%s253 + $0x5c] sm:$0xf]
        %v415 = vld [vmem:[%s253 + $0x60] sm:$0xf]
        %v416 = vld [vmem:[%s253 + $0x64] sm:$0xf]
        %v417 = vld [vmem:[%s253 + $0x68] sm:$0xf]
        %v418 = vld [vmem:[%s253 + $0x6c] sm:$0xf]
        %v419 = vld [vmem:[%s253 + $0x70] sm:$0xf]
        %v420 = vld [vmem:[%s253 + $0x74] sm:$0xf]
        %v421 = vld [vmem:[%s253 + $0x78] sm:$0xf]
        %v422 = vld [vmem:[%s253 + $0x7c] sm:$0xf]
        %v423 = vld [vmem:[%s253 + $0x80] sm:$0xf]
        %v424 = vld [vmem:[%s253 + $0x84] sm:$0xf]
        %v425 = vld [vmem:[%s253 + $0x88] sm:$0xf]
        %v426 = vld [vmem:[%s253 + $0x8c] sm:$0xf]
        %v427 = vld [vmem:[%s253 + $0x90] sm:$0xf]
        %v428 = vld [vmem:[%s253 + $0x94] sm:$0xf]
        %v429 = vld [vmem:[%s253 + $0x98] sm:$0xf]
        %v430 = vld [vmem:[%s253 + $0x9c] sm:$0xf]
        %v431 = vld [vmem:[%s253 + $0xa0] sm:$0xf]
        %v432 = vld [vmem:[%s253 + $0xa4] sm:$0xf]
        %v433 = vld [vmem:[%s253 + $0xa8] sm:$0xf]
        %v434 = vld [vmem:[%s253 + $0xac] sm:$0xf]
        %v435 = vld [vmem:[%s253 + $0xb0] sm:$0xf]
        %v436 = vld [vmem:[%s253 + $0xb4] sm:$0x3]
        %v437 = vld [vmem:[%s256] sm:$0x1]
        %v439 = vlaneseq
        %v440 = vshrl.u32 %v439, 7
        %v441 = vsub.s32 0, %v440
        %v442 = vrot.slane %v437, %v441
        %v572 = vunpack.c.l.b16 %v263
        %v573 = vunpack.c.h.b16 %v263
        %v574 = vunpack.c.l.b16 %v264
        %v575 = vunpack.c.l.b16 %v265
        %v576 = vunpack.c.h.b16 %v265
        %v577 = vunpack.c.l.b16 %v266
        %v578 = vunpack.c.l.b16 %v267
        %v579 = vunpack.c.h.b16 %v267
        %v580 = vunpack.c.l.b16 %v268
        %v581 = vunpack.c.l.b16 %v269
        %v582 = vunpack.c.h.b16 %v269
        %v583 = vunpack.c.l.b16 %v270
        %v584 = vunpack.c.l.b16 %v271
        %v585 = vunpack.c.h.b16 %v271
        %v586 = vunpack.c.l.b16 %v272
        %v587 = vunpack.c.l.b16 %v273
        %v588 = vunpack.c.h.b16 %v273
        %v589 = vunpack.c.l.b16 %v274
        %v590 = vunpack.c.l.b16 %v275
        %v591 = vunpack.c.h.b16 %v275
        %v592 = vunpack.c.l.b16 %v276
        %v593 = vunpack.c.l.b16 %v277
        %v594 = vunpack.c.h.b16 %v277
        %v595 = vunpack.c.l.b16 %v278
        %v596 = vunpack.c.l.b16 %v279
        %v597 = vunpack.c.h.b16 %v279
        %v598 = vunpack.c.l.b16 %v280
        %v599 = vunpack.c.l.b16 %v281
        %v600 = vunpack.c.h.b16 %v281
        %v601 = vunpack.c.l.b16 %v282
        %v602 = vunpack.c.l.b16 %v283
        %v603 = vunpack.c.h.b16 %v283
        %v604 = vunpack.c.l.b16 %v284
        %v605 = vunpack.c.l.b16 %v285
        %v606 = vunpack.c.h.b16 %v285
        %v607 = vunpack.c.l.b16 %v286
        %v608 = vunpack.c.l.b16 %v287
        %v609 = vunpack.c.h.b16 %v287
        %v610 = vunpack.c.l.b16 %v288
        %v611 = vunpack.c.l.b16 %v289
        %v612 = vunpack.c.h.b16 %v289
        %v613 = vunpack.c.l.b16 %v290
        %v614 = vunpack.c.l.b16 %v291
        %v615 = vunpack.c.h.b16 %v291
        %v616 = vunpack.c.l.b16 %v292
        %v617 = vunpack.c.l.b16 %v293
        %v618 = vunpack.c.h.b16 %v293
        %v619 = vunpack.c.l.b16 %v294
        %v620 = vunpack.c.l.b16 %v295
        %v621 = vunpack.c.h.b16 %v295
        %v622 = vunpack.c.l.b16 %v296
        %v623 = vunpack.c.l.b16 %v297
        %v624 = vunpack.c.h.b16 %v297
        %v625 = vunpack.c.l.b16 %v298
        %v626 = vunpack.c.l.b16 %v299
        %v627 = vunpack.c.h.b16 %v299
        %v628 = vunpack.c.l.b16 %v300
        %v629 = vunpack.c.l.b16 %v301
        %v630 = vunpack.c.h.b16 %v301
        %v631 = vunpack.c.l.b16 %v302
        %v632 = vunpack.c.l.b16 %v303
        %v633 = vunpack.c.h.b16 %v303
        %v634 = vunpack.c.l.b16 %v304
        %v635 = vunpack.c.l.b16 %v305
        %v636 = vunpack.c.h.b16 %v305
        %v637 = vunpack.c.l.b16 %v306
        %v638 = vunpack.c.l.b16 %v307
        %v639 = vunpack.c.h.b16 %v307
        %v640 = vunpack.c.l.b16 %v308
        %v641 = vunpack.c.l.b16 %v309
        %v642 = vunpack.c.h.b16 %v309
        %v643 = vunpack.c.l.b16 %v310
        %v644 = vunpack.c.l.b16 %v311
        %v645 = vunpack.c.h.b16 %v311
        %v646 = vunpack.c.l.b16 %v312
        %v647 = vunpack.c.l.b16 %v313
        %v648 = vunpack.c.h.b16 %v313
        %v649 = vunpack.c.l.b16 %v314
        %v650 = vunpack.c.l.b16 %v315
        %v651 = vunpack.c.h.b16 %v315
        %v652 = vunpack.c.l.b16 %v316
        %v653 = vunpack.c.l.b16 %v317
        %v654 = vunpack.c.h.b16 %v317
        %v655 = vunpack.c.l.b16 %v318
        %v656 = vunpack.c.l.b16 %v319
        %v657 = vunpack.c.h.b16 %v319
        %v658 = vunpack.c.l.b16 %v320
        %v659 = vunpack.c.l.b16 %v321
        %v660 = vunpack.c.h.b16 %v321
        %v661 = vunpack.c.l.b16 %v322
        %v662 = vunpack.c.l.b16 %v323
        %v663 = vunpack.c.h.b16 %v323
        %v664 = vunpack.c.l.b16 %v324
        %v665 = vunpack.c.l.b16 %v325
        %v666 = vunpack.c.h.b16 %v325
        %v667 = vunpack.c.l.b16 %v326
        %v668 = vunpack.c.l.b16 %v327
        %v669 = vunpack.c.h.b16 %v327
        %v670 = vunpack.c.l.b16 %v328
        %v671 = vunpack.c.l.b16 %v329
        %v672 = vunpack.c.h.b16 %v329
        %v673 = vunpack.c.l.b16 %v330
        %v674 = vunpack.c.l.b16 %v331
        %v675 = vunpack.c.h.b16 %v331
        %v676 = vunpack.c.l.b16 %v332
        %v677 = vunpack.c.l.b16 %v333
        %v678 = vunpack.c.h.b16 %v333
        %v679 = vunpack.c.l.b16 %v334
        %v680 = vunpack.c.l.b16 %v335
        %v681 = vunpack.c.h.b16 %v335
        %v682 = vunpack.c.l.b16 %v336
        %v683 = vunpack.c.l.b16 %v337
        %v684 = vunpack.c.h.b16 %v337
        %v685 = vunpack.c.l.b16 %v338
        %v686 = vunpack.c.l.b16 %v339
        %v687 = vunpack.c.h.b16 %v339
        %v688 = vunpack.c.l.b16 %v340
        %v689 = vunpack.c.l.b16 %v341
        %v690 = vunpack.c.h.b16 %v341
        %v691 = vunpack.c.l.b16 %v342
        %v692 = vunpack.c.l.b16 %v343
        %v693 = vunpack.c.h.b16 %v343
        %v694 = vunpack.c.l.b16 %v344
        %v695 = vunpack.c.l.b16 %v345
        %v696 = vunpack.c.h.b16 %v345
        %v697 = vunpack.c.l.b16 %v346
        %v698 = vunpack.c.l.b16 %v347
        %v699 = vunpack.c.h.b16 %v347
        %v700 = vunpack.c.l.b16 %v348
        %v701 = vunpack.c.l.b16 %v349
        %v702 = vunpack.c.h.b16 %v349
        %v703 = vunpack.c.l.b16 %v350
        %v704 = vunpack.c.l.b16 %v351
        %v705 = vunpack.c.h.b16 %v351
        %v706 = vunpack.c.l.b16 %v352
        %v707 = vunpack.c.l.b16 %v353
        %v708 = vunpack.c.h.b16 %v353
        %v709 = vunpack.c.l.b16 %v354
        %v710 = vunpack.c.l.b16 %v355
        %v711 = vunpack.c.h.b16 %v355
        %v712 = vunpack.c.l.b16 %v356
        %v713 = vunpack.c.l.b16 %v357
        %v714 = vunpack.c.h.b16 %v357
        %v715 = vunpack.c.l.b16 %v358
        %v716 = vunpack.c.l.b16 %v359
        %v717 = vunpack.c.h.b16 %v359
        %v718 = vunpack.c.l.b16 %v360
        %v719 = vunpack.c.l.b16 %v361
        %v720 = vunpack.c.h.b16 %v361
        %v721 = vunpack.c.l.b16 %v362
        %v722 = vunpack.c.l.b16 %v363
        %v723 = vunpack.c.h.b16 %v363
        %v724 = vunpack.c.l.b16 %v364
        %v725 = vunpack.c.l.b16 %v365
        %v726 = vunpack.c.h.b16 %v365
        %v727 = vunpack.c.l.b16 %v366
        %v728 = vunpack.c.l.b16 %v367
        %v729 = vunpack.c.h.b16 %v367
        %v730 = vunpack.c.l.b16 %v368
        %v731 = vunpack.c.l.b16 %v369
        %v732 = vunpack.c.h.b16 %v369
        %v733 = vunpack.c.l.b16 %v370
        %v734 = vunpack.c.l.b16 %v371
        %v735 = vunpack.c.h.b16 %v371
        %v736 = vunpack.c.l.b16 %v372
        %v737 = vunpack.c.l.b16 %v373
        %v738 = vunpack.c.h.b16 %v373
        %v739 = vunpack.c.l.b16 %v374
        %v740 = vunpack.c.l.b16 %v375
        %v741 = vunpack.c.h.b16 %v375
        %v742 = vunpack.c.l.b16 %v376
        %v743 = vunpack.c.l.b16 %v377
        %v744 = vunpack.c.h.b16 %v377
        %v745 = vunpack.c.l.b16 %v378
        %v746 = vunpack.c.l.b16 %v379
        %v747 = vunpack.c.h.b16 %v379
        %v748 = vunpack.c.l.b16 %v380
        %v749 = vunpack.c.l.b16 %v381
        %v750 = vunpack.c.h.b16 %v381
        %v751 = vunpack.c.l.b16 %v382
        %v752 = vunpack.c.l.b16 %v383
        %v753 = vunpack.c.h.b16 %v383
        %v754 = vunpack.c.l.b16 %v384
        %v755 = vunpack.c.l.b16 %v385
        %v756 = vunpack.c.h.b16 %v385
        %v757 = vunpack.c.l.b16 %v386
        %v758 = vunpack.c.l.b16 %v387
        %v759 = vunpack.c.h.b16 %v387
        %v760 = vunpack.c.l.b16 %v388
        %v761 = vunpack.c.l.b16 %v389
        %v762 = vunpack.c.h.b16 %v389
        %v763 = vunpack.c.l.b16 %v390
        %v764 = vpack.c.b16 %v575, %v572
        %v765 = vpack.c.b16 %v576, %v573
        %v766 = vpack.c.b16 %v577, %v574
        %v767 = vpack.c.b16 %v581, %v578
        %v768 = vpack.c.b16 %v582, %v579
        %v769 = vpack.c.b16 %v583, %v580
        %v770 = vpack.c.b16 %v587, %v584
        %v771 = vpack.c.b16 %v588, %v585
        %v772 = vpack.c.b16 %v589, %v586
        %v773 = vpack.c.b16 %v593, %v590
        %v774 = vpack.c.b16 %v594, %v591
        %v775 = vpack.c.b16 %v595, %v592
        %v776 = vpack.c.b16 %v599, %v596
        %v777 = vpack.c.b16 %v600, %v597
        %v778 = vpack.c.b16 %v601, %v598
        %v779 = vpack.c.b16 %v605, %v602
        %v780 = vpack.c.b16 %v606, %v603
        %v781 = vpack.c.b16 %v607, %v604
        %v782 = vpack.c.b16 %v611, %v608
        %v783 = vpack.c.b16 %v612, %v609
        %v784 = vpack.c.b16 %v613, %v610
        %v785 = vpack.c.b16 %v617, %v614
        %v786 = vpack.c.b16 %v618, %v615
        %v787 = vpack.c.b16 %v619, %v616
        %v788 = vpack.c.b16 %v623, %v620
        %v789 = vpack.c.b16 %v624, %v621
        %v790 = vpack.c.b16 %v625, %v622
        %v791 = vpack.c.b16 %v629, %v626
        %v792 = vpack.c.b16 %v630, %v627
        %v793 = vpack.c.b16 %v631, %v628
        %v794 = vpack.c.b16 %v635, %v632
        %v795 = vpack.c.b16 %v636, %v633
        %v796 = vpack.c.b16 %v637, %v634
        %v797 = vpack.c.b16 %v641, %v638
        %v798 = vpack.c.b16 %v642, %v639
        %v799 = vpack.c.b16 %v643, %v640
        %v800 = vpack.c.b16 %v647, %v644
        %v801 = vpack.c.b16 %v648, %v645
        %v802 = vpack.c.b16 %v649, %v646
        %v803 = vpack.c.b16 %v653, %v650
        %v804 = vpack.c.b16 %v654, %v651
        %v805 = vpack.c.b16 %v655, %v652
        %v806 = vpack.c.b16 %v659, %v656
        %v807 = vpack.c.b16 %v660, %v657
        %v808 = vpack.c.b16 %v661, %v658
        %v809 = vpack.c.b16 %v665, %v662
        %v810 = vpack.c.b16 %v666, %v663
        %v811 = vpack.c.b16 %v667, %v664
        %v812 = vpack.c.b16 %v671, %v668
        %v813 = vpack.c.b16 %v672, %v669
        %v814 = vpack.c.b16 %v673, %v670
        %v815 = vpack.c.b16 %v677, %v674
        %v816 = vpack.c.b16 %v678, %v675
        %v817 = vpack.c.b16 %v679, %v676
        %v818 = vpack.c.b16 %v683, %v680
        %v819 = vpack.c.b16 %v684, %v681
        %v820 = vpack.c.b16 %v685, %v682
        %v821 = vpack.c.b16 %v689, %v686
        %v822 = vpack.c.b16 %v690, %v687
        %v823 = vpack.c.b16 %v691, %v688
        %v824 = vpack.c.b16 %v695, %v692
        %v825 = vpack.c.b16 %v696, %v693
        %v826 = vpack.c.b16 %v697, %v694
        %v827 = vpack.c.b16 %v701, %v698
        %v828 = vpack.c.b16 %v702, %v699
        %v829 = vpack.c.b16 %v703, %v700
        %v830 = vpack.c.b16 %v707, %v704
        %v831 = vpack.c.b16 %v708, %v705
        %v832 = vpack.c.b16 %v709, %v706
        %v833 = vpack.c.b16 %v713, %v710
        %v834 = vpack.c.b16 %v714, %v711
        %v835 = vpack.c.b16 %v715, %v712
        %v836 = vpack.c.b16 %v719, %v716
        %v837 = vpack.c.b16 %v720, %v717
        %v838 = vpack.c.b16 %v721, %v718
        %v839 = vpack.c.b16 %v725, %v722
        %v840 = vpack.c.b16 %v726, %v723
        %v841 = vpack.c.b16 %v727, %v724
        %v842 = vpack.c.b16 %v731, %v728
        %v843 = vpack.c.b16 %v732, %v729
        %v844 = vpack.c.b16 %v733, %v730
        %v845 = vpack.c.b16 %v737, %v734
        %v846 = vpack.c.b16 %v738, %v735
        %v847 = vpack.c.b16 %v739, %v736
        %v848 = vpack.c.b16 %v743, %v740
        %v849 = vpack.c.b16 %v744, %v741
        %v850 = vpack.c.b16 %v745, %v742
        %v851 = vpack.c.b16 %v749, %v746
        %v852 = vpack.c.b16 %v750, %v747
        %v853 = vpack.c.b16 %v751, %v748
        %v854 = vpack.c.b16 %v755, %v752
        %v855 = vpack.c.b16 %v756, %v753
        %v856 = vpack.c.b16 %v757, %v754
        %v857 = vpack.c.b16 %v761, %v758
        %v858 = vpack.c.b16 %v762, %v759
        %v859 = vpack.c.b16 %v763, %v760
        %v970 = vunpack.c.l.b16 %v391
        %v971 = vunpack.c.l.b16 %v392
        %v972 = vunpack.c.l.b16 %v393
        %v973 = vunpack.c.l.b16 %v394
        %v974 = vunpack.c.l.b16 %v395
        %v975 = vunpack.c.l.b16 %v396
        %v976 = vunpack.c.l.b16 %v397
        %v977 = vunpack.c.l.b16 %v398
        %v978 = vunpack.c.l.b16 %v399
        %v979 = vunpack.c.l.b16 %v400
        %v980 = vunpack.c.l.b16 %v401
        %v981 = vunpack.c.l.b16 %v402
        %v982 = vunpack.c.l.b16 %v403
        %v983 = vunpack.c.l.b16 %v404
        %v984 = vunpack.c.l.b16 %v405
        %v985 = vunpack.c.l.b16 %v406
        %v986 = vunpack.c.l.b16 %v407
        %v987 = vunpack.c.l.b16 %v408
        %v988 = vunpack.c.l.b16 %v409
        %v989 = vunpack.c.l.b16 %v410
        %v990 = vunpack.c.l.b16 %v411
        %v991 = vunpack.c.l.b16 %v412
        %v992 = vunpack.c.l.b16 %v413
        %v993 = vunpack.c.l.b16 %v414
        %v994 = vunpack.c.l.b16 %v415
        %v995 = vunpack.c.l.b16 %v416
        %v996 = vunpack.c.l.b16 %v417
        %v997 = vunpack.c.l.b16 %v418
        %v998 = vunpack.c.l.b16 %v419
        %v999 = vunpack.c.l.b16 %v420
        %v1000 = vunpack.c.l.b16 %v421
        %v1001 = vunpack.c.l.b16 %v422
        %v1002 = vunpack.c.l.b16 %v423
        %v1003 = vunpack.c.l.b16 %v424
        %v1004 = vunpack.c.l.b16 %v425
        %v1005 = vunpack.c.l.b16 %v426
        %v1006 = vunpack.c.l.b16 %v427
        %v1007 = vunpack.c.l.b16 %v428
        %v1008 = vunpack.c.l.b16 %v429
        %v1009 = vunpack.c.l.b16 %v430
        %v1010 = vunpack.c.l.b16 %v431
        %v1011 = vunpack.c.l.b16 %v432
        %v1012 = vunpack.c.l.b16 %v433
        %v1013 = vunpack.c.l.b16 %v434
        %v1014 = vunpack.c.l.b16 %v435
        %v1015 = vunpack.c.l.b16 %v436
        %v1016 = vpack.c.b16 %v971, %v970
        %v1017 = vpack.c.b16 %v973, %v972
        %v1018 = vpack.c.b16 %v975, %v974
        %v1019 = vpack.c.b16 %v977, %v976
        %v1020 = vpack.c.b16 %v979, %v978
        %v1021 = vpack.c.b16 %v981, %v980
        %v1022 = vpack.c.b16 %v983, %v982
        %v1023 = vpack.c.b16 %v985, %v984
        %v1024 = vpack.c.b16 %v987, %v986
        %v1025 = vpack.c.b16 %v989, %v988
        %v1026 = vpack.c.b16 %v991, %v990
        %v1027 = vpack.c.b16 %v993, %v992
        %v1028 = vpack.c.b16 %v995, %v994
        %v1029 = vpack.c.b16 %v997, %v996
        %v1030 = vpack.c.b16 %v999, %v998
        %v1031 = vpack.c.b16 %v1001, %v1000
        %v1032 = vpack.c.b16 %v1003, %v1002
        %v1033 = vpack.c.b16 %v1005, %v1004
        %v1034 = vpack.c.b16 %v1007, %v1006
        %v1035 = vpack.c.b16 %v1009, %v1008
        %v1036 = vpack.c.b16 %v1011, %v1010
        %v1037 = vpack.c.b16 %v1013, %v1012
        %v1038 = vpack.c.b16 %v1015, %v1014
        %vm1061 = vcmask 875520
        %v1063 = vsel %vm1061, %v766, 0
        %v1066 = vsel %vm1061, %v769, 0
        %v1069 = vsel %vm1061, %v772, 0
        %v1072 = vsel %vm1061, %v775, 0
        %v1075 = vsel %vm1061, %v778, 0
        %v1078 = vsel %vm1061, %v781, 0
        %v1081 = vsel %vm1061, %v784, 0
        %v1084 = vsel %vm1061, %v787, 0
        %v1087 = vsel %vm1061, %v790, 0
        %v1090 = vsel %vm1061, %v793, 0
        %v1093 = vsel %vm1061, %v796, 0
        %v1096 = vsel %vm1061, %v799, 0
        %v1099 = vsel %vm1061, %v802, 0
        %v1102 = vsel %vm1061, %v805, 0
        %v1105 = vsel %vm1061, %v808, 0
        %v1108 = vsel %vm1061, %v811, 0
        %v1111 = vsel %vm1061, %v814, 0
        %v1114 = vsel %vm1061, %v817, 0
        %v1117 = vsel %vm1061, %v820, 0
        %v1120 = vsel %vm1061, %v823, 0
        %v1123 = vsel %vm1061, %v826, 0
        %v1126 = vsel %vm1061, %v829, 0
        %v1129 = vsel %vm1061, %v832, 0
        %v1132 = vsel %vm1061, %v835, 0
        %v1135 = vsel %vm1061, %v838, 0
        %v1138 = vsel %vm1061, %v841, 0
        %v1141 = vsel %vm1061, %v844, 0
        %v1144 = vsel %vm1061, %v847, 0
        %v1147 = vsel %vm1061, %v850, 0
        %v1150 = vsel %vm1061, %v853, 0
        %v1153 = vsel %vm1061, %v856, 0
        %v1156 = vsel %vm1061, %v859, 0
        %vm1158 = vcmask 1044480
        %vm1159 = vcmask 1045504
        %v1160 = vsel %vm1158, 4294967295, 65535
        %v1161 = vsel %vm1159, %v1160, 0
        %v1163 = vand.u32 %v1038, %v1161
        %1165 = vmatprep.subr.bf16.mxu0 0
        %1166 = vmatpush1.bf16.msra.mxu0 %v1023
        %1167 = vmatprep.subr.bf16.mxu0 0
        %1168 = vmatpush1.bf16.msra.mxu0 %v1022
        %1169 = vmatprep.subr.bf16.mxu0 0
        %1170 = vmatpush1.bf16.msra.mxu0 %v1021
        %1171 = vmatprep.subr.bf16.mxu0 0
        %1172 = vmatpush1.bf16.msra.mxu0 %v1020
        %1173 = vmatprep.subr.bf16.mxu0 0
        %1174 = vmatpush1.bf16.msra.mxu0 %v1019
        %1175 = vmatprep.subr.bf16.mxu0 0
        %1176 = vmatpush1.bf16.msra.mxu0 %v1018
        %1177 = vmatprep.subr.bf16.mxu0 0
        %1178 = vmatpush1.bf16.msra.mxu0 %v1017
        %1179 = vmatprep.subr.bf16.mxu0 0
        %1180 = vmatpush1.bf16.msra.mxu0 %v1016
        %1181 = vmatprep.subr.bf16.mxu0 0
        %1182 = vmatpush2.bf16.msra.mxu0 %v1031
        %1183 = vmatprep.subr.bf16.mxu0 0
        %1184 = vmatpush2.bf16.msra.mxu0 %v1030
        %1185 = vmatprep.subr.bf16.mxu0 0
        %1186 = vmatpush2.bf16.msra.mxu0 %v1029
        %1187 = vmatprep.subr.bf16.mxu0 0
        %1188 = vmatpush2.bf16.msra.mxu0 %v1028
        %1189 = vmatprep.subr.bf16.mxu0 0
        %1190 = vmatpush2.bf16.msra.mxu0 %v1027
        %1191 = vmatprep.subr.bf16.mxu0 0
        %1192 = vmatpush2.bf16.msra.mxu0 %v1026
        %1193 = vmatprep.subr.bf16.mxu0 0
        %1194 = vmatpush2.bf16.msra.mxu0 %v1025
        %1195 = vmatprep.subr.bf16.mxu0 0
        %1196 = vmatpush2.bf16.msra.mxu0 %v1024
        %1197 = vmatprep.mubr.bf16.mxu0 %v765
        %1198 = vmatmul.mubr.bf16.gmra.mxu0 %v764
        %v1199 = vpop.f32.mrf.mxu0
        %v1200 = vadd.f32 %v442, %v1199
        %v1201 = vpop.f32.mrf.mxu0
        %v1202 = vpop.f32.mrf.mxu0
        %v1203 = vadd.f32 %v442, %v1202
        %v1204 = vpop.f32.mrf.mxu0
        %1205 = vmatprep.mubr.bf16.mxu0 %v768
        %1206 = vmatmul.mubr.bf16.gmra.mxu0 %v767
        %v1207 = vpop.f32.mrf.mxu0
        %v1208 = vadd.f32 %v442, %v1207
        %v1209 = vpop.f32.mrf.mxu0
        %v1210 = vpop.f32.mrf.mxu0
        %v1211 = vadd.f32 %v442, %v1210
        %v1212 = vpop.f32.mrf.mxu0
        %1213 = vmatprep.mubr.bf16.mxu0 %v771
        %1214 = vmatmul.mubr.bf16.gmra.mxu0 %v770
        %v1215 = vpop.f32.mrf.mxu0
        %v1216 = vadd.f32 %v442, %v1215
        %v1217 = vpop.f32.mrf.mxu0
        %v1218 = vpop.f32.mrf.mxu0
        %v1219 = vadd.f32 %v442, %v1218
        %v1220 = vpop.f32.mrf.mxu0
        %1221 = vmatprep.mubr.bf16.mxu0 %v774
        %1222 = vmatmul.mubr.bf16.gmra.mxu0 %v773
        %v1223 = vpop.f32.mrf.mxu0
        %v1224 = vadd.f32 %v442, %v1223
        %v1225 = vpop.f32.mrf.mxu0
        %v1226 = vpop.f32.mrf.mxu0
        %v1227 = vadd.f32 %v442, %v1226
        %v1228 = vpop.f32.mrf.mxu0
        %1229 = vmatprep.mubr.bf16.mxu0 %v777
        %1230 = vmatmul.mubr.bf16.gmra.mxu0 %v776
        %v1231 = vpop.f32.mrf.mxu0
        %v1232 = vadd.f32 %v442, %v1231
        %v1233 = vpop.f32.mrf.mxu0
        %v1234 = vpop.f32.mrf.mxu0
        %v1235 = vadd.f32 %v442, %v1234
        %v1236 = vpop.f32.mrf.mxu0
        %1237 = vmatprep.mubr.bf16.mxu0 %v780
        %1238 = vmatmul.mubr.bf16.gmra.mxu0 %v779
        %v1239 = vpop.f32.mrf.mxu0
        %v1240 = vadd.f32 %v442, %v1239
        %v1241 = vpop.f32.mrf.mxu0
        %v1242 = vpop.f32.mrf.mxu0
        %v1243 = vadd.f32 %v442, %v1242
        %v1244 = vpop.f32.mrf.mxu0
        %1245 = vmatprep.mubr.bf16.mxu0 %v783
        %1246 = vmatmul.mubr.bf16.gmra.mxu0 %v782
        %v1247 = vpop.f32.mrf.mxu0
        %v1248 = vadd.f32 %v442, %v1247
        %v1249 = vpop.f32.mrf.mxu0
        %v1250 = vpop.f32.mrf.mxu0
        %v1251 = vadd.f32 %v442, %v1250
        %v1252 = vpop.f32.mrf.mxu0
        %1253 = vmatprep.mubr.bf16.mxu0 %v786
        %1254 = vmatmul.mubr.bf16.gmra.mxu0 %v785
        %v1255 = vpop.f32.mrf.mxu0
        %v1256 = vadd.f32 %v442, %v1255
        %v1257 = vpop.f32.mrf.mxu0
        %v1258 = vpop.f32.mrf.mxu0
        %v1259 = vadd.f32 %v442, %v1258
        %v1260 = vpop.f32.mrf.mxu0
        %1261 = vmatprep.mubr.bf16.mxu0 %v789
        %1262 = vmatmul.mubr.bf16.gmra.mxu0 %v788
        %v1263 = vpop.f32.mrf.mxu0
        %v1264 = vadd.f32 %v442, %v1263
        %v1265 = vpop.f32.mrf.mxu0
        %v1266 = vpop.f32.mrf.mxu0
        %v1267 = vadd.f32 %v442, %v1266
        %v1268 = vpop.f32.mrf.mxu0
        %1269 = vmatprep.mubr.bf16.mxu0 %v792
        %1270 = vmatmul.mubr.bf16.gmra.mxu0 %v791
        %v1271 = vpop.f32.mrf.mxu0
        %v1272 = vadd.f32 %v442, %v1271
        %v1273 = vpop.f32.mrf.mxu0
        %v1274 = vpop.f32.mrf.mxu0
        %v1275 = vadd.f32 %v442, %v1274
        %v1276 = vpop.f32.mrf.mxu0
        %1277 = vmatprep.mubr.bf16.mxu0 %v795
        %1278 = vmatmul.mubr.bf16.gmra.mxu0 %v794
        %v1279 = vpop.f32.mrf.mxu0
        %v1280 = vadd.f32 %v442, %v1279
        %v1281 = vpop.f32.mrf.mxu0
        %v1282 = vpop.f32.mrf.mxu0
        %v1283 = vadd.f32 %v442, %v1282
        %v1284 = vpop.f32.mrf.mxu0
        %1285 = vmatprep.mubr.bf16.mxu0 %v798
        %1286 = vmatmul.mubr.bf16.gmra.mxu0 %v797
        %v1287 = vpop.f32.mrf.mxu0
        %v1288 = vadd.f32 %v442, %v1287
        %v1289 = vpop.f32.mrf.mxu0
        %v1290 = vpop.f32.mrf.mxu0
        %v1291 = vadd.f32 %v442, %v1290
        %v1292 = vpop.f32.mrf.mxu0
        %1293 = vmatprep.mubr.bf16.mxu0 %v801
        %1294 = vmatmul.mubr.bf16.gmra.mxu0 %v800
        %v1295 = vpop.f32.mrf.mxu0
        %v1296 = vadd.f32 %v442, %v1295
        %v1297 = vpop.f32.mrf.mxu0
        %v1298 = vpop.f32.mrf.mxu0
        %v1299 = vadd.f32 %v442, %v1298
        %v1300 = vpop.f32.mrf.mxu0
        %1301 = vmatprep.mubr.bf16.mxu0 %v804
        %1302 = vmatmul.mubr.bf16.gmra.mxu0 %v803
        %v1303 = vpop.f32.mrf.mxu0
        %v1304 = vadd.f32 %v442, %v1303
        %v1305 = vpop.f32.mrf.mxu0
        %v1306 = vpop.f32.mrf.mxu0
        %v1307 = vadd.f32 %v442, %v1306
        %v1308 = vpop.f32.mrf.mxu0
        %1309 = vmatprep.mubr.bf16.mxu0 %v807
        %1310 = vmatmul.mubr.bf16.gmra.mxu0 %v806
        %v1311 = vpop.f32.mrf.mxu0
        %v1312 = vadd.f32 %v442, %v1311
        %v1313 = vpop.f32.mrf.mxu0
        %v1314 = vpop.f32.mrf.mxu0
        %v1315 = vadd.f32 %v442, %v1314
        %v1316 = vpop.f32.mrf.mxu0
        %1317 = vmatprep.mubr.bf16.mxu0 %v810
        %1318 = vmatmul.mubr.bf16.gmra.mxu0 %v809
        %v1319 = vpop.f32.mrf.mxu0
        %v1320 = vadd.f32 %v442, %v1319
        %v1321 = vpop.f32.mrf.mxu0
        %v1322 = vpop.f32.mrf.mxu0
        %v1323 = vadd.f32 %v442, %v1322
        %v1324 = vpop.f32.mrf.mxu0
        %1325 = vmatprep.mubr.bf16.mxu0 %v813
        %1326 = vmatmul.mubr.bf16.gmra.mxu0 %v812
        %v1327 = vpop.f32.mrf.mxu0
        %v1328 = vadd.f32 %v442, %v1327
        %v1329 = vpop.f32.mrf.mxu0
        %v1330 = vpop.f32.mrf.mxu0
        %v1331 = vadd.f32 %v442, %v1330
        %v1332 = vpop.f32.mrf.mxu0
        %1333 = vmatprep.mubr.bf16.mxu0 %v816
        %1334 = vmatmul.mubr.bf16.gmra.mxu0 %v815
        %v1335 = vpop.f32.mrf.mxu0
        %v1336 = vadd.f32 %v442, %v1335
        %v1337 = vpop.f32.mrf.mxu0
        %v1338 = vpop.f32.mrf.mxu0
        %v1339 = vadd.f32 %v442, %v1338
        %v1340 = vpop.f32.mrf.mxu0
        %1341 = vmatprep.mubr.bf16.mxu0 %v819
        %1342 = vmatmul.mubr.bf16.gmra.mxu0 %v818
        %v1343 = vpop.f32.mrf.mxu0
        %v1344 = vadd.f32 %v442, %v1343
        %v1345 = vpop.f32.mrf.mxu0
        %v1346 = vpop.f32.mrf.mxu0
        %v1347 = vadd.f32 %v442, %v1346
        %v1348 = vpop.f32.mrf.mxu0
        %1349 = vmatprep.mubr.bf16.mxu0 %v822
        %1350 = vmatmul.mubr.bf16.gmra.mxu0 %v821
        %v1351 = vpop.f32.mrf.mxu0
        %v1352 = vadd.f32 %v442, %v1351
        %v1353 = vpop.f32.mrf.mxu0
        %v1354 = vpop.f32.mrf.mxu0
        %v1355 = vadd.f32 %v442, %v1354
        %v1356 = vpop.f32.mrf.mxu0
        %1357 = vmatprep.mubr.bf16.mxu0 %v825
        %1358 = vmatmul.mubr.bf16.gmra.mxu0 %v824
        %v1359 = vpop.f32.mrf.mxu0
        %v1360 = vadd.f32 %v442, %v1359
        %v1361 = vpop.f32.mrf.mxu0
        %v1362 = vpop.f32.mrf.mxu0
        %v1363 = vadd.f32 %v442, %v1362
        %v1364 = vpop.f32.mrf.mxu0
        %1365 = vmatprep.mubr.bf16.mxu0 %v828
        %1366 = vmatmul.mubr.bf16.gmra.mxu0 %v827
        %v1367 = vpop.f32.mrf.mxu0
        %v1368 = vadd.f32 %v442, %v1367
        %v1369 = vpop.f32.mrf.mxu0
        %v1370 = vpop.f32.mrf.mxu0
        %v1371 = vadd.f32 %v442, %v1370
        %v1372 = vpop.f32.mrf.mxu0
        %1373 = vmatprep.mubr.bf16.mxu0 %v831
        %1374 = vmatmul.mubr.bf16.gmra.mxu0 %v830
        %v1375 = vpop.f32.mrf.mxu0
        %v1376 = vadd.f32 %v442, %v1375
        %v1377 = vpop.f32.mrf.mxu0
        %v1378 = vpop.f32.mrf.mxu0
        %v1379 = vadd.f32 %v442, %v1378
        %v1380 = vpop.f32.mrf.mxu0
        %1381 = vmatprep.mubr.bf16.mxu0 %v834
        %1382 = vmatmul.mubr.bf16.gmra.mxu0 %v833
        %v1383 = vpop.f32.mrf.mxu0
        %v1384 = vadd.f32 %v442, %v1383
        %v1385 = vpop.f32.mrf.mxu0
        %v1386 = vpop.f32.mrf.mxu0
        %v1387 = vadd.f32 %v442, %v1386
        %v1388 = vpop.f32.mrf.mxu0
        %1389 = vmatprep.mubr.bf16.mxu0 %v837
        %1390 = vmatmul.mubr.bf16.gmra.mxu0 %v836
        %v1391 = vpop.f32.mrf.mxu0
        %v1392 = vadd.f32 %v442, %v1391
        %v1393 = vpop.f32.mrf.mxu0
        %v1394 = vpop.f32.mrf.mxu0
        %v1395 = vadd.f32 %v442, %v1394
        %v1396 = vpop.f32.mrf.mxu0
        %1397 = vmatprep.mubr.bf16.mxu0 %v840
        %1398 = vmatmul.mubr.bf16.gmra.mxu0 %v839
        %v1399 = vpop.f32.mrf.mxu0
        %v1400 = vadd.f32 %v442, %v1399
        %v1401 = vpop.f32.mrf.mxu0
        %v1402 = vpop.f32.mrf.mxu0
        %v1403 = vadd.f32 %v442, %v1402
        %v1404 = vpop.f32.mrf.mxu0
        %1405 = vmatprep.mubr.bf16.mxu0 %v843
        %1406 = vmatmul.mubr.bf16.gmra.mxu0 %v842
        %v1407 = vpop.f32.mrf.mxu0
        %v1408 = vadd.f32 %v442, %v1407
        %v1409 = vpop.f32.mrf.mxu0
        %v1410 = vpop.f32.mrf.mxu0
        %v1411 = vadd.f32 %v442, %v1410
        %v1412 = vpop.f32.mrf.mxu0
        %1413 = vmatprep.mubr.bf16.mxu0 %v846
        %1414 = vmatmul.mubr.bf16.gmra.mxu0 %v845
        %v1415 = vpop.f32.mrf.mxu0
        %v1416 = vadd.f32 %v442, %v1415
        %v1417 = vpop.f32.mrf.mxu0
        %v1418 = vpop.f32.mrf.mxu0
        %v1419 = vadd.f32 %v442, %v1418
        %v1420 = vpop.f32.mrf.mxu0
        %1421 = vmatprep.mubr.bf16.mxu0 %v849
        %1422 = vmatmul.mubr.bf16.gmra.mxu0 %v848
        %v1423 = vpop.f32.mrf.mxu0
        %v1424 = vadd.f32 %v442, %v1423
        %v1425 = vpop.f32.mrf.mxu0
        %v1426 = vpop.f32.mrf.mxu0
        %v1427 = vadd.f32 %v442, %v1426
        %v1428 = vpop.f32.mrf.mxu0
        %1429 = vmatprep.mubr.bf16.mxu0 %v852
        %1430 = vmatmul.mubr.bf16.gmra.mxu0 %v851
        %v1431 = vpop.f32.mrf.mxu0
        %v1432 = vadd.f32 %v442, %v1431
        %v1433 = vpop.f32.mrf.mxu0
        %v1434 = vpop.f32.mrf.mxu0
        %v1435 = vadd.f32 %v442, %v1434
        %v1436 = vpop.f32.mrf.mxu0
        %1437 = vmatprep.mubr.bf16.mxu0 %v855
        %1438 = vmatmul.mubr.bf16.gmra.mxu0 %v854
        %v1439 = vpop.f32.mrf.mxu0
        %v1440 = vadd.f32 %v442, %v1439
        %v1441 = vpop.f32.mrf.mxu0
        %v1442 = vpop.f32.mrf.mxu0
        %v1443 = vadd.f32 %v442, %v1442
        %v1444 = vpop.f32.mrf.mxu0
        %1445 = vmatprep.mubr.bf16.mxu0 %v858
        %1446 = vmatmul.mubr.bf16.gmra.mxu0 %v857
        %v1447 = vpop.f32.mrf.mxu0
        %v1448 = vadd.f32 %v442, %v1447
        %v1449 = vpop.f32.mrf.mxu0
        %v1450 = vpop.f32.mrf.mxu0
        %v1451 = vadd.f32 %v442, %v1450
        %v1452 = vpop.f32.mrf.mxu0
        %1453 = vdwg.mxu0
        %1454 = vmatprep.subr.bf16.mxu0 0
        %1455 = vmatpush1.bf16.msra.mxu0 0
        %1456 = vmatprep.subr.bf16.mxu0 0
        %1457 = vmatpush1.bf16.msra.mxu0 %v1163
        %1458 = vmatprep.subr.bf16.mxu0 0
        %1459 = vmatpush1.bf16.msra.mxu0 %v1037
        %1460 = vmatprep.subr.bf16.mxu0 0
        %1461 = vmatpush1.bf16.msra.mxu0 %v1036
        %1462 = vmatprep.subr.bf16.mxu0 0
        %1463 = vmatpush1.bf16.msra.mxu0 %v1035
        %1464 = vmatprep.subr.bf16.mxu0 0
        %1465 = vmatpush1.bf16.msra.mxu0 %v1034
        %1466 = vmatprep.subr.bf16.mxu0 0
        %1467 = vmatpush1.bf16.msra.mxu0 %v1033
        %1468 = vmatprep.subr.bf16.mxu0 0
        %1469 = vmatpush1.bf16.msra.mxu0 %v1032
        %1470 = vmatprep.subr.bf16.mxu0 0
        %1471 = vmatpush2.bf16.msra.mxu0 0
        %1472 = vmatprep.subr.bf16.mxu0 0
        %1473 = vmatpush2.bf16.msra.mxu0 0
        %1474 = vmatprep.subr.bf16.mxu0 0
        %1475 = vmatpush2.bf16.msra.mxu0 0
        %1476 = vmatprep.subr.bf16.mxu0 0
        %1477 = vmatpush2.bf16.msra.mxu0 0
        %1478 = vmatprep.subr.bf16.mxu0 0
        %1479 = vmatpush2.bf16.msra.mxu0 0
        %1480 = vmatprep.subr.bf16.mxu0 0
        %1481 = vmatpush2.bf16.msra.mxu0 0
        %1482 = vmatprep.subr.bf16.mxu0 0
        %1483 = vmatpush2.bf16.msra.mxu0 0
        %1484 = vmatprep.subr.bf16.mxu0 0
        %1485 = vmatpush2.bf16.msra.mxu0 0
        %1486 = vmatprep.mubr.bf16.mxu0 0
        %1487 = vmatmul.mubr.bf16.gmra.mxu0 %v1063
        %v1488 = vpop.f32.mrf.mxu0
        %v1489 = vadd.f32 %v1200, %v1488
        %v1490 = vpop.f32.mrf.mxu0
        %v1491 = vpop.f32.mrf.mxu0
        %v1492 = vadd.f32 %v1203, %v1491
        %v1493 = vpop.f32.mrf.mxu0
        %1494 = vmatprep.mubr.bf16.mxu0 0
        %1495 = vmatmul.mubr.bf16.gmra.mxu0 %v1066
        %v1496 = vpop.f32.mrf.mxu0
        %v1497 = vadd.f32 %v1208, %v1496
        %v1498 = vpop.f32.mrf.mxu0
        %v1499 = vpop.f32.mrf.mxu0
        %v1500 = vadd.f32 %v1211, %v1499
        %v1501 = vpop.f32.mrf.mxu0
        %1502 = vmatprep.mubr.bf16.mxu0 0
        %1503 = vmatmul.mubr.bf16.gmra.mxu0 %v1069
        %v1504 = vpop.f32.mrf.mxu0
        %v1505 = vadd.f32 %v1216, %v1504
        %v1506 = vpop.f32.mrf.mxu0
        %v1507 = vpop.f32.mrf.mxu0
        %v1508 = vadd.f32 %v1219, %v1507
        %v1509 = vpop.f32.mrf.mxu0
        %1510 = vmatprep.mubr.bf16.mxu0 0
        %1511 = vmatmul.mubr.bf16.gmra.mxu0 %v1072
        %v1512 = vpop.f32.mrf.mxu0
        %v1513 = vadd.f32 %v1224, %v1512
        %v1514 = vpop.f32.mrf.mxu0
        %v1515 = vpop.f32.mrf.mxu0
        %v1516 = vadd.f32 %v1227, %v1515
        %v1517 = vpop.f32.mrf.mxu0
        %1518 = vmatprep.mubr.bf16.mxu0 0
        %1519 = vmatmul.mubr.bf16.gmra.mxu0 %v1075
        %v1520 = vpop.f32.mrf.mxu0
        %v1521 = vadd.f32 %v1232, %v1520
        %v1522 = vpop.f32.mrf.mxu0
        %v1523 = vpop.f32.mrf.mxu0
        %v1524 = vadd.f32 %v1235, %v1523
        %v1525 = vpop.f32.mrf.mxu0
        %1526 = vmatprep.mubr.bf16.mxu0 0
        %1527 = vmatmul.mubr.bf16.gmra.mxu0 %v1078
        %v1528 = vpop.f32.mrf.mxu0
        %v1529 = vadd.f32 %v1240, %v1528
        %v1530 = vpop.f32.mrf.mxu0
        %v1531 = vpop.f32.mrf.mxu0
        %v1532 = vadd.f32 %v1243, %v1531
        %v1533 = vpop.f32.mrf.mxu0
        %1534 = vmatprep.mubr.bf16.mxu0 0
        %1535 = vmatmul.mubr.bf16.gmra.mxu0 %v1081
        %v1536 = vpop.f32.mrf.mxu0
        %v1537 = vadd.f32 %v1248, %v1536
        %v1538 = vpop.f32.mrf.mxu0
        %v1539 = vpop.f32.mrf.mxu0
        %v1540 = vadd.f32 %v1251, %v1539
        %v1541 = vpop.f32.mrf.mxu0
        %1542 = vmatprep.mubr.bf16.mxu0 0
        %1543 = vmatmul.mubr.bf16.gmra.mxu0 %v1084
        %v1544 = vpop.f32.mrf.mxu0
        %v1545 = vadd.f32 %v1256, %v1544
        %v1546 = vpop.f32.mrf.mxu0
        %v1547 = vpop.f32.mrf.mxu0
        %v1548 = vadd.f32 %v1259, %v1547
        %v1549 = vpop.f32.mrf.mxu0
        %1550 = vmatprep.mubr.bf16.mxu0 0
        %1551 = vmatmul.mubr.bf16.gmra.mxu0 %v1087
        %v1552 = vpop.f32.mrf.mxu0
        %v1553 = vadd.f32 %v1264, %v1552
        %v1554 = vpop.f32.mrf.mxu0
        %v1555 = vpop.f32.mrf.mxu0
        %v1556 = vadd.f32 %v1267, %v1555
        %v1557 = vpop.f32.mrf.mxu0
        %1558 = vmatprep.mubr.bf16.mxu0 0
        %1559 = vmatmul.mubr.bf16.gmra.mxu0 %v1090
        %v1560 = vpop.f32.mrf.mxu0
        %v1561 = vadd.f32 %v1272, %v1560
        %v1562 = vpop.f32.mrf.mxu0
        %v1563 = vpop.f32.mrf.mxu0
        %v1564 = vadd.f32 %v1275, %v1563
        %v1565 = vpop.f32.mrf.mxu0
        %1566 = vmatprep.mubr.bf16.mxu0 0
        %1567 = vmatmul.mubr.bf16.gmra.mxu0 %v1093
        %v1568 = vpop.f32.mrf.mxu0
        %v1569 = vadd.f32 %v1280, %v1568
        %v1570 = vpop.f32.mrf.mxu0
        %v1571 = vpop.f32.mrf.mxu0
        %v1572 = vadd.f32 %v1283, %v1571
        %v1573 = vpop.f32.mrf.mxu0
        %1574 = vmatprep.mubr.bf16.mxu0 0
        %1575 = vmatmul.mubr.bf16.gmra.mxu0 %v1096
        %v1576 = vpop.f32.mrf.mxu0
        %v1577 = vadd.f32 %v1288, %v1576
        %v1578 = vpop.f32.mrf.mxu0
        %v1579 = vpop.f32.mrf.mxu0
        %v1580 = vadd.f32 %v1291, %v1579
        %v1581 = vpop.f32.mrf.mxu0
        %1582 = vmatprep.mubr.bf16.mxu0 0
        %1583 = vmatmul.mubr.bf16.gmra.mxu0 %v1099
        %v1584 = vpop.f32.mrf.mxu0
        %v1585 = vadd.f32 %v1296, %v1584
        %v1586 = vpop.f32.mrf.mxu0
        %v1587 = vpop.f32.mrf.mxu0
        %v1588 = vadd.f32 %v1299, %v1587
        %v1589 = vpop.f32.mrf.mxu0
        %1590 = vmatprep.mubr.bf16.mxu0 0
        %1591 = vmatmul.mubr.bf16.gmra.mxu0 %v1102
        %v1592 = vpop.f32.mrf.mxu0
        %v1593 = vadd.f32 %v1304, %v1592
        %v1594 = vpop.f32.mrf.mxu0
        %v1595 = vpop.f32.mrf.mxu0
        %v1596 = vadd.f32 %v1307, %v1595
        %v1597 = vpop.f32.mrf.mxu0
        %1598 = vmatprep.mubr.bf16.mxu0 0
        %1599 = vmatmul.mubr.bf16.gmra.mxu0 %v1105
        %v1600 = vpop.f32.mrf.mxu0
        %v1601 = vadd.f32 %v1312, %v1600
        %v1602 = vpop.f32.mrf.mxu0
        %v1603 = vpop.f32.mrf.mxu0
        %v1604 = vadd.f32 %v1315, %v1603
        %v1605 = vpop.f32.mrf.mxu0
        %1606 = vmatprep.mubr.bf16.mxu0 0
        %1607 = vmatmul.mubr.bf16.gmra.mxu0 %v1108
        %v1608 = vpop.f32.mrf.mxu0
        %v1609 = vadd.f32 %v1320, %v1608
        %v1610 = vpop.f32.mrf.mxu0
        %v1611 = vpop.f32.mrf.mxu0
        %v1612 = vadd.f32 %v1323, %v1611
        %v1613 = vpop.f32.mrf.mxu0
        %1614 = vmatprep.mubr.bf16.mxu0 0
        %1615 = vmatmul.mubr.bf16.gmra.mxu0 %v1111
        %v1616 = vpop.f32.mrf.mxu0
        %v1617 = vadd.f32 %v1328, %v1616
        %v1618 = vpop.f32.mrf.mxu0
        %v1619 = vpop.f32.mrf.mxu0
        %v1620 = vadd.f32 %v1331, %v1619
        %v1621 = vpop.f32.mrf.mxu0
        %1622 = vmatprep.mubr.bf16.mxu0 0
        %1623 = vmatmul.mubr.bf16.gmra.mxu0 %v1114
        %v1624 = vpop.f32.mrf.mxu0
        %v1625 = vadd.f32 %v1336, %v1624
        %v1626 = vpop.f32.mrf.mxu0
        %v1627 = vpop.f32.mrf.mxu0
        %v1628 = vadd.f32 %v1339, %v1627
        %v1629 = vpop.f32.mrf.mxu0
        %1630 = vmatprep.mubr.bf16.mxu0 0
        %1631 = vmatmul.mubr.bf16.gmra.mxu0 %v1117
        %v1632 = vpop.f32.mrf.mxu0
        %v1633 = vadd.f32 %v1344, %v1632
        %v1634 = vpop.f32.mrf.mxu0
        %v1635 = vpop.f32.mrf.mxu0
        %v1636 = vadd.f32 %v1347, %v1635
        %v1637 = vpop.f32.mrf.mxu0
        %1638 = vmatprep.mubr.bf16.mxu0 0
        %1639 = vmatmul.mubr.bf16.gmra.mxu0 %v1120
        %v1640 = vpop.f32.mrf.mxu0
        %v1641 = vadd.f32 %v1352, %v1640
        %v1642 = vpop.f32.mrf.mxu0
        %v1643 = vpop.f32.mrf.mxu0
        %v1644 = vadd.f32 %v1355, %v1643
        %v1645 = vpop.f32.mrf.mxu0
        %1646 = vmatprep.mubr.bf16.mxu0 0
        %1647 = vmatmul.mubr.bf16.gmra.mxu0 %v1123
        %v1648 = vpop.f32.mrf.mxu0
        %v1649 = vadd.f32 %v1360, %v1648
        %v1650 = vpop.f32.mrf.mxu0
        %v1651 = vpop.f32.mrf.mxu0
        %v1652 = vadd.f32 %v1363, %v1651
        %v1653 = vpop.f32.mrf.mxu0
        %1654 = vmatprep.mubr.bf16.mxu0 0
        %1655 = vmatmul.mubr.bf16.gmra.mxu0 %v1126
        %v1656 = vpop.f32.mrf.mxu0
        %v1657 = vadd.f32 %v1368, %v1656
        %v1658 = vpop.f32.mrf.mxu0
        %v1659 = vpop.f32.mrf.mxu0
        %v1660 = vadd.f32 %v1371, %v1659
        %v1661 = vpop.f32.mrf.mxu0
        %1662 = vmatprep.mubr.bf16.mxu0 0
        %1663 = vmatmul.mubr.bf16.gmra.mxu0 %v1129
        %v1664 = vpop.f32.mrf.mxu0
        %v1665 = vadd.f32 %v1376, %v1664
        %v1666 = vpop.f32.mrf.mxu0
        %v1667 = vpop.f32.mrf.mxu0
        %v1668 = vadd.f32 %v1379, %v1667
        %v1669 = vpop.f32.mrf.mxu0
        %1670 = vmatprep.mubr.bf16.mxu0 0
        %1671 = vmatmul.mubr.bf16.gmra.mxu0 %v1132
        %v1672 = vpop.f32.mrf.mxu0
        %v1673 = vadd.f32 %v1384, %v1672
        %v1674 = vpop.f32.mrf.mxu0
        %v1675 = vpop.f32.mrf.mxu0
        %v1676 = vadd.f32 %v1387, %v1675
        %v1677 = vpop.f32.mrf.mxu0
        %1678 = vmatprep.mubr.bf16.mxu0 0
        %1679 = vmatmul.mubr.bf16.gmra.mxu0 %v1135
        %v1680 = vpop.f32.mrf.mxu0
        %v1681 = vadd.f32 %v1392, %v1680
        %v1682 = vpop.f32.mrf.mxu0
        %v1683 = vpop.f32.mrf.mxu0
        %v1684 = vadd.f32 %v1395, %v1683
        %v1685 = vpop.f32.mrf.mxu0
        %1686 = vmatprep.mubr.bf16.mxu0 0
        %1687 = vmatmul.mubr.bf16.gmra.mxu0 %v1138
        %v1688 = vpop.f32.mrf.mxu0
        %v1689 = vadd.f32 %v1400, %v1688
        %v1690 = vpop.f32.mrf.mxu0
        %v1691 = vpop.f32.mrf.mxu0
        %v1692 = vadd.f32 %v1403, %v1691
        %v1693 = vpop.f32.mrf.mxu0
        %1694 = vmatprep.mubr.bf16.mxu0 0
        %1695 = vmatmul.mubr.bf16.gmra.mxu0 %v1141
        %v1696 = vpop.f32.mrf.mxu0
        %v1697 = vadd.f32 %v1408, %v1696
        %v1698 = vpop.f32.mrf.mxu0
        %v1699 = vpop.f32.mrf.mxu0
        %v1700 = vadd.f32 %v1411, %v1699
        %v1701 = vpop.f32.mrf.mxu0
        %1702 = vmatprep.mubr.bf16.mxu0 0
        %1703 = vmatmul.mubr.bf16.gmra.mxu0 %v1144
        %v1704 = vpop.f32.mrf.mxu0
        %v1705 = vadd.f32 %v1416, %v1704
        %v1706 = vpop.f32.mrf.mxu0
        %v1707 = vpop.f32.mrf.mxu0
        %v1708 = vadd.f32 %v1419, %v1707
        %v1709 = vpop.f32.mrf.mxu0
        %1710 = vmatprep.mubr.bf16.mxu0 0
        %1711 = vmatmul.mubr.bf16.gmra.mxu0 %v1147
        %v1712 = vpop.f32.mrf.mxu0
        %v1713 = vadd.f32 %v1424, %v1712
        %v1714 = vpop.f32.mrf.mxu0
        %v1715 = vpop.f32.mrf.mxu0
        %v1716 = vadd.f32 %v1427, %v1715
        %v1717 = vpop.f32.mrf.mxu0
        %1718 = vmatprep.mubr.bf16.mxu0 0
        %1719 = vmatmul.mubr.bf16.gmra.mxu0 %v1150
        %v1720 = vpop.f32.mrf.mxu0
        %v1721 = vadd.f32 %v1432, %v1720
        %v1722 = vpop.f32.mrf.mxu0
        %v1723 = vpop.f32.mrf.mxu0
        %v1724 = vadd.f32 %v1435, %v1723
        %v1725 = vpop.f32.mrf.mxu0
        %1726 = vmatprep.mubr.bf16.mxu0 0
        %1727 = vmatmul.mubr.bf16.gmra.mxu0 %v1153
        %v1728 = vpop.f32.mrf.mxu0
        %v1729 = vadd.f32 %v1440, %v1728
        %v1730 = vpop.f32.mrf.mxu0
        %v1731 = vpop.f32.mrf.mxu0
        %v1732 = vadd.f32 %v1443, %v1731
        %v1733 = vpop.f32.mrf.mxu0
        %1734 = vmatprep.mubr.bf16.mxu0 0
        %1735 = vmatmul.mubr.bf16.gmra.mxu0 %v1156
        %v1736 = vpop.f32.mrf.mxu0
        %v1737 = vadd.f32 %v1448, %v1736
        %v1738 = vpop.f32.mrf.mxu0
        %v1739 = vpop.f32.mrf.mxu0
        %v1740 = vadd.f32 %v1451, %v1739
        %v1741 = vpop.f32.mrf.mxu0
        %1742 = vdwg.mxu0
        %v1743 = vmax.f32 %v1489, 0.0
        %v1744 = vmax.f32 %v1492, 0.0
        %v1745 = vmax.f32 %v1497, 0.0
        %v1746 = vmax.f32 %v1500, 0.0
        %v1747 = vmax.f32 %v1505, 0.0
        %v1748 = vmax.f32 %v1508, 0.0
        %v1749 = vmax.f32 %v1513, 0.0
        %v1750 = vmax.f32 %v1516, 0.0
        %v1751 = vmax.f32 %v1521, 0.0
        %v1752 = vmax.f32 %v1524, 0.0
        %v1753 = vmax.f32 %v1529, 0.0
        %v1754 = vmax.f32 %v1532, 0.0
        %v1755 = vmax.f32 %v1537, 0.0
        %v1756 = vmax.f32 %v1540, 0.0
        %v1757 = vmax.f32 %v1545, 0.0
        %v1758 = vmax.f32 %v1548, 0.0
        %v1759 = vmax.f32 %v1553, 0.0
        %v1760 = vmax.f32 %v1556, 0.0
        %v1761 = vmax.f32 %v1561, 0.0
        %v1762 = vmax.f32 %v1564, 0.0
        %v1763 = vmax.f32 %v1569, 0.0
        %v1764 = vmax.f32 %v1572, 0.0
        %v1765 = vmax.f32 %v1577, 0.0
        %v1766 = vmax.f32 %v1580, 0.0
        %v1767 = vmax.f32 %v1585, 0.0
        %v1768 = vmax.f32 %v1588, 0.0
        %v1769 = vmax.f32 %v1593, 0.0
        %v1770 = vmax.f32 %v1596, 0.0
        %v1771 = vmax.f32 %v1601, 0.0
        %v1772 = vmax.f32 %v1604, 0.0
        %v1773 = vmax.f32 %v1609, 0.0
        %v1774 = vmax.f32 %v1612, 0.0
        %v1775 = vmax.f32 %v1617, 0.0
        %v1776 = vmax.f32 %v1620, 0.0
        %v1777 = vmax.f32 %v1625, 0.0
        %v1778 = vmax.f32 %v1628, 0.0
        %v1779 = vmax.f32 %v1633, 0.0
        %v1780 = vmax.f32 %v1636, 0.0
        %v1781 = vmax.f32 %v1641, 0.0
        %v1782 = vmax.f32 %v1644, 0.0
        %v1783 = vmax.f32 %v1649, 0.0
        %v1784 = vmax.f32 %v1652, 0.0
        %v1785 = vmax.f32 %v1657, 0.0
        %v1786 = vmax.f32 %v1660, 0.0
        %v1787 = vmax.f32 %v1665, 0.0
        %v1788 = vmax.f32 %v1668, 0.0
        %v1789 = vmax.f32 %v1673, 0.0
        %v1790 = vmax.f32 %v1676, 0.0
        %v1791 = vmax.f32 %v1681, 0.0
        %v1792 = vmax.f32 %v1684, 0.0
        %v1793 = vmax.f32 %v1689, 0.0
        %v1794 = vmax.f32 %v1692, 0.0
        %v1795 = vmax.f32 %v1697, 0.0
        %v1796 = vmax.f32 %v1700, 0.0
        %v1797 = vmax.f32 %v1705, 0.0
        %v1798 = vmax.f32 %v1708, 0.0
        %v1799 = vmax.f32 %v1713, 0.0
        %v1800 = vmax.f32 %v1716, 0.0
        %v1801 = vmax.f32 %v1721, 0.0
        %v1802 = vmax.f32 %v1724, 0.0
        %v1803 = vmax.f32 %v1729, 0.0
        %v1804 = vmax.f32 %v1732, 0.0
        %v1805 = vmax.f32 %v1737, 0.0
        %v1806 = vmax.f32 %v1740, 0.0
        %1807 = vst [vmem:[%s227] sm:$0xff] %v1743
        %1808 = vst [vmem:[%s227 + $0x8] sm:$0xff] %v1744
        %1809 = vst [vmem:[%s227 + $0x10] sm:$0xff] %v1745
        %1810 = vst [vmem:[%s227 + $0x18] sm:$0xff] %v1746
        %1811 = vst [vmem:[%s227 + $0x20] sm:$0xff] %v1747
        %1812 = vst [vmem:[%s227 + $0x28] sm:$0xff] %v1748
        %1813 = vst [vmem:[%s227 + $0x30] sm:$0xff] %v1749
        %1814 = vst [vmem:[%s227 + $0x38] sm:$0xff] %v1750
        %1815 = vst [vmem:[%s227 + $0x40] sm:$0xff] %v1751
        %1816 = vst [vmem:[%s227 + $0x48] sm:$0xff] %v1752
        %1817 = vst [vmem:[%s227 + $0x50] sm:$0xff] %v1753
        %1818 = vst [vmem:[%s227 + $0x58] sm:$0xff] %v1754
        %1819 = vst [vmem:[%s227 + $0x60] sm:$0xff] %v1755
        %1820 = vst [vmem:[%s227 + $0x68] sm:$0xff] %v1756
        %1821 = vst [vmem:[%s227 + $0x70] sm:$0xff] %v1757
        %1822 = vst [vmem:[%s227 + $0x78] sm:$0xff] %v1758
        %1823 = vst [vmem:[%s227 + $0x80] sm:$0xff] %v1759
        %1824 = vst [vmem:[%s227 + $0x88] sm:$0xff] %v1760
        %1825 = vst [vmem:[%s227 + $0x90] sm:$0xff] %v1761
        %1826 = vst [vmem:[%s227 + $0x98] sm:$0xff] %v1762
        %1827 = vst [vmem:[%s227 + $0xa0] sm:$0xff] %v1763
        %1828 = vst [vmem:[%s227 + $0xa8] sm:$0xff] %v1764
        %1829 = vst [vmem:[%s227 + $0xb0] sm:$0xff] %v1765
        %1830 = vst [vmem:[%s227 + $0xb8] sm:$0xff] %v1766
        %1831 = vst [vmem:[%s227 + $0xc0] sm:$0xff] %v1767
        %1832 = vst [vmem:[%s227 + $0xc8] sm:$0xff] %v1768
        %1833 = vst [vmem:[%s227 + $0xd0] sm:$0xff] %v1769
        %1834 = vst [vmem:[%s227 + $0xd8] sm:$0xff] %v1770
        %1835 = vst [vmem:[%s227 + $0xe0] sm:$0xff] %v1771
        %1836 = vst [vmem:[%s227 + $0xe8] sm:$0xff] %v1772
        %1837 = vst [vmem:[%s227 + $0xf0] sm:$0xff] %v1773
        %1838 = vst [vmem:[%s227 + $0xf8] sm:$0xff] %v1774
        %1839 = vst [vmem:[%s227 + $0x100] sm:$0xff] %v1775
        %1840 = vst [vmem:[%s227 + $0x108] sm:$0xff] %v1776
        %1841 = vst [vmem:[%s227 + $0x110] sm:$0xff] %v1777
        %1842 = vst [vmem:[%s227 + $0x118] sm:$0xff] %v1778
        %1843 = vst [vmem:[%s227 + $0x120] sm:$0xff] %v1779
        %1844 = vst [vmem:[%s227 + $0x128] sm:$0xff] %v1780
        %1845 = vst [vmem:[%s227 + $0x130] sm:$0xff] %v1781
        %1846 = vst [vmem:[%s227 + $0x138] sm:$0xff] %v1782
        %1847 = vst [vmem:[%s227 + $0x140] sm:$0xff] %v1783
        %1848 = vst [vmem:[%s227 + $0x148] sm:$0xff] %v1784
        %1849 = vst [vmem:[%s227 + $0x150] sm:$0xff] %v1785
        %1850 = vst [vmem:[%s227 + $0x158] sm:$0xff] %v1786
        %1851 = vst [vmem:[%s227 + $0x160] sm:$0xff] %v1787
        %1852 = vst [vmem:[%s227 + $0x168] sm:$0xff] %v1788
        %1853 = vst [vmem:[%s227 + $0x170] sm:$0xff] %v1789
        %1854 = vst [vmem:[%s227 + $0x178] sm:$0xff] %v1790
        %1855 = vst [vmem:[%s227 + $0x180] sm:$0xff] %v1791
        %1856 = vst [vmem:[%s227 + $0x188] sm:$0xff] %v1792
        %1857 = vst [vmem:[%s227 + $0x190] sm:$0xff] %v1793
        %1858 = vst [vmem:[%s227 + $0x198] sm:$0xff] %v1794
        %1859 = vst [vmem:[%s227 + $0x1a0] sm:$0xff] %v1795
        %1860 = vst [vmem:[%s227 + $0x1a8] sm:$0xff] %v1796
        %1861 = vst [vmem:[%s227 + $0x1b0] sm:$0xff] %v1797
        %1862 = vst [vmem:[%s227 + $0x1b8] sm:$0xff] %v1798
        %1863 = vst [vmem:[%s227 + $0x1c0] sm:$0xff] %v1799
        %1864 = vst [vmem:[%s227 + $0x1c8] sm:$0xff] %v1800
        %1865 = vst [vmem:[%s227 + $0x1d0] sm:$0xff] %v1801
        %1866 = vst [vmem:[%s227 + $0x1d8] sm:$0xff] %v1802
        %1867 = vst [vmem:[%s227 + $0x1e0] sm:$0xff] %v1803
        %1868 = vst [vmem:[%s227 + $0x1e8] sm:$0xff] %v1804
        %1869 = vst [vmem:[%s227 + $0x1f0] sm:$0xff] %v1805
        %1870 = vst [vmem:[%s227 + $0x1f8] sm:$0xff] %v1806
        %s1871 = sand.u32 %s116, 1
        %s1872 = sand.u32 %s116, 1
        %s1873 = smul.addr %s1872, 512
        %s1874 = scalar_lea.vmem [#allocation2], %s1873
        // Predicated region
        $region33: #{cnnl4_forward.4} parent=31 // pred_check
          %p1875 = pneg %p126
        $region34: #{cnnl4_forward.4} parent=31 // pred_check_branch
          %1877 = sbr.rel (%p1875) target = $region36
        $region35: #{cnnl4_forward.4} parent=31 // pred_region
          %s1878 = smul.u32 64, %s19
          %s1879 = ssub.s32 381, %s1878
          %p1880 = scmp.lt.s32.totalorder %s1879, 64
          %s1881 = scalar_select %p1880, %s1879, 64
          %s1882 = smul.u32 128, %s1881
          %p1883 = scmp.ne.s32.totalorder 0, %s1882
          %s1884 = smul.addr %s18, 381
          %s1885 = sadd.s32 %s1878, %s1884
          %s1886 = smul.addr %s1885, 8
          %s1887 = scalar_lea.vmem %s3, %s1886
          // Predicated region
          $region37: #{cnnl4_forward.4} parent=35 // pred_check
            %p1888 = pneg %p1883
          $region38: #{cnnl4_forward.4} parent=35 // pred_check_branch
            %1890 = sbr.rel (%p1888) target = $region40
          $region39: #{cnnl4_forward.4} parent=35 // pred_region
            // Predicated region
            $region41: #{cnnl4_forward.4} parent=39 // pred_check
              _
            $region42: #{cnnl4_forward.4} parent=39 // pred_check_branch
              %1892 = sbr.rel (0) target = $region44
            $region43: #{cnnl4_forward.4} parent=39 // pred_region
              // Predicated region
              $region63: #{cnnl4_forward.4} parent=43 // pred_check
                _
              $region64: #{cnnl4_forward.4} parent=43 // pred_check_branch
                %2068 = sbr.rel (0) target = $region66
              $region65: #{cnnl4_forward.4} parent=43 // pred_region
                %s2069 = sshrl.u32 %s1881, 6
                // While loop
                $region67: #{cnnl4_forward.4} parent=65 // loop_pre_header
                  _
                $region68: #{cnnl4_forward.4} parent=65 // loop_header
                  %s2071 = sphi 0, %s2073
                  %p2072 = scmp.ge.s32.totalorder %s2071, %s2069
                  %s2076 = sphi 0, %s2209
                  %s2077 = sphi %s1874, %s2212
                  %s2078 = sphi %s1887, %s2213
                $region69: #{cnnl4_forward.4} parent=65 // loop_header_branch
                  %2075 = sbr.rel (%p2072) target = $region73
                $region70: #{cnnl4_forward.4} parent=65 // loop_body
                  %v2079 = vld [vmem:[%s2077] sm:$0xff]
                  %2080 = vst [vmem:[%s2078] sm:$0xff] %v2079
                  %v2081 = vld [vmem:[%s2077 + $0x8] sm:$0xff]
                  %2082 = vst [vmem:[%s2078 + $0x8] sm:$0xff] %v2081
                  %v2083 = vld [vmem:[%s2077 + $0x10] sm:$0xff]
                  %2084 = vst [vmem:[%s2078 + $0x10] sm:$0xff] %v2083
                  %v2085 = vld [vmem:[%s2077 + $0x18] sm:$0xff]
                  %2086 = vst [vmem:[%s2078 + $0x18] sm:$0xff] %v2085
                  %v2087 = vld [vmem:[%s2077 + $0x20] sm:$0xff]
                  %2088 = vst [vmem:[%s2078 + $0x20] sm:$0xff] %v2087
                  %v2089 = vld [vmem:[%s2077 + $0x28] sm:$0xff]
                  %2090 = vst [vmem:[%s2078 + $0x28] sm:$0xff] %v2089
                  %v2091 = vld [vmem:[%s2077 + $0x30] sm:$0xff]
                  %2092 = vst [vmem:[%s2078 + $0x30] sm:$0xff] %v2091
                  %v2093 = vld [vmem:[%s2077 + $0x38] sm:$0xff]
                  %2094 = vst [vmem:[%s2078 + $0x38] sm:$0xff] %v2093
                  %v2095 = vld [vmem:[%s2077 + $0x40] sm:$0xff]
                  %2096 = vst [vmem:[%s2078 + $0x40] sm:$0xff] %v2095
                  %v2097 = vld [vmem:[%s2077 + $0x48] sm:$0xff]
                  %2098 = vst [vmem:[%s2078 + $0x48] sm:$0xff] %v2097
                  %v2099 = vld [vmem:[%s2077 + $0x50] sm:$0xff]
                  %2100 = vst [vmem:[%s2078 + $0x50] sm:$0xff] %v2099
                  %v2101 = vld [vmem:[%s2077 + $0x58] sm:$0xff]
                  %2102 = vst [vmem:[%s2078 + $0x58] sm:$0xff] %v2101
                  %v2103 = vld [vmem:[%s2077 + $0x60] sm:$0xff]
                  %2104 = vst [vmem:[%s2078 + $0x60] sm:$0xff] %v2103
                  %v2105 = vld [vmem:[%s2077 + $0x68] sm:$0xff]
                  %2106 = vst [vmem:[%s2078 + $0x68] sm:$0xff] %v2105
                  %v2107 = vld [vmem:[%s2077 + $0x70] sm:$0xff]
                  %2108 = vst [vmem:[%s2078 + $0x70] sm:$0xff] %v2107
                  %v2109 = vld [vmem:[%s2077 + $0x78] sm:$0xff]
                  %2110 = vst [vmem:[%s2078 + $0x78] sm:$0xff] %v2109
                  %v2111 = vld [vmem:[%s2077 + $0x80] sm:$0xff]
                  %2112 = vst [vmem:[%s2078 + $0x80] sm:$0xff] %v2111
                  %v2113 = vld [vmem:[%s2077 + $0x88] sm:$0xff]
                  %2114 = vst [vmem:[%s2078 + $0x88] sm:$0xff] %v2113
                  %v2115 = vld [vmem:[%s2077 + $0x90] sm:$0xff]
                  %2116 = vst [vmem:[%s2078 + $0x90] sm:$0xff] %v2115
                  %v2117 = vld [vmem:[%s2077 + $0x98] sm:$0xff]
                  %2118 = vst [vmem:[%s2078 + $0x98] sm:$0xff] %v2117
                  %v2119 = vld [vmem:[%s2077 + $0xa0] sm:$0xff]
                  %2120 = vst [vmem:[%s2078 + $0xa0] sm:$0xff] %v2119
                  %v2121 = vld [vmem:[%s2077 + $0xa8] sm:$0xff]
                  %2122 = vst [vmem:[%s2078 + $0xa8] sm:$0xff] %v2121
                  %v2123 = vld [vmem:[%s2077 + $0xb0] sm:$0xff]
                  %2124 = vst [vmem:[%s2078 + $0xb0] sm:$0xff] %v2123
                  %v2125 = vld [vmem:[%s2077 + $0xb8] sm:$0xff]
                  %2126 = vst [vmem:[%s2078 + $0xb8] sm:$0xff] %v2125
                  %v2127 = vld [vmem:[%s2077 + $0xc0] sm:$0xff]
                  %2128 = vst [vmem:[%s2078 + $0xc0] sm:$0xff] %v2127
                  %v2129 = vld [vmem:[%s2077 + $0xc8] sm:$0xff]
                  %2130 = vst [vmem:[%s2078 + $0xc8] sm:$0xff] %v2129
                  %v2131 = vld [vmem:[%s2077 + $0xd0] sm:$0xff]
                  %2132 = vst [vmem:[%s2078 + $0xd0] sm:$0xff] %v2131
                  %v2133 = vld [vmem:[%s2077 + $0xd8] sm:$0xff]
                  %2134 = vst [vmem:[%s2078 + $0xd8] sm:$0xff] %v2133
                  %v2135 = vld [vmem:[%s2077 + $0xe0] sm:$0xff]
                  %2136 = vst [vmem:[%s2078 + $0xe0] sm:$0xff] %v2135
                  %v2137 = vld [vmem:[%s2077 + $0xe8] sm:$0xff]
                  %2138 = vst [vmem:[%s2078 + $0xe8] sm:$0xff] %v2137
                  %v2139 = vld [vmem:[%s2077 + $0xf0] sm:$0xff]
                  %2140 = vst [vmem:[%s2078 + $0xf0] sm:$0xff] %v2139
                  %v2141 = vld [vmem:[%s2077 + $0xf8] sm:$0xff]
                  %2142 = vst [vmem:[%s2078 + $0xf8] sm:$0xff] %v2141
                  %v2143 = vld [vmem:[%s2077 + $0x100] sm:$0xff]
                  %2144 = vst [vmem:[%s2078 + $0x100] sm:$0xff] %v2143
                  %v2145 = vld [vmem:[%s2077 + $0x108] sm:$0xff]
                  %2146 = vst [vmem:[%s2078 + $0x108] sm:$0xff] %v2145
                  %v2147 = vld [vmem:[%s2077 + $0x110] sm:$0xff]
                  %2148 = vst [vmem:[%s2078 + $0x110] sm:$0xff] %v2147
                  %v2149 = vld [vmem:[%s2077 + $0x118] sm:$0xff]
                  %2150 = vst [vmem:[%s2078 + $0x118] sm:$0xff] %v2149
                  %v2151 = vld [vmem:[%s2077 + $0x120] sm:$0xff]
                  %2152 = vst [vmem:[%s2078 + $0x120] sm:$0xff] %v2151
                  %v2153 = vld [vmem:[%s2077 + $0x128] sm:$0xff]
                  %2154 = vst [vmem:[%s2078 + $0x128] sm:$0xff] %v2153
                  %v2155 = vld [vmem:[%s2077 + $0x130] sm:$0xff]
                  %2156 = vst [vmem:[%s2078 + $0x130] sm:$0xff] %v2155
                  %v2157 = vld [vmem:[%s2077 + $0x138] sm:$0xff]
                  %2158 = vst [vmem:[%s2078 + $0x138] sm:$0xff] %v2157
                  %v2159 = vld [vmem:[%s2077 + $0x140] sm:$0xff]
                  %2160 = vst [vmem:[%s2078 + $0x140] sm:$0xff] %v2159
                  %v2161 = vld [vmem:[%s2077 + $0x148] sm:$0xff]
                  %2162 = vst [vmem:[%s2078 + $0x148] sm:$0xff] %v2161
                  %v2163 = vld [vmem:[%s2077 + $0x150] sm:$0xff]
                  %2164 = vst [vmem:[%s2078 + $0x150] sm:$0xff] %v2163
                  %v2165 = vld [vmem:[%s2077 + $0x158] sm:$0xff]
                  %2166 = vst [vmem:[%s2078 + $0x158] sm:$0xff] %v2165
                  %v2167 = vld [vmem:[%s2077 + $0x160] sm:$0xff]
                  %2168 = vst [vmem:[%s2078 + $0x160] sm:$0xff] %v2167
                  %v2169 = vld [vmem:[%s2077 + $0x168] sm:$0xff]
                  %2170 = vst [vmem:[%s2078 + $0x168] sm:$0xff] %v2169
                  %v2171 = vld [vmem:[%s2077 + $0x170] sm:$0xff]
                  %2172 = vst [vmem:[%s2078 + $0x170] sm:$0xff] %v2171
                  %v2173 = vld [vmem:[%s2077 + $0x178] sm:$0xff]
                  %2174 = vst [vmem:[%s2078 + $0x178] sm:$0xff] %v2173
                  %v2175 = vld [vmem:[%s2077 + $0x180] sm:$0xff]
                  %2176 = vst [vmem:[%s2078 + $0x180] sm:$0xff] %v2175
                  %v2177 = vld [vmem:[%s2077 + $0x188] sm:$0xff]
                  %2178 = vst [vmem:[%s2078 + $0x188] sm:$0xff] %v2177
                  %v2179 = vld [vmem:[%s2077 + $0x190] sm:$0xff]
                  %2180 = vst [vmem:[%s2078 + $0x190] sm:$0xff] %v2179
                  %v2181 = vld [vmem:[%s2077 + $0x198] sm:$0xff]
                  %2182 = vst [vmem:[%s2078 + $0x198] sm:$0xff] %v2181
                  %v2183 = vld [vmem:[%s2077 + $0x1a0] sm:$0xff]
                  %2184 = vst [vmem:[%s2078 + $0x1a0] sm:$0xff] %v2183
                  %v2185 = vld [vmem:[%s2077 + $0x1a8] sm:$0xff]
                  %2186 = vst [vmem:[%s2078 + $0x1a8] sm:$0xff] %v2185
                  %v2187 = vld [vmem:[%s2077 + $0x1b0] sm:$0xff]
                  %2188 = vst [vmem:[%s2078 + $0x1b0] sm:$0xff] %v2187
                  %v2189 = vld [vmem:[%s2077 + $0x1b8] sm:$0xff]
                  %2190 = vst [vmem:[%s2078 + $0x1b8] sm:$0xff] %v2189
                  %v2191 = vld [vmem:[%s2077 + $0x1c0] sm:$0xff]
                  %2192 = vst [vmem:[%s2078 + $0x1c0] sm:$0xff] %v2191
                  %v2193 = vld [vmem:[%s2077 + $0x1c8] sm:$0xff]
                  %2194 = vst [vmem:[%s2078 + $0x1c8] sm:$0xff] %v2193
                  %v2195 = vld [vmem:[%s2077 + $0x1d0] sm:$0xff]
                  %2196 = vst [vmem:[%s2078 + $0x1d0] sm:$0xff] %v2195
                  %v2197 = vld [vmem:[%s2077 + $0x1d8] sm:$0xff]
                  %2198 = vst [vmem:[%s2078 + $0x1d8] sm:$0xff] %v2197
                  %v2199 = vld [vmem:[%s2077 + $0x1e0] sm:$0xff]
                  %2200 = vst [vmem:[%s2078 + $0x1e0] sm:$0xff] %v2199
                  %v2201 = vld [vmem:[%s2077 + $0x1e8] sm:$0xff]
                  %2202 = vst [vmem:[%s2078 + $0x1e8] sm:$0xff] %v2201
                  %v2203 = vld [vmem:[%s2077 + $0x1f0] sm:$0xff]
                  %2204 = vst [vmem:[%s2078 + $0x1f0] sm:$0xff] %v2203
                  %v2205 = vld [vmem:[%s2077 + $0x1f8] sm:$0xff]
                  %2206 = vst [vmem:[%s2078 + $0x1f8] sm:$0xff] %v2205
                  %s2207 = sadd.s32 1, %s2076
                  %p2208 = scmp.ge.s32.totalorder %s2207, %s2069
                  %s2209 = scalar_select %p2208, 0, %s2207
                  %s2210 = smul.u32 %s2209, 512
                  %s2211 = smul.u32 %s2209, 512
                  %s2212 = scalar_lea.vmem %s1874, %s2210 [#allocation2]
                  %s2213 = scalar_lea.vmem %s1887, %s2211
                $region71: #{cnnl4_forward.4} parent=65 // loop_footer
                  %s2073 = sadd.s32 %s2071, 1
                $region72: #{cnnl4_forward.4} parent=65 // loop_footer_branch
                  %2070 = sbr.rel target = $region68
                $region73: #{cnnl4_forward.4} parent=65 // loop_exit
                  _
                %s2214 = sshrl.u32 %s1881, 6
                %s2215 = sand.u32 %s1881, 63
                %s2216 = smul.u32 %s2214, 64
                %s2217 = smul.u32 8, %s2216
                %s2218 = scalar_lea.vmem %s1874, %s2217 [#allocation2]
                %s2219 = smul.u32 8, %s2216
                %s2220 = scalar_lea.vmem %s1887, %s2219
                // While loop
                $region74: #{cnnl4_forward.4} parent=65 // loop_pre_header
                  _
                $region75: #{cnnl4_forward.4} parent=65 // loop_header
                  %s2222 = sphi 0, %s2224
                  %p2223 = scmp.ge.s32.totalorder %s2222, %s2215
                  %s2227 = sphi 0, %s2234
                  %s2228 = sphi %s2218, %s2237
                  %s2229 = sphi %s2220, %s2238
                $region76: #{cnnl4_forward.4} parent=65 // loop_header_branch
                  %2226 = sbr.rel (%p2223) target = $region80
                $region77: #{cnnl4_forward.4} parent=65 // loop_body
                  %v2230 = vld [vmem:[%s2228] sm:$0xff]
                  %2231 = vst [vmem:[%s2229] sm:$0xff] %v2230
                  %s2232 = sadd.s32 1, %s2227
                  %p2233 = scmp.ge.s32.totalorder %s2232, %s2215
                  %s2234 = scalar_select %p2233, 0, %s2232
                  %s2235 = smul.u32 %s2234, 8
                  %s2236 = smul.u32 %s2234, 8
                  %s2237 = scalar_lea.vmem %s2218, %s2235 [#allocation2]
                  %s2238 = scalar_lea.vmem %s2220, %s2236
                $region78: #{cnnl4_forward.4} parent=65 // loop_footer
                  %s2224 = sadd.s32 %s2222, 1
                $region79: #{cnnl4_forward.4} parent=65 // loop_footer_branch
                  %2221 = sbr.rel target = $region75
                $region80: #{cnnl4_forward.4} parent=65 // loop_exit
                  _
              $region66: #{cnnl4_forward.4} parent=43 // pred_fallthru
                _
              // Predicated region
              $region81: #{cnnl4_forward.4} parent=43 // pred_check
                _
              $region82: #{cnnl4_forward.4} parent=43 // pred_check_branch
                %2240 = sbr.rel target = $region84
              $region83: #{cnnl4_forward.4} parent=43 // pred_region
                _
              $region84: #{cnnl4_forward.4} parent=43 // pred_fallthru
                _
            $region44: #{cnnl4_forward.4} parent=39 // pred_fallthru
              _
            // Predicated region
            $region45: #{cnnl4_forward.4} parent=39 // pred_check
              _
            $region46: #{cnnl4_forward.4} parent=39 // pred_check_branch
              %1894 = sbr.rel target = $region48
            $region47: #{cnnl4_forward.4} parent=39 // pred_region
              %s1896 = ssub.s32 256, 1
              %s1897 = sshrl.u32 %s1881, 6
              // While loop
              $region49: #{cnnl4_forward.4} parent=47 // loop_pre_header
                _
              $region50: #{cnnl4_forward.4} parent=47 // loop_header
                %s1899 = sphi 0, %s1901
                %p1900 = scmp.ge.s32.totalorder %s1899, %s1897
                %s1904 = sphi 0, %s2037
                %s1905 = sphi %s1874, %s2040
                %s1906 = sphi %s1887, %s2041
              $region51: #{cnnl4_forward.4} parent=47 // loop_header_branch
                %1903 = sbr.rel (%p1900) target = $region55
              $region52: #{cnnl4_forward.4} parent=47 // loop_body
                %v1907 = vld [vmem:[%s1905] sm:%s1896]
                %1908 = vst [vmem:[%s1906] sm:%s1896] %v1907
                %v1909 = vld [vmem:[%s1905 + $0x8] sm:%s1896]
                %1910 = vst [vmem:[%s1906 + $0x8] sm:%s1896] %v1909
                %v1911 = vld [vmem:[%s1905 + $0x10] sm:%s1896]
                %1912 = vst [vmem:[%s1906 + $0x10] sm:%s1896] %v1911
                %v1913 = vld [vmem:[%s1905 + $0x18] sm:%s1896]
                %1914 = vst [vmem:[%s1906 + $0x18] sm:%s1896] %v1913
                %v1915 = vld [vmem:[%s1905 + $0x20] sm:%s1896]
                %1916 = vst [vmem:[%s1906 + $0x20] sm:%s1896] %v1915
                %v1917 = vld [vmem:[%s1905 + $0x28] sm:%s1896]
                %1918 = vst [vmem:[%s1906 + $0x28] sm:%s1896] %v1917
                %v1919 = vld [vmem:[%s1905 + $0x30] sm:%s1896]
                %1920 = vst [vmem:[%s1906 + $0x30] sm:%s1896] %v1919
                %v1921 = vld [vmem:[%s1905 + $0x38] sm:%s1896]
                %1922 = vst [vmem:[%s1906 + $0x38] sm:%s1896] %v1921
                %v1923 = vld [vmem:[%s1905 + $0x40] sm:%s1896]
                %1924 = vst [vmem:[%s1906 + $0x40] sm:%s1896] %v1923
                %v1925 = vld [vmem:[%s1905 + $0x48] sm:%s1896]
                %1926 = vst [vmem:[%s1906 + $0x48] sm:%s1896] %v1925
                %v1927 = vld [vmem:[%s1905 + $0x50] sm:%s1896]
                %1928 = vst [vmem:[%s1906 + $0x50] sm:%s1896] %v1927
                %v1929 = vld [vmem:[%s1905 + $0x58] sm:%s1896]
                %1930 = vst [vmem:[%s1906 + $0x58] sm:%s1896] %v1929
                %v1931 = vld [vmem:[%s1905 + $0x60] sm:%s1896]
                %1932 = vst [vmem:[%s1906 + $0x60] sm:%s1896] %v1931
                %v1933 = vld [vmem:[%s1905 + $0x68] sm:%s1896]
                %1934 = vst [vmem:[%s1906 + $0x68] sm:%s1896] %v1933
                %v1935 = vld [vmem:[%s1905 + $0x70] sm:%s1896]
                %1936 = vst [vmem:[%s1906 + $0x70] sm:%s1896] %v1935
                %v1937 = vld [vmem:[%s1905 + $0x78] sm:%s1896]
                %1938 = vst [vmem:[%s1906 + $0x78] sm:%s1896] %v1937
                %v1939 = vld [vmem:[%s1905 + $0x80] sm:%s1896]
                %1940 = vst [vmem:[%s1906 + $0x80] sm:%s1896] %v1939
                %v1941 = vld [vmem:[%s1905 + $0x88] sm:%s1896]
                %1942 = vst [vmem:[%s1906 + $0x88] sm:%s1896] %v1941
                %v1943 = vld [vmem:[%s1905 + $0x90] sm:%s1896]
                %1944 = vst [vmem:[%s1906 + $0x90] sm:%s1896] %v1943
                %v1945 = vld [vmem:[%s1905 + $0x98] sm:%s1896]
                %1946 = vst [vmem:[%s1906 + $0x98] sm:%s1896] %v1945
                %v1947 = vld [vmem:[%s1905 + $0xa0] sm:%s1896]
                %1948 = vst [vmem:[%s1906 + $0xa0] sm:%s1896] %v1947
                %v1949 = vld [vmem:[%s1905 + $0xa8] sm:%s1896]
                %1950 = vst [vmem:[%s1906 + $0xa8] sm:%s1896] %v1949
                %v1951 = vld [vmem:[%s1905 + $0xb0] sm:%s1896]
                %1952 = vst [vmem:[%s1906 + $0xb0] sm:%s1896] %v1951
                %v1953 = vld [vmem:[%s1905 + $0xb8] sm:%s1896]
                %1954 = vst [vmem:[%s1906 + $0xb8] sm:%s1896] %v1953
                %v1955 = vld [vmem:[%s1905 + $0xc0] sm:%s1896]
                %1956 = vst [vmem:[%s1906 + $0xc0] sm:%s1896] %v1955
                %v1957 = vld [vmem:[%s1905 + $0xc8] sm:%s1896]
                %1958 = vst [vmem:[%s1906 + $0xc8] sm:%s1896] %v1957
                %v1959 = vld [vmem:[%s1905 + $0xd0] sm:%s1896]
                %1960 = vst [vmem:[%s1906 + $0xd0] sm:%s1896] %v1959
                %v1961 = vld [vmem:[%s1905 + $0xd8] sm:%s1896]
                %1962 = vst [vmem:[%s1906 + $0xd8] sm:%s1896] %v1961
                %v1963 = vld [vmem:[%s1905 + $0xe0] sm:%s1896]
                %1964 = vst [vmem:[%s1906 + $0xe0] sm:%s1896] %v1963
                %v1965 = vld [vmem:[%s1905 + $0xe8] sm:%s1896]
                %1966 = vst [vmem:[%s1906 + $0xe8] sm:%s1896] %v1965
                %v1967 = vld [vmem:[%s1905 + $0xf0] sm:%s1896]
                %1968 = vst [vmem:[%s1906 + $0xf0] sm:%s1896] %v1967
                %v1969 = vld [vmem:[%s1905 + $0xf8] sm:%s1896]
                %1970 = vst [vmem:[%s1906 + $0xf8] sm:%s1896] %v1969
                %v1971 = vld [vmem:[%s1905 + $0x100] sm:%s1896]
                %1972 = vst [vmem:[%s1906 + $0x100] sm:%s1896] %v1971
                %v1973 = vld [vmem:[%s1905 + $0x108] sm:%s1896]
                %1974 = vst [vmem:[%s1906 + $0x108] sm:%s1896] %v1973
                %v1975 = vld [vmem:[%s1905 + $0x110] sm:%s1896]
                %1976 = vst [vmem:[%s1906 + $0x110] sm:%s1896] %v1975
                %v1977 = vld [vmem:[%s1905 + $0x118] sm:%s1896]
                %1978 = vst [vmem:[%s1906 + $0x118] sm:%s1896] %v1977
                %v1979 = vld [vmem:[%s1905 + $0x120] sm:%s1896]
                %1980 = vst [vmem:[%s1906 + $0x120] sm:%s1896] %v1979
                %v1981 = vld [vmem:[%s1905 + $0x128] sm:%s1896]
                %1982 = vst [vmem:[%s1906 + $0x128] sm:%s1896] %v1981
                %v1983 = vld [vmem:[%s1905 + $0x130] sm:%s1896]
                %1984 = vst [vmem:[%s1906 + $0x130] sm:%s1896] %v1983
                %v1985 = vld [vmem:[%s1905 + $0x138] sm:%s1896]
                %1986 = vst [vmem:[%s1906 + $0x138] sm:%s1896] %v1985
                %v1987 = vld [vmem:[%s1905 + $0x140] sm:%s1896]
                %1988 = vst [vmem:[%s1906 + $0x140] sm:%s1896] %v1987
                %v1989 = vld [vmem:[%s1905 + $0x148] sm:%s1896]
                %1990 = vst [vmem:[%s1906 + $0x148] sm:%s1896] %v1989
                %v1991 = vld [vmem:[%s1905 + $0x150] sm:%s1896]
                %1992 = vst [vmem:[%s1906 + $0x150] sm:%s1896] %v1991
                %v1993 = vld [vmem:[%s1905 + $0x158] sm:%s1896]
                %1994 = vst [vmem:[%s1906 + $0x158] sm:%s1896] %v1993
                %v1995 = vld [vmem:[%s1905 + $0x160] sm:%s1896]
                %1996 = vst [vmem:[%s1906 + $0x160] sm:%s1896] %v1995
                %v1997 = vld [vmem:[%s1905 + $0x168] sm:%s1896]
                %1998 = vst [vmem:[%s1906 + $0x168] sm:%s1896] %v1997
                %v1999 = vld [vmem:[%s1905 + $0x170] sm:%s1896]
                %2000 = vst [vmem:[%s1906 + $0x170] sm:%s1896] %v1999
                %v2001 = vld [vmem:[%s1905 + $0x178] sm:%s1896]
                %2002 = vst [vmem:[%s1906 + $0x178] sm:%s1896] %v2001
                %v2003 = vld [vmem:[%s1905 + $0x180] sm:%s1896]
                %2004 = vst [vmem:[%s1906 + $0x180] sm:%s1896] %v2003
                %v2005 = vld [vmem:[%s1905 + $0x188] sm:%s1896]
                %2006 = vst [vmem:[%s1906 + $0x188] sm:%s1896] %v2005
                %v2007 = vld [vmem:[%s1905 + $0x190] sm:%s1896]
                %2008 = vst [vmem:[%s1906 + $0x190] sm:%s1896] %v2007
                %v2009 = vld [vmem:[%s1905 + $0x198] sm:%s1896]
                %2010 = vst [vmem:[%s1906 + $0x198] sm:%s1896] %v2009
                %v2011 = vld [vmem:[%s1905 + $0x1a0] sm:%s1896]
                %2012 = vst [vmem:[%s1906 + $0x1a0] sm:%s1896] %v2011
                %v2013 = vld [vmem:[%s1905 + $0x1a8] sm:%s1896]
                %2014 = vst [vmem:[%s1906 + $0x1a8] sm:%s1896] %v2013
                %v2015 = vld [vmem:[%s1905 + $0x1b0] sm:%s1896]
                %2016 = vst [vmem:[%s1906 + $0x1b0] sm:%s1896] %v2015
                %v2017 = vld [vmem:[%s1905 + $0x1b8] sm:%s1896]
                %2018 = vst [vmem:[%s1906 + $0x1b8] sm:%s1896] %v2017
                %v2019 = vld [vmem:[%s1905 + $0x1c0] sm:%s1896]
                %2020 = vst [vmem:[%s1906 + $0x1c0] sm:%s1896] %v2019
                %v2021 = vld [vmem:[%s1905 + $0x1c8] sm:%s1896]
                %2022 = vst [vmem:[%s1906 + $0x1c8] sm:%s1896] %v2021
                %v2023 = vld [vmem:[%s1905 + $0x1d0] sm:%s1896]
                %2024 = vst [vmem:[%s1906 + $0x1d0] sm:%s1896] %v2023
                %v2025 = vld [vmem:[%s1905 + $0x1d8] sm:%s1896]
                %2026 = vst [vmem:[%s1906 + $0x1d8] sm:%s1896] %v2025
                %v2027 = vld [vmem:[%s1905 + $0x1e0] sm:%s1896]
                %2028 = vst [vmem:[%s1906 + $0x1e0] sm:%s1896] %v2027
                %v2029 = vld [vmem:[%s1905 + $0x1e8] sm:%s1896]
                %2030 = vst [vmem:[%s1906 + $0x1e8] sm:%s1896] %v2029
                %v2031 = vld [vmem:[%s1905 + $0x1f0] sm:%s1896]
                %2032 = vst [vmem:[%s1906 + $0x1f0] sm:%s1896] %v2031
                %v2033 = vld [vmem:[%s1905 + $0x1f8] sm:%s1896]
                %2034 = vst [vmem:[%s1906 + $0x1f8] sm:%s1896] %v2033
                %s2035 = sadd.s32 1, %s1904
                %p2036 = scmp.ge.s32.totalorder %s2035, %s1897
                %s2037 = scalar_select %p2036, 0, %s2035
                %s2038 = smul.u32 %s2037, 512
                %s2039 = smul.u32 %s2037, 512
                %s2040 = scalar_lea.vmem %s1874, %s2038 [#allocation2]
                %s2041 = scalar_lea.vmem %s1887, %s2039
              $region53: #{cnnl4_forward.4} parent=47 // loop_footer
                %s1901 = sadd.s32 %s1899, 1
              $region54: #{cnnl4_forward.4} parent=47 // loop_footer_branch
                %1898 = sbr.rel target = $region50
              $region55: #{cnnl4_forward.4} parent=47 // loop_exit
                _
              %s2042 = sshrl.u32 %s1881, 6
              %s2043 = sand.u32 %s1881, 63
              %s2044 = smul.u32 %s2042, 64
              %s2045 = smul.u32 8, %s2044
              %s2046 = scalar_lea.vmem %s1874, %s2045 [#allocation2]
              %s2047 = smul.u32 8, %s2044
              %s2048 = scalar_lea.vmem %s1887, %s2047
              // While loop
              $region56: #{cnnl4_forward.4} parent=47 // loop_pre_header
                _
              $region57: #{cnnl4_forward.4} parent=47 // loop_header
                %s2050 = sphi 0, %s2052
                %p2051 = scmp.ge.s32.totalorder %s2050, %s2043
                %s2055 = sphi 0, %s2062
                %s2056 = sphi %s2046, %s2065
                %s2057 = sphi %s2048, %s2066
              $region58: #{cnnl4_forward.4} parent=47 // loop_header_branch
                %2054 = sbr.rel (%p2051) target = $region62
              $region59: #{cnnl4_forward.4} parent=47 // loop_body
                %v2058 = vld [vmem:[%s2056] sm:%s1896]
                %2059 = vst [vmem:[%s2057] sm:%s1896] %v2058
                %s2060 = sadd.s32 1, %s2055
                %p2061 = scmp.ge.s32.totalorder %s2060, %s2043
                %s2062 = scalar_select %p2061, 0, %s2060
                %s2063 = smul.u32 %s2062, 8
                %s2064 = smul.u32 %s2062, 8
                %s2065 = scalar_lea.vmem %s2046, %s2063 [#allocation2]
                %s2066 = scalar_lea.vmem %s2048, %s2064
              $region60: #{cnnl4_forward.4} parent=47 // loop_footer
                %s2052 = sadd.s32 %s2050, 1
              $region61: #{cnnl4_forward.4} parent=47 // loop_footer_branch
                %2049 = sbr.rel target = $region57
              $region62: #{cnnl4_forward.4} parent=47 // loop_exit
                _
            $region48: #{cnnl4_forward.4} parent=39 // pred_fallthru
              _
          $region40: #{cnnl4_forward.4} parent=35 // pred_fallthru
            _
          %2241 = vnop
        $region36: #{cnnl4_forward.4} parent=31 // pred_fallthru
          _
      $region32: #{cnnl4_forward.4} parent=5 // pred_fallthru
        _
      %p2242 = scmp.le.s32.totalorder 2, %s9
      // Predicated region
      $region85: #{cnnl4_forward.4} parent=5 // pred_check
        %p2243 = pneg %p2242
      $region86: #{cnnl4_forward.4} parent=5 // pred_check_branch
        %2245 = sbr.rel (%p2243) target = $region88
      $region87: #{cnnl4_forward.4} parent=5 // pred_region
        %s2246 = ssub.s32 %s9, 2
        // Predicated region
        $region89: #{cnnl4_forward.4} parent=87 // pred_check
          %p2247 = pneg %p132
        $region90: #{cnnl4_forward.4} parent=87 // pred_check_branch
          %2249 = sbr.rel (%p2247) target = $region92
        $region91: #{cnnl4_forward.4} parent=87 // pred_region
          %s2250 = sand.u32 %s117, 1
          %s2251 = sand.u32 %s117, 1
          %s2252 = smul.addr %s2251, 512
          %s2253 = scalar_lea.vmem [#allocation2], %s2252
        $region92: #{cnnl4_forward.4} parent=87 // pred_fallthru
          _
      $region88: #{cnnl4_forward.4} parent=5 // pred_fallthru
        _
    $region6: #{cnnl4_forward.4} parent=1 // loop_footer
      %s13 = sadd.s32 1, %s9
    $region7: #{cnnl4_forward.4} parent=1 // loop_footer_branch
      %8 = sbr.rel target = $region3
    $region8: #{cnnl4_forward.4} parent=1 // loop_exit
      _

// kernel: cnnl4_forward.5
$region0: #{cnnl4_forward.5}
  #allocation0 [shape = 'u32[]', space=smem, size = 0x4, offset = 0x4, fixed_abs, tag = 'smem constant byte address 0x4 - core index']
  #allocation1 [shape = 'u32[144,128]{1,0:T(1,128)}', space=vmem, size = 0x12000, scoped, tag = 'internal scratch']
  %s0 = inlined_call_operand.vmem [shape: bf16[2,450,1200], index: 0, kind: input, shape index: {}]
  %s1 = inlined_call_operand.vmem [shape: bf16[2,1200,128], index: 1, kind: input, shape index: {}]
  %s2 = inlined_call_operand.vmem [shape: f32[2,1,128], index: 2, kind: input, shape index: {}]
  %s3 = inlined_call_operand.vmem [shape: f32[2,450,128], index: 3, kind: output, shape index: {}]
  %s4 = sld [smem:[#allocation0]]
  $region45: #{cnnl4_forward.5} parent=0
    _
  %s6 = ssub.s32 1, %s4
  %s7 = scalar_select 0, %s6, %s4
  loop: start=0, step=1, limit=4
  $region2: #{cnnl4_forward.5} parent=0 // loop_pre_header
    _
  $region3: #{cnnl4_forward.5} parent=0 // loop_header
    %s9 = sphi 0, %s13
    %p10 = scmp.ge.s32.totalorder %s9, 4
    %s16 = sphi 0, %s28
    %s17 = sphi 0, %s24
    %s18 = sphi 0, %s16
    %s19 = sphi 0, %s17
    %s20 = sphi 0, %s18
    %s21 = sphi 0, %s19
    %s33 = sphi 0, %s35
    %s36 = sphi 0, %s33
    %s37 = sphi 0, %s36
    %s53 = sphi 0, %s37
    %s59 = sphi 0, %s61
    %s62 = sphi 0, %s59
    %s63 = sphi 0, %s62
    %s79 = sphi 0, %s63
    %s85 = sphi 0, %s87
    %s88 = sphi 0, %s85
    %s89 = sphi 0, %s88
    %s105 = sphi 0, %s89
    %s113 = sphi 0, %s115
    %s116 = sphi 0, %s113
    %s117 = sphi 0, %s116
    %s133 = sphi 0, %s117
  $region4: #{cnnl4_forward.5} parent=0 // loop_header_branch
    %12 = sbr.rel (%p10) target = $region8
  $region5: #{cnnl4_forward.5} parent=0 // loop_body
    %s14 = ssub.s32 %s9, 1
    %s15 = ssub.s32 %s9, 2
    %s22 = sadd.s32 1, %s17
    %p23 = scmp.ge.s32.totalorder %s22, 1
    %s24 = scalar_select %p23, 0, %s22
    %s25 = sadd.s32 1, %s16
    %s26 = scalar_select %p23, %s25, %s16
    %p27 = scmp.ge.s32.totalorder %s26, 2
    %s28 = scalar_select %p27, 0, %s26
    %s29 = ssub.s32 %s16, %s28
    %s30 = ssub.s32 %s17, %s24
    %s31 = sor.u32 %s29, %s30
    %p32 = scmp.eq.s32.totalorder %s31, 0
    %s34 = sadd.s32 %s33, 1
    %s35 = scalar_select %p32, %s33, %s34
    %p38 = pneg %p32
    %p39 = scmp.eq.s32.totalorder %s9, 1
    %p40 = por %p38, %p39
    %p41 = scmp.ne.s32.totalorder %s33, %s36
    %p42 = scmp.eq.s32.totalorder %s9, 0
    %p43 = por %p41, %p42
    %p44 = scmp.ne.s32.totalorder %s33, %s36
    %p45 = scmp.eq.s32.totalorder %s14, 1
    %p46 = por %p44, %p45
    %p47 = scmp.ne.s32.totalorder %s36, %s37
    %p48 = scmp.eq.s32.totalorder %s14, 0
    %p49 = por %p47, %p48
    %p50 = scmp.ne.s32.totalorder %s36, %s37
    %p51 = scmp.eq.s32.totalorder %s15, 1
    %p52 = por %p50, %p51
    %p54 = scmp.ne.s32.totalorder %s37, %s53
    %p55 = scmp.eq.s32.totalorder %s15, 0
    %p56 = por %p54, %p55
    %s57 = ssub.s32 %s16, %s28
    %p58 = scmp.eq.s32.totalorder %s57, 0
    %s60 = sadd.s32 %s59, 1
    %s61 = scalar_select %p58, %s59, %s60
    %p64 = pneg %p58
    %p65 = scmp.eq.s32.totalorder %s9, 1
    %p66 = por %p64, %p65
    %p67 = scmp.ne.s32.totalorder %s59, %s62
    %p68 = scmp.eq.s32.totalorder %s9, 0
    %p69 = por %p67, %p68
    %p70 = scmp.ne.s32.totalorder %s59, %s62
    %p71 = scmp.eq.s32.totalorder %s14, 1
    %p72 = por %p70, %p71
    %p73 = scmp.ne.s32.totalorder %s62, %s63
    %p74 = scmp.eq.s32.totalorder %s14, 0
    %p75 = por %p73, %p74
    %p76 = scmp.ne.s32.totalorder %s62, %s63
    %p77 = scmp.eq.s32.totalorder %s15, 1
    %p78 = por %p76, %p77
    %p80 = scmp.ne.s32.totalorder %s63, %s79
    %p81 = scmp.eq.s32.totalorder %s15, 0
    %p82 = por %p80, %p81
    %s83 = ssub.s32 %s16, %s28
    %p84 = scmp.eq.s32.totalorder %s83, 0
    %s86 = sadd.s32 %s85, 1
    %s87 = scalar_select %p84, %s85, %s86
    %p90 = pneg %p84
    %p91 = scmp.eq.s32.totalorder %s9, 1
    %p92 = por %p90, %p91
    %p93 = scmp.ne.s32.totalorder %s85, %s88
    %p94 = scmp.eq.s32.totalorder %s9, 0
    %p95 = por %p93, %p94
    %p96 = scmp.ne.s32.totalorder %s85, %s88
    %p97 = scmp.eq.s32.totalorder %s14, 1
    %p98 = por %p96, %p97
    %p99 = scmp.ne.s32.totalorder %s88, %s89
    %p100 = scmp.eq.s32.totalorder %s14, 0
    %p101 = por %p99, %p100
    %p102 = scmp.ne.s32.totalorder %s88, %s89
    %p103 = scmp.eq.s32.totalorder %s15, 1
    %p104 = por %p102, %p103
    %p106 = scmp.ne.s32.totalorder %s89, %s105
    %p107 = scmp.eq.s32.totalorder %s15, 0
    %p108 = por %p106, %p107
    %s109 = ssub.s32 %s16, %s28
    %s110 = ssub.s32 %s17, %s24
    %s111 = sor.u32 %s109, %s110
    %p112 = scmp.eq.s32.totalorder %s111, 0
    %s114 = sadd.s32 %s113, 1
    %s115 = scalar_select %p112, %s113, %s114
    %p118 = pneg %p112
    %p119 = scmp.eq.s32.totalorder %s9, 1
    %p120 = por %p118, %p119
    %p121 = scmp.ne.s32.totalorder %s113, %s116
    %p122 = scmp.eq.s32.totalorder %s9, 0
    %p123 = por %p121, %p122
    %p124 = scmp.ne.s32.totalorder %s113, %s116
    %p125 = scmp.eq.s32.totalorder %s14, 1
    %p126 = por %p124, %p125
    %p127 = scmp.ne.s32.totalorder %s116, %s117
    %p128 = scmp.eq.s32.totalorder %s14, 0
    %p129 = por %p127, %p128
    %p130 = scmp.ne.s32.totalorder %s116, %s117
    %p131 = scmp.eq.s32.totalorder %s15, 1
    %p132 = por %p130, %p131
    %p134 = scmp.ne.s32.totalorder %s117, %s133
    %p135 = scmp.eq.s32.totalorder %s15, 0
    %p136 = por %p134, %p135
    %p137 = scmp.le.s32.totalorder 1, %s9
    %p138 = scmp.lt.s32.totalorder %s9, 3
    %p139 = pnand %p137, %p138
    %p140 = pneg %p139
    // Predicated region
    $region9: #{cnnl4_forward.5} parent=5 // pred_check
      _
    $region10: #{cnnl4_forward.5} parent=5 // pred_check_branch
      %142 = sbr.rel (%p139) target = $region12
    $region11: #{cnnl4_forward.5} parent=5 // pred_region
      %s143 = ssub.s32 %s9, 1
    $region12: #{cnnl4_forward.5} parent=5 // pred_fallthru
      _
    %p144 = scmp.lt.s32.totalorder %s9, 2
    // Predicated region
    $region13: #{cnnl4_forward.5} parent=5 // pred_check
      %p145 = pneg %p144
    $region14: #{cnnl4_forward.5} parent=5 // pred_check_branch
      %147 = sbr.rel (%p145) target = $region16
    $region15: #{cnnl4_forward.5} parent=5 // pred_region
      // Predicated region
      $region17: #{cnnl4_forward.5} parent=15 // pred_check
        %p148 = pneg %p43
      $region18: #{cnnl4_forward.5} parent=15 // pred_check_branch
        %150 = sbr.rel (%p148) target = $region20
      $region19: #{cnnl4_forward.5} parent=15 // pred_region
        %s151 = smul.u32 57, %s17
        %p152 = scmp.lt.s32.totalorder %s16, 1
        %s153 = scalar_select %p152, %s16, 1
        %p154 = scmp.lt.s32.totalorder %s151, 56
        %s155 = scalar_select %p154, %s151, 56
        %s156 = smul.addr %s155, 10
        %s157 = smul.addr %s153, 570
        %s158 = sadd.s32 %s156, %s157
        %s159 = smul.addr %s158, 4
        %s160 = scalar_lea.vmem %s0, %s159
        %s161 = smul.u32 57, %s17
      $region20: #{cnnl4_forward.5} parent=15 // pred_fallthru
        _
      // Predicated region
      $region21: #{cnnl4_forward.5} parent=15 // pred_check
        %p162 = pneg %p69
      $region22: #{cnnl4_forward.5} parent=15 // pred_check_branch
        %164 = sbr.rel (%p162) target = $region24
      $region23: #{cnnl4_forward.5} parent=15 // pred_region
        %p165 = scmp.lt.s32.totalorder %s16, 1
        %s166 = scalar_select %p165, %s16, 1
        %s167 = smul.addr %s166, 150
        %s168 = smul.addr %s167, 4
        %s169 = scalar_lea.vmem %s1, %s168
      $region24: #{cnnl4_forward.5} parent=15 // pred_fallthru
        _
      // Predicated region
      $region25: #{cnnl4_forward.5} parent=15 // pred_check
        %p170 = pneg %p95
      $region26: #{cnnl4_forward.5} parent=15 // pred_check_branch
        %172 = sbr.rel (%p170) target = $region28
      $region27: #{cnnl4_forward.5} parent=15 // pred_region
        %p173 = scmp.lt.s32.totalorder %s16, 1
        %s174 = scalar_select %p173, %s16, 1
        %s175 = scalar_lea.vmem %s2, %s174
      $region28: #{cnnl4_forward.5} parent=15 // pred_fallthru
        _
    $region16: #{cnnl4_forward.5} parent=5 // pred_fallthru
      _
    %p176 = scmp.le.s32.totalorder 1, %s9
    %p177 = scmp.lt.s32.totalorder %s9, 3
    %p178 = pnand %p176, %p177
    %p179 = pneg %p178
    // Predicated region
    $region29: #{cnnl4_forward.5} parent=5 // pred_check
      _
    $region30: #{cnnl4_forward.5} parent=5 // pred_check_branch
      %181 = sbr.rel (%p178) target = $region32
    $region31: #{cnnl4_forward.5} parent=5 // pred_region
      %s182 = ssub.s32 %s9, 1
      %s183 = smul.u32 57, %s19
      %p184 = scmp.lt.s32.totalorder %s18, 1
      %s185 = scalar_select %p184, %s18, 1
      %p186 = scmp.lt.s32.totalorder %s183, 56
      %s187 = scalar_select %p186, %s183, 56
      %s188 = smul.addr %s187, 10
      %s189 = smul.addr %s185, 570
      %s190 = sadd.s32 %s188, %s189
      %s191 = smul.addr %s190, 4
      %s192 = scalar_lea.vmem %s0, %s191
      %p193 = pneg %p49
      %p194 = pneg %p46
      %p195 = scmp.lt.s32.totalorder %s18, 1
      %s196 = scalar_select %p195, %s18, 1
      %s197 = smul.addr %s196, 150
      %s198 = smul.addr %s197, 4
      %s199 = scalar_lea.vmem %s1, %s198
      %p200 = pneg %p75
      %p201 = pneg %p72
      %p202 = scmp.lt.s32.totalorder %s18, 1
      %s203 = scalar_select %p202, %s18, 1
      %s204 = scalar_lea.vmem %s2, %s203
      %p205 = pneg %p101
      %p206 = pneg %p98
      %p207 = pneg %p129
      %p208 = pneg %p126
      %s209 = smul.u32 57, %s19
      %p210 = scmp.lt.s32.totalorder %s18, 1
      %s211 = scalar_select %p210, %s18, 1
      %p212 = scmp.lt.s32.totalorder %s209, 56
      %s213 = scalar_select %p212, %s209, 56
      %s214 = smul.addr %s211, 57
      %s215 = sadd.s32 %s213, %s214
      %s216 = smul.addr %s215, 8
      %s217 = scalar_lea.vmem %s3, %s216
      %s218 = smul.u32 57, %s19
      %p219 = scmp.lt.s32.totalorder %s18, 1
      %s220 = scalar_select %p219, %s18, 1
      %p221 = scmp.lt.s32.totalorder %s218, 56
      %s222 = scalar_select %p221, %s218, 56
      %s223 = smul.addr %s222, 10
      %s224 = smul.addr %s220, 570
      %s225 = sadd.s32 %s223, %s224
      %s226 = smul.addr %s225, 4
      %s227 = scalar_lea.vmem %s0, %s226
      %s228 = smul.u32 57, %s19
      %p229 = scmp.lt.s32.totalorder %s18, 1
      %s230 = scalar_select %p229, %s18, 1
      %s231 = smul.addr %s230, 150
      %s232 = smul.addr %s231, 4
      %s233 = scalar_lea.vmem %s1, %s232
      %p234 = scmp.lt.s32.totalorder %s18, 1
      %s235 = scalar_select %p234, %s18, 1
      %s236 = scalar_lea.vmem %s2, %s235
      %s237 = smul.u32 57, %s19
      %p238 = scmp.lt.s32.totalorder %s18, 1
      %s239 = scalar_select %p238, %s18, 1
      %p240 = scmp.lt.s32.totalorder %s237, 56
      %s241 = scalar_select %p240, %s237, 56
      %s242 = smul.addr %s239, 57
      %s243 = sadd.s32 %s241, %s242
      %s244 = smul.addr %s243, 8
      %s245 = scalar_lea.vmem %s3, %s244
      %s246 = smul.u32 57, %s19
      %v248 = vld [vmem:[%s227] sm:$0xff]
      %v249 = vld [vmem:[%s227 + $0x8] sm:$0xff]
      %v250 = vld [vmem:[%s227 + $0x10] sm:$0xff]
      %v251 = vld [vmem:[%s227 + $0x18] sm:$0xff]
      %v252 = vld [vmem:[%s227 + $0x20] sm:$0xff]
      %v253 = vld [vmem:[%s227 + $0x28] sm:$0xff]
      %v254 = vld [vmem:[%s227 + $0x30] sm:$0xff]
      %v255 = vld [vmem:[%s227 + $0x38] sm:$0xff]
      %v256 = vld [vmem:[%s227 + $0x40] sm:$0xff]
      %v257 = vld [vmem:[%s227 + $0x48] sm:$0xff]
      %v258 = vld [vmem:[%s227 + $0x50] sm:$0xff]
      %v259 = vld [vmem:[%s227 + $0x58] sm:$0xff]
      %v260 = vld [vmem:[%s227 + $0x60] sm:$0xff]
      %v261 = vld [vmem:[%s227 + $0x68] sm:$0xff]
      %v262 = vld [vmem:[%s227 + $0x70] sm:$0xff]
      %v263 = vld [vmem:[%s227 + $0x78] sm:$0xff]
      %v264 = vld [vmem:[%s227 + $0x80] sm:$0xff]
      %v265 = vld [vmem:[%s227 + $0x88] sm:$0xff]
      %v266 = vld [vmem:[%s227 + $0x90] sm:$0xff]
      %v267 = vld [vmem:[%s227 + $0x98] sm:$0xff]
      %v268 = vld [vmem:[%s227 + $0xa0] sm:$0xff]
      %v269 = vld [vmem:[%s227 + $0xa8] sm:$0xff]
      %v270 = vld [vmem:[%s227 + $0xb0] sm:$0xff]
      %v271 = vld [vmem:[%s227 + $0xb8] sm:$0xff]
      %v272 = vld [vmem:[%s227 + $0xc0] sm:$0xff]
      %v273 = vld [vmem:[%s227 + $0xc8] sm:$0xff]
      %v274 = vld [vmem:[%s227 + $0xd0] sm:$0xff]
      %v275 = vld [vmem:[%s227 + $0xd8] sm:$0xff]
      %v276 = vld [vmem:[%s227 + $0xe0] sm:$0xff]
      %v277 = vld [vmem:[%s227 + $0xe8] sm:$0xff]
      %v278 = vld [vmem:[%s227 + $0xf0] sm:$0xff]
      %v279 = vld [vmem:[%s227 + $0xf8] sm:$0xff]
      %v280 = vld [vmem:[%s227 + $0x100] sm:$0xff]
      %v281 = vld [vmem:[%s227 + $0x108] sm:$0xff]
      %v282 = vld [vmem:[%s227 + $0x110] sm:$0xff]
      %v283 = vld [vmem:[%s227 + $0x118] sm:$0xff]
      %v284 = vld [vmem:[%s227 + $0x120] sm:$0xff]
      %v285 = vld [vmem:[%s227 + $0x128] sm:$0xff]
      %v286 = vld [vmem:[%s227 + $0x130] sm:$0xff]
      %v287 = vld [vmem:[%s227 + $0x138] sm:$0xff]
      %v288 = vld [vmem:[%s227 + $0x140] sm:$0xff]
      %v289 = vld [vmem:[%s227 + $0x148] sm:$0xff]
      %v290 = vld [vmem:[%s227 + $0x150] sm:$0xff]
      %v291 = vld [vmem:[%s227 + $0x158] sm:$0xff]
      %v292 = vld [vmem:[%s227 + $0x160] sm:$0xff]
      %v293 = vld [vmem:[%s227 + $0x168] sm:$0xff]
      %v294 = vld [vmem:[%s227 + $0x170] sm:$0xff]
      %v295 = vld [vmem:[%s227 + $0x178] sm:$0xff]
      %v296 = vld [vmem:[%s227 + $0x180] sm:$0xff]
      %v297 = vld [vmem:[%s227 + $0x188] sm:$0xff]
      %v298 = vld [vmem:[%s227 + $0x190] sm:$0xff]
      %v299 = vld [vmem:[%s227 + $0x198] sm:$0xff]
      %v300 = vld [vmem:[%s227 + $0x1a0] sm:$0xff]
      %v301 = vld [vmem:[%s227 + $0x1a8] sm:$0xff]
      %v302 = vld [vmem:[%s227 + $0x1b0] sm:$0xff]
      %v303 = vld [vmem:[%s227 + $0x1b8] sm:$0xff]
      %v304 = vld [vmem:[%s227 + $0x1c0] sm:$0xff]
      %v305 = vld [vmem:[%s227 + $0x1c8] sm:$0xff]
      %v306 = vld [vmem:[%s227 + $0x1d0] sm:$0xff]
      %v307 = vld [vmem:[%s227 + $0x1d8] sm:$0xff]
      %v308 = vld [vmem:[%s227 + $0x1e0] sm:$0xff]
      %v309 = vld [vmem:[%s227 + $0x1e8] sm:$0xff]
      %v310 = vld [vmem:[%s227 + $0x1f0] sm:$0xff]
      %v311 = vld [vmem:[%s227 + $0x1f8] sm:$0xff]
      %v312 = vld [vmem:[%s227 + $0x200] sm:$0xff]
      %v313 = vld [vmem:[%s227 + $0x208] sm:$0xff]
      %v314 = vld [vmem:[%s227 + $0x210] sm:$0xff]
      %v315 = vld [vmem:[%s227 + $0x218] sm:$0xff]
      %v316 = vld [vmem:[%s227 + $0x220] sm:$0xff]
      %v317 = vld [vmem:[%s227 + $0x228] sm:$0xff]
      %v318 = vld [vmem:[%s227 + $0x230] sm:$0xff]
      %v319 = vld [vmem:[%s227 + $0x238] sm:$0xff]
      %v320 = vld [vmem:[%s227 + $0x240] sm:$0xff]
      %v321 = vld [vmem:[%s227 + $0x248] sm:$0xff]
      %v322 = vld [vmem:[%s227 + $0x250] sm:$0xff]
      %v323 = vld [vmem:[%s227 + $0x258] sm:$0xff]
      %v324 = vld [vmem:[%s227 + $0x260] sm:$0xff]
      %v325 = vld [vmem:[%s227 + $0x268] sm:$0xff]
      %v326 = vld [vmem:[%s227 + $0x270] sm:$0xff]
      %v327 = vld [vmem:[%s227 + $0x278] sm:$0xff]
      %v328 = vld [vmem:[%s227 + $0x280] sm:$0xff]
      %v329 = vld [vmem:[%s227 + $0x288] sm:$0xff]
      %v330 = vld [vmem:[%s227 + $0x290] sm:$0xff]
      %v331 = vld [vmem:[%s227 + $0x298] sm:$0xff]
      %v332 = vld [vmem:[%s227 + $0x2a0] sm:$0xff]
      %v333 = vld [vmem:[%s227 + $0x2a8] sm:$0xff]
      %v334 = vld [vmem:[%s227 + $0x2b0] sm:$0xff]
      %v335 = vld [vmem:[%s227 + $0x2b8] sm:$0xff]
      %v336 = vld [vmem:[%s227 + $0x2c0] sm:$0xff]
      %v337 = vld [vmem:[%s227 + $0x2c8] sm:$0xff]
      %v338 = vld [vmem:[%s227 + $0x2d0] sm:$0xff]
      %v339 = vld [vmem:[%s227 + $0x2d8] sm:$0xff]
      %v340 = vld [vmem:[%s227 + $0x2e0] sm:$0xff]
      %v341 = vld [vmem:[%s227 + $0x2e8] sm:$0xff]
      %v342 = vld [vmem:[%s227 + $0x2f0] sm:$0xff]
      %v343 = vld [vmem:[%s227 + $0x2f8] sm:$0xff]
      %v344 = vld [vmem:[%s227 + $0x300] sm:$0xff]
      %v345 = vld [vmem:[%s227 + $0x308] sm:$0xff]
      %v346 = vld [vmem:[%s227 + $0x310] sm:$0xff]
      %v347 = vld [vmem:[%s227 + $0x318] sm:$0xff]
      %v348 = vld [vmem:[%s227 + $0x320] sm:$0xff]
      %v349 = vld [vmem:[%s227 + $0x328] sm:$0xff]
      %v350 = vld [vmem:[%s227 + $0x330] sm:$0xff]
      %v351 = vld [vmem:[%s227 + $0x338] sm:$0xff]
      %v352 = vld [vmem:[%s227 + $0x340] sm:$0xff]
      %v353 = vld [vmem:[%s227 + $0x348] sm:$0xff]
      %v354 = vld [vmem:[%s227 + $0x350] sm:$0xff]
      %v355 = vld [vmem:[%s227 + $0x358] sm:$0xff]
      %v356 = vld [vmem:[%s227 + $0x360] sm:$0xff]
      %v357 = vld [vmem:[%s227 + $0x368] sm:$0xff]
      %v358 = vld [vmem:[%s227 + $0x370] sm:$0xff]
      %v359 = vld [vmem:[%s227 + $0x378] sm:$0xff]
      %v360 = vld [vmem:[%s227 + $0x380] sm:$0xff]
      %v361 = vld [vmem:[%s227 + $0x388] sm:$0xff]
      %v362 = vld [vmem:[%s227 + $0x390] sm:$0xff]
      %v363 = vld [vmem:[%s227 + $0x398] sm:$0xff]
      %v364 = vld [vmem:[%s227 + $0x3a0] sm:$0xff]
      %v365 = vld [vmem:[%s227 + $0x3a8] sm:$0xff]
      %v366 = vld [vmem:[%s227 + $0x3b0] sm:$0xff]
      %v367 = vld [vmem:[%s227 + $0x3b8] sm:$0xff]
      %v368 = vld [vmem:[%s227 + $0x3c0] sm:$0xff]
      %v369 = vld [vmem:[%s227 + $0x3c8] sm:$0xff]
      %v370 = vld [vmem:[%s227 + $0x3d0] sm:$0xff]
      %v371 = vld [vmem:[%s227 + $0x3d8] sm:$0xff]
      %v372 = vld [vmem:[%s227 + $0x3e0] sm:$0xff]
      %v373 = vld [vmem:[%s227 + $0x3e8] sm:$0xff]
      %v374 = vld [vmem:[%s227 + $0x3f0] sm:$0xff]
      %v375 = vld [vmem:[%s227 + $0x3f8] sm:$0xff]
      %v376 = vld [vmem:[%s227 + $0x400] sm:$0xff]
      %v377 = vld [vmem:[%s227 + $0x408] sm:$0xff]
      %v378 = vld [vmem:[%s227 + $0x410] sm:$0xff]
      %v379 = vld [vmem:[%s227 + $0x418] sm:$0xff]
      %v380 = vld [vmem:[%s227 + $0x420] sm:$0xff]
      %v381 = vld [vmem:[%s227 + $0x428] sm:$0xff]
      %v382 = vld [vmem:[%s227 + $0x430] sm:$0xff]
      %v383 = vld [vmem:[%s227 + $0x438] sm:$0xff]
      %v384 = vld [vmem:[%s227 + $0x440] sm:$0xff]
      %v385 = vld [vmem:[%s227 + $0x448] sm:$0xff]
      %v386 = vld [vmem:[%s227 + $0x450] sm:$0xff]
      %v387 = vld [vmem:[%s227 + $0x458] sm:$0xff]
      %v388 = vld [vmem:[%s227 + $0x460] sm:$0xff]
      %v389 = vld [vmem:[%s227 + $0x468] sm:$0xff]
      %v390 = vld [vmem:[%s227 + $0x470] sm:$0xff]
      %v391 = vld [vmem:[%s227 + $0x478] sm:$0xff]
      %v392 = vld [vmem:[%s227 + $0x480] sm:$0xff]
      %v393 = vld [vmem:[%s227 + $0x488] sm:$0xff]
      %v394 = vld [vmem:[%s227 + $0x490] sm:$0xff]
      %v395 = vld [vmem:[%s227 + $0x498] sm:$0xff]
      %v396 = vld [vmem:[%s227 + $0x4a0] sm:$0xff]
      %v397 = vld [vmem:[%s227 + $0x4a8] sm:$0xff]
      %v398 = vld [vmem:[%s227 + $0x4b0] sm:$0xff]
      %v399 = vld [vmem:[%s227 + $0x4b8] sm:$0xff]
      %v400 = vld [vmem:[%s227 + $0x4c0] sm:$0xff]
      %v401 = vld [vmem:[%s227 + $0x4c8] sm:$0xff]
      %v402 = vld [vmem:[%s227 + $0x4d0] sm:$0xff]
      %v403 = vld [vmem:[%s227 + $0x4d8] sm:$0xff]
      %v404 = vld [vmem:[%s227 + $0x4e0] sm:$0xff]
      %v405 = vld [vmem:[%s227 + $0x4e8] sm:$0xff]
      %v406 = vld [vmem:[%s227 + $0x4f0] sm:$0xff]
      %v407 = vld [vmem:[%s227 + $0x4f8] sm:$0xff]
      %v408 = vld [vmem:[%s227 + $0x500] sm:$0xff]
      %v409 = vld [vmem:[%s227 + $0x508] sm:$0xff]
      %v410 = vld [vmem:[%s227 + $0x510] sm:$0xff]
      %v411 = vld [vmem:[%s227 + $0x518] sm:$0xff]
      %v412 = vld [vmem:[%s227 + $0x520] sm:$0xff]
      %v413 = vld [vmem:[%s227 + $0x528] sm:$0xff]
      %v414 = vld [vmem:[%s227 + $0x530] sm:$0xff]
      %v415 = vld [vmem:[%s227 + $0x538] sm:$0xff]
      %v416 = vld [vmem:[%s227 + $0x540] sm:$0xff]
      %v417 = vld [vmem:[%s227 + $0x548] sm:$0xff]
      %v418 = vld [vmem:[%s227 + $0x550] sm:$0xff]
      %v419 = vld [vmem:[%s227 + $0x558] sm:$0xff]
      %v420 = vld [vmem:[%s227 + $0x560] sm:$0xff]
      %v421 = vld [vmem:[%s227 + $0x568] sm:$0xff]
      %v422 = vld [vmem:[%s227 + $0x570] sm:$0xff]
      %v423 = vld [vmem:[%s227 + $0x578] sm:$0xff]
      %v424 = vld [vmem:[%s227 + $0x580] sm:$0xff]
      %v425 = vld [vmem:[%s227 + $0x588] sm:$0xff]
      %v426 = vld [vmem:[%s227 + $0x590] sm:$0xff]
      %v427 = vld [vmem:[%s227 + $0x598] sm:$0xff]
      %v428 = vld [vmem:[%s227 + $0x5a0] sm:$0xff]
      %v429 = vld [vmem:[%s227 + $0x5a8] sm:$0xff]
      %v430 = vld [vmem:[%s227 + $0x5b0] sm:$0xff]
      %v431 = vld [vmem:[%s227 + $0x5b8] sm:$0xff]
      %v432 = vld [vmem:[%s227 + $0x5c0] sm:$0xff]
      %v433 = vld [vmem:[%s227 + $0x5c8] sm:$0xff]
      %v434 = vld [vmem:[%s227 + $0x5d0] sm:$0xff]
      %v435 = vld [vmem:[%s227 + $0x5d8] sm:$0xff]
      %v436 = vld [vmem:[%s227 + $0x5e0] sm:$0xff]
      %v437 = vld [vmem:[%s227 + $0x5e8] sm:$0xff]
      %v438 = vld [vmem:[%s227 + $0x5f0] sm:$0xff]
      %v439 = vld [vmem:[%s227 + $0x5f8] sm:$0xff]
      %v440 = vld [vmem:[%s227 + $0x600] sm:$0xff]
      %v441 = vld [vmem:[%s227 + $0x608] sm:$0xff]
      %v442 = vld [vmem:[%s227 + $0x610] sm:$0xff]
      %v443 = vld [vmem:[%s227 + $0x618] sm:$0xff]
      %v444 = vld [vmem:[%s227 + $0x620] sm:$0xff]
      %v445 = vld [vmem:[%s227 + $0x628] sm:$0xff]
      %v446 = vld [vmem:[%s227 + $0x630] sm:$0xff]
      %v447 = vld [vmem:[%s227 + $0x638] sm:$0xff]
      %v448 = vld [vmem:[%s227 + $0x640] sm:$0xff]
      %v449 = vld [vmem:[%s227 + $0x648] sm:$0xff]
      %v450 = vld [vmem:[%s227 + $0x650] sm:$0xff]
      %v451 = vld [vmem:[%s227 + $0x658] sm:$0xff]
      %v452 = vld [vmem:[%s227 + $0x660] sm:$0xff]
      %v453 = vld [vmem:[%s227 + $0x668] sm:$0xff]
      %v454 = vld [vmem:[%s227 + $0x670] sm:$0xff]
      %v455 = vld [vmem:[%s227 + $0x678] sm:$0xff]
      %v456 = vld [vmem:[%s227 + $0x680] sm:$0xff]
      %v457 = vld [vmem:[%s227 + $0x688] sm:$0xff]
      %v458 = vld [vmem:[%s227 + $0x690] sm:$0xff]
      %v459 = vld [vmem:[%s227 + $0x698] sm:$0xff]
      %v460 = vld [vmem:[%s227 + $0x6a0] sm:$0xff]
      %v461 = vld [vmem:[%s227 + $0x6a8] sm:$0xff]
      %v462 = vld [vmem:[%s227 + $0x6b0] sm:$0xff]
      %v463 = vld [vmem:[%s227 + $0x6b8] sm:$0xff]
      %v464 = vld [vmem:[%s227 + $0x6c0] sm:$0xff]
      %v465 = vld [vmem:[%s227 + $0x6c8] sm:$0xff]
      %v466 = vld [vmem:[%s227 + $0x6d0] sm:$0xff]
      %v467 = vld [vmem:[%s227 + $0x6d8] sm:$0xff]
      %v468 = vld [vmem:[%s227 + $0x6e0] sm:$0xff]
      %v469 = vld [vmem:[%s227 + $0x6e8] sm:$0xff]
      %v470 = vld [vmem:[%s227 + $0x6f0] sm:$0xff]
      %v471 = vld [vmem:[%s227 + $0x6f8] sm:$0xff]
      %v472 = vld [vmem:[%s227 + $0x700] sm:$0xff]
      %v473 = vld [vmem:[%s227 + $0x708] sm:$0xff]
      %v474 = vld [vmem:[%s227 + $0x710] sm:$0xff]
      %v475 = vld [vmem:[%s227 + $0x718] sm:$0xff]
      %v476 = vld [vmem:[%s227 + $0x720] sm:$0xff]
      %v477 = vld [vmem:[%s227 + $0x728] sm:$0xff]
      %v478 = vld [vmem:[%s227 + $0x730] sm:$0xff]
      %v479 = vld [vmem:[%s227 + $0x738] sm:$0xff]
      %v480 = vld [vmem:[%s227 + $0x740] sm:$0xff]
      %v481 = vld [vmem:[%s227 + $0x748] sm:$0xff]
      %v482 = vld [vmem:[%s227 + $0x750] sm:$0xff]
      %v483 = vld [vmem:[%s227 + $0x758] sm:$0xff]
      %v484 = vld [vmem:[%s227 + $0x760] sm:$0xff]
      %v485 = vld [vmem:[%s227 + $0x768] sm:$0xff]
      %v486 = vld [vmem:[%s227 + $0x770] sm:$0xff]
      %v487 = vld [vmem:[%s227 + $0x778] sm:$0xff]
      %v488 = vld [vmem:[%s227 + $0x780] sm:$0xff]
      %v489 = vld [vmem:[%s227 + $0x788] sm:$0xff]
      %v490 = vld [vmem:[%s227 + $0x790] sm:$0xff]
      %v491 = vld [vmem:[%s227 + $0x798] sm:$0xff]
      %v492 = vld [vmem:[%s227 + $0x7a0] sm:$0xff]
      %v493 = vld [vmem:[%s227 + $0x7a8] sm:$0xff]
      %v494 = vld [vmem:[%s227 + $0x7b0] sm:$0xff]
      %v495 = vld [vmem:[%s227 + $0x7b8] sm:$0xff]
      %v496 = vld [vmem:[%s227 + $0x7c0] sm:$0xff]
      %v497 = vld [vmem:[%s227 + $0x7c8] sm:$0xff]
      %v498 = vld [vmem:[%s227 + $0x7d0] sm:$0xff]
      %v499 = vld [vmem:[%s227 + $0x7d8] sm:$0xff]
      %v500 = vld [vmem:[%s227 + $0x7e0] sm:$0xff]
      %v501 = vld [vmem:[%s227 + $0x7e8] sm:$0xff]
      %v502 = vld [vmem:[%s227 + $0x7f0] sm:$0xff]
      %v503 = vld [vmem:[%s227 + $0x7f8] sm:$0xff]
      %v504 = vld [vmem:[%s227 + $0x800] sm:$0xff]
      %v505 = vld [vmem:[%s227 + $0x808] sm:$0xff]
      %v506 = vld [vmem:[%s227 + $0x810] sm:$0xff]
      %v507 = vld [vmem:[%s227 + $0x818] sm:$0xff]
      %v508 = vld [vmem:[%s227 + $0x820] sm:$0xff]
      %v509 = vld [vmem:[%s227 + $0x828] sm:$0xff]
      %v510 = vld [vmem:[%s227 + $0x830] sm:$0xff]
      %v511 = vld [vmem:[%s227 + $0x838] sm:$0xff]
      %v512 = vld [vmem:[%s227 + $0x840] sm:$0xff]
      %v513 = vld [vmem:[%s227 + $0x848] sm:$0xff]
      %v514 = vld [vmem:[%s227 + $0x850] sm:$0xff]
      %v515 = vld [vmem:[%s227 + $0x858] sm:$0xff]
      %v516 = vld [vmem:[%s227 + $0x860] sm:$0xff]
      %v517 = vld [vmem:[%s227 + $0x868] sm:$0xff]
      %v518 = vld [vmem:[%s227 + $0x870] sm:$0xff]
      %v519 = vld [vmem:[%s227 + $0x878] sm:$0xff]
      %v520 = vld [vmem:[%s227 + $0x880] sm:$0xff]
      %v521 = vld [vmem:[%s227 + $0x888] sm:$0xff]
      %v522 = vld [vmem:[%s227 + $0x890] sm:$0xff]
      %v523 = vld [vmem:[%s227 + $0x898] sm:$0xff]
      %v524 = vld [vmem:[%s227 + $0x8a0] sm:$0xff]
      %v525 = vld [vmem:[%s227 + $0x8a8] sm:$0xff]
      %v526 = vld [vmem:[%s227 + $0x8b0] sm:$0xff]
      %v527 = vld [vmem:[%s227 + $0x8b8] sm:$0xff]
      %v528 = vld [vmem:[%s227 + $0x8c0] sm:$0x11]
      %v529 = vld [vmem:[%s227 + $0x8c8] sm:$0x11]
      %v530 = vld [vmem:[%s227 + $0x8d0] sm:$0x11]
      %v531 = vld [vmem:[%s227 + $0x8d8] sm:$0x11]
      %v532 = vld [vmem:[%s227 + $0x8e0] sm:$0x11]
      %v533 = vld [vmem:[%s233] sm:$0xf]
      %v534 = vld [vmem:[%s233 + $0x4] sm:$0xf]
      %v535 = vld [vmem:[%s233 + $0x8] sm:$0xf]
      %v536 = vld [vmem:[%s233 + $0xc] sm:$0xf]
      %v537 = vld [vmem:[%s233 + $0x10] sm:$0xf]
      %v538 = vld [vmem:[%s233 + $0x14] sm:$0xf]
      %v539 = vld [vmem:[%s233 + $0x18] sm:$0xf]
      %v540 = vld [vmem:[%s233 + $0x1c] sm:$0xf]
      %v541 = vld [vmem:[%s233 + $0x20] sm:$0xf]
      %v542 = vld [vmem:[%s233 + $0x24] sm:$0xf]
      %v543 = vld [vmem:[%s233 + $0x28] sm:$0xf]
      %v544 = vld [vmem:[%s233 + $0x2c] sm:$0xf]
      %v545 = vld [vmem:[%s233 + $0x30] sm:$0xf]
      %v546 = vld [vmem:[%s233 + $0x34] sm:$0xf]
      %v547 = vld [vmem:[%s233 + $0x38] sm:$0xf]
      %v548 = vld [vmem:[%s233 + $0x3c] sm:$0xf]
      %v549 = vld [vmem:[%s233 + $0x40] sm:$0xf]
      %v550 = vld [vmem:[%s233 + $0x44] sm:$0xf]
      %v551 = vld [vmem:[%s233 + $0x48] sm:$0xf]
      %v552 = vld [vmem:[%s233 + $0x4c] sm:$0xf]
      %v553 = vld [vmem:[%s233 + $0x50] sm:$0xf]
      %v554 = vld [vmem:[%s233 + $0x54] sm:$0xf]
      %v555 = vld [vmem:[%s233 + $0x58] sm:$0xf]
      %v556 = vld [vmem:[%s233 + $0x5c] sm:$0xf]
      %v557 = vld [vmem:[%s233 + $0x60] sm:$0xf]
      %v558 = vld [vmem:[%s233 + $0x64] sm:$0xf]
      %v559 = vld [vmem:[%s233 + $0x68] sm:$0xf]
      %v560 = vld [vmem:[%s233 + $0x6c] sm:$0xf]
      %v561 = vld [vmem:[%s233 + $0x70] sm:$0xf]
      %v562 = vld [vmem:[%s233 + $0x74] sm:$0xf]
      %v563 = vld [vmem:[%s233 + $0x78] sm:$0xf]
      %v564 = vld [vmem:[%s233 + $0x7c] sm:$0xf]
      %v565 = vld [vmem:[%s233 + $0x80] sm:$0xf]
      %v566 = vld [vmem:[%s233 + $0x84] sm:$0xf]
      %v567 = vld [vmem:[%s233 + $0x88] sm:$0xf]
      %v568 = vld [vmem:[%s233 + $0x8c] sm:$0xf]
      %v569 = vld [vmem:[%s233 + $0x90] sm:$0xf]
      %v570 = vld [vmem:[%s233 + $0x94] sm:$0xf]
      %v571 = vld [vmem:[%s233 + $0x98] sm:$0xf]
      %v572 = vld [vmem:[%s233 + $0x9c] sm:$0xf]
      %v573 = vld [vmem:[%s233 + $0xa0] sm:$0xf]
      %v574 = vld [vmem:[%s233 + $0xa4] sm:$0xf]
      %v575 = vld [vmem:[%s233 + $0xa8] sm:$0xf]
      %v576 = vld [vmem:[%s233 + $0xac] sm:$0xf]
      %v577 = vld [vmem:[%s233 + $0xb0] sm:$0xf]
      %v578 = vld [vmem:[%s233 + $0xb4] sm:$0xf]
      %v579 = vld [vmem:[%s233 + $0xb8] sm:$0xf]
      %v580 = vld [vmem:[%s233 + $0xbc] sm:$0xf]
      %v581 = vld [vmem:[%s233 + $0xc0] sm:$0xf]
      %v582 = vld [vmem:[%s233 + $0xc4] sm:$0xf]
      %v583 = vld [vmem:[%s233 + $0xc8] sm:$0xf]
      %v584 = vld [vmem:[%s233 + $0xcc] sm:$0xf]
      %v585 = vld [vmem:[%s233 + $0xd0] sm:$0xf]
      %v586 = vld [vmem:[%s233 + $0xd4] sm:$0xf]
      %v587 = vld [vmem:[%s233 + $0xd8] sm:$0xf]
      %v588 = vld [vmem:[%s233 + $0xdc] sm:$0xf]
      %v589 = vld [vmem:[%s233 + $0xe0] sm:$0xf]
      %v590 = vld [vmem:[%s233 + $0xe4] sm:$0xf]
      %v591 = vld [vmem:[%s233 + $0xe8] sm:$0xf]
      %v592 = vld [vmem:[%s233 + $0xec] sm:$0xf]
      %v593 = vld [vmem:[%s233 + $0xf0] sm:$0xf]
      %v594 = vld [vmem:[%s233 + $0xf4] sm:$0xf]
      %v595 = vld [vmem:[%s233 + $0xf8] sm:$0xf]
      %v596 = vld [vmem:[%s233 + $0xfc] sm:$0xf]
      %v597 = vld [vmem:[%s233 + $0x100] sm:$0xf]
      %v598 = vld [vmem:[%s233 + $0x104] sm:$0xf]
      %v599 = vld [vmem:[%s233 + $0x108] sm:$0xf]
      %v600 = vld [vmem:[%s233 + $0x10c] sm:$0xf]
      %v601 = vld [vmem:[%s233 + $0x110] sm:$0xf]
      %v602 = vld [vmem:[%s233 + $0x114] sm:$0xf]
      %v603 = vld [vmem:[%s233 + $0x118] sm:$0xf]
      %v604 = vld [vmem:[%s233 + $0x11c] sm:$0xf]
      %v605 = vld [vmem:[%s233 + $0x120] sm:$0xf]
      %v606 = vld [vmem:[%s233 + $0x124] sm:$0xf]
      %v607 = vld [vmem:[%s233 + $0x128] sm:$0xf]
      %v608 = vld [vmem:[%s233 + $0x12c] sm:$0xf]
      %v609 = vld [vmem:[%s233 + $0x130] sm:$0xf]
      %v610 = vld [vmem:[%s233 + $0x134] sm:$0xf]
      %v611 = vld [vmem:[%s233 + $0x138] sm:$0xf]
      %v612 = vld [vmem:[%s233 + $0x13c] sm:$0xf]
      %v613 = vld [vmem:[%s233 + $0x140] sm:$0xf]
      %v614 = vld [vmem:[%s233 + $0x144] sm:$0xf]
      %v615 = vld [vmem:[%s233 + $0x148] sm:$0xf]
      %v616 = vld [vmem:[%s233 + $0x14c] sm:$0xf]
      %v617 = vld [vmem:[%s233 + $0x150] sm:$0xf]
      %v618 = vld [vmem:[%s233 + $0x154] sm:$0xf]
      %v619 = vld [vmem:[%s233 + $0x158] sm:$0xf]
      %v620 = vld [vmem:[%s233 + $0x15c] sm:$0xf]
      %v621 = vld [vmem:[%s233 + $0x160] sm:$0xf]
      %v622 = vld [vmem:[%s233 + $0x164] sm:$0xf]
      %v623 = vld [vmem:[%s233 + $0x168] sm:$0xf]
      %v624 = vld [vmem:[%s233 + $0x16c] sm:$0xf]
      %v625 = vld [vmem:[%s233 + $0x170] sm:$0xf]
      %v626 = vld [vmem:[%s233 + $0x174] sm:$0xf]
      %v627 = vld [vmem:[%s233 + $0x178] sm:$0xf]
      %v628 = vld [vmem:[%s233 + $0x17c] sm:$0xf]
      %v629 = vld [vmem:[%s233 + $0x180] sm:$0xf]
      %v630 = vld [vmem:[%s233 + $0x184] sm:$0xf]
      %v631 = vld [vmem:[%s233 + $0x188] sm:$0xf]
      %v632 = vld [vmem:[%s233 + $0x18c] sm:$0xf]
      %v633 = vld [vmem:[%s233 + $0x190] sm:$0xf]
      %v634 = vld [vmem:[%s233 + $0x194] sm:$0xf]
      %v635 = vld [vmem:[%s233 + $0x198] sm:$0xf]
      %v636 = vld [vmem:[%s233 + $0x19c] sm:$0xf]
      %v637 = vld [vmem:[%s233 + $0x1a0] sm:$0xf]
      %v638 = vld [vmem:[%s233 + $0x1a4] sm:$0xf]
      %v639 = vld [vmem:[%s233 + $0x1a8] sm:$0xf]
      %v640 = vld [vmem:[%s233 + $0x1ac] sm:$0xf]
      %v641 = vld [vmem:[%s233 + $0x1b0] sm:$0xf]
      %v642 = vld [vmem:[%s233 + $0x1b4] sm:$0xf]
      %v643 = vld [vmem:[%s233 + $0x1b8] sm:$0xf]
      %v644 = vld [vmem:[%s233 + $0x1bc] sm:$0xf]
      %v645 = vld [vmem:[%s233 + $0x1c0] sm:$0xf]
      %v646 = vld [vmem:[%s233 + $0x1c4] sm:$0xf]
      %v647 = vld [vmem:[%s233 + $0x1c8] sm:$0xf]
      %v648 = vld [vmem:[%s233 + $0x1cc] sm:$0xf]
      %v649 = vld [vmem:[%s233 + $0x1d0] sm:$0xf]
      %v650 = vld [vmem:[%s233 + $0x1d4] sm:$0xf]
      %v651 = vld [vmem:[%s233 + $0x1d8] sm:$0xf]
      %v652 = vld [vmem:[%s233 + $0x1dc] sm:$0xf]
      %v653 = vld [vmem:[%s233 + $0x1e0] sm:$0xf]
      %v654 = vld [vmem:[%s233 + $0x1e4] sm:$0xf]
      %v655 = vld [vmem:[%s233 + $0x1e8] sm:$0xf]
      %v656 = vld [vmem:[%s233 + $0x1ec] sm:$0xf]
      %v657 = vld [vmem:[%s233 + $0x1f0] sm:$0xf]
      %v658 = vld [vmem:[%s233 + $0x1f4] sm:$0xf]
      %v659 = vld [vmem:[%s233 + $0x1f8] sm:$0xf]
      %v660 = vld [vmem:[%s233 + $0x1fc] sm:$0xf]
      %v661 = vld [vmem:[%s233 + $0x200] sm:$0xf]
      %v662 = vld [vmem:[%s233 + $0x204] sm:$0xf]
      %v663 = vld [vmem:[%s233 + $0x208] sm:$0xf]
      %v664 = vld [vmem:[%s233 + $0x20c] sm:$0xf]
      %v665 = vld [vmem:[%s233 + $0x210] sm:$0xf]
      %v666 = vld [vmem:[%s233 + $0x214] sm:$0xf]
      %v667 = vld [vmem:[%s233 + $0x218] sm:$0xf]
      %v668 = vld [vmem:[%s233 + $0x21c] sm:$0xf]
      %v669 = vld [vmem:[%s233 + $0x220] sm:$0xf]
      %v670 = vld [vmem:[%s233 + $0x224] sm:$0xf]
      %v671 = vld [vmem:[%s233 + $0x228] sm:$0xf]
      %v672 = vld [vmem:[%s233 + $0x22c] sm:$0xf]
      %v673 = vld [vmem:[%s233 + $0x230] sm:$0xf]
      %v674 = vld [vmem:[%s233 + $0x234] sm:$0xf]
      %v675 = vld [vmem:[%s233 + $0x238] sm:$0xf]
      %v676 = vld [vmem:[%s233 + $0x23c] sm:$0xf]
      %v677 = vld [vmem:[%s233 + $0x240] sm:$0xf]
      %v678 = vld [vmem:[%s233 + $0x244] sm:$0xf]
      %v679 = vld [vmem:[%s233 + $0x248] sm:$0xf]
      %v680 = vld [vmem:[%s233 + $0x24c] sm:$0xf]
      %v681 = vld [vmem:[%s233 + $0x250] sm:$0xf]
      %v682 = vld [vmem:[%s233 + $0x254] sm:$0xf]
      %v683 = vld [vmem:[%s236] sm:$0x1]
      %v685 = vlaneseq
      %v686 = vshrl.u32 %v685, 7
      %v687 = vsub.s32 0, %v686
      %v688 = vrot.slane %v683, %v687
      %v975 = vunpack.c.l.b16 %v248
      %v976 = vunpack.c.h.b16 %v248
      %v977 = vunpack.c.l.b16 %v249
      %v978 = vunpack.c.h.b16 %v249
      %v979 = vunpack.c.l.b16 %v250
      %v980 = vunpack.c.h.b16 %v250
      %v981 = vunpack.c.l.b16 %v251
      %v982 = vunpack.c.h.b16 %v251
      %v983 = vunpack.c.l.b16 %v252
      %v984 = vunpack.c.h.b16 %v252
      %v985 = vunpack.c.l.b16 %v253
      %v986 = vunpack.c.h.b16 %v253
      %v987 = vunpack.c.l.b16 %v254
      %v988 = vunpack.c.h.b16 %v254
      %v989 = vunpack.c.l.b16 %v255
      %v990 = vunpack.c.h.b16 %v255
      %v991 = vunpack.c.l.b16 %v256
      %v992 = vunpack.c.h.b16 %v256
      %v993 = vunpack.c.l.b16 %v257
      %v994 = vunpack.c.h.b16 %v257
      %v995 = vunpack.c.l.b16 %v258
      %v996 = vunpack.c.h.b16 %v258
      %v997 = vunpack.c.l.b16 %v259
      %v998 = vunpack.c.h.b16 %v259
      %v999 = vunpack.c.l.b16 %v260
      %v1000 = vunpack.c.h.b16 %v260
      %v1001 = vunpack.c.l.b16 %v261
      %v1002 = vunpack.c.h.b16 %v261
      %v1003 = vunpack.c.l.b16 %v262
      %v1004 = vunpack.c.h.b16 %v262
      %v1005 = vunpack.c.l.b16 %v263
      %v1006 = vunpack.c.h.b16 %v263
      %v1007 = vunpack.c.l.b16 %v264
      %v1008 = vunpack.c.h.b16 %v264
      %v1009 = vunpack.c.l.b16 %v265
      %v1010 = vunpack.c.h.b16 %v265
      %v1011 = vunpack.c.l.b16 %v266
      %v1012 = vunpack.c.h.b16 %v266
      %v1013 = vunpack.c.l.b16 %v267
      %v1014 = vunpack.c.h.b16 %v267
      %v1015 = vunpack.c.l.b16 %v268
      %v1016 = vunpack.c.h.b16 %v268
      %v1017 = vunpack.c.l.b16 %v269
      %v1018 = vunpack.c.h.b16 %v269
      %v1019 = vunpack.c.l.b16 %v270
      %v1020 = vunpack.c.h.b16 %v270
      %v1021 = vunpack.c.l.b16 %v271
      %v1022 = vunpack.c.h.b16 %v271
      %v1023 = vunpack.c.l.b16 %v272
      %v1024 = vunpack.c.h.b16 %v272
      %v1025 = vunpack.c.l.b16 %v273
      %v1026 = vunpack.c.h.b16 %v273
      %v1027 = vunpack.c.l.b16 %v274
      %v1028 = vunpack.c.h.b16 %v274
      %v1029 = vunpack.c.l.b16 %v275
      %v1030 = vunpack.c.h.b16 %v275
      %v1031 = vunpack.c.l.b16 %v276
      %v1032 = vunpack.c.h.b16 %v276
      %v1033 = vunpack.c.l.b16 %v277
      %v1034 = vunpack.c.h.b16 %v277
      %v1035 = vunpack.c.l.b16 %v278
      %v1036 = vunpack.c.h.b16 %v278
      %v1037 = vunpack.c.l.b16 %v279
      %v1038 = vunpack.c.h.b16 %v279
      %v1039 = vunpack.c.l.b16 %v280
      %v1040 = vunpack.c.h.b16 %v280
      %v1041 = vunpack.c.l.b16 %v281
      %v1042 = vunpack.c.h.b16 %v281
      %v1043 = vunpack.c.l.b16 %v282
      %v1044 = vunpack.c.h.b16 %v282
      %v1045 = vunpack.c.l.b16 %v283
      %v1046 = vunpack.c.h.b16 %v283
      %v1047 = vunpack.c.l.b16 %v284
      %v1048 = vunpack.c.h.b16 %v284
      %v1049 = vunpack.c.l.b16 %v285
      %v1050 = vunpack.c.h.b16 %v285
      %v1051 = vunpack.c.l.b16 %v286
      %v1052 = vunpack.c.h.b16 %v286
      %v1053 = vunpack.c.l.b16 %v287
      %v1054 = vunpack.c.h.b16 %v287
      %v1055 = vunpack.c.l.b16 %v288
      %v1056 = vunpack.c.h.b16 %v288
      %v1057 = vunpack.c.l.b16 %v289
      %v1058 = vunpack.c.h.b16 %v289
      %v1059 = vunpack.c.l.b16 %v290
      %v1060 = vunpack.c.h.b16 %v290
      %v1061 = vunpack.c.l.b16 %v291
      %v1062 = vunpack.c.h.b16 %v291
      %v1063 = vunpack.c.l.b16 %v292
      %v1064 = vunpack.c.h.b16 %v292
      %v1065 = vunpack.c.l.b16 %v293
      %v1066 = vunpack.c.h.b16 %v293
      %v1067 = vunpack.c.l.b16 %v294
      %v1068 = vunpack.c.h.b16 %v294
      %v1069 = vunpack.c.l.b16 %v295
      %v1070 = vunpack.c.h.b16 %v295
      %v1071 = vunpack.c.l.b16 %v296
      %v1072 = vunpack.c.h.b16 %v296
      %v1073 = vunpack.c.l.b16 %v297
      %v1074 = vunpack.c.h.b16 %v297
      %v1075 = vunpack.c.l.b16 %v298
      %v1076 = vunpack.c.h.b16 %v298
      %v1077 = vunpack.c.l.b16 %v299
      %v1078 = vunpack.c.h.b16 %v299
      %v1079 = vunpack.c.l.b16 %v300
      %v1080 = vunpack.c.h.b16 %v300
      %v1081 = vunpack.c.l.b16 %v301
      %v1082 = vunpack.c.h.b16 %v301
      %v1083 = vunpack.c.l.b16 %v302
      %v1084 = vunpack.c.h.b16 %v302
      %v1085 = vunpack.c.l.b16 %v303
      %v1086 = vunpack.c.h.b16 %v303
      %v1087 = vunpack.c.l.b16 %v304
      %v1088 = vunpack.c.h.b16 %v304
      %v1089 = vunpack.c.l.b16 %v305
      %v1090 = vunpack.c.h.b16 %v305
      %v1091 = vunpack.c.l.b16 %v306
      %v1092 = vunpack.c.h.b16 %v306
      %v1093 = vunpack.c.l.b16 %v307
      %v1094 = vunpack.c.h.b16 %v307
      %v1095 = vunpack.c.l.b16 %v308
      %v1096 = vunpack.c.h.b16 %v308
      %v1097 = vunpack.c.l.b16 %v309
      %v1098 = vunpack.c.h.b16 %v309
      %v1099 = vunpack.c.l.b16 %v310
      %v1100 = vunpack.c.h.b16 %v310
      %v1101 = vunpack.c.l.b16 %v311
      %v1102 = vunpack.c.h.b16 %v311
      %v1103 = vunpack.c.l.b16 %v312
      %v1104 = vunpack.c.h.b16 %v312
      %v1105 = vunpack.c.l.b16 %v313
      %v1106 = vunpack.c.h.b16 %v313
      %v1107 = vunpack.c.l.b16 %v314
      %v1108 = vunpack.c.h.b16 %v314
      %v1109 = vunpack.c.l.b16 %v315
      %v1110 = vunpack.c.h.b16 %v315
      %v1111 = vunpack.c.l.b16 %v316
      %v1112 = vunpack.c.h.b16 %v316
      %v1113 = vunpack.c.l.b16 %v317
      %v1114 = vunpack.c.h.b16 %v317
      %v1115 = vunpack.c.l.b16 %v318
      %v1116 = vunpack.c.h.b16 %v318
      %v1117 = vunpack.c.l.b16 %v319
      %v1118 = vunpack.c.h.b16 %v319
      %v1119 = vunpack.c.l.b16 %v320
      %v1120 = vunpack.c.h.b16 %v320
      %v1121 = vunpack.c.l.b16 %v321
      %v1122 = vunpack.c.h.b16 %v321
      %v1123 = vunpack.c.l.b16 %v322
      %v1124 = vunpack.c.h.b16 %v322
      %v1125 = vunpack.c.l.b16 %v323
      %v1126 = vunpack.c.h.b16 %v323
      %v1127 = vunpack.c.l.b16 %v324
      %v1128 = vunpack.c.h.b16 %v324
      %v1129 = vunpack.c.l.b16 %v325
      %v1130 = vunpack.c.h.b16 %v325
      %v1131 = vunpack.c.l.b16 %v326
      %v1132 = vunpack.c.h.b16 %v326
      %v1133 = vunpack.c.l.b16 %v327
      %v1134 = vunpack.c.h.b16 %v327
      %v1135 = vunpack.c.l.b16 %v328
      %v1136 = vunpack.c.h.b16 %v328
      %v1137 = vunpack.c.l.b16 %v329
      %v1138 = vunpack.c.h.b16 %v329
      %v1139 = vunpack.c.l.b16 %v330
      %v1140 = vunpack.c.h.b16 %v330
      %v1141 = vunpack.c.l.b16 %v331
      %v1142 = vunpack.c.h.b16 %v331
      %v1143 = vunpack.c.l.b16 %v332
      %v1144 = vunpack.c.h.b16 %v332
      %v1145 = vunpack.c.l.b16 %v333
      %v1146 = vunpack.c.h.b16 %v333
      %v1147 = vunpack.c.l.b16 %v334
      %v1148 = vunpack.c.h.b16 %v334
      %v1149 = vunpack.c.l.b16 %v335
      %v1150 = vunpack.c.h.b16 %v335
      %v1151 = vunpack.c.l.b16 %v336
      %v1152 = vunpack.c.h.b16 %v336
      %v1153 = vunpack.c.l.b16 %v337
      %v1154 = vunpack.c.h.b16 %v337
      %v1155 = vunpack.c.l.b16 %v338
      %v1156 = vunpack.c.h.b16 %v338
      %v1157 = vunpack.c.l.b16 %v339
      %v1158 = vunpack.c.h.b16 %v339
      %v1159 = vunpack.c.l.b16 %v340
      %v1160 = vunpack.c.h.b16 %v340
      %v1161 = vunpack.c.l.b16 %v341
      %v1162 = vunpack.c.h.b16 %v341
      %v1163 = vunpack.c.l.b16 %v342
      %v1164 = vunpack.c.h.b16 %v342
      %v1165 = vunpack.c.l.b16 %v343
      %v1166 = vunpack.c.h.b16 %v343
      %v1167 = vunpack.c.l.b16 %v344
      %v1168 = vunpack.c.h.b16 %v344
      %v1169 = vunpack.c.l.b16 %v345
      %v1170 = vunpack.c.h.b16 %v345
      %v1171 = vunpack.c.l.b16 %v346
      %v1172 = vunpack.c.h.b16 %v346
      %v1173 = vunpack.c.l.b16 %v347
      %v1174 = vunpack.c.h.b16 %v347
      %v1175 = vunpack.c.l.b16 %v348
      %v1176 = vunpack.c.h.b16 %v348
      %v1177 = vunpack.c.l.b16 %v349
      %v1178 = vunpack.c.h.b16 %v349
      %v1179 = vunpack.c.l.b16 %v350
      %v1180 = vunpack.c.h.b16 %v350
      %v1181 = vunpack.c.l.b16 %v351
      %v1182 = vunpack.c.h.b16 %v351
      %v1183 = vunpack.c.l.b16 %v352
      %v1184 = vunpack.c.h.b16 %v352
      %v1185 = vunpack.c.l.b16 %v353
      %v1186 = vunpack.c.h.b16 %v353
      %v1187 = vunpack.c.l.b16 %v354
      %v1188 = vunpack.c.h.b16 %v354
      %v1189 = vunpack.c.l.b16 %v355
      %v1190 = vunpack.c.h.b16 %v355
      %v1191 = vunpack.c.l.b16 %v356
      %v1192 = vunpack.c.h.b16 %v356
      %v1193 = vunpack.c.l.b16 %v357
      %v1194 = vunpack.c.h.b16 %v357
      %v1195 = vunpack.c.l.b16 %v358
      %v1196 = vunpack.c.h.b16 %v358
      %v1197 = vunpack.c.l.b16 %v359
      %v1198 = vunpack.c.h.b16 %v359
      %v1199 = vunpack.c.l.b16 %v360
      %v1200 = vunpack.c.h.b16 %v360
      %v1201 = vunpack.c.l.b16 %v361
      %v1202 = vunpack.c.h.b16 %v361
      %v1203 = vunpack.c.l.b16 %v362
      %v1204 = vunpack.c.h.b16 %v362
      %v1205 = vunpack.c.l.b16 %v363
      %v1206 = vunpack.c.h.b16 %v363
      %v1207 = vunpack.c.l.b16 %v364
      %v1208 = vunpack.c.h.b16 %v364
      %v1209 = vunpack.c.l.b16 %v365
      %v1210 = vunpack.c.h.b16 %v365
      %v1211 = vunpack.c.l.b16 %v366
      %v1212 = vunpack.c.h.b16 %v366
      %v1213 = vunpack.c.l.b16 %v367
      %v1214 = vunpack.c.h.b16 %v367
      %v1215 = vunpack.c.l.b16 %v368
      %v1216 = vunpack.c.h.b16 %v368
      %v1217 = vunpack.c.l.b16 %v369
      %v1218 = vunpack.c.h.b16 %v369
      %v1219 = vunpack.c.l.b16 %v370
      %v1220 = vunpack.c.h.b16 %v370
      %v1221 = vunpack.c.l.b16 %v371
      %v1222 = vunpack.c.h.b16 %v371
      %v1223 = vunpack.c.l.b16 %v372
      %v1224 = vunpack.c.h.b16 %v372
      %v1225 = vunpack.c.l.b16 %v373
      %v1226 = vunpack.c.h.b16 %v373
      %v1227 = vunpack.c.l.b16 %v374
      %v1228 = vunpack.c.h.b16 %v374
      %v1229 = vunpack.c.l.b16 %v375
      %v1230 = vunpack.c.h.b16 %v375
      %v1231 = vunpack.c.l.b16 %v376
      %v1232 = vunpack.c.h.b16 %v376
      %v1233 = vunpack.c.l.b16 %v377
      %v1234 = vunpack.c.h.b16 %v377
      %v1235 = vunpack.c.l.b16 %v378
      %v1236 = vunpack.c.h.b16 %v378
      %v1237 = vunpack.c.l.b16 %v379
      %v1238 = vunpack.c.h.b16 %v379
      %v1239 = vunpack.c.l.b16 %v380
      %v1240 = vunpack.c.h.b16 %v380
      %v1241 = vunpack.c.l.b16 %v381
      %v1242 = vunpack.c.h.b16 %v381
      %v1243 = vunpack.c.l.b16 %v382
      %v1244 = vunpack.c.h.b16 %v382
      %v1245 = vunpack.c.l.b16 %v383
      %v1246 = vunpack.c.h.b16 %v383
      %v1247 = vunpack.c.l.b16 %v384
      %v1248 = vunpack.c.h.b16 %v384
      %v1249 = vunpack.c.l.b16 %v385
      %v1250 = vunpack.c.h.b16 %v385
      %v1251 = vunpack.c.l.b16 %v386
      %v1252 = vunpack.c.h.b16 %v386
      %v1253 = vunpack.c.l.b16 %v387
      %v1254 = vunpack.c.h.b16 %v387
      %v1255 = vunpack.c.l.b16 %v388
      %v1256 = vunpack.c.h.b16 %v388
      %v1257 = vunpack.c.l.b16 %v389
      %v1258 = vunpack.c.h.b16 %v389
      %v1259 = vunpack.c.l.b16 %v390
      %v1260 = vunpack.c.h.b16 %v390
      %v1261 = vunpack.c.l.b16 %v391
      %v1262 = vunpack.c.h.b16 %v391
      %v1263 = vunpack.c.l.b16 %v392
      %v1264 = vunpack.c.h.b16 %v392
      %v1265 = vunpack.c.l.b16 %v393
      %v1266 = vunpack.c.h.b16 %v393
      %v1267 = vunpack.c.l.b16 %v394
      %v1268 = vunpack.c.h.b16 %v394
      %v1269 = vunpack.c.l.b16 %v395
      %v1270 = vunpack.c.h.b16 %v395
      %v1271 = vunpack.c.l.b16 %v396
      %v1272 = vunpack.c.h.b16 %v396
      %v1273 = vunpack.c.l.b16 %v397
      %v1274 = vunpack.c.h.b16 %v397
      %v1275 = vunpack.c.l.b16 %v398
      %v1276 = vunpack.c.h.b16 %v398
      %v1277 = vunpack.c.l.b16 %v399
      %v1278 = vunpack.c.h.b16 %v399
      %v1279 = vunpack.c.l.b16 %v400
      %v1280 = vunpack.c.h.b16 %v400
      %v1281 = vunpack.c.l.b16 %v401
      %v1282 = vunpack.c.h.b16 %v401
      %v1283 = vunpack.c.l.b16 %v402
      %v1284 = vunpack.c.h.b16 %v402
      %v1285 = vunpack.c.l.b16 %v403
      %v1286 = vunpack.c.h.b16 %v403
      %v1287 = vunpack.c.l.b16 %v404
      %v1288 = vunpack.c.h.b16 %v404
      %v1289 = vunpack.c.l.b16 %v405
      %v1290 = vunpack.c.h.b16 %v405
      %v1291 = vunpack.c.l.b16 %v406
      %v1292 = vunpack.c.h.b16 %v406
      %v1293 = vunpack.c.l.b16 %v407
      %v1294 = vunpack.c.h.b16 %v407
      %v1295 = vunpack.c.l.b16 %v408
      %v1296 = vunpack.c.h.b16 %v408
      %v1297 = vunpack.c.l.b16 %v409
      %v1298 = vunpack.c.h.b16 %v409
      %v1299 = vunpack.c.l.b16 %v410
      %v1300 = vunpack.c.h.b16 %v410
      %v1301 = vunpack.c.l.b16 %v411
      %v1302 = vunpack.c.h.b16 %v411
      %v1303 = vunpack.c.l.b16 %v412
      %v1304 = vunpack.c.h.b16 %v412
      %v1305 = vunpack.c.l.b16 %v413
      %v1306 = vunpack.c.h.b16 %v413
      %v1307 = vunpack.c.l.b16 %v414
      %v1308 = vunpack.c.h.b16 %v414
      %v1309 = vunpack.c.l.b16 %v415
      %v1310 = vunpack.c.h.b16 %v415
      %v1311 = vunpack.c.l.b16 %v416
      %v1312 = vunpack.c.h.b16 %v416
      %v1313 = vunpack.c.l.b16 %v417
      %v1314 = vunpack.c.h.b16 %v417
      %v1315 = vunpack.c.l.b16 %v418
      %v1316 = vunpack.c.h.b16 %v418
      %v1317 = vunpack.c.l.b16 %v419
      %v1318 = vunpack.c.h.b16 %v419
      %v1319 = vunpack.c.l.b16 %v420
      %v1320 = vunpack.c.h.b16 %v420
      %v1321 = vunpack.c.l.b16 %v421
      %v1322 = vunpack.c.h.b16 %v421
      %v1323 = vunpack.c.l.b16 %v422
      %v1324 = vunpack.c.h.b16 %v422
      %v1325 = vunpack.c.l.b16 %v423
      %v1326 = vunpack.c.h.b16 %v423
      %v1327 = vunpack.c.l.b16 %v424
      %v1328 = vunpack.c.h.b16 %v424
      %v1329 = vunpack.c.l.b16 %v425
      %v1330 = vunpack.c.h.b16 %v425
      %v1331 = vunpack.c.l.b16 %v426
      %v1332 = vunpack.c.h.b16 %v426
      %v1333 = vunpack.c.l.b16 %v427
      %v1334 = vunpack.c.h.b16 %v427
      %v1335 = vunpack.c.l.b16 %v428
      %v1336 = vunpack.c.h.b16 %v428
      %v1337 = vunpack.c.l.b16 %v429
      %v1338 = vunpack.c.h.b16 %v429
      %v1339 = vunpack.c.l.b16 %v430
      %v1340 = vunpack.c.h.b16 %v430
      %v1341 = vunpack.c.l.b16 %v431
      %v1342 = vunpack.c.h.b16 %v431
      %v1343 = vunpack.c.l.b16 %v432
      %v1344 = vunpack.c.h.b16 %v432
      %v1345 = vunpack.c.l.b16 %v433
      %v1346 = vunpack.c.h.b16 %v433
      %v1347 = vunpack.c.l.b16 %v434
      %v1348 = vunpack.c.h.b16 %v434
      %v1349 = vunpack.c.l.b16 %v435
      %v1350 = vunpack.c.h.b16 %v435
      %v1351 = vunpack.c.l.b16 %v436
      %v1352 = vunpack.c.h.b16 %v436
      %v1353 = vunpack.c.l.b16 %v437
      %v1354 = vunpack.c.h.b16 %v437
      %v1355 = vunpack.c.l.b16 %v438
      %v1356 = vunpack.c.h.b16 %v438
      %v1357 = vunpack.c.l.b16 %v439
      %v1358 = vunpack.c.h.b16 %v439
      %v1359 = vunpack.c.l.b16 %v440
      %v1360 = vunpack.c.h.b16 %v440
      %v1361 = vunpack.c.l.b16 %v441
      %v1362 = vunpack.c.h.b16 %v441
      %v1363 = vunpack.c.l.b16 %v442
      %v1364 = vunpack.c.h.b16 %v442
      %v1365 = vunpack.c.l.b16 %v443
      %v1366 = vunpack.c.h.b16 %v443
      %v1367 = vunpack.c.l.b16 %v444
      %v1368 = vunpack.c.h.b16 %v444
      %v1369 = vunpack.c.l.b16 %v445
      %v1370 = vunpack.c.h.b16 %v445
      %v1371 = vunpack.c.l.b16 %v446
      %v1372 = vunpack.c.h.b16 %v446
      %v1373 = vunpack.c.l.b16 %v447
      %v1374 = vunpack.c.h.b16 %v447
      %v1375 = vunpack.c.l.b16 %v448
      %v1376 = vunpack.c.h.b16 %v448
      %v1377 = vunpack.c.l.b16 %v449
      %v1378 = vunpack.c.h.b16 %v449
      %v1379 = vunpack.c.l.b16 %v450
      %v1380 = vunpack.c.h.b16 %v450
      %v1381 = vunpack.c.l.b16 %v451
      %v1382 = vunpack.c.h.b16 %v451
      %v1383 = vunpack.c.l.b16 %v452
      %v1384 = vunpack.c.h.b16 %v452
      %v1385 = vunpack.c.l.b16 %v453
      %v1386 = vunpack.c.h.b16 %v453
      %v1387 = vunpack.c.l.b16 %v454
      %v1388 = vunpack.c.h.b16 %v454
      %v1389 = vunpack.c.l.b16 %v455
      %v1390 = vunpack.c.h.b16 %v455
      %v1391 = vunpack.c.l.b16 %v456
      %v1392 = vunpack.c.h.b16 %v456
      %v1393 = vunpack.c.l.b16 %v457
      %v1394 = vunpack.c.h.b16 %v457
      %v1395 = vunpack.c.l.b16 %v458
      %v1396 = vunpack.c.h.b16 %v458
      %v1397 = vunpack.c.l.b16 %v459
      %v1398 = vunpack.c.h.b16 %v459
      %v1399 = vunpack.c.l.b16 %v460
      %v1400 = vunpack.c.h.b16 %v460
      %v1401 = vunpack.c.l.b16 %v461
      %v1402 = vunpack.c.h.b16 %v461
      %v1403 = vunpack.c.l.b16 %v462
      %v1404 = vunpack.c.h.b16 %v462
      %v1405 = vunpack.c.l.b16 %v463
      %v1406 = vunpack.c.h.b16 %v463
      %v1407 = vunpack.c.l.b16 %v464
      %v1408 = vunpack.c.h.b16 %v464
      %v1409 = vunpack.c.l.b16 %v465
      %v1410 = vunpack.c.h.b16 %v465
      %v1411 = vunpack.c.l.b16 %v466
      %v1412 = vunpack.c.h.b16 %v466
      %v1413 = vunpack.c.l.b16 %v467
      %v1414 = vunpack.c.h.b16 %v467
      %v1415 = vunpack.c.l.b16 %v468
      %v1416 = vunpack.c.h.b16 %v468
      %v1417 = vunpack.c.l.b16 %v469
      %v1418 = vunpack.c.h.b16 %v469
      %v1419 = vunpack.c.l.b16 %v470
      %v1420 = vunpack.c.h.b16 %v470
      %v1421 = vunpack.c.l.b16 %v471
      %v1422 = vunpack.c.h.b16 %v471
      %v1423 = vunpack.c.l.b16 %v472
      %v1424 = vunpack.c.h.b16 %v472
      %v1425 = vunpack.c.l.b16 %v473
      %v1426 = vunpack.c.h.b16 %v473
      %v1427 = vunpack.c.l.b16 %v474
      %v1428 = vunpack.c.h.b16 %v474
      %v1429 = vunpack.c.l.b16 %v475
      %v1430 = vunpack.c.h.b16 %v475
      %v1431 = vunpack.c.l.b16 %v476
      %v1432 = vunpack.c.h.b16 %v476
      %v1433 = vunpack.c.l.b16 %v477
      %v1434 = vunpack.c.h.b16 %v477
      %v1435 = vunpack.c.l.b16 %v478
      %v1436 = vunpack.c.h.b16 %v478
      %v1437 = vunpack.c.l.b16 %v479
      %v1438 = vunpack.c.h.b16 %v479
      %v1439 = vunpack.c.l.b16 %v480
      %v1440 = vunpack.c.h.b16 %v480
      %v1441 = vunpack.c.l.b16 %v481
      %v1442 = vunpack.c.h.b16 %v481
      %v1443 = vunpack.c.l.b16 %v482
      %v1444 = vunpack.c.h.b16 %v482
      %v1445 = vunpack.c.l.b16 %v483
      %v1446 = vunpack.c.h.b16 %v483
      %v1447 = vunpack.c.l.b16 %v484
      %v1448 = vunpack.c.h.b16 %v484
      %v1449 = vunpack.c.l.b16 %v485
      %v1450 = vunpack.c.h.b16 %v485
      %v1451 = vunpack.c.l.b16 %v486
      %v1452 = vunpack.c.h.b16 %v486
      %v1453 = vunpack.c.l.b16 %v487
      %v1454 = vunpack.c.h.b16 %v487
      %v1455 = vunpack.c.l.b16 %v488
      %v1456 = vunpack.c.h.b16 %v488
      %v1457 = vunpack.c.l.b16 %v489
      %v1458 = vunpack.c.h.b16 %v489
      %v1459 = vunpack.c.l.b16 %v490
      %v1460 = vunpack.c.h.b16 %v490
      %v1461 = vunpack.c.l.b16 %v491
      %v1462 = vunpack.c.h.b16 %v491
      %v1463 = vunpack.c.l.b16 %v492
      %v1464 = vunpack.c.h.b16 %v492
      %v1465 = vunpack.c.l.b16 %v493
      %v1466 = vunpack.c.h.b16 %v493
      %v1467 = vunpack.c.l.b16 %v494
      %v1468 = vunpack.c.h.b16 %v494
      %v1469 = vunpack.c.l.b16 %v495
      %v1470 = vunpack.c.h.b16 %v495
      %v1471 = vunpack.c.l.b16 %v496
      %v1472 = vunpack.c.h.b16 %v496
      %v1473 = vunpack.c.l.b16 %v497
      %v1474 = vunpack.c.h.b16 %v497
      %v1475 = vunpack.c.l.b16 %v498
      %v1476 = vunpack.c.h.b16 %v498
      %v1477 = vunpack.c.l.b16 %v499
      %v1478 = vunpack.c.h.b16 %v499
      %v1479 = vunpack.c.l.b16 %v500
      %v1480 = vunpack.c.h.b16 %v500
      %v1481 = vunpack.c.l.b16 %v501
      %v1482 = vunpack.c.h.b16 %v501
      %v1483 = vunpack.c.l.b16 %v502
      %v1484 = vunpack.c.h.b16 %v502
      %v1485 = vunpack.c.l.b16 %v503
      %v1486 = vunpack.c.h.b16 %v503
      %v1487 = vunpack.c.l.b16 %v504
      %v1488 = vunpack.c.h.b16 %v504
      %v1489 = vunpack.c.l.b16 %v505
      %v1490 = vunpack.c.h.b16 %v505
      %v1491 = vunpack.c.l.b16 %v506
      %v1492 = vunpack.c.h.b16 %v506
      %v1493 = vunpack.c.l.b16 %v507
      %v1494 = vunpack.c.h.b16 %v507
      %v1495 = vunpack.c.l.b16 %v508
      %v1496 = vunpack.c.h.b16 %v508
      %v1497 = vunpack.c.l.b16 %v509
      %v1498 = vunpack.c.h.b16 %v509
      %v1499 = vunpack.c.l.b16 %v510
      %v1500 = vunpack.c.h.b16 %v510
      %v1501 = vunpack.c.l.b16 %v511
      %v1502 = vunpack.c.h.b16 %v511
      %v1503 = vunpack.c.l.b16 %v512
      %v1504 = vunpack.c.h.b16 %v512
      %v1505 = vunpack.c.l.b16 %v513
      %v1506 = vunpack.c.h.b16 %v513
      %v1507 = vunpack.c.l.b16 %v514
      %v1508 = vunpack.c.h.b16 %v514
      %v1509 = vunpack.c.l.b16 %v515
      %v1510 = vunpack.c.h.b16 %v515
      %v1511 = vunpack.c.l.b16 %v516
      %v1512 = vunpack.c.h.b16 %v516
      %v1513 = vunpack.c.l.b16 %v517
      %v1514 = vunpack.c.h.b16 %v517
      %v1515 = vunpack.c.l.b16 %v518
      %v1516 = vunpack.c.h.b16 %v518
      %v1517 = vunpack.c.l.b16 %v519
      %v1518 = vunpack.c.h.b16 %v519
      %v1519 = vunpack.c.l.b16 %v520
      %v1520 = vunpack.c.h.b16 %v520
      %v1521 = vunpack.c.l.b16 %v521
      %v1522 = vunpack.c.h.b16 %v521
      %v1523 = vunpack.c.l.b16 %v522
      %v1524 = vunpack.c.h.b16 %v522
      %v1525 = vunpack.c.l.b16 %v523
      %v1526 = vunpack.c.h.b16 %v523
      %v1527 = vunpack.c.l.b16 %v524
      %v1528 = vunpack.c.h.b16 %v524
      %v1529 = vunpack.c.l.b16 %v525
      %v1530 = vunpack.c.h.b16 %v525
      %v1531 = vunpack.c.l.b16 %v526
      %v1532 = vunpack.c.h.b16 %v526
      %v1533 = vunpack.c.l.b16 %v527
      %v1534 = vunpack.c.h.b16 %v527
      %v1535 = vunpack.c.l.b16 %v528
      %v1536 = vunpack.c.h.b16 %v528
      %v1537 = vunpack.c.l.b16 %v529
      %v1538 = vunpack.c.h.b16 %v529
      %v1539 = vunpack.c.l.b16 %v530
      %v1540 = vunpack.c.h.b16 %v530
      %v1541 = vunpack.c.l.b16 %v531
      %v1542 = vunpack.c.h.b16 %v531
      %v1543 = vunpack.c.l.b16 %v532
      %v1544 = vunpack.c.h.b16 %v532
      %v1545 = vpack.c.b16 %v985, %v975
      %v1546 = vpack.c.b16 %v986, %v976
      %v1547 = vpack.c.b16 %v987, %v977
      %v1548 = vpack.c.b16 %v988, %v978
      %v1549 = vpack.c.b16 %v989, %v979
      %v1550 = vpack.c.b16 %v990, %v980
      %v1551 = vpack.c.b16 %v991, %v981
      %v1552 = vpack.c.b16 %v992, %v982
      %v1553 = vpack.c.b16 %v993, %v983
      %v1554 = vpack.c.b16 %v994, %v984
      %v1555 = vpack.c.b16 %v1005, %v995
      %v1556 = vpack.c.b16 %v1006, %v996
      %v1557 = vpack.c.b16 %v1007, %v997
      %v1558 = vpack.c.b16 %v1008, %v998
      %v1559 = vpack.c.b16 %v1009, %v999
      %v1560 = vpack.c.b16 %v1010, %v1000
      %v1561 = vpack.c.b16 %v1011, %v1001
      %v1562 = vpack.c.b16 %v1012, %v1002
      %v1563 = vpack.c.b16 %v1013, %v1003
      %v1564 = vpack.c.b16 %v1014, %v1004
      %v1565 = vpack.c.b16 %v1025, %v1015
      %v1566 = vpack.c.b16 %v1026, %v1016
      %v1567 = vpack.c.b16 %v1027, %v1017
      %v1568 = vpack.c.b16 %v1028, %v1018
      %v1569 = vpack.c.b16 %v1029, %v1019
      %v1570 = vpack.c.b16 %v1030, %v1020
      %v1571 = vpack.c.b16 %v1031, %v1021
      %v1572 = vpack.c.b16 %v1032, %v1022
      %v1573 = vpack.c.b16 %v1033, %v1023
      %v1574 = vpack.c.b16 %v1034, %v1024
      %v1575 = vpack.c.b16 %v1045, %v1035
      %v1576 = vpack.c.b16 %v1046, %v1036
      %v1577 = vpack.c.b16 %v1047, %v1037
      %v1578 = vpack.c.b16 %v1048, %v1038
      %v1579 = vpack.c.b16 %v1049, %v1039
      %v1580 = vpack.c.b16 %v1050, %v1040
      %v1581 = vpack.c.b16 %v1051, %v1041
      %v1582 = vpack.c.b16 %v1052, %v1042
      %v1583 = vpack.c.b16 %v1053, %v1043
      %v1584 = vpack.c.b16 %v1054, %v1044
      %v1585 = vpack.c.b16 %v1065, %v1055
      %v1586 = vpack.c.b16 %v1066, %v1056
      %v1587 = vpack.c.b16 %v1067, %v1057
      %v1588 = vpack.c.b16 %v1068, %v1058
      %v1589 = vpack.c.b16 %v1069, %v1059
      %v1590 = vpack.c.b16 %v1070, %v1060
      %v1591 = vpack.c.b16 %v1071, %v1061
      %v1592 = vpack.c.b16 %v1072, %v1062
      %v1593 = vpack.c.b16 %v1073, %v1063
      %v1594 = vpack.c.b16 %v1074, %v1064
      %v1595 = vpack.c.b16 %v1085, %v1075
      %v1596 = vpack.c.b16 %v1086, %v1076
      %v1597 = vpack.c.b16 %v1087, %v1077
      %v1598 = vpack.c.b16 %v1088, %v1078
      %v1599 = vpack.c.b16 %v1089, %v1079
      %v1600 = vpack.c.b16 %v1090, %v1080
      %v1601 = vpack.c.b16 %v1091, %v1081
      %v1602 = vpack.c.b16 %v1092, %v1082
      %v1603 = vpack.c.b16 %v1093, %v1083
      %v1604 = vpack.c.b16 %v1094, %v1084
      %v1605 = vpack.c.b16 %v1105, %v1095
      %v1606 = vpack.c.b16 %v1106, %v1096
      %v1607 = vpack.c.b16 %v1107, %v1097
      %v1608 = vpack.c.b16 %v1108, %v1098
      %v1609 = vpack.c.b16 %v1109, %v1099
      %v1610 = vpack.c.b16 %v1110, %v1100
      %v1611 = vpack.c.b16 %v1111, %v1101
      %v1612 = vpack.c.b16 %v1112, %v1102
      %v1613 = vpack.c.b16 %v1113, %v1103
      %v1614 = vpack.c.b16 %v1114, %v1104
      %v1615 = vpack.c.b16 %v1125, %v1115
      %v1616 = vpack.c.b16 %v1126, %v1116
      %v1617 = vpack.c.b16 %v1127, %v1117
      %v1618 = vpack.c.b16 %v1128, %v1118
      %v1619 = vpack.c.b16 %v1129, %v1119
      %v1620 = vpack.c.b16 %v1130, %v1120
      %v1621 = vpack.c.b16 %v1131, %v1121
      %v1622 = vpack.c.b16 %v1132, %v1122
      %v1623 = vpack.c.b16 %v1133, %v1123
      %v1624 = vpack.c.b16 %v1134, %v1124
      %v1625 = vpack.c.b16 %v1145, %v1135
      %v1626 = vpack.c.b16 %v1146, %v1136
      %v1627 = vpack.c.b16 %v1147, %v1137
      %v1628 = vpack.c.b16 %v1148, %v1138
      %v1629 = vpack.c.b16 %v1149, %v1139
      %v1630 = vpack.c.b16 %v1150, %v1140
      %v1631 = vpack.c.b16 %v1151, %v1141
      %v1632 = vpack.c.b16 %v1152, %v1142
      %v1633 = vpack.c.b16 %v1153, %v1143
      %v1634 = vpack.c.b16 %v1154, %v1144
      %v1635 = vpack.c.b16 %v1165, %v1155
      %v1636 = vpack.c.b16 %v1166, %v1156
      %v1637 = vpack.c.b16 %v1167, %v1157
      %v1638 = vpack.c.b16 %v1168, %v1158
      %v1639 = vpack.c.b16 %v1169, %v1159
      %v1640 = vpack.c.b16 %v1170, %v1160
      %v1641 = vpack.c.b16 %v1171, %v1161
      %v1642 = vpack.c.b16 %v1172, %v1162
      %v1643 = vpack.c.b16 %v1173, %v1163
      %v1644 = vpack.c.b16 %v1174, %v1164
      %v1645 = vpack.c.b16 %v1185, %v1175
      %v1646 = vpack.c.b16 %v1186, %v1176
      %v1647 = vpack.c.b16 %v1187, %v1177
      %v1648 = vpack.c.b16 %v1188, %v1178
      %v1649 = vpack.c.b16 %v1189, %v1179
      %v1650 = vpack.c.b16 %v1190, %v1180
      %v1651 = vpack.c.b16 %v1191, %v1181
      %v1652 = vpack.c.b16 %v1192, %v1182
      %v1653 = vpack.c.b16 %v1193, %v1183
      %v1654 = vpack.c.b16 %v1194, %v1184
      %v1655 = vpack.c.b16 %v1205, %v1195
      %v1656 = vpack.c.b16 %v1206, %v1196
      %v1657 = vpack.c.b16 %v1207, %v1197
      %v1658 = vpack.c.b16 %v1208, %v1198
      %v1659 = vpack.c.b16 %v1209, %v1199
      %v1660 = vpack.c.b16 %v1210, %v1200
      %v1661 = vpack.c.b16 %v1211, %v1201
      %v1662 = vpack.c.b16 %v1212, %v1202
      %v1663 = vpack.c.b16 %v1213, %v1203
      %v1664 = vpack.c.b16 %v1214, %v1204
      %v1665 = vpack.c.b16 %v1225, %v1215
      %v1666 = vpack.c.b16 %v1226, %v1216
      %v1667 = vpack.c.b16 %v1227, %v1217
      %v1668 = vpack.c.b16 %v1228, %v1218
      %v1669 = vpack.c.b16 %v1229, %v1219
      %v1670 = vpack.c.b16 %v1230, %v1220
      %v1671 = vpack.c.b16 %v1231, %v1221
      %v1672 = vpack.c.b16 %v1232, %v1222
      %v1673 = vpack.c.b16 %v1233, %v1223
      %v1674 = vpack.c.b16 %v1234, %v1224
      %v1675 = vpack.c.b16 %v1245, %v1235
      %v1676 = vpack.c.b16 %v1246, %v1236
      %v1677 = vpack.c.b16 %v1247, %v1237
      %v1678 = vpack.c.b16 %v1248, %v1238
      %v1679 = vpack.c.b16 %v1249, %v1239
      %v1680 = vpack.c.b16 %v1250, %v1240
      %v1681 = vpack.c.b16 %v1251, %v1241
      %v1682 = vpack.c.b16 %v1252, %v1242
      %v1683 = vpack.c.b16 %v1253, %v1243
      %v1684 = vpack.c.b16 %v1254, %v1244
      %v1685 = vpack.c.b16 %v1265, %v1255
      %v1686 = vpack.c.b16 %v1266, %v1256
      %v1687 = vpack.c.b16 %v1267, %v1257
      %v1688 = vpack.c.b16 %v1268, %v1258
      %v1689 = vpack.c.b16 %v1269, %v1259
      %v1690 = vpack.c.b16 %v1270, %v1260
      %v1691 = vpack.c.b16 %v1271, %v1261
      %v1692 = vpack.c.b16 %v1272, %v1262
      %v1693 = vpack.c.b16 %v1273, %v1263
      %v1694 = vpack.c.b16 %v1274, %v1264
      %v1695 = vpack.c.b16 %v1285, %v1275
      %v1696 = vpack.c.b16 %v1286, %v1276
      %v1697 = vpack.c.b16 %v1287, %v1277
      %v1698 = vpack.c.b16 %v1288, %v1278
      %v1699 = vpack.c.b16 %v1289, %v1279
      %v1700 = vpack.c.b16 %v1290, %v1280
      %v1701 = vpack.c.b16 %v1291, %v1281
      %v1702 = vpack.c.b16 %v1292, %v1282
      %v1703 = vpack.c.b16 %v1293, %v1283
      %v1704 = vpack.c.b16 %v1294, %v1284
      %v1705 = vpack.c.b16 %v1305, %v1295
      %v1706 = vpack.c.b16 %v1306, %v1296
      %v1707 = vpack.c.b16 %v1307, %v1297
      %v1708 = vpack.c.b16 %v1308, %v1298
      %v1709 = vpack.c.b16 %v1309, %v1299
      %v1710 = vpack.c.b16 %v1310, %v1300
      %v1711 = vpack.c.b16 %v1311, %v1301
      %v1712 = vpack.c.b16 %v1312, %v1302
      %v1713 = vpack.c.b16 %v1313, %v1303
      %v1714 = vpack.c.b16 %v1314, %v1304
      %v1715 = vpack.c.b16 %v1325, %v1315
      %v1716 = vpack.c.b16 %v1326, %v1316
      %v1717 = vpack.c.b16 %v1327, %v1317
      %v1718 = vpack.c.b16 %v1328, %v1318
      %v1719 = vpack.c.b16 %v1329, %v1319
      %v1720 = vpack.c.b16 %v1330, %v1320
      %v1721 = vpack.c.b16 %v1331, %v1321
      %v1722 = vpack.c.b16 %v1332, %v1322
      %v1723 = vpack.c.b16 %v1333, %v1323
      %v1724 = vpack.c.b16 %v1334, %v1324
      %v1725 = vpack.c.b16 %v1345, %v1335
      %v1726 = vpack.c.b16 %v1346, %v1336
      %v1727 = vpack.c.b16 %v1347, %v1337
      %v1728 = vpack.c.b16 %v1348, %v1338
      %v1729 = vpack.c.b16 %v1349, %v1339
      %v1730 = vpack.c.b16 %v1350, %v1340
      %v1731 = vpack.c.b16 %v1351, %v1341
      %v1732 = vpack.c.b16 %v1352, %v1342
      %v1733 = vpack.c.b16 %v1353, %v1343
      %v1734 = vpack.c.b16 %v1354, %v1344
      %v1735 = vpack.c.b16 %v1365, %v1355
      %v1736 = vpack.c.b16 %v1366, %v1356
      %v1737 = vpack.c.b16 %v1367, %v1357
      %v1738 = vpack.c.b16 %v1368, %v1358
      %v1739 = vpack.c.b16 %v1369, %v1359
      %v1740 = vpack.c.b16 %v1370, %v1360
      %v1741 = vpack.c.b16 %v1371, %v1361
      %v1742 = vpack.c.b16 %v1372, %v1362
      %v1743 = vpack.c.b16 %v1373, %v1363
      %v1744 = vpack.c.b16 %v1374, %v1364
      %v1745 = vpack.c.b16 %v1385, %v1375
      %v1746 = vpack.c.b16 %v1386, %v1376
      %v1747 = vpack.c.b16 %v1387, %v1377
      %v1748 = vpack.c.b16 %v1388, %v1378
      %v1749 = vpack.c.b16 %v1389, %v1379
      %v1750 = vpack.c.b16 %v1390, %v1380
      %v1751 = vpack.c.b16 %v1391, %v1381
      %v1752 = vpack.c.b16 %v1392, %v1382
      %v1753 = vpack.c.b16 %v1393, %v1383
      %v1754 = vpack.c.b16 %v1394, %v1384
      %v1755 = vpack.c.b16 %v1405, %v1395
      %v1756 = vpack.c.b16 %v1406, %v1396
      %v1757 = vpack.c.b16 %v1407, %v1397
      %v1758 = vpack.c.b16 %v1408, %v1398
      %v1759 = vpack.c.b16 %v1409, %v1399
      %v1760 = vpack.c.b16 %v1410, %v1400
      %v1761 = vpack.c.b16 %v1411, %v1401
      %v1762 = vpack.c.b16 %v1412, %v1402
      %v1763 = vpack.c.b16 %v1413, %v1403
      %v1764 = vpack.c.b16 %v1414, %v1404
      %v1765 = vpack.c.b16 %v1425, %v1415
      %v1766 = vpack.c.b16 %v1426, %v1416
      %v1767 = vpack.c.b16 %v1427, %v1417
      %v1768 = vpack.c.b16 %v1428, %v1418
      %v1769 = vpack.c.b16 %v1429, %v1419
      %v1770 = vpack.c.b16 %v1430, %v1420
      %v1771 = vpack.c.b16 %v1431, %v1421
      %v1772 = vpack.c.b16 %v1432, %v1422
      %v1773 = vpack.c.b16 %v1433, %v1423
      %v1774 = vpack.c.b16 %v1434, %v1424
      %v1775 = vpack.c.b16 %v1445, %v1435
      %v1776 = vpack.c.b16 %v1446, %v1436
      %v1777 = vpack.c.b16 %v1447, %v1437
      %v1778 = vpack.c.b16 %v1448, %v1438
      %v1779 = vpack.c.b16 %v1449, %v1439
      %v1780 = vpack.c.b16 %v1450, %v1440
      %v1781 = vpack.c.b16 %v1451, %v1441
      %v1782 = vpack.c.b16 %v1452, %v1442
      %v1783 = vpack.c.b16 %v1453, %v1443
      %v1784 = vpack.c.b16 %v1454, %v1444
      %v1785 = vpack.c.b16 %v1465, %v1455
      %v1786 = vpack.c.b16 %v1466, %v1456
      %v1787 = vpack.c.b16 %v1467, %v1457
      %v1788 = vpack.c.b16 %v1468, %v1458
      %v1789 = vpack.c.b16 %v1469, %v1459
      %v1790 = vpack.c.b16 %v1470, %v1460
      %v1791 = vpack.c.b16 %v1471, %v1461
      %v1792 = vpack.c.b16 %v1472, %v1462
      %v1793 = vpack.c.b16 %v1473, %v1463
      %v1794 = vpack.c.b16 %v1474, %v1464
      %v1795 = vpack.c.b16 %v1485, %v1475
      %v1796 = vpack.c.b16 %v1486, %v1476
      %v1797 = vpack.c.b16 %v1487, %v1477
      %v1798 = vpack.c.b16 %v1488, %v1478
      %v1799 = vpack.c.b16 %v1489, %v1479
      %v1800 = vpack.c.b16 %v1490, %v1480
      %v1801 = vpack.c.b16 %v1491, %v1481
      %v1802 = vpack.c.b16 %v1492, %v1482
      %v1803 = vpack.c.b16 %v1493, %v1483
      %v1804 = vpack.c.b16 %v1494, %v1484
      %v1805 = vpack.c.b16 %v1505, %v1495
      %v1806 = vpack.c.b16 %v1506, %v1496
      %v1807 = vpack.c.b16 %v1507, %v1497
      %v1808 = vpack.c.b16 %v1508, %v1498
      %v1809 = vpack.c.b16 %v1509, %v1499
      %v1810 = vpack.c.b16 %v1510, %v1500
      %v1811 = vpack.c.b16 %v1511, %v1501
      %v1812 = vpack.c.b16 %v1512, %v1502
      %v1813 = vpack.c.b16 %v1513, %v1503
      %v1814 = vpack.c.b16 %v1514, %v1504
      %v1815 = vpack.c.b16 %v1525, %v1515
      %v1816 = vpack.c.b16 %v1526, %v1516
      %v1817 = vpack.c.b16 %v1527, %v1517
      %v1818 = vpack.c.b16 %v1528, %v1518
      %v1819 = vpack.c.b16 %v1529, %v1519
      %v1820 = vpack.c.b16 %v1530, %v1520
      %v1821 = vpack.c.b16 %v1531, %v1521
      %v1822 = vpack.c.b16 %v1532, %v1522
      %v1823 = vpack.c.b16 %v1533, %v1523
      %v1824 = vpack.c.b16 %v1534, %v1524
      %v1825 = vpack.c.b16 %v1535, %v1535
      %v1826 = vpack.c.b16 %v1536, %v1536
      %v1827 = vpack.c.b16 %v1537, %v1537
      %v1828 = vpack.c.b16 %v1538, %v1538
      %v1829 = vpack.c.b16 %v1539, %v1539
      %v1830 = vpack.c.b16 %v1540, %v1540
      %v1831 = vpack.c.b16 %v1541, %v1541
      %v1832 = vpack.c.b16 %v1542, %v1542
      %v1833 = vpack.c.b16 %v1543, %v1543
      %v1834 = vpack.c.b16 %v1544, %v1544
      %v2246 = vunpack.c.l.b16 %v533
      %v2247 = vunpack.c.l.b16 %v534
      %v2248 = vunpack.c.l.b16 %v535
      %v2249 = vunpack.c.l.b16 %v536
      %v2250 = vunpack.c.l.b16 %v537
      %v2251 = vunpack.c.l.b16 %v538
      %v2252 = vunpack.c.l.b16 %v539
      %v2253 = vunpack.c.l.b16 %v540
      %v2254 = vunpack.c.l.b16 %v541
      %v2255 = vunpack.c.l.b16 %v542
      %v2256 = vunpack.c.l.b16 %v543
      %v2257 = vunpack.c.l.b16 %v544
      %v2258 = vunpack.c.l.b16 %v545
      %v2259 = vunpack.c.l.b16 %v546
      %v2260 = vunpack.c.l.b16 %v547
      %v2261 = vunpack.c.l.b16 %v548
      %v2262 = vunpack.c.l.b16 %v549
      %v2263 = vunpack.c.l.b16 %v550
      %v2264 = vunpack.c.l.b16 %v551
      %v2265 = vunpack.c.l.b16 %v552
      %v2266 = vunpack.c.l.b16 %v553
      %v2267 = vunpack.c.l.b16 %v554
      %v2268 = vunpack.c.l.b16 %v555
      %v2269 = vunpack.c.l.b16 %v556
      %v2270 = vunpack.c.l.b16 %v557
      %v2271 = vunpack.c.l.b16 %v558
      %v2272 = vunpack.c.l.b16 %v559
      %v2273 = vunpack.c.l.b16 %v560
      %v2274 = vunpack.c.l.b16 %v561
      %v2275 = vunpack.c.l.b16 %v562
      %v2276 = vunpack.c.l.b16 %v563
      %v2277 = vunpack.c.l.b16 %v564
      %v2278 = vunpack.c.l.b16 %v565
      %v2279 = vunpack.c.l.b16 %v566
      %v2280 = vunpack.c.l.b16 %v567
      %v2281 = vunpack.c.l.b16 %v568
      %v2282 = vunpack.c.l.b16 %v569
      %v2283 = vunpack.c.l.b16 %v570
      %v2284 = vunpack.c.l.b16 %v571
      %v2285 = vunpack.c.l.b16 %v572
      %v2286 = vunpack.c.l.b16 %v573
      %v2287 = vunpack.c.l.b16 %v574
      %v2288 = vunpack.c.l.b16 %v575
      %v2289 = vunpack.c.l.b16 %v576
      %v2290 = vunpack.c.l.b16 %v577
      %v2291 = vunpack.c.l.b16 %v578
      %v2292 = vunpack.c.l.b16 %v579
      %v2293 = vunpack.c.l.b16 %v580
      %v2294 = vunpack.c.l.b16 %v581
      %v2295 = vunpack.c.l.b16 %v582
      %v2296 = vunpack.c.l.b16 %v583
      %v2297 = vunpack.c.l.b16 %v584
      %v2298 = vunpack.c.l.b16 %v585
      %v2299 = vunpack.c.l.b16 %v586
      %v2300 = vunpack.c.l.b16 %v587
      %v2301 = vunpack.c.l.b16 %v588
      %v2302 = vunpack.c.l.b16 %v589
      %v2303 = vunpack.c.l.b16 %v590
      %v2304 = vunpack.c.l.b16 %v591
      %v2305 = vunpack.c.l.b16 %v592
      %v2306 = vunpack.c.l.b16 %v593
      %v2307 = vunpack.c.l.b16 %v594
      %v2308 = vunpack.c.l.b16 %v595
      %v2309 = vunpack.c.l.b16 %v596
      %v2310 = vunpack.c.l.b16 %v597
      %v2311 = vunpack.c.l.b16 %v598
      %v2312 = vunpack.c.l.b16 %v599
      %v2313 = vunpack.c.l.b16 %v600
      %v2314 = vunpack.c.l.b16 %v601
      %v2315 = vunpack.c.l.b16 %v602
      %v2316 = vunpack.c.l.b16 %v603
      %v2317 = vunpack.c.l.b16 %v604
      %v2318 = vunpack.c.l.b16 %v605
      %v2319 = vunpack.c.l.b16 %v606
      %v2320 = vunpack.c.l.b16 %v607
      %v2321 = vunpack.c.l.b16 %v608
      %v2322 = vunpack.c.l.b16 %v609
      %v2323 = vunpack.c.l.b16 %v610
      %v2324 = vunpack.c.l.b16 %v611
      %v2325 = vunpack.c.l.b16 %v612
      %v2326 = vunpack.c.l.b16 %v613
      %v2327 = vunpack.c.l.b16 %v614
      %v2328 = vunpack.c.l.b16 %v615
      %v2329 = vunpack.c.l.b16 %v616
      %v2330 = vunpack.c.l.b16 %v617
      %v2331 = vunpack.c.l.b16 %v618
      %v2332 = vunpack.c.l.b16 %v619
      %v2333 = vunpack.c.l.b16 %v620
      %v2334 = vunpack.c.l.b16 %v621
      %v2335 = vunpack.c.l.b16 %v622
      %v2336 = vunpack.c.l.b16 %v623
      %v2337 = vunpack.c.l.b16 %v624
      %v2338 = vunpack.c.l.b16 %v625
      %v2339 = vunpack.c.l.b16 %v626
      %v2340 = vunpack.c.l.b16 %v627
      %v2341 = vunpack.c.l.b16 %v628
      %v2342 = vunpack.c.l.b16 %v629
      %v2343 = vunpack.c.l.b16 %v630
      %v2344 = vunpack.c.l.b16 %v631
      %v2345 = vunpack.c.l.b16 %v632
      %v2346 = vunpack.c.l.b16 %v633
      %v2347 = vunpack.c.l.b16 %v634
      %v2348 = vunpack.c.l.b16 %v635
      %v2349 = vunpack.c.l.b16 %v636
      %v2350 = vunpack.c.l.b16 %v637
      %v2351 = vunpack.c.l.b16 %v638
      %v2352 = vunpack.c.l.b16 %v639
      %v2353 = vunpack.c.l.b16 %v640
      %v2354 = vunpack.c.l.b16 %v641
      %v2355 = vunpack.c.l.b16 %v642
      %v2356 = vunpack.c.l.b16 %v643
      %v2357 = vunpack.c.l.b16 %v644
      %v2358 = vunpack.c.l.b16 %v645
      %v2359 = vunpack.c.l.b16 %v646
      %v2360 = vunpack.c.l.b16 %v647
      %v2361 = vunpack.c.l.b16 %v648
      %v2362 = vunpack.c.l.b16 %v649
      %v2363 = vunpack.c.l.b16 %v650
      %v2364 = vunpack.c.l.b16 %v651
      %v2365 = vunpack.c.l.b16 %v652
      %v2366 = vunpack.c.l.b16 %v653
      %v2367 = vunpack.c.l.b16 %v654
      %v2368 = vunpack.c.l.b16 %v655
      %v2369 = vunpack.c.l.b16 %v656
      %v2370 = vunpack.c.l.b16 %v657
      %v2371 = vunpack.c.l.b16 %v658
      %v2372 = vunpack.c.l.b16 %v659
      %v2373 = vunpack.c.l.b16 %v660
      %v2374 = vunpack.c.l.b16 %v661
      %v2375 = vunpack.c.l.b16 %v662
      %v2376 = vunpack.c.l.b16 %v663
      %v2377 = vunpack.c.l.b16 %v664
      %v2378 = vunpack.c.l.b16 %v665
      %v2379 = vunpack.c.l.b16 %v666
      %v2380 = vunpack.c.l.b16 %v667
      %v2381 = vunpack.c.l.b16 %v668
      %v2382 = vunpack.c.l.b16 %v669
      %v2383 = vunpack.c.l.b16 %v670
      %v2384 = vunpack.c.l.b16 %v671
      %v2385 = vunpack.c.l.b16 %v672
      %v2386 = vunpack.c.l.b16 %v673
      %v2387 = vunpack.c.l.b16 %v674
      %v2388 = vunpack.c.l.b16 %v675
      %v2389 = vunpack.c.l.b16 %v676
      %v2390 = vunpack.c.l.b16 %v677
      %v2391 = vunpack.c.l.b16 %v678
      %v2392 = vunpack.c.l.b16 %v679
      %v2393 = vunpack.c.l.b16 %v680
      %v2394 = vunpack.c.l.b16 %v681
      %v2395 = vunpack.c.l.b16 %v682
      %v2396 = vpack.c.b16 %v2247, %v2246
      %v2397 = vpack.c.b16 %v2249, %v2248
      %v2398 = vpack.c.b16 %v2251, %v2250
      %v2399 = vpack.c.b16 %v2253, %v2252
      %v2400 = vpack.c.b16 %v2255, %v2254
      %v2401 = vpack.c.b16 %v2257, %v2256
      %v2402 = vpack.c.b16 %v2259, %v2258
      %v2403 = vpack.c.b16 %v2261, %v2260
      %v2404 = vpack.c.b16 %v2263, %v2262
      %v2405 = vpack.c.b16 %v2265, %v2264
      %v2406 = vpack.c.b16 %v2267, %v2266
      %v2407 = vpack.c.b16 %v2269, %v2268
      %v2408 = vpack.c.b16 %v2271, %v2270
      %v2409 = vpack.c.b16 %v2273, %v2272
      %v2410 = vpack.c.b16 %v2275, %v2274
      %v2411 = vpack.c.b16 %v2277, %v2276
      %v2412 = vpack.c.b16 %v2279, %v2278
      %v2413 = vpack.c.b16 %v2281, %v2280
      %v2414 = vpack.c.b16 %v2283, %v2282
      %v2415 = vpack.c.b16 %v2285, %v2284
      %v2416 = vpack.c.b16 %v2287, %v2286
      %v2417 = vpack.c.b16 %v2289, %v2288
      %v2418 = vpack.c.b16 %v2291, %v2290
      %v2419 = vpack.c.b16 %v2293, %v2292
      %v2420 = vpack.c.b16 %v2295, %v2294
      %v2421 = vpack.c.b16 %v2297, %v2296
      %v2422 = vpack.c.b16 %v2299, %v2298
      %v2423 = vpack.c.b16 %v2301, %v2300
      %v2424 = vpack.c.b16 %v2303, %v2302
      %v2425 = vpack.c.b16 %v2305, %v2304
      %v2426 = vpack.c.b16 %v2307, %v2306
      %v2427 = vpack.c.b16 %v2309, %v2308
      %v2428 = vpack.c.b16 %v2311, %v2310
      %v2429 = vpack.c.b16 %v2313, %v2312
      %v2430 = vpack.c.b16 %v2315, %v2314
      %v2431 = vpack.c.b16 %v2317, %v2316
      %v2432 = vpack.c.b16 %v2319, %v2318
      %v2433 = vpack.c.b16 %v2321, %v2320
      %v2434 = vpack.c.b16 %v2323, %v2322
      %v2435 = vpack.c.b16 %v2325, %v2324
      %v2436 = vpack.c.b16 %v2327, %v2326
      %v2437 = vpack.c.b16 %v2329, %v2328
      %v2438 = vpack.c.b16 %v2331, %v2330
      %v2439 = vpack.c.b16 %v2333, %v2332
      %v2440 = vpack.c.b16 %v2335, %v2334
      %v2441 = vpack.c.b16 %v2337, %v2336
      %v2442 = vpack.c.b16 %v2339, %v2338
      %v2443 = vpack.c.b16 %v2341, %v2340
      %v2444 = vpack.c.b16 %v2343, %v2342
      %v2445 = vpack.c.b16 %v2345, %v2344
      %v2446 = vpack.c.b16 %v2347, %v2346
      %v2447 = vpack.c.b16 %v2349, %v2348
      %v2448 = vpack.c.b16 %v2351, %v2350
      %v2449 = vpack.c.b16 %v2353, %v2352
      %v2450 = vpack.c.b16 %v2355, %v2354
      %v2451 = vpack.c.b16 %v2357, %v2356
      %v2452 = vpack.c.b16 %v2359, %v2358
      %v2453 = vpack.c.b16 %v2361, %v2360
      %v2454 = vpack.c.b16 %v2363, %v2362
      %v2455 = vpack.c.b16 %v2365, %v2364
      %v2456 = vpack.c.b16 %v2367, %v2366
      %v2457 = vpack.c.b16 %v2369, %v2368
      %v2458 = vpack.c.b16 %v2371, %v2370
      %v2459 = vpack.c.b16 %v2373, %v2372
      %v2460 = vpack.c.b16 %v2375, %v2374
      %v2461 = vpack.c.b16 %v2377, %v2376
      %v2462 = vpack.c.b16 %v2379, %v2378
      %v2463 = vpack.c.b16 %v2381, %v2380
      %v2464 = vpack.c.b16 %v2383, %v2382
      %v2465 = vpack.c.b16 %v2385, %v2384
      %v2466 = vpack.c.b16 %v2387, %v2386
      %v2467 = vpack.c.b16 %v2389, %v2388
      %v2468 = vpack.c.b16 %v2391, %v2390
      %v2469 = vpack.c.b16 %v2393, %v2392
      %v2470 = vpack.c.b16 %v2395, %v2394
      %vm2546 = vcmask 392192
      %v2548 = vsel %vm2546, %v1554, 0
      %v2551 = vsel %vm2546, %v1564, 0
      %v2554 = vsel %vm2546, %v1574, 0
      %v2557 = vsel %vm2546, %v1584, 0
      %v2560 = vsel %vm2546, %v1594, 0
      %v2563 = vsel %vm2546, %v1604, 0
      %v2566 = vsel %vm2546, %v1614, 0
      %v2569 = vsel %vm2546, %v1624, 0
      %v2572 = vsel %vm2546, %v1634, 0
      %v2575 = vsel %vm2546, %v1644, 0
      %v2578 = vsel %vm2546, %v1654, 0
      %v2581 = vsel %vm2546, %v1664, 0
      %v2584 = vsel %vm2546, %v1674, 0
      %v2587 = vsel %vm2546, %v1684, 0
      %v2590 = vsel %vm2546, %v1694, 0
      %v2593 = vsel %vm2546, %v1704, 0
      %v2596 = vsel %vm2546, %v1714, 0
      %v2599 = vsel %vm2546, %v1724, 0
      %v2602 = vsel %vm2546, %v1734, 0
      %v2605 = vsel %vm2546, %v1744, 0
      %v2608 = vsel %vm2546, %v1754, 0
      %v2611 = vsel %vm2546, %v1764, 0
      %v2614 = vsel %vm2546, %v1774, 0
      %v2617 = vsel %vm2546, %v1784, 0
      %v2620 = vsel %vm2546, %v1794, 0
      %v2623 = vsel %vm2546, %v1804, 0
      %v2626 = vsel %vm2546, %v1814, 0
      %v2629 = vsel %vm2546, %v1824, 0
      %v2632 = vsel %vm2546, %v1834, 0
      %2634 = vmatprep.subr.bf16.mxu0 0
      %2635 = vmatpush1.bf16.msra.mxu0 %v2403
      %2636 = vmatprep.subr.bf16.mxu0 0
      %2637 = vmatpush1.bf16.msra.mxu0 %v2402
      %2638 = vmatprep.subr.bf16.mxu0 0
      %2639 = vmatpush1.bf16.msra.mxu0 %v2401
      %2640 = vmatprep.subr.bf16.mxu0 0
      %2641 = vmatpush1.bf16.msra.mxu0 %v2400
      %2642 = vmatprep.subr.bf16.mxu0 0
      %2643 = vmatpush1.bf16.msra.mxu0 %v2399
      %2644 = vmatprep.subr.bf16.mxu0 0
      %2645 = vmatpush1.bf16.msra.mxu0 %v2398
      %2646 = vmatprep.subr.bf16.mxu0 0
      %2647 = vmatpush1.bf16.msra.mxu0 %v2397
      %2648 = vmatprep.subr.bf16.mxu0 0
      %2649 = vmatpush1.bf16.msra.mxu0 %v2396
      %2650 = vmatprep.subr.bf16.mxu0 0
      %2651 = vmatpush2.bf16.msra.mxu0 %v2411
      %2652 = vmatprep.subr.bf16.mxu0 0
      %2653 = vmatpush2.bf16.msra.mxu0 %v2410
      %2654 = vmatprep.subr.bf16.mxu0 0
      %2655 = vmatpush2.bf16.msra.mxu0 %v2409
      %2656 = vmatprep.subr.bf16.mxu0 0
      %2657 = vmatpush2.bf16.msra.mxu0 %v2408
      %2658 = vmatprep.subr.bf16.mxu0 0
      %2659 = vmatpush2.bf16.msra.mxu0 %v2407
      %2660 = vmatprep.subr.bf16.mxu0 0
      %2661 = vmatpush2.bf16.msra.mxu0 %v2406
      %2662 = vmatprep.subr.bf16.mxu0 0
      %2663 = vmatpush2.bf16.msra.mxu0 %v2405
      %2664 = vmatprep.subr.bf16.mxu0 0
      %2665 = vmatpush2.bf16.msra.mxu0 %v2404
      %2666 = vmatprep.mubr.bf16.mxu0 %v1546
      %2667 = vmatmul.mubr.bf16.gmra.mxu0 %v1545
      %v2668 = vpop.f32.mrf.mxu0
      %v2669 = vadd.f32 %v688, %v2668
      %v2670 = vpop.f32.mrf.mxu0
      %v2671 = vpop.f32.mrf.mxu0
      %v2672 = vadd.f32 %v688, %v2671
      %v2673 = vpop.f32.mrf.mxu0
      %2674 = vmatprep.mubr.bf16.mxu0 %v1556
      %2675 = vmatmul.mubr.bf16.gmra.mxu0 %v1555
      %v2676 = vpop.f32.mrf.mxu0
      %v2677 = vadd.f32 %v688, %v2676
      %v2678 = vpop.f32.mrf.mxu0
      %v2679 = vpop.f32.mrf.mxu0
      %v2680 = vadd.f32 %v688, %v2679
      %v2681 = vpop.f32.mrf.mxu0
      %2682 = vmatprep.mubr.bf16.mxu0 %v1566
      %2683 = vmatmul.mubr.bf16.gmra.mxu0 %v1565
      %v2684 = vpop.f32.mrf.mxu0
      %v2685 = vadd.f32 %v688, %v2684
      %v2686 = vpop.f32.mrf.mxu0
      %v2687 = vpop.f32.mrf.mxu0
      %v2688 = vadd.f32 %v688, %v2687
      %v2689 = vpop.f32.mrf.mxu0
      %2690 = vmatprep.mubr.bf16.mxu0 %v1576
      %2691 = vmatmul.mubr.bf16.gmra.mxu0 %v1575
      %v2692 = vpop.f32.mrf.mxu0
      %v2693 = vadd.f32 %v688, %v2692
      %v2694 = vpop.f32.mrf.mxu0
      %v2695 = vpop.f32.mrf.mxu0
      %v2696 = vadd.f32 %v688, %v2695
      %v2697 = vpop.f32.mrf.mxu0
      %2698 = vmatprep.mubr.bf16.mxu0 %v1586
      %2699 = vmatmul.mubr.bf16.gmra.mxu0 %v1585
      %v2700 = vpop.f32.mrf.mxu0
      %v2701 = vadd.f32 %v688, %v2700
      %v2702 = vpop.f32.mrf.mxu0
      %v2703 = vpop.f32.mrf.mxu0
      %v2704 = vadd.f32 %v688, %v2703
      %v2705 = vpop.f32.mrf.mxu0
      %2706 = vmatprep.mubr.bf16.mxu0 %v1596
      %2707 = vmatmul.mubr.bf16.gmra.mxu0 %v1595
      %v2708 = vpop.f32.mrf.mxu0
      %v2709 = vadd.f32 %v688, %v2708
      %v2710 = vpop.f32.mrf.mxu0
      %v2711 = vpop.f32.mrf.mxu0
      %v2712 = vadd.f32 %v688, %v2711
      %v2713 = vpop.f32.mrf.mxu0
      %2714 = vmatprep.mubr.bf16.mxu0 %v1606
      %2715 = vmatmul.mubr.bf16.gmra.mxu0 %v1605
      %v2716 = vpop.f32.mrf.mxu0
      %v2717 = vadd.f32 %v688, %v2716
      %v2718 = vpop.f32.mrf.mxu0
      %v2719 = vpop.f32.mrf.mxu0
      %v2720 = vadd.f32 %v688, %v2719
      %v2721 = vpop.f32.mrf.mxu0
      %2722 = vmatprep.mubr.bf16.mxu0 %v1616
      %2723 = vmatmul.mubr.bf16.gmra.mxu0 %v1615
      %v2724 = vpop.f32.mrf.mxu0
      %v2725 = vadd.f32 %v688, %v2724
      %v2726 = vpop.f32.mrf.mxu0
      %v2727 = vpop.f32.mrf.mxu0
      %v2728 = vadd.f32 %v688, %v2727
      %v2729 = vpop.f32.mrf.mxu0
      %2730 = vmatprep.mubr.bf16.mxu0 %v1626
      %2731 = vmatmul.mubr.bf16.gmra.mxu0 %v1625
      %v2732 = vpop.f32.mrf.mxu0
      %v2733 = vadd.f32 %v688, %v2732
      %v2734 = vpop.f32.mrf.mxu0
      %v2735 = vpop.f32.mrf.mxu0
      %v2736 = vadd.f32 %v688, %v2735
      %v2737 = vpop.f32.mrf.mxu0
      %2738 = vmatprep.mubr.bf16.mxu0 %v1636
      %2739 = vmatmul.mubr.bf16.gmra.mxu0 %v1635
      %v2740 = vpop.f32.mrf.mxu0
      %v2741 = vadd.f32 %v688, %v2740
      %v2742 = vpop.f32.mrf.mxu0
      %v2743 = vpop.f32.mrf.mxu0
      %v2744 = vadd.f32 %v688, %v2743
      %v2745 = vpop.f32.mrf.mxu0
      %2746 = vmatprep.mubr.bf16.mxu0 %v1646
      %2747 = vmatmul.mubr.bf16.gmra.mxu0 %v1645
      %v2748 = vpop.f32.mrf.mxu0
      %v2749 = vadd.f32 %v688, %v2748
      %v2750 = vpop.f32.mrf.mxu0
      %v2751 = vpop.f32.mrf.mxu0
      %v2752 = vadd.f32 %v688, %v2751
      %v2753 = vpop.f32.mrf.mxu0
      %2754 = vmatprep.mubr.bf16.mxu0 %v1656
      %2755 = vmatmul.mubr.bf16.gmra.mxu0 %v1655
      %v2756 = vpop.f32.mrf.mxu0
      %v2757 = vadd.f32 %v688, %v2756
      %v2758 = vpop.f32.mrf.mxu0
      %v2759 = vpop.f32.mrf.mxu0
      %v2760 = vadd.f32 %v688, %v2759
      %v2761 = vpop.f32.mrf.mxu0
      %2762 = vmatprep.mubr.bf16.mxu0 %v1666
      %2763 = vmatmul.mubr.bf16.gmra.mxu0 %v1665
      %v2764 = vpop.f32.mrf.mxu0
      %v2765 = vadd.f32 %v688, %v2764
      %v2766 = vpop.f32.mrf.mxu0
      %v2767 = vpop.f32.mrf.mxu0
      %v2768 = vadd.f32 %v688, %v2767
      %v2769 = vpop.f32.mrf.mxu0
      %2770 = vmatprep.mubr.bf16.mxu0 %v1676
      %2771 = vmatmul.mubr.bf16.gmra.mxu0 %v1675
      %v2772 = vpop.f32.mrf.mxu0
      %v2773 = vadd.f32 %v688, %v2772
      %v2774 = vpop.f32.mrf.mxu0
      %v2775 = vpop.f32.mrf.mxu0
      %v2776 = vadd.f32 %v688, %v2775
      %v2777 = vpop.f32.mrf.mxu0
      %2778 = vmatprep.mubr.bf16.mxu0 %v1686
      %2779 = vmatmul.mubr.bf16.gmra.mxu0 %v1685
      %v2780 = vpop.f32.mrf.mxu0
      %v2781 = vadd.f32 %v688, %v2780
      %v2782 = vpop.f32.mrf.mxu0
      %v2783 = vpop.f32.mrf.mxu0
      %v2784 = vadd.f32 %v688, %v2783
      %v2785 = vpop.f32.mrf.mxu0
      %2786 = vmatprep.mubr.bf16.mxu0 %v1696
      %2787 = vmatmul.mubr.bf16.gmra.mxu0 %v1695
      %v2788 = vpop.f32.mrf.mxu0
      %v2789 = vadd.f32 %v688, %v2788
      %v2790 = vpop.f32.mrf.mxu0
      %v2791 = vpop.f32.mrf.mxu0
      %v2792 = vadd.f32 %v688, %v2791
      %v2793 = vpop.f32.mrf.mxu0
      %2794 = vmatprep.mubr.bf16.mxu0 %v1706
      %2795 = vmatmul.mubr.bf16.gmra.mxu0 %v1705
      %v2796 = vpop.f32.mrf.mxu0
      %v2797 = vadd.f32 %v688, %v2796
      %v2798 = vpop.f32.mrf.mxu0
      %v2799 = vpop.f32.mrf.mxu0
      %v2800 = vadd.f32 %v688, %v2799
      %v2801 = vpop.f32.mrf.mxu0
      %2802 = vmatprep.mubr.bf16.mxu0 %v1716
      %2803 = vmatmul.mubr.bf16.gmra.mxu0 %v1715
      %v2804 = vpop.f32.mrf.mxu0
      %v2805 = vadd.f32 %v688, %v2804
      %v2806 = vpop.f32.mrf.mxu0
      %v2807 = vpop.f32.mrf.mxu0
      %v2808 = vadd.f32 %v688, %v2807
      %v2809 = vpop.f32.mrf.mxu0
      %2810 = vmatprep.mubr.bf16.mxu0 %v1726
      %2811 = vmatmul.mubr.bf16.gmra.mxu0 %v1725
      %v2812 = vpop.f32.mrf.mxu0
      %v2813 = vadd.f32 %v688, %v2812
      %v2814 = vpop.f32.mrf.mxu0
      %v2815 = vpop.f32.mrf.mxu0
      %v2816 = vadd.f32 %v688, %v2815
      %v2817 = vpop.f32.mrf.mxu0
      %2818 = vmatprep.mubr.bf16.mxu0 %v1736
      %2819 = vmatmul.mubr.bf16.gmra.mxu0 %v1735
      %v2820 = vpop.f32.mrf.mxu0
      %v2821 = vadd.f32 %v688, %v2820
      %v2822 = vpop.f32.mrf.mxu0
      %v2823 = vpop.f32.mrf.mxu0
      %v2824 = vadd.f32 %v688, %v2823
      %v2825 = vpop.f32.mrf.mxu0
      %2826 = vmatprep.mubr.bf16.mxu0 %v1746
      %2827 = vmatmul.mubr.bf16.gmra.mxu0 %v1745
      %v2828 = vpop.f32.mrf.mxu0
      %v2829 = vadd.f32 %v688, %v2828
      %v2830 = vpop.f32.mrf.mxu0
      %v2831 = vpop.f32.mrf.mxu0
      %v2832 = vadd.f32 %v688, %v2831
      %v2833 = vpop.f32.mrf.mxu0
      %2834 = vmatprep.mubr.bf16.mxu0 %v1756
      %2835 = vmatmul.mubr.bf16.gmra.mxu0 %v1755
      %v2836 = vpop.f32.mrf.mxu0
      %v2837 = vadd.f32 %v688, %v2836
      %v2838 = vpop.f32.mrf.mxu0
      %v2839 = vpop.f32.mrf.mxu0
      %v2840 = vadd.f32 %v688, %v2839
      %v2841 = vpop.f32.mrf.mxu0
      %2842 = vmatprep.mubr.bf16.mxu0 %v1766
      %2843 = vmatmul.mubr.bf16.gmra.mxu0 %v1765
      %v2844 = vpop.f32.mrf.mxu0
      %v2845 = vadd.f32 %v688, %v2844
      %v2846 = vpop.f32.mrf.mxu0
      %v2847 = vpop.f32.mrf.mxu0
      %v2848 = vadd.f32 %v688, %v2847
      %v2849 = vpop.f32.mrf.mxu0
      %2850 = vmatprep.mubr.bf16.mxu0 %v1776
      %2851 = vmatmul.mubr.bf16.gmra.mxu0 %v1775
      %v2852 = vpop.f32.mrf.mxu0
      %v2853 = vadd.f32 %v688, %v2852
      %v2854 = vpop.f32.mrf.mxu0
      %v2855 = vpop.f32.mrf.mxu0
      %v2856 = vadd.f32 %v688, %v2855
      %v2857 = vpop.f32.mrf.mxu0
      %2858 = vmatprep.mubr.bf16.mxu0 %v1786
      %2859 = vmatmul.mubr.bf16.gmra.mxu0 %v1785
      %v2860 = vpop.f32.mrf.mxu0
      %v2861 = vadd.f32 %v688, %v2860
      %v2862 = vpop.f32.mrf.mxu0
      %v2863 = vpop.f32.mrf.mxu0
      %v2864 = vadd.f32 %v688, %v2863
      %v2865 = vpop.f32.mrf.mxu0
      %2866 = vmatprep.mubr.bf16.mxu0 %v1796
      %2867 = vmatmul.mubr.bf16.gmra.mxu0 %v1795
      %v2868 = vpop.f32.mrf.mxu0
      %v2869 = vadd.f32 %v688, %v2868
      %v2870 = vpop.f32.mrf.mxu0
      %v2871 = vpop.f32.mrf.mxu0
      %v2872 = vadd.f32 %v688, %v2871
      %v2873 = vpop.f32.mrf.mxu0
      %2874 = vmatprep.mubr.bf16.mxu0 %v1806
      %2875 = vmatmul.mubr.bf16.gmra.mxu0 %v1805
      %v2876 = vpop.f32.mrf.mxu0
      %v2877 = vadd.f32 %v688, %v2876
      %v2878 = vpop.f32.mrf.mxu0
      %v2879 = vpop.f32.mrf.mxu0
      %v2880 = vadd.f32 %v688, %v2879
      %v2881 = vpop.f32.mrf.mxu0
      %2882 = vmatprep.mubr.bf16.mxu0 %v1816
      %2883 = vmatmul.mubr.bf16.gmra.mxu0 %v1815
      %v2884 = vpop.f32.mrf.mxu0
      %v2885 = vadd.f32 %v688, %v2884
      %v2886 = vpop.f32.mrf.mxu0
      %v2887 = vpop.f32.mrf.mxu0
      %v2888 = vadd.f32 %v688, %v2887
      %v2889 = vpop.f32.mrf.mxu0
      %2890 = vmatprep.mubr.bf16.mxu0 %v1826
      %2891 = vmatmul.mubr.bf16.gmra.mxu0 %v1825
      %v2892 = vpop.f32.mrf.mxu0
      %v2893 = vadd.f32 %v688, %v2892
      %v2894 = vpop.f32.mrf.mxu0
      %v2895 = vpop.f32.mrf.mxu0
      %v2896 = vpop.f32.mrf.mxu0
      %2897 = vdwg.mxu0
      %2898 = vmatprep.subr.bf16.mxu0 0
      %2899 = vmatpush1.bf16.msra.mxu0 %v2419
      %2900 = vmatprep.subr.bf16.mxu0 0
      %2901 = vmatpush1.bf16.msra.mxu0 %v2418
      %2902 = vmatprep.subr.bf16.mxu0 0
      %2903 = vmatpush1.bf16.msra.mxu0 %v2417
      %2904 = vmatprep.subr.bf16.mxu0 0
      %2905 = vmatpush1.bf16.msra.mxu0 %v2416
      %2906 = vmatprep.subr.bf16.mxu0 0
      %2907 = vmatpush1.bf16.msra.mxu0 %v2415
      %2908 = vmatprep.subr.bf16.mxu0 0
      %2909 = vmatpush1.bf16.msra.mxu0 %v2414
      %2910 = vmatprep.subr.bf16.mxu0 0
      %2911 = vmatpush1.bf16.msra.mxu0 %v2413
      %2912 = vmatprep.subr.bf16.mxu0 0
      %2913 = vmatpush1.bf16.msra.mxu0 %v2412
      %2914 = vmatprep.subr.bf16.mxu0 0
      %2915 = vmatpush2.bf16.msra.mxu0 %v2427
      %2916 = vmatprep.subr.bf16.mxu0 0
      %2917 = vmatpush2.bf16.msra.mxu0 %v2426
      %2918 = vmatprep.subr.bf16.mxu0 0
      %2919 = vmatpush2.bf16.msra.mxu0 %v2425
      %2920 = vmatprep.subr.bf16.mxu0 0
      %2921 = vmatpush2.bf16.msra.mxu0 %v2424
      %2922 = vmatprep.subr.bf16.mxu0 0
      %2923 = vmatpush2.bf16.msra.mxu0 %v2423
      %2924 = vmatprep.subr.bf16.mxu0 0
      %2925 = vmatpush2.bf16.msra.mxu0 %v2422
      %2926 = vmatprep.subr.bf16.mxu0 0
      %2927 = vmatpush2.bf16.msra.mxu0 %v2421
      %2928 = vmatprep.subr.bf16.mxu0 0
      %2929 = vmatpush2.bf16.msra.mxu0 %v2420
      %2930 = vmatprep.mubr.bf16.mxu0 %v1548
      %2931 = vmatmul.mubr.bf16.gmra.mxu0 %v1547
      %v2932 = vpop.f32.mrf.mxu0
      %v2933 = vadd.f32 %v2669, %v2932
      %v2934 = vpop.f32.mrf.mxu0
      %v2935 = vpop.f32.mrf.mxu0
      %v2936 = vadd.f32 %v2672, %v2935
      %v2937 = vpop.f32.mrf.mxu0
      %2938 = vmatprep.mubr.bf16.mxu0 %v1558
      %2939 = vmatmul.mubr.bf16.gmra.mxu0 %v1557
      %v2940 = vpop.f32.mrf.mxu0
      %v2941 = vadd.f32 %v2677, %v2940
      %v2942 = vpop.f32.mrf.mxu0
      %v2943 = vpop.f32.mrf.mxu0
      %v2944 = vadd.f32 %v2680, %v2943
      %v2945 = vpop.f32.mrf.mxu0
      %2946 = vmatprep.mubr.bf16.mxu0 %v1568
      %2947 = vmatmul.mubr.bf16.gmra.mxu0 %v1567
      %v2948 = vpop.f32.mrf.mxu0
      %v2949 = vadd.f32 %v2685, %v2948
      %v2950 = vpop.f32.mrf.mxu0
      %v2951 = vpop.f32.mrf.mxu0
      %v2952 = vadd.f32 %v2688, %v2951
      %v2953 = vpop.f32.mrf.mxu0
      %2954 = vmatprep.mubr.bf16.mxu0 %v1578
      %2955 = vmatmul.mubr.bf16.gmra.mxu0 %v1577
      %v2956 = vpop.f32.mrf.mxu0
      %v2957 = vadd.f32 %v2693, %v2956
      %v2958 = vpop.f32.mrf.mxu0
      %v2959 = vpop.f32.mrf.mxu0
      %v2960 = vadd.f32 %v2696, %v2959
      %v2961 = vpop.f32.mrf.mxu0
      %2962 = vmatprep.mubr.bf16.mxu0 %v1588
      %2963 = vmatmul.mubr.bf16.gmra.mxu0 %v1587
      %v2964 = vpop.f32.mrf.mxu0
      %v2965 = vadd.f32 %v2701, %v2964
      %v2966 = vpop.f32.mrf.mxu0
      %v2967 = vpop.f32.mrf.mxu0
      %v2968 = vadd.f32 %v2704, %v2967
      %v2969 = vpop.f32.mrf.mxu0
      %2970 = vmatprep.mubr.bf16.mxu0 %v1598
      %2971 = vmatmul.mubr.bf16.gmra.mxu0 %v1597
      %v2972 = vpop.f32.mrf.mxu0
      %v2973 = vadd.f32 %v2709, %v2972
      %v2974 = vpop.f32.mrf.mxu0
      %v2975 = vpop.f32.mrf.mxu0
      %v2976 = vadd.f32 %v2712, %v2975
      %v2977 = vpop.f32.mrf.mxu0
      %2978 = vmatprep.mubr.bf16.mxu0 %v1608
      %2979 = vmatmul.mubr.bf16.gmra.mxu0 %v1607
      %v2980 = vpop.f32.mrf.mxu0
      %v2981 = vadd.f32 %v2717, %v2980
      %v2982 = vpop.f32.mrf.mxu0
      %v2983 = vpop.f32.mrf.mxu0
      %v2984 = vadd.f32 %v2720, %v2983
      %v2985 = vpop.f32.mrf.mxu0
      %2986 = vmatprep.mubr.bf16.mxu0 %v1618
      %2987 = vmatmul.mubr.bf16.gmra.mxu0 %v1617
      %v2988 = vpop.f32.mrf.mxu0
      %v2989 = vadd.f32 %v2725, %v2988
      %v2990 = vpop.f32.mrf.mxu0
      %v2991 = vpop.f32.mrf.mxu0
      %v2992 = vadd.f32 %v2728, %v2991
      %v2993 = vpop.f32.mrf.mxu0
      %2994 = vmatprep.mubr.bf16.mxu0 %v1628
      %2995 = vmatmul.mubr.bf16.gmra.mxu0 %v1627
      %v2996 = vpop.f32.mrf.mxu0
      %v2997 = vadd.f32 %v2733, %v2996
      %v2998 = vpop.f32.mrf.mxu0
      %v2999 = vpop.f32.mrf.mxu0
      %v3000 = vadd.f32 %v2736, %v2999
      %v3001 = vpop.f32.mrf.mxu0
      %3002 = vmatprep.mubr.bf16.mxu0 %v1638
      %3003 = vmatmul.mubr.bf16.gmra.mxu0 %v1637
      %v3004 = vpop.f32.mrf.mxu0
      %v3005 = vadd.f32 %v2741, %v3004
      %v3006 = vpop.f32.mrf.mxu0
      %v3007 = vpop.f32.mrf.mxu0
      %v3008 = vadd.f32 %v2744, %v3007
      %v3009 = vpop.f32.mrf.mxu0
      %3010 = vmatprep.mubr.bf16.mxu0 %v1648
      %3011 = vmatmul.mubr.bf16.gmra.mxu0 %v1647
      %v3012 = vpop.f32.mrf.mxu0
      %v3013 = vadd.f32 %v2749, %v3012
      %v3014 = vpop.f32.mrf.mxu0
      %v3015 = vpop.f32.mrf.mxu0
      %v3016 = vadd.f32 %v2752, %v3015
      %v3017 = vpop.f32.mrf.mxu0
      %3018 = vmatprep.mubr.bf16.mxu0 %v1658
      %3019 = vmatmul.mubr.bf16.gmra.mxu0 %v1657
      %v3020 = vpop.f32.mrf.mxu0
      %v3021 = vadd.f32 %v2757, %v3020
      %v3022 = vpop.f32.mrf.mxu0
      %v3023 = vpop.f32.mrf.mxu0
      %v3024 = vadd.f32 %v2760, %v3023
      %v3025 = vpop.f32.mrf.mxu0
      %3026 = vmatprep.mubr.bf16.mxu0 %v1668
      %3027 = vmatmul.mubr.bf16.gmra.mxu0 %v1667
      %v3028 = vpop.f32.mrf.mxu0
      %v3029 = vadd.f32 %v2765, %v3028
      %v3030 = vpop.f32.mrf.mxu0
      %v3031 = vpop.f32.mrf.mxu0
      %v3032 = vadd.f32 %v2768, %v3031
      %v3033 = vpop.f32.mrf.mxu0
      %3034 = vmatprep.mubr.bf16.mxu0 %v1678
      %3035 = vmatmul.mubr.bf16.gmra.mxu0 %v1677
      %v3036 = vpop.f32.mrf.mxu0
      %v3037 = vadd.f32 %v2773, %v3036
      %v3038 = vpop.f32.mrf.mxu0
      %v3039 = vpop.f32.mrf.mxu0
      %v3040 = vadd.f32 %v2776, %v3039
      %v3041 = vpop.f32.mrf.mxu0
      %3042 = vmatprep.mubr.bf16.mxu0 %v1688
      %3043 = vmatmul.mubr.bf16.gmra.mxu0 %v1687
      %v3044 = vpop.f32.mrf.mxu0
      %v3045 = vadd.f32 %v2781, %v3044
      %v3046 = vpop.f32.mrf.mxu0
      %v3047 = vpop.f32.mrf.mxu0
      %v3048 = vadd.f32 %v2784, %v3047
      %v3049 = vpop.f32.mrf.mxu0
      %3050 = vmatprep.mubr.bf16.mxu0 %v1698
      %3051 = vmatmul.mubr.bf16.gmra.mxu0 %v1697
      %v3052 = vpop.f32.mrf.mxu0
      %v3053 = vadd.f32 %v2789, %v3052
      %v3054 = vpop.f32.mrf.mxu0
      %v3055 = vpop.f32.mrf.mxu0
      %v3056 = vadd.f32 %v2792, %v3055
      %v3057 = vpop.f32.mrf.mxu0
      %3058 = vmatprep.mubr.bf16.mxu0 %v1708
      %3059 = vmatmul.mubr.bf16.gmra.mxu0 %v1707
      %v3060 = vpop.f32.mrf.mxu0
      %v3061 = vadd.f32 %v2797, %v3060
      %v3062 = vpop.f32.mrf.mxu0
      %v3063 = vpop.f32.mrf.mxu0
      %v3064 = vadd.f32 %v2800, %v3063
      %v3065 = vpop.f32.mrf.mxu0
      %3066 = vmatprep.mubr.bf16.mxu0 %v1718
      %3067 = vmatmul.mubr.bf16.gmra.mxu0 %v1717
      %v3068 = vpop.f32.mrf.mxu0
      %v3069 = vadd.f32 %v2805, %v3068
      %v3070 = vpop.f32.mrf.mxu0
      %v3071 = vpop.f32.mrf.mxu0
      %v3072 = vadd.f32 %v2808, %v3071
      %v3073 = vpop.f32.mrf.mxu0
      %3074 = vmatprep.mubr.bf16.mxu0 %v1728
      %3075 = vmatmul.mubr.bf16.gmra.mxu0 %v1727
      %v3076 = vpop.f32.mrf.mxu0
      %v3077 = vadd.f32 %v2813, %v3076
      %v3078 = vpop.f32.mrf.mxu0
      %v3079 = vpop.f32.mrf.mxu0
      %v3080 = vadd.f32 %v2816, %v3079
      %v3081 = vpop.f32.mrf.mxu0
      %3082 = vmatprep.mubr.bf16.mxu0 %v1738
      %3083 = vmatmul.mubr.bf16.gmra.mxu0 %v1737
      %v3084 = vpop.f32.mrf.mxu0
      %v3085 = vadd.f32 %v2821, %v3084
      %v3086 = vpop.f32.mrf.mxu0
      %v3087 = vpop.f32.mrf.mxu0
      %v3088 = vadd.f32 %v2824, %v3087
      %v3089 = vpop.f32.mrf.mxu0
      %3090 = vmatprep.mubr.bf16.mxu0 %v1748
      %3091 = vmatmul.mubr.bf16.gmra.mxu0 %v1747
      %v3092 = vpop.f32.mrf.mxu0
      %v3093 = vadd.f32 %v2829, %v3092
      %v3094 = vpop.f32.mrf.mxu0
      %v3095 = vpop.f32.mrf.mxu0
      %v3096 = vadd.f32 %v2832, %v3095
      %v3097 = vpop.f32.mrf.mxu0
      %3098 = vmatprep.mubr.bf16.mxu0 %v1758
      %3099 = vmatmul.mubr.bf16.gmra.mxu0 %v1757
      %v3100 = vpop.f32.mrf.mxu0
      %v3101 = vadd.f32 %v2837, %v3100
      %v3102 = vpop.f32.mrf.mxu0
      %v3103 = vpop.f32.mrf.mxu0
      %v3104 = vadd.f32 %v2840, %v3103
      %v3105 = vpop.f32.mrf.mxu0
      %3106 = vmatprep.mubr.bf16.mxu0 %v1768
      %3107 = vmatmul.mubr.bf16.gmra.mxu0 %v1767
      %v3108 = vpop.f32.mrf.mxu0
      %v3109 = vadd.f32 %v2845, %v3108
      %v3110 = vpop.f32.mrf.mxu0
      %v3111 = vpop.f32.mrf.mxu0
      %v3112 = vadd.f32 %v2848, %v3111
      %v3113 = vpop.f32.mrf.mxu0
      %3114 = vmatprep.mubr.bf16.mxu0 %v1778
      %3115 = vmatmul.mubr.bf16.gmra.mxu0 %v1777
      %v3116 = vpop.f32.mrf.mxu0
      %v3117 = vadd.f32 %v2853, %v3116
      %v3118 = vpop.f32.mrf.mxu0
      %v3119 = vpop.f32.mrf.mxu0
      %v3120 = vadd.f32 %v2856, %v3119
      %v3121 = vpop.f32.mrf.mxu0
      %3122 = vmatprep.mubr.bf16.mxu0 %v1788
      %3123 = vmatmul.mubr.bf16.gmra.mxu0 %v1787
      %v3124 = vpop.f32.mrf.mxu0
      %v3125 = vadd.f32 %v2861, %v3124
      %v3126 = vpop.f32.mrf.mxu0
      %v3127 = vpop.f32.mrf.mxu0
      %v3128 = vadd.f32 %v2864, %v3127
      %v3129 = vpop.f32.mrf.mxu0
      %3130 = vmatprep.mubr.bf16.mxu0 %v1798
      %3131 = vmatmul.mubr.bf16.gmra.mxu0 %v1797
      %v3132 = vpop.f32.mrf.mxu0
      %v3133 = vadd.f32 %v2869, %v3132
      %v3134 = vpop.f32.mrf.mxu0
      %v3135 = vpop.f32.mrf.mxu0
      %v3136 = vadd.f32 %v2872, %v3135
      %v3137 = vpop.f32.mrf.mxu0
      %3138 = vmatprep.mubr.bf16.mxu0 %v1808
      %3139 = vmatmul.mubr.bf16.gmra.mxu0 %v1807
      %v3140 = vpop.f32.mrf.mxu0
      %v3141 = vadd.f32 %v2877, %v3140
      %v3142 = vpop.f32.mrf.mxu0
      %v3143 = vpop.f32.mrf.mxu0
      %v3144 = vadd.f32 %v2880, %v3143
      %v3145 = vpop.f32.mrf.mxu0
      %3146 = vmatprep.mubr.bf16.mxu0 %v1818
      %3147 = vmatmul.mubr.bf16.gmra.mxu0 %v1817
      %v3148 = vpop.f32.mrf.mxu0
      %v3149 = vadd.f32 %v2885, %v3148
      %v3150 = vpop.f32.mrf.mxu0
      %v3151 = vpop.f32.mrf.mxu0
      %v3152 = vadd.f32 %v2888, %v3151
      %v3153 = vpop.f32.mrf.mxu0
      %3154 = vmatprep.mubr.bf16.mxu0 %v1828
      %3155 = vmatmul.mubr.bf16.gmra.mxu0 %v1827
      %v3156 = vpop.f32.mrf.mxu0
      %v3157 = vadd.f32 %v2893, %v3156
      %v3158 = vpop.f32.mrf.mxu0
      %v3159 = vpop.f32.mrf.mxu0
      %v3160 = vpop.f32.mrf.mxu0
      %3161 = vdwg.mxu0
      %3162 = vmatprep.subr.bf16.mxu0 0
      %3163 = vmatpush1.bf16.msra.mxu0 %v2435
      %3164 = vmatprep.subr.bf16.mxu0 0
      %3165 = vmatpush1.bf16.msra.mxu0 %v2434
      %3166 = vmatprep.subr.bf16.mxu0 0
      %3167 = vmatpush1.bf16.msra.mxu0 %v2433
      %3168 = vmatprep.subr.bf16.mxu0 0
      %3169 = vmatpush1.bf16.msra.mxu0 %v2432
      %3170 = vmatprep.subr.bf16.mxu0 0
      %3171 = vmatpush1.bf16.msra.mxu0 %v2431
      %3172 = vmatprep.subr.bf16.mxu0 0
      %3173 = vmatpush1.bf16.msra.mxu0 %v2430
      %3174 = vmatprep.subr.bf16.mxu0 0
      %3175 = vmatpush1.bf16.msra.mxu0 %v2429
      %3176 = vmatprep.subr.bf16.mxu0 0
      %3177 = vmatpush1.bf16.msra.mxu0 %v2428
      %3178 = vmatprep.subr.bf16.mxu0 0
      %3179 = vmatpush2.bf16.msra.mxu0 %v2443
      %3180 = vmatprep.subr.bf16.mxu0 0
      %3181 = vmatpush2.bf16.msra.mxu0 %v2442
      %3182 = vmatprep.subr.bf16.mxu0 0
      %3183 = vmatpush2.bf16.msra.mxu0 %v2441
      %3184 = vmatprep.subr.bf16.mxu0 0
      %3185 = vmatpush2.bf16.msra.mxu0 %v2440
      %3186 = vmatprep.subr.bf16.mxu0 0
      %3187 = vmatpush2.bf16.msra.mxu0 %v2439
      %3188 = vmatprep.subr.bf16.mxu0 0
      %3189 = vmatpush2.bf16.msra.mxu0 %v2438
      %3190 = vmatprep.subr.bf16.mxu0 0
      %3191 = vmatpush2.bf16.msra.mxu0 %v2437
      %3192 = vmatprep.subr.bf16.mxu0 0
      %3193 = vmatpush2.bf16.msra.mxu0 %v2436
      %3194 = vmatprep.mubr.bf16.mxu0 %v1550
      %3195 = vmatmul.mubr.bf16.gmra.mxu0 %v1549
      %v3196 = vpop.f32.mrf.mxu0
      %v3197 = vadd.f32 %v2933, %v3196
      %v3198 = vpop.f32.mrf.mxu0
      %v3199 = vpop.f32.mrf.mxu0
      %v3200 = vadd.f32 %v2936, %v3199
      %v3201 = vpop.f32.mrf.mxu0
      %3202 = vmatprep.mubr.bf16.mxu0 %v1560
      %3203 = vmatmul.mubr.bf16.gmra.mxu0 %v1559
      %v3204 = vpop.f32.mrf.mxu0
      %v3205 = vadd.f32 %v2941, %v3204
      %v3206 = vpop.f32.mrf.mxu0
      %v3207 = vpop.f32.mrf.mxu0
      %v3208 = vadd.f32 %v2944, %v3207
      %v3209 = vpop.f32.mrf.mxu0
      %3210 = vmatprep.mubr.bf16.mxu0 %v1570
      %3211 = vmatmul.mubr.bf16.gmra.mxu0 %v1569
      %v3212 = vpop.f32.mrf.mxu0
      %v3213 = vadd.f32 %v2949, %v3212
      %v3214 = vpop.f32.mrf.mxu0
      %v3215 = vpop.f32.mrf.mxu0
      %v3216 = vadd.f32 %v2952, %v3215
      %v3217 = vpop.f32.mrf.mxu0
      %3218 = vmatprep.mubr.bf16.mxu0 %v1580
      %3219 = vmatmul.mubr.bf16.gmra.mxu0 %v1579
      %v3220 = vpop.f32.mrf.mxu0
      %v3221 = vadd.f32 %v2957, %v3220
      %v3222 = vpop.f32.mrf.mxu0
      %v3223 = vpop.f32.mrf.mxu0
      %v3224 = vadd.f32 %v2960, %v3223
      %v3225 = vpop.f32.mrf.mxu0
      %3226 = vmatprep.mubr.bf16.mxu0 %v1590
      %3227 = vmatmul.mubr.bf16.gmra.mxu0 %v1589
      %v3228 = vpop.f32.mrf.mxu0
      %v3229 = vadd.f32 %v2965, %v3228
      %v3230 = vpop.f32.mrf.mxu0
      %v3231 = vpop.f32.mrf.mxu0
      %v3232 = vadd.f32 %v2968, %v3231
      %v3233 = vpop.f32.mrf.mxu0
      %3234 = vmatprep.mubr.bf16.mxu0 %v1600
      %3235 = vmatmul.mubr.bf16.gmra.mxu0 %v1599
      %v3236 = vpop.f32.mrf.mxu0
      %v3237 = vadd.f32 %v2973, %v3236
      %v3238 = vpop.f32.mrf.mxu0
      %v3239 = vpop.f32.mrf.mxu0
      %v3240 = vadd.f32 %v2976, %v3239
      %v3241 = vpop.f32.mrf.mxu0
      %3242 = vmatprep.mubr.bf16.mxu0 %v1610
      %3243 = vmatmul.mubr.bf16.gmra.mxu0 %v1609
      %v3244 = vpop.f32.mrf.mxu0
      %v3245 = vadd.f32 %v2981, %v3244
      %v3246 = vpop.f32.mrf.mxu0
      %v3247 = vpop.f32.mrf.mxu0
      %v3248 = vadd.f32 %v2984, %v3247
      %v3249 = vpop.f32.mrf.mxu0
      %3250 = vmatprep.mubr.bf16.mxu0 %v1620
      %3251 = vmatmul.mubr.bf16.gmra.mxu0 %v1619
      %v3252 = vpop.f32.mrf.mxu0
      %v3253 = vadd.f32 %v2989, %v3252
      %v3254 = vpop.f32.mrf.mxu0
      %v3255 = vpop.f32.mrf.mxu0
      %v3256 = vadd.f32 %v2992, %v3255
      %v3257 = vpop.f32.mrf.mxu0
      %3258 = vmatprep.mubr.bf16.mxu0 %v1630
      %3259 = vmatmul.mubr.bf16.gmra.mxu0 %v1629
      %v3260 = vpop.f32.mrf.mxu0
      %v3261 = vadd.f32 %v2997, %v3260
      %v3262 = vpop.f32.mrf.mxu0
      %v3263 = vpop.f32.mrf.mxu0
      %v3264 = vadd.f32 %v3000, %v3263
      %v3265 = vpop.f32.mrf.mxu0
      %3266 = vmatprep.mubr.bf16.mxu0 %v1640
      %3267 = vmatmul.mubr.bf16.gmra.mxu0 %v1639
      %v3268 = vpop.f32.mrf.mxu0
      %v3269 = vadd.f32 %v3005, %v3268
      %v3270 = vpop.f32.mrf.mxu0
      %v3271 = vpop.f32.mrf.mxu0
      %v3272 = vadd.f32 %v3008, %v3271
      %v3273 = vpop.f32.mrf.mxu0
      %3274 = vmatprep.mubr.bf16.mxu0 %v1650
      %3275 = vmatmul.mubr.bf16.gmra.mxu0 %v1649
      %v3276 = vpop.f32.mrf.mxu0
      %v3277 = vadd.f32 %v3013, %v3276
      %v3278 = vpop.f32.mrf.mxu0
      %v3279 = vpop.f32.mrf.mxu0
      %v3280 = vadd.f32 %v3016, %v3279
      %v3281 = vpop.f32.mrf.mxu0
      %3282 = vmatprep.mubr.bf16.mxu0 %v1660
      %3283 = vmatmul.mubr.bf16.gmra.mxu0 %v1659
      %v3284 = vpop.f32.mrf.mxu0
      %v3285 = vadd.f32 %v3021, %v3284
      %v3286 = vpop.f32.mrf.mxu0
      %v3287 = vpop.f32.mrf.mxu0
      %v3288 = vadd.f32 %v3024, %v3287
      %v3289 = vpop.f32.mrf.mxu0
      %3290 = vmatprep.mubr.bf16.mxu0 %v1670
      %3291 = vmatmul.mubr.bf16.gmra.mxu0 %v1669
      %v3292 = vpop.f32.mrf.mxu0
      %v3293 = vadd.f32 %v3029, %v3292
      %v3294 = vpop.f32.mrf.mxu0
      %v3295 = vpop.f32.mrf.mxu0
      %v3296 = vadd.f32 %v3032, %v3295
      %v3297 = vpop.f32.mrf.mxu0
      %3298 = vmatprep.mubr.bf16.mxu0 %v1680
      %3299 = vmatmul.mubr.bf16.gmra.mxu0 %v1679
      %v3300 = vpop.f32.mrf.mxu0
      %v3301 = vadd.f32 %v3037, %v3300
      %v3302 = vpop.f32.mrf.mxu0
      %v3303 = vpop.f32.mrf.mxu0
      %v3304 = vadd.f32 %v3040, %v3303
      %v3305 = vpop.f32.mrf.mxu0
      %3306 = vmatprep.mubr.bf16.mxu0 %v1690
      %3307 = vmatmul.mubr.bf16.gmra.mxu0 %v1689
      %v3308 = vpop.f32.mrf.mxu0
      %v3309 = vadd.f32 %v3045, %v3308
      %v3310 = vpop.f32.mrf.mxu0
      %v3311 = vpop.f32.mrf.mxu0
      %v3312 = vadd.f32 %v3048, %v3311
      %v3313 = vpop.f32.mrf.mxu0
      %3314 = vmatprep.mubr.bf16.mxu0 %v1700
      %3315 = vmatmul.mubr.bf16.gmra.mxu0 %v1699
      %v3316 = vpop.f32.mrf.mxu0
      %v3317 = vadd.f32 %v3053, %v3316
      %v3318 = vpop.f32.mrf.mxu0
      %v3319 = vpop.f32.mrf.mxu0
      %v3320 = vadd.f32 %v3056, %v3319
      %v3321 = vpop.f32.mrf.mxu0
      %3322 = vmatprep.mubr.bf16.mxu0 %v1710
      %3323 = vmatmul.mubr.bf16.gmra.mxu0 %v1709
      %v3324 = vpop.f32.mrf.mxu0
      %v3325 = vadd.f32 %v3061, %v3324
      %v3326 = vpop.f32.mrf.mxu0
      %v3327 = vpop.f32.mrf.mxu0
      %v3328 = vadd.f32 %v3064, %v3327
      %v3329 = vpop.f32.mrf.mxu0
      %3330 = vmatprep.mubr.bf16.mxu0 %v1720
      %3331 = vmatmul.mubr.bf16.gmra.mxu0 %v1719
      %v3332 = vpop.f32.mrf.mxu0
      %v3333 = vadd.f32 %v3069, %v3332
      %v3334 = vpop.f32.mrf.mxu0
      %v3335 = vpop.f32.mrf.mxu0
      %v3336 = vadd.f32 %v3072, %v3335
      %v3337 = vpop.f32.mrf.mxu0
      %3338 = vmatprep.mubr.bf16.mxu0 %v1730
      %3339 = vmatmul.mubr.bf16.gmra.mxu0 %v1729
      %v3340 = vpop.f32.mrf.mxu0
      %v3341 = vadd.f32 %v3077, %v3340
      %v3342 = vpop.f32.mrf.mxu0
      %v3343 = vpop.f32.mrf.mxu0
      %v3344 = vadd.f32 %v3080, %v3343
      %v3345 = vpop.f32.mrf.mxu0
      %3346 = vmatprep.mubr.bf16.mxu0 %v1740
      %3347 = vmatmul.mubr.bf16.gmra.mxu0 %v1739
      %v3348 = vpop.f32.mrf.mxu0
      %v3349 = vadd.f32 %v3085, %v3348
      %v3350 = vpop.f32.mrf.mxu0
      %v3351 = vpop.f32.mrf.mxu0
      %v3352 = vadd.f32 %v3088, %v3351
      %v3353 = vpop.f32.mrf.mxu0
      %3354 = vmatprep.mubr.bf16.mxu0 %v1750
      %3355 = vmatmul.mubr.bf16.gmra.mxu0 %v1749
      %v3356 = vpop.f32.mrf.mxu0
      %v3357 = vadd.f32 %v3093, %v3356
      %v3358 = vpop.f32.mrf.mxu0
      %v3359 = vpop.f32.mrf.mxu0
      %v3360 = vadd.f32 %v3096, %v3359
      %v3361 = vpop.f32.mrf.mxu0
      %3362 = vmatprep.mubr.bf16.mxu0 %v1760
      %3363 = vmatmul.mubr.bf16.gmra.mxu0 %v1759
      %v3364 = vpop.f32.mrf.mxu0
      %v3365 = vadd.f32 %v3101, %v3364
      %v3366 = vpop.f32.mrf.mxu0
      %v3367 = vpop.f32.mrf.mxu0
      %v3368 = vadd.f32 %v3104, %v3367
      %v3369 = vpop.f32.mrf.mxu0
      %3370 = vmatprep.mubr.bf16.mxu0 %v1770
      %3371 = vmatmul.mubr.bf16.gmra.mxu0 %v1769
      %v3372 = vpop.f32.mrf.mxu0
      %v3373 = vadd.f32 %v3109, %v3372
      %v3374 = vpop.f32.mrf.mxu0
      %v3375 = vpop.f32.mrf.mxu0
      %v3376 = vadd.f32 %v3112, %v3375
      %v3377 = vpop.f32.mrf.mxu0
      %3378 = vmatprep.mubr.bf16.mxu0 %v1780
      %3379 = vmatmul.mubr.bf16.gmra.mxu0 %v1779
      %v3380 = vpop.f32.mrf.mxu0
      %v3381 = vadd.f32 %v3117, %v3380
      %v3382 = vpop.f32.mrf.mxu0
      %v3383 = vpop.f32.mrf.mxu0
      %v3384 = vadd.f32 %v3120, %v3383
      %v3385 = vpop.f32.mrf.mxu0
      %3386 = vmatprep.mubr.bf16.mxu0 %v1790
      %3387 = vmatmul.mubr.bf16.gmra.mxu0 %v1789
      %v3388 = vpop.f32.mrf.mxu0
      %v3389 = vadd.f32 %v3125, %v3388
      %v3390 = vpop.f32.mrf.mxu0
      %v3391 = vpop.f32.mrf.mxu0
      %v3392 = vadd.f32 %v3128, %v3391
      %v3393 = vpop.f32.mrf.mxu0
      %3394 = vmatprep.mubr.bf16.mxu0 %v1800
      %3395 = vmatmul.mubr.bf16.gmra.mxu0 %v1799
      %v3396 = vpop.f32.mrf.mxu0
      %v3397 = vadd.f32 %v3133, %v3396
      %v3398 = vpop.f32.mrf.mxu0
      %v3399 = vpop.f32.mrf.mxu0
      %v3400 = vadd.f32 %v3136, %v3399
      %v3401 = vpop.f32.mrf.mxu0
      %3402 = vmatprep.mubr.bf16.mxu0 %v1810
      %3403 = vmatmul.mubr.bf16.gmra.mxu0 %v1809
      %v3404 = vpop.f32.mrf.mxu0
      %v3405 = vadd.f32 %v3141, %v3404
      %v3406 = vpop.f32.mrf.mxu0
      %v3407 = vpop.f32.mrf.mxu0
      %v3408 = vadd.f32 %v3144, %v3407
      %v3409 = vpop.f32.mrf.mxu0
      %3410 = vmatprep.mubr.bf16.mxu0 %v1820
      %3411 = vmatmul.mubr.bf16.gmra.mxu0 %v1819
      %v3412 = vpop.f32.mrf.mxu0
      %v3413 = vadd.f32 %v3149, %v3412
      %v3414 = vpop.f32.mrf.mxu0
      %v3415 = vpop.f32.mrf.mxu0
      %v3416 = vadd.f32 %v3152, %v3415
      %v3417 = vpop.f32.mrf.mxu0
      %3418 = vmatprep.mubr.bf16.mxu0 %v1830
      %3419 = vmatmul.mubr.bf16.gmra.mxu0 %v1829
      %v3420 = vpop.f32.mrf.mxu0
      %v3421 = vadd.f32 %v3157, %v3420
      %v3422 = vpop.f32.mrf.mxu0
      %v3423 = vpop.f32.mrf.mxu0
      %v3424 = vpop.f32.mrf.mxu0
      %3425 = vdwg.mxu0
      %3426 = vmatprep.subr.bf16.mxu0 0
      %3427 = vmatpush1.bf16.msra.mxu0 %v2451
      %3428 = vmatprep.subr.bf16.mxu0 0
      %3429 = vmatpush1.bf16.msra.mxu0 %v2450
      %3430 = vmatprep.subr.bf16.mxu0 0
      %3431 = vmatpush1.bf16.msra.mxu0 %v2449
      %3432 = vmatprep.subr.bf16.mxu0 0
      %3433 = vmatpush1.bf16.msra.mxu0 %v2448
      %3434 = vmatprep.subr.bf16.mxu0 0
      %3435 = vmatpush1.bf16.msra.mxu0 %v2447
      %3436 = vmatprep.subr.bf16.mxu0 0
      %3437 = vmatpush1.bf16.msra.mxu0 %v2446
      %3438 = vmatprep.subr.bf16.mxu0 0
      %3439 = vmatpush1.bf16.msra.mxu0 %v2445
      %3440 = vmatprep.subr.bf16.mxu0 0
      %3441 = vmatpush1.bf16.msra.mxu0 %v2444
      %3442 = vmatprep.subr.bf16.mxu0 0
      %3443 = vmatpush2.bf16.msra.mxu0 %v2459
      %3444 = vmatprep.subr.bf16.mxu0 0
      %3445 = vmatpush2.bf16.msra.mxu0 %v2458
      %3446 = vmatprep.subr.bf16.mxu0 0
      %3447 = vmatpush2.bf16.msra.mxu0 %v2457
      %3448 = vmatprep.subr.bf16.mxu0 0
      %3449 = vmatpush2.bf16.msra.mxu0 %v2456
      %3450 = vmatprep.subr.bf16.mxu0 0
      %3451 = vmatpush2.bf16.msra.mxu0 %v2455
      %3452 = vmatprep.subr.bf16.mxu0 0
      %3453 = vmatpush2.bf16.msra.mxu0 %v2454
      %3454 = vmatprep.subr.bf16.mxu0 0
      %3455 = vmatpush2.bf16.msra.mxu0 %v2453
      %3456 = vmatprep.subr.bf16.mxu0 0
      %3457 = vmatpush2.bf16.msra.mxu0 %v2452
      %3458 = vmatprep.mubr.bf16.mxu0 %v1552
      %3459 = vmatmul.mubr.bf16.gmra.mxu0 %v1551
      %v3460 = vpop.f32.mrf.mxu0
      %v3461 = vadd.f32 %v3197, %v3460
      %v3462 = vpop.f32.mrf.mxu0
      %v3463 = vpop.f32.mrf.mxu0
      %v3464 = vadd.f32 %v3200, %v3463
      %v3465 = vpop.f32.mrf.mxu0
      %3466 = vmatprep.mubr.bf16.mxu0 %v1562
      %3467 = vmatmul.mubr.bf16.gmra.mxu0 %v1561
      %v3468 = vpop.f32.mrf.mxu0
      %v3469 = vadd.f32 %v3205, %v3468
      %v3470 = vpop.f32.mrf.mxu0
      %v3471 = vpop.f32.mrf.mxu0
      %v3472 = vadd.f32 %v3208, %v3471
      %v3473 = vpop.f32.mrf.mxu0
      %3474 = vmatprep.mubr.bf16.mxu0 %v1572
      %3475 = vmatmul.mubr.bf16.gmra.mxu0 %v1571
      %v3476 = vpop.f32.mrf.mxu0
      %v3477 = vadd.f32 %v3213, %v3476
      %v3478 = vpop.f32.mrf.mxu0
      %v3479 = vpop.f32.mrf.mxu0
      %v3480 = vadd.f32 %v3216, %v3479
      %v3481 = vpop.f32.mrf.mxu0
      %3482 = vmatprep.mubr.bf16.mxu0 %v1582
      %3483 = vmatmul.mubr.bf16.gmra.mxu0 %v1581
      %v3484 = vpop.f32.mrf.mxu0
      %v3485 = vadd.f32 %v3221, %v3484
      %v3486 = vpop.f32.mrf.mxu0
      %v3487 = vpop.f32.mrf.mxu0
      %v3488 = vadd.f32 %v3224, %v3487
      %v3489 = vpop.f32.mrf.mxu0
      %3490 = vmatprep.mubr.bf16.mxu0 %v1592
      %3491 = vmatmul.mubr.bf16.gmra.mxu0 %v1591
      %v3492 = vpop.f32.mrf.mxu0
      %v3493 = vadd.f32 %v3229, %v3492
      %v3494 = vpop.f32.mrf.mxu0
      %v3495 = vpop.f32.mrf.mxu0
      %v3496 = vadd.f32 %v3232, %v3495
      %v3497 = vpop.f32.mrf.mxu0
      %3498 = vmatprep.mubr.bf16.mxu0 %v1602
      %3499 = vmatmul.mubr.bf16.gmra.mxu0 %v1601
      %v3500 = vpop.f32.mrf.mxu0
      %v3501 = vadd.f32 %v3237, %v3500
      %v3502 = vpop.f32.mrf.mxu0
      %v3503 = vpop.f32.mrf.mxu0
      %v3504 = vadd.f32 %v3240, %v3503
      %v3505 = vpop.f32.mrf.mxu0
      %3506 = vmatprep.mubr.bf16.mxu0 %v1612
      %3507 = vmatmul.mubr.bf16.gmra.mxu0 %v1611
      %v3508 = vpop.f32.mrf.mxu0
      %v3509 = vadd.f32 %v3245, %v3508
      %v3510 = vpop.f32.mrf.mxu0
      %v3511 = vpop.f32.mrf.mxu0
      %v3512 = vadd.f32 %v3248, %v3511
      %v3513 = vpop.f32.mrf.mxu0
      %3514 = vmatprep.mubr.bf16.mxu0 %v1622
      %3515 = vmatmul.mubr.bf16.gmra.mxu0 %v1621
      %v3516 = vpop.f32.mrf.mxu0
      %v3517 = vadd.f32 %v3253, %v3516
      %v3518 = vpop.f32.mrf.mxu0
      %v3519 = vpop.f32.mrf.mxu0
      %v3520 = vadd.f32 %v3256, %v3519
      %v3521 = vpop.f32.mrf.mxu0
      %3522 = vmatprep.mubr.bf16.mxu0 %v1632
      %3523 = vmatmul.mubr.bf16.gmra.mxu0 %v1631
      %v3524 = vpop.f32.mrf.mxu0
      %v3525 = vadd.f32 %v3261, %v3524
      %v3526 = vpop.f32.mrf.mxu0
      %v3527 = vpop.f32.mrf.mxu0
      %v3528 = vadd.f32 %v3264, %v3527
      %v3529 = vpop.f32.mrf.mxu0
      %3530 = vmatprep.mubr.bf16.mxu0 %v1642
      %3531 = vmatmul.mubr.bf16.gmra.mxu0 %v1641
      %v3532 = vpop.f32.mrf.mxu0
      %v3533 = vadd.f32 %v3269, %v3532
      %v3534 = vpop.f32.mrf.mxu0
      %v3535 = vpop.f32.mrf.mxu0
      %v3536 = vadd.f32 %v3272, %v3535
      %v3537 = vpop.f32.mrf.mxu0
      %3538 = vmatprep.mubr.bf16.mxu0 %v1652
      %3539 = vmatmul.mubr.bf16.gmra.mxu0 %v1651
      %v3540 = vpop.f32.mrf.mxu0
      %v3541 = vadd.f32 %v3277, %v3540
      %v3542 = vpop.f32.mrf.mxu0
      %v3543 = vpop.f32.mrf.mxu0
      %v3544 = vadd.f32 %v3280, %v3543
      %v3545 = vpop.f32.mrf.mxu0
      %3546 = vmatprep.mubr.bf16.mxu0 %v1662
      %3547 = vmatmul.mubr.bf16.gmra.mxu0 %v1661
      %v3548 = vpop.f32.mrf.mxu0
      %v3549 = vadd.f32 %v3285, %v3548
      %v3550 = vpop.f32.mrf.mxu0
      %v3551 = vpop.f32.mrf.mxu0
      %v3552 = vadd.f32 %v3288, %v3551
      %v3553 = vpop.f32.mrf.mxu0
      %3554 = vmatprep.mubr.bf16.mxu0 %v1672
      %3555 = vmatmul.mubr.bf16.gmra.mxu0 %v1671
      %v3556 = vpop.f32.mrf.mxu0
      %v3557 = vadd.f32 %v3293, %v3556
      %v3558 = vpop.f32.mrf.mxu0
      %v3559 = vpop.f32.mrf.mxu0
      %v3560 = vadd.f32 %v3296, %v3559
      %v3561 = vpop.f32.mrf.mxu0
      %3562 = vmatprep.mubr.bf16.mxu0 %v1682
      %3563 = vmatmul.mubr.bf16.gmra.mxu0 %v1681
      %v3564 = vpop.f32.mrf.mxu0
      %v3565 = vadd.f32 %v3301, %v3564
      %v3566 = vpop.f32.mrf.mxu0
      %v3567 = vpop.f32.mrf.mxu0
      %v3568 = vadd.f32 %v3304, %v3567
      %v3569 = vpop.f32.mrf.mxu0
      %3570 = vmatprep.mubr.bf16.mxu0 %v1692
      %3571 = vmatmul.mubr.bf16.gmra.mxu0 %v1691
      %v3572 = vpop.f32.mrf.mxu0
      %v3573 = vadd.f32 %v3309, %v3572
      %v3574 = vpop.f32.mrf.mxu0
      %v3575 = vpop.f32.mrf.mxu0
      %v3576 = vadd.f32 %v3312, %v3575
      %v3577 = vpop.f32.mrf.mxu0
      %3578 = vmatprep.mubr.bf16.mxu0 %v1702
      %3579 = vmatmul.mubr.bf16.gmra.mxu0 %v1701
      %v3580 = vpop.f32.mrf.mxu0
      %v3581 = vadd.f32 %v3317, %v3580
      %v3582 = vpop.f32.mrf.mxu0
      %v3583 = vpop.f32.mrf.mxu0
      %v3584 = vadd.f32 %v3320, %v3583
      %v3585 = vpop.f32.mrf.mxu0
      %3586 = vmatprep.mubr.bf16.mxu0 %v1712
      %3587 = vmatmul.mubr.bf16.gmra.mxu0 %v1711
      %v3588 = vpop.f32.mrf.mxu0
      %v3589 = vadd.f32 %v3325, %v3588
      %v3590 = vpop.f32.mrf.mxu0
      %v3591 = vpop.f32.mrf.mxu0
      %v3592 = vadd.f32 %v3328, %v3591
      %v3593 = vpop.f32.mrf.mxu0
      %3594 = vmatprep.mubr.bf16.mxu0 %v1722
      %3595 = vmatmul.mubr.bf16.gmra.mxu0 %v1721
      %v3596 = vpop.f32.mrf.mxu0
      %v3597 = vadd.f32 %v3333, %v3596
      %v3598 = vpop.f32.mrf.mxu0
      %v3599 = vpop.f32.mrf.mxu0
      %v3600 = vadd.f32 %v3336, %v3599
      %v3601 = vpop.f32.mrf.mxu0
      %3602 = vmatprep.mubr.bf16.mxu0 %v1732
      %3603 = vmatmul.mubr.bf16.gmra.mxu0 %v1731
      %v3604 = vpop.f32.mrf.mxu0
      %v3605 = vadd.f32 %v3341, %v3604
      %v3606 = vpop.f32.mrf.mxu0
      %v3607 = vpop.f32.mrf.mxu0
      %v3608 = vadd.f32 %v3344, %v3607
      %v3609 = vpop.f32.mrf.mxu0
      %3610 = vmatprep.mubr.bf16.mxu0 %v1742
      %3611 = vmatmul.mubr.bf16.gmra.mxu0 %v1741
      %v3612 = vpop.f32.mrf.mxu0
      %v3613 = vadd.f32 %v3349, %v3612
      %v3614 = vpop.f32.mrf.mxu0
      %v3615 = vpop.f32.mrf.mxu0
      %v3616 = vadd.f32 %v3352, %v3615
      %v3617 = vpop.f32.mrf.mxu0
      %3618 = vmatprep.mubr.bf16.mxu0 %v1752
      %3619 = vmatmul.mubr.bf16.gmra.mxu0 %v1751
      %v3620 = vpop.f32.mrf.mxu0
      %v3621 = vadd.f32 %v3357, %v3620
      %v3622 = vpop.f32.mrf.mxu0
      %v3623 = vpop.f32.mrf.mxu0
      %v3624 = vadd.f32 %v3360, %v3623
      %v3625 = vpop.f32.mrf.mxu0
      %3626 = vmatprep.mubr.bf16.mxu0 %v1762
      %3627 = vmatmul.mubr.bf16.gmra.mxu0 %v1761
      %v3628 = vpop.f32.mrf.mxu0
      %v3629 = vadd.f32 %v3365, %v3628
      %v3630 = vpop.f32.mrf.mxu0
      %v3631 = vpop.f32.mrf.mxu0
      %v3632 = vadd.f32 %v3368, %v3631
      %v3633 = vpop.f32.mrf.mxu0
      %3634 = vmatprep.mubr.bf16.mxu0 %v1772
      %3635 = vmatmul.mubr.bf16.gmra.mxu0 %v1771
      %v3636 = vpop.f32.mrf.mxu0
      %v3637 = vadd.f32 %v3373, %v3636
      %v3638 = vpop.f32.mrf.mxu0
      %v3639 = vpop.f32.mrf.mxu0
      %v3640 = vadd.f32 %v3376, %v3639
      %v3641 = vpop.f32.mrf.mxu0
      %3642 = vmatprep.mubr.bf16.mxu0 %v1782
      %3643 = vmatmul.mubr.bf16.gmra.mxu0 %v1781
      %v3644 = vpop.f32.mrf.mxu0
      %v3645 = vadd.f32 %v3381, %v3644
      %v3646 = vpop.f32.mrf.mxu0
      %v3647 = vpop.f32.mrf.mxu0
      %v3648 = vadd.f32 %v3384, %v3647
      %v3649 = vpop.f32.mrf.mxu0
      %3650 = vmatprep.mubr.bf16.mxu0 %v1792
      %3651 = vmatmul.mubr.bf16.gmra.mxu0 %v1791
      %v3652 = vpop.f32.mrf.mxu0
      %v3653 = vadd.f32 %v3389, %v3652
      %v3654 = vpop.f32.mrf.mxu0
      %v3655 = vpop.f32.mrf.mxu0
      %v3656 = vadd.f32 %v3392, %v3655
      %v3657 = vpop.f32.mrf.mxu0
      %3658 = vmatprep.mubr.bf16.mxu0 %v1802
      %3659 = vmatmul.mubr.bf16.gmra.mxu0 %v1801
      %v3660 = vpop.f32.mrf.mxu0
      %v3661 = vadd.f32 %v3397, %v3660
      %v3662 = vpop.f32.mrf.mxu0
      %v3663 = vpop.f32.mrf.mxu0
      %v3664 = vadd.f32 %v3400, %v3663
      %v3665 = vpop.f32.mrf.mxu0
      %3666 = vmatprep.mubr.bf16.mxu0 %v1812
      %3667 = vmatmul.mubr.bf16.gmra.mxu0 %v1811
      %v3668 = vpop.f32.mrf.mxu0
      %v3669 = vadd.f32 %v3405, %v3668
      %v3670 = vpop.f32.mrf.mxu0
      %v3671 = vpop.f32.mrf.mxu0
      %v3672 = vadd.f32 %v3408, %v3671
      %v3673 = vpop.f32.mrf.mxu0
      %3674 = vmatprep.mubr.bf16.mxu0 %v1822
      %3675 = vmatmul.mubr.bf16.gmra.mxu0 %v1821
      %v3676 = vpop.f32.mrf.mxu0
      %v3677 = vadd.f32 %v3413, %v3676
      %v3678 = vpop.f32.mrf.mxu0
      %v3679 = vpop.f32.mrf.mxu0
      %v3680 = vadd.f32 %v3416, %v3679
      %v3681 = vpop.f32.mrf.mxu0
      %3682 = vmatprep.mubr.bf16.mxu0 %v1832
      %3683 = vmatmul.mubr.bf16.gmra.mxu0 %v1831
      %v3684 = vpop.f32.mrf.mxu0
      %v3685 = vadd.f32 %v3421, %v3684
      %v3686 = vpop.f32.mrf.mxu0
      %v3687 = vpop.f32.mrf.mxu0
      %v3688 = vpop.f32.mrf.mxu0
      %3689 = vdwg.mxu0
      %3690 = vmatprep.subr.bf16.mxu0 0
      %3691 = vmatpush1.bf16.msra.mxu0 %v2467
      %3692 = vmatprep.subr.bf16.mxu0 0
      %3693 = vmatpush1.bf16.msra.mxu0 %v2466
      %3694 = vmatprep.subr.bf16.mxu0 0
      %3695 = vmatpush1.bf16.msra.mxu0 %v2465
      %3696 = vmatprep.subr.bf16.mxu0 0
      %3697 = vmatpush1.bf16.msra.mxu0 %v2464
      %3698 = vmatprep.subr.bf16.mxu0 0
      %3699 = vmatpush1.bf16.msra.mxu0 %v2463
      %3700 = vmatprep.subr.bf16.mxu0 0
      %3701 = vmatpush1.bf16.msra.mxu0 %v2462
      %3702 = vmatprep.subr.bf16.mxu0 0
      %3703 = vmatpush1.bf16.msra.mxu0 %v2461
      %3704 = vmatprep.subr.bf16.mxu0 0
      %3705 = vmatpush1.bf16.msra.mxu0 %v2460
      %3706 = vmatprep.subr.bf16.mxu0 0
      %3707 = vmatpush2.bf16.msra.mxu0 0
      %3708 = vmatprep.subr.bf16.mxu0 0
      %3709 = vmatpush2.bf16.msra.mxu0 0
      %3710 = vmatprep.subr.bf16.mxu0 0
      %3711 = vmatpush2.bf16.msra.mxu0 0
      %3712 = vmatprep.subr.bf16.mxu0 0
      %3713 = vmatpush2.bf16.msra.mxu0 0
      %3714 = vmatprep.subr.bf16.mxu0 0
      %3715 = vmatpush2.bf16.msra.mxu0 0
      %3716 = vmatprep.subr.bf16.mxu0 0
      %3717 = vmatpush2.bf16.msra.mxu0 %v2470
      %3718 = vmatprep.subr.bf16.mxu0 0
      %3719 = vmatpush2.bf16.msra.mxu0 %v2469
      %3720 = vmatprep.subr.bf16.mxu0 0
      %3721 = vmatpush2.bf16.msra.mxu0 %v2468
      %3722 = vmatprep.mubr.bf16.mxu0 %v2548
      %3723 = vmatmul.mubr.bf16.gmra.mxu0 %v1553
      %v3724 = vpop.f32.mrf.mxu0
      %v3725 = vadd.f32 %v3461, %v3724
      %v3726 = vpop.f32.mrf.mxu0
      %v3727 = vpop.f32.mrf.mxu0
      %v3728 = vadd.f32 %v3464, %v3727
      %v3729 = vpop.f32.mrf.mxu0
      %3730 = vmatprep.mubr.bf16.mxu0 %v2551
      %3731 = vmatmul.mubr.bf16.gmra.mxu0 %v1563
      %v3732 = vpop.f32.mrf.mxu0
      %v3733 = vadd.f32 %v3469, %v3732
      %v3734 = vpop.f32.mrf.mxu0
      %v3735 = vpop.f32.mrf.mxu0
      %v3736 = vadd.f32 %v3472, %v3735
      %v3737 = vpop.f32.mrf.mxu0
      %3738 = vmatprep.mubr.bf16.mxu0 %v2554
      %3739 = vmatmul.mubr.bf16.gmra.mxu0 %v1573
      %v3740 = vpop.f32.mrf.mxu0
      %v3741 = vadd.f32 %v3477, %v3740
      %v3742 = vpop.f32.mrf.mxu0
      %v3743 = vpop.f32.mrf.mxu0
      %v3744 = vadd.f32 %v3480, %v3743
      %v3745 = vpop.f32.mrf.mxu0
      %3746 = vmatprep.mubr.bf16.mxu0 %v2557
      %3747 = vmatmul.mubr.bf16.gmra.mxu0 %v1583
      %v3748 = vpop.f32.mrf.mxu0
      %v3749 = vadd.f32 %v3485, %v3748
      %v3750 = vpop.f32.mrf.mxu0
      %v3751 = vpop.f32.mrf.mxu0
      %v3752 = vadd.f32 %v3488, %v3751
      %v3753 = vpop.f32.mrf.mxu0
      %3754 = vmatprep.mubr.bf16.mxu0 %v2560
      %3755 = vmatmul.mubr.bf16.gmra.mxu0 %v1593
      %v3756 = vpop.f32.mrf.mxu0
      %v3757 = vadd.f32 %v3493, %v3756
      %v3758 = vpop.f32.mrf.mxu0
      %v3759 = vpop.f32.mrf.mxu0
      %v3760 = vadd.f32 %v3496, %v3759
      %v3761 = vpop.f32.mrf.mxu0
      %3762 = vmatprep.mubr.bf16.mxu0 %v2563
      %3763 = vmatmul.mubr.bf16.gmra.mxu0 %v1603
      %v3764 = vpop.f32.mrf.mxu0
      %v3765 = vadd.f32 %v3501, %v3764
      %v3766 = vpop.f32.mrf.mxu0
      %v3767 = vpop.f32.mrf.mxu0
      %v3768 = vadd.f32 %v3504, %v3767
      %v3769 = vpop.f32.mrf.mxu0
      %3770 = vmatprep.mubr.bf16.mxu0 %v2566
      %3771 = vmatmul.mubr.bf16.gmra.mxu0 %v1613
      %v3772 = vpop.f32.mrf.mxu0
      %v3773 = vadd.f32 %v3509, %v3772
      %v3774 = vpop.f32.mrf.mxu0
      %v3775 = vpop.f32.mrf.mxu0
      %v3776 = vadd.f32 %v3512, %v3775
      %v3777 = vpop.f32.mrf.mxu0
      %3778 = vmatprep.mubr.bf16.mxu0 %v2569
      %3779 = vmatmul.mubr.bf16.gmra.mxu0 %v1623
      %v3780 = vpop.f32.mrf.mxu0
      %v3781 = vadd.f32 %v3517, %v3780
      %v3782 = vpop.f32.mrf.mxu0
      %v3783 = vpop.f32.mrf.mxu0
      %v3784 = vadd.f32 %v3520, %v3783
      %v3785 = vpop.f32.mrf.mxu0
      %3786 = vmatprep.mubr.bf16.mxu0 %v2572
      %3787 = vmatmul.mubr.bf16.gmra.mxu0 %v1633
      %v3788 = vpop.f32.mrf.mxu0
      %v3789 = vadd.f32 %v3525, %v3788
      %v3790 = vpop.f32.mrf.mxu0
      %v3791 = vpop.f32.mrf.mxu0
      %v3792 = vadd.f32 %v3528, %v3791
      %v3793 = vpop.f32.mrf.mxu0
      %3794 = vmatprep.mubr.bf16.mxu0 %v2575
      %3795 = vmatmul.mubr.bf16.gmra.mxu0 %v1643
      %v3796 = vpop.f32.mrf.mxu0
      %v3797 = vadd.f32 %v3533, %v3796
      %v3798 = vpop.f32.mrf.mxu0
      %v3799 = vpop.f32.mrf.mxu0
      %v3800 = vadd.f32 %v3536, %v3799
      %v3801 = vpop.f32.mrf.mxu0
      %3802 = vmatprep.mubr.bf16.mxu0 %v2578
      %3803 = vmatmul.mubr.bf16.gmra.mxu0 %v1653
      %v3804 = vpop.f32.mrf.mxu0
      %v3805 = vadd.f32 %v3541, %v3804
      %v3806 = vpop.f32.mrf.mxu0
      %v3807 = vpop.f32.mrf.mxu0
      %v3808 = vadd.f32 %v3544, %v3807
      %v3809 = vpop.f32.mrf.mxu0
      %3810 = vmatprep.mubr.bf16.mxu0 %v2581
      %3811 = vmatmul.mubr.bf16.gmra.mxu0 %v1663
      %v3812 = vpop.f32.mrf.mxu0
      %v3813 = vadd.f32 %v3549, %v3812
      %v3814 = vpop.f32.mrf.mxu0
      %v3815 = vpop.f32.mrf.mxu0
      %v3816 = vadd.f32 %v3552, %v3815
      %v3817 = vpop.f32.mrf.mxu0
      %3818 = vmatprep.mubr.bf16.mxu0 %v2584
      %3819 = vmatmul.mubr.bf16.gmra.mxu0 %v1673
      %v3820 = vpop.f32.mrf.mxu0
      %v3821 = vadd.f32 %v3557, %v3820
      %v3822 = vpop.f32.mrf.mxu0
      %v3823 = vpop.f32.mrf.mxu0
      %v3824 = vadd.f32 %v3560, %v3823
      %v3825 = vpop.f32.mrf.mxu0
      %3826 = vmatprep.mubr.bf16.mxu0 %v2587
      %3827 = vmatmul.mubr.bf16.gmra.mxu0 %v1683
      %v3828 = vpop.f32.mrf.mxu0
      %v3829 = vadd.f32 %v3565, %v3828
      %v3830 = vpop.f32.mrf.mxu0
      %v3831 = vpop.f32.mrf.mxu0
      %v3832 = vadd.f32 %v3568, %v3831
      %v3833 = vpop.f32.mrf.mxu0
      %3834 = vmatprep.mubr.bf16.mxu0 %v2590
      %3835 = vmatmul.mubr.bf16.gmra.mxu0 %v1693
      %v3836 = vpop.f32.mrf.mxu0
      %v3837 = vadd.f32 %v3573, %v3836
      %v3838 = vpop.f32.mrf.mxu0
      %v3839 = vpop.f32.mrf.mxu0
      %v3840 = vadd.f32 %v3576, %v3839
      %v3841 = vpop.f32.mrf.mxu0
      %3842 = vmatprep.mubr.bf16.mxu0 %v2593
      %3843 = vmatmul.mubr.bf16.gmra.mxu0 %v1703
      %v3844 = vpop.f32.mrf.mxu0
      %v3845 = vadd.f32 %v3581, %v3844
      %v3846 = vpop.f32.mrf.mxu0
      %v3847 = vpop.f32.mrf.mxu0
      %v3848 = vadd.f32 %v3584, %v3847
      %v3849 = vpop.f32.mrf.mxu0
      %3850 = vmatprep.mubr.bf16.mxu0 %v2596
      %3851 = vmatmul.mubr.bf16.gmra.mxu0 %v1713
      %v3852 = vpop.f32.mrf.mxu0
      %v3853 = vadd.f32 %v3589, %v3852
      %v3854 = vpop.f32.mrf.mxu0
      %v3855 = vpop.f32.mrf.mxu0
      %v3856 = vadd.f32 %v3592, %v3855
      %v3857 = vpop.f32.mrf.mxu0
      %3858 = vmatprep.mubr.bf16.mxu0 %v2599
      %3859 = vmatmul.mubr.bf16.gmra.mxu0 %v1723
      %v3860 = vpop.f32.mrf.mxu0
      %v3861 = vadd.f32 %v3597, %v3860
      %v3862 = vpop.f32.mrf.mxu0
      %v3863 = vpop.f32.mrf.mxu0
      %v3864 = vadd.f32 %v3600, %v3863
      %v3865 = vpop.f32.mrf.mxu0
      %3866 = vmatprep.mubr.bf16.mxu0 %v2602
      %3867 = vmatmul.mubr.bf16.gmra.mxu0 %v1733
      %v3868 = vpop.f32.mrf.mxu0
      %v3869 = vadd.f32 %v3605, %v3868
      %v3870 = vpop.f32.mrf.mxu0
      %v3871 = vpop.f32.mrf.mxu0
      %v3872 = vadd.f32 %v3608, %v3871
      %v3873 = vpop.f32.mrf.mxu0
      %3874 = vmatprep.mubr.bf16.mxu0 %v2605
      %3875 = vmatmul.mubr.bf16.gmra.mxu0 %v1743
      %v3876 = vpop.f32.mrf.mxu0
      %v3877 = vadd.f32 %v3613, %v3876
      %v3878 = vpop.f32.mrf.mxu0
      %v3879 = vpop.f32.mrf.mxu0
      %v3880 = vadd.f32 %v3616, %v3879
      %v3881 = vpop.f32.mrf.mxu0
      %3882 = vmatprep.mubr.bf16.mxu0 %v2608
      %3883 = vmatmul.mubr.bf16.gmra.mxu0 %v1753
      %v3884 = vpop.f32.mrf.mxu0
      %v3885 = vadd.f32 %v3621, %v3884
      %v3886 = vpop.f32.mrf.mxu0
      %v3887 = vpop.f32.mrf.mxu0
      %v3888 = vadd.f32 %v3624, %v3887
      %v3889 = vpop.f32.mrf.mxu0
      %3890 = vmatprep.mubr.bf16.mxu0 %v2611
      %3891 = vmatmul.mubr.bf16.gmra.mxu0 %v1763
      %v3892 = vpop.f32.mrf.mxu0
      %v3893 = vadd.f32 %v3629, %v3892
      %v3894 = vpop.f32.mrf.mxu0
      %v3895 = vpop.f32.mrf.mxu0
      %v3896 = vadd.f32 %v3632, %v3895
      %v3897 = vpop.f32.mrf.mxu0
      %3898 = vmatprep.mubr.bf16.mxu0 %v2614
      %3899 = vmatmul.mubr.bf16.gmra.mxu0 %v1773
      %v3900 = vpop.f32.mrf.mxu0
      %v3901 = vadd.f32 %v3637, %v3900
      %v3902 = vpop.f32.mrf.mxu0
      %v3903 = vpop.f32.mrf.mxu0
      %v3904 = vadd.f32 %v3640, %v3903
      %v3905 = vpop.f32.mrf.mxu0
      %3906 = vmatprep.mubr.bf16.mxu0 %v2617
      %3907 = vmatmul.mubr.bf16.gmra.mxu0 %v1783
      %v3908 = vpop.f32.mrf.mxu0
      %v3909 = vadd.f32 %v3645, %v3908
      %v3910 = vpop.f32.mrf.mxu0
      %v3911 = vpop.f32.mrf.mxu0
      %v3912 = vadd.f32 %v3648, %v3911
      %v3913 = vpop.f32.mrf.mxu0
      %3914 = vmatprep.mubr.bf16.mxu0 %v2620
      %3915 = vmatmul.mubr.bf16.gmra.mxu0 %v1793
      %v3916 = vpop.f32.mrf.mxu0
      %v3917 = vadd.f32 %v3653, %v3916
      %v3918 = vpop.f32.mrf.mxu0
      %v3919 = vpop.f32.mrf.mxu0
      %v3920 = vadd.f32 %v3656, %v3919
      %v3921 = vpop.f32.mrf.mxu0
      %3922 = vmatprep.mubr.bf16.mxu0 %v2623
      %3923 = vmatmul.mubr.bf16.gmra.mxu0 %v1803
      %v3924 = vpop.f32.mrf.mxu0
      %v3925 = vadd.f32 %v3661, %v3924
      %v3926 = vpop.f32.mrf.mxu0
      %v3927 = vpop.f32.mrf.mxu0
      %v3928 = vadd.f32 %v3664, %v3927
      %v3929 = vpop.f32.mrf.mxu0
      %3930 = vmatprep.mubr.bf16.mxu0 %v2626
      %3931 = vmatmul.mubr.bf16.gmra.mxu0 %v1813
      %v3932 = vpop.f32.mrf.mxu0
      %v3933 = vadd.f32 %v3669, %v3932
      %v3934 = vpop.f32.mrf.mxu0
      %v3935 = vpop.f32.mrf.mxu0
      %v3936 = vadd.f32 %v3672, %v3935
      %v3937 = vpop.f32.mrf.mxu0
      %3938 = vmatprep.mubr.bf16.mxu0 %v2629
      %3939 = vmatmul.mubr.bf16.gmra.mxu0 %v1823
      %v3940 = vpop.f32.mrf.mxu0
      %v3941 = vadd.f32 %v3677, %v3940
      %v3942 = vpop.f32.mrf.mxu0
      %v3943 = vpop.f32.mrf.mxu0
      %v3944 = vadd.f32 %v3680, %v3943
      %v3945 = vpop.f32.mrf.mxu0
      %3946 = vmatprep.mubr.bf16.mxu0 %v2632
      %3947 = vmatmul.mubr.bf16.gmra.mxu0 %v1833
      %v3948 = vpop.f32.mrf.mxu0
      %v3949 = vadd.f32 %v3685, %v3948
      %v3950 = vpop.f32.mrf.mxu0
      %v3951 = vpop.f32.mrf.mxu0
      %v3952 = vpop.f32.mrf.mxu0
      %3953 = vdwg.mxu0
      %v3954 = vmax.f32 %v3725, 0.0
      %v3955 = vmax.f32 %v3728, 0.0
      %v3956 = vmax.f32 %v3733, 0.0
      %v3957 = vmax.f32 %v3736, 0.0
      %v3958 = vmax.f32 %v3741, 0.0
      %v3959 = vmax.f32 %v3744, 0.0
      %v3960 = vmax.f32 %v3749, 0.0
      %v3961 = vmax.f32 %v3752, 0.0
      %v3962 = vmax.f32 %v3757, 0.0
      %v3963 = vmax.f32 %v3760, 0.0
      %v3964 = vmax.f32 %v3765, 0.0
      %v3965 = vmax.f32 %v3768, 0.0
      %v3966 = vmax.f32 %v3773, 0.0
      %v3967 = vmax.f32 %v3776, 0.0
      %v3968 = vmax.f32 %v3781, 0.0
      %v3969 = vmax.f32 %v3784, 0.0
      %v3970 = vmax.f32 %v3789, 0.0
      %v3971 = vmax.f32 %v3792, 0.0
      %v3972 = vmax.f32 %v3797, 0.0
      %v3973 = vmax.f32 %v3800, 0.0
      %v3974 = vmax.f32 %v3805, 0.0
      %v3975 = vmax.f32 %v3808, 0.0
      %v3976 = vmax.f32 %v3813, 0.0
      %v3977 = vmax.f32 %v3816, 0.0
      %v3978 = vmax.f32 %v3821, 0.0
      %v3979 = vmax.f32 %v3824, 0.0
      %v3980 = vmax.f32 %v3829, 0.0
      %v3981 = vmax.f32 %v3832, 0.0
      %v3982 = vmax.f32 %v3837, 0.0
      %v3983 = vmax.f32 %v3840, 0.0
      %v3984 = vmax.f32 %v3845, 0.0
      %v3985 = vmax.f32 %v3848, 0.0
      %v3986 = vmax.f32 %v3853, 0.0
      %v3987 = vmax.f32 %v3856, 0.0
      %v3988 = vmax.f32 %v3861, 0.0
      %v3989 = vmax.f32 %v3864, 0.0
      %v3990 = vmax.f32 %v3869, 0.0
      %v3991 = vmax.f32 %v3872, 0.0
      %v3992 = vmax.f32 %v3877, 0.0
      %v3993 = vmax.f32 %v3880, 0.0
      %v3994 = vmax.f32 %v3885, 0.0
      %v3995 = vmax.f32 %v3888, 0.0
      %v3996 = vmax.f32 %v3893, 0.0
      %v3997 = vmax.f32 %v3896, 0.0
      %v3998 = vmax.f32 %v3901, 0.0
      %v3999 = vmax.f32 %v3904, 0.0
      %v4000 = vmax.f32 %v3909, 0.0
      %v4001 = vmax.f32 %v3912, 0.0
      %v4002 = vmax.f32 %v3917, 0.0
      %v4003 = vmax.f32 %v3920, 0.0
      %v4004 = vmax.f32 %v3925, 0.0
      %v4005 = vmax.f32 %v3928, 0.0
      %v4006 = vmax.f32 %v3933, 0.0
      %v4007 = vmax.f32 %v3936, 0.0
      %v4008 = vmax.f32 %v3941, 0.0
      %v4009 = vmax.f32 %v3944, 0.0
      %v4010 = vmax.f32 %v3949, 0.0
      %4011 = vst [vmem:[%s245] sm:$0xff] %v3954
      %4012 = vst [vmem:[%s245 + $0x8] sm:$0xff] %v3955
      %4013 = vst [vmem:[%s245 + $0x10] sm:$0xff] %v3956
      %4014 = vst [vmem:[%s245 + $0x18] sm:$0xff] %v3957
      %4015 = vst [vmem:[%s245 + $0x20] sm:$0xff] %v3958
      %4016 = vst [vmem:[%s245 + $0x28] sm:$0xff] %v3959
      %4017 = vst [vmem:[%s245 + $0x30] sm:$0xff] %v3960
      %4018 = vst [vmem:[%s245 + $0x38] sm:$0xff] %v3961
      %4019 = vst [vmem:[%s245 + $0x40] sm:$0xff] %v3962
      %4020 = vst [vmem:[%s245 + $0x48] sm:$0xff] %v3963
      %4021 = vst [vmem:[%s245 + $0x50] sm:$0xff] %v3964
      %4022 = vst [vmem:[%s245 + $0x58] sm:$0xff] %v3965
      %4023 = vst [vmem:[%s245 + $0x60] sm:$0xff] %v3966
      %4024 = vst [vmem:[%s245 + $0x68] sm:$0xff] %v3967
      %4025 = vst [vmem:[%s245 + $0x70] sm:$0xff] %v3968
      %4026 = vst [vmem:[%s245 + $0x78] sm:$0xff] %v3969
      %4027 = vst [vmem:[%s245 + $0x80] sm:$0xff] %v3970
      %4028 = vst [vmem:[%s245 + $0x88] sm:$0xff] %v3971
      %4029 = vst [vmem:[%s245 + $0x90] sm:$0xff] %v3972
      %4030 = vst [vmem:[%s245 + $0x98] sm:$0xff] %v3973
      %4031 = vst [vmem:[%s245 + $0xa0] sm:$0xff] %v3974
      %4032 = vst [vmem:[%s245 + $0xa8] sm:$0xff] %v3975
      %4033 = vst [vmem:[%s245 + $0xb0] sm:$0xff] %v3976
      %4034 = vst [vmem:[%s245 + $0xb8] sm:$0xff] %v3977
      %4035 = vst [vmem:[%s245 + $0xc0] sm:$0xff] %v3978
      %4036 = vst [vmem:[%s245 + $0xc8] sm:$0xff] %v3979
      %4037 = vst [vmem:[%s245 + $0xd0] sm:$0xff] %v3980
      %4038 = vst [vmem:[%s245 + $0xd8] sm:$0xff] %v3981
      %4039 = vst [vmem:[%s245 + $0xe0] sm:$0xff] %v3982
      %4040 = vst [vmem:[%s245 + $0xe8] sm:$0xff] %v3983
      %4041 = vst [vmem:[%s245 + $0xf0] sm:$0xff] %v3984
      %4042 = vst [vmem:[%s245 + $0xf8] sm:$0xff] %v3985
      %4043 = vst [vmem:[%s245 + $0x100] sm:$0xff] %v3986
      %4044 = vst [vmem:[%s245 + $0x108] sm:$0xff] %v3987
      %4045 = vst [vmem:[%s245 + $0x110] sm:$0xff] %v3988
      %4046 = vst [vmem:[%s245 + $0x118] sm:$0xff] %v3989
      %4047 = vst [vmem:[%s245 + $0x120] sm:$0xff] %v3990
      %4048 = vst [vmem:[%s245 + $0x128] sm:$0xff] %v3991
      %4049 = vst [vmem:[%s245 + $0x130] sm:$0xff] %v3992
      %4050 = vst [vmem:[%s245 + $0x138] sm:$0xff] %v3993
      %4051 = vst [vmem:[%s245 + $0x140] sm:$0xff] %v3994
      %4052 = vst [vmem:[%s245 + $0x148] sm:$0xff] %v3995
      %4053 = vst [vmem:[%s245 + $0x150] sm:$0xff] %v3996
      %4054 = vst [vmem:[%s245 + $0x158] sm:$0xff] %v3997
      %4055 = vst [vmem:[%s245 + $0x160] sm:$0xff] %v3998
      %4056 = vst [vmem:[%s245 + $0x168] sm:$0xff] %v3999
      %4057 = vst [vmem:[%s245 + $0x170] sm:$0xff] %v4000
      %4058 = vst [vmem:[%s245 + $0x178] sm:$0xff] %v4001
      %4059 = vst [vmem:[%s245 + $0x180] sm:$0xff] %v4002
      %4060 = vst [vmem:[%s245 + $0x188] sm:$0xff] %v4003
      %4061 = vst [vmem:[%s245 + $0x190] sm:$0xff] %v4004
      %4062 = vst [vmem:[%s245 + $0x198] sm:$0xff] %v4005
      %4063 = vst [vmem:[%s245 + $0x1a0] sm:$0xff] %v4006
      %4064 = vst [vmem:[%s245 + $0x1a8] sm:$0xff] %v4007
      %4065 = vst [vmem:[%s245 + $0x1b0] sm:$0xff] %v4008
      %4066 = vst [vmem:[%s245 + $0x1b8] sm:$0xff] %v4009
      %4067 = vst [vmem:[%s245 + $0x1c0] sm:$0x3] %v4010
      %s4068 = smul.u32 57, %s19
      %p4069 = scmp.lt.s32.totalorder %s18, 1
      %s4070 = scalar_select %p4069, %s18, 1
      %p4071 = scmp.lt.s32.totalorder %s4068, 56
      %s4072 = scalar_select %p4071, %s4068, 56
      %s4073 = smul.addr %s4070, 57
      %s4074 = sadd.s32 %s4072, %s4073
      %s4075 = smul.addr %s4074, 8
      %s4076 = scalar_lea.vmem %s3, %s4075
      // Predicated region
      $region33: #{cnnl4_forward.5} parent=31 // pred_check
        %p4077 = pneg %p126
      $region34: #{cnnl4_forward.5} parent=31 // pred_check_branch
        %4079 = sbr.rel (%p4077) target = $region36
      $region35: #{cnnl4_forward.5} parent=31 // pred_region
        %s4080 = smul.u32 57, %s19
      $region36: #{cnnl4_forward.5} parent=31 // pred_fallthru
        _
    $region32: #{cnnl4_forward.5} parent=5 // pred_fallthru
      _
    %p4081 = scmp.le.s32.totalorder 2, %s9
    // Predicated region
    $region37: #{cnnl4_forward.5} parent=5 // pred_check
      %p4082 = pneg %p4081
    $region38: #{cnnl4_forward.5} parent=5 // pred_check_branch
      %4084 = sbr.rel (%p4082) target = $region40
    $region39: #{cnnl4_forward.5} parent=5 // pred_region
      %s4085 = ssub.s32 %s9, 2
      // Predicated region
      $region41: #{cnnl4_forward.5} parent=39 // pred_check
        %p4086 = pneg %p132
      $region42: #{cnnl4_forward.5} parent=39 // pred_check_branch
        %4088 = sbr.rel (%p4086) target = $region44
      $region43: #{cnnl4_forward.5} parent=39 // pred_region
        %s4089 = smul.u32 57, %s21
        %p4090 = scmp.lt.s32.totalorder %s20, 1
        %s4091 = scalar_select %p4090, %s20, 1
        %p4092 = scmp.lt.s32.totalorder %s4089, 56
        %s4093 = scalar_select %p4092, %s4089, 56
        %s4094 = smul.addr %s4091, 57
        %s4095 = sadd.s32 %s4093, %s4094
        %s4096 = smul.addr %s4095, 8
        %s4097 = scalar_lea.vmem %s3, %s4096
      $region44: #{cnnl4_forward.5} parent=39 // pred_fallthru
        _
    $region40: #{cnnl4_forward.5} parent=5 // pred_fallthru
      _
  $region6: #{cnnl4_forward.5} parent=0 // loop_footer
    %s13 = sadd.s32 1, %s9
  $region7: #{cnnl4_forward.5} parent=0 // loop_footer_branch
    %8 = sbr.rel target = $region3
  $region8: #{cnnl4_forward.5} parent=0 // loop_exit
    _

// kernel: cnnl4_forward.6
$region0: #{cnnl4_forward.6}
  #allocation0 [shape = 'u32[]', space=smem, size = 0x4, offset = 0x4, fixed_abs, tag = 'smem constant byte address 0x4 - core index']
  #allocation1 [shape = 'u32[144,128]{1,0:T(1,128)}', space=vmem, size = 0x12000, scoped, tag = 'internal scratch']
  %s0 = inlined_call_operand.vmem [shape: bf16[2,50,1152], index: 0, kind: input, shape index: {}]
  %s1 = inlined_call_operand.vmem [shape: bf16[2,1152,256], index: 1, kind: input, shape index: {}]
  %s2 = inlined_call_operand.vmem [shape: f32[2,1,256], index: 2, kind: input, shape index: {}]
  %s3 = inlined_call_operand.vmem [shape: f32[2,50,256], index: 3, kind: output, shape index: {}]
  %s4 = sld [smem:[#allocation0]]
  $region45: #{cnnl4_forward.6} parent=0
    _
  %s6 = ssub.s32 1, %s4
  %s7 = scalar_select 0, %s6, %s4
  loop: start=0, step=1, limit=4
  $region2: #{cnnl4_forward.6} parent=0 // loop_pre_header
    _
  $region3: #{cnnl4_forward.6} parent=0 // loop_header
    %s9 = sphi 0, %s13
    %p10 = scmp.ge.s32.totalorder %s9, 4
    %s16 = sphi 0, %s28
    %s17 = sphi 0, %s24
    %s18 = sphi 0, %s16
    %s19 = sphi 0, %s17
    %s20 = sphi 0, %s18
    %s21 = sphi 0, %s19
    %s33 = sphi 0, %s35
    %s36 = sphi 0, %s33
    %s37 = sphi 0, %s36
    %s53 = sphi 0, %s37
    %s59 = sphi 0, %s61
    %s62 = sphi 0, %s59
    %s63 = sphi 0, %s62
    %s79 = sphi 0, %s63
    %s85 = sphi 0, %s87
    %s88 = sphi 0, %s85
    %s89 = sphi 0, %s88
    %s105 = sphi 0, %s89
    %s113 = sphi 0, %s115
    %s116 = sphi 0, %s113
    %s117 = sphi 0, %s116
    %s133 = sphi 0, %s117
  $region4: #{cnnl4_forward.6} parent=0 // loop_header_branch
    %12 = sbr.rel (%p10) target = $region8
  $region5: #{cnnl4_forward.6} parent=0 // loop_body
    %s14 = ssub.s32 %s9, 1
    %s15 = ssub.s32 %s9, 2
    %s22 = sadd.s32 1, %s17
    %p23 = scmp.ge.s32.totalorder %s22, 1
    %s24 = scalar_select %p23, 0, %s22
    %s25 = sadd.s32 1, %s16
    %s26 = scalar_select %p23, %s25, %s16
    %p27 = scmp.ge.s32.totalorder %s26, 2
    %s28 = scalar_select %p27, 0, %s26
    %s29 = ssub.s32 %s16, %s28
    %s30 = ssub.s32 %s17, %s24
    %s31 = sor.u32 %s29, %s30
    %p32 = scmp.eq.s32.totalorder %s31, 0
    %s34 = sadd.s32 %s33, 1
    %s35 = scalar_select %p32, %s33, %s34
    %p38 = pneg %p32
    %p39 = scmp.eq.s32.totalorder %s9, 1
    %p40 = por %p38, %p39
    %p41 = scmp.ne.s32.totalorder %s33, %s36
    %p42 = scmp.eq.s32.totalorder %s9, 0
    %p43 = por %p41, %p42
    %p44 = scmp.ne.s32.totalorder %s33, %s36
    %p45 = scmp.eq.s32.totalorder %s14, 1
    %p46 = por %p44, %p45
    %p47 = scmp.ne.s32.totalorder %s36, %s37
    %p48 = scmp.eq.s32.totalorder %s14, 0
    %p49 = por %p47, %p48
    %p50 = scmp.ne.s32.totalorder %s36, %s37
    %p51 = scmp.eq.s32.totalorder %s15, 1
    %p52 = por %p50, %p51
    %p54 = scmp.ne.s32.totalorder %s37, %s53
    %p55 = scmp.eq.s32.totalorder %s15, 0
    %p56 = por %p54, %p55
    %s57 = ssub.s32 %s16, %s28
    %p58 = scmp.eq.s32.totalorder %s57, 0
    %s60 = sadd.s32 %s59, 1
    %s61 = scalar_select %p58, %s59, %s60
    %p64 = pneg %p58
    %p65 = scmp.eq.s32.totalorder %s9, 1
    %p66 = por %p64, %p65
    %p67 = scmp.ne.s32.totalorder %s59, %s62
    %p68 = scmp.eq.s32.totalorder %s9, 0
    %p69 = por %p67, %p68
    %p70 = scmp.ne.s32.totalorder %s59, %s62
    %p71 = scmp.eq.s32.totalorder %s14, 1
    %p72 = por %p70, %p71
    %p73 = scmp.ne.s32.totalorder %s62, %s63
    %p74 = scmp.eq.s32.totalorder %s14, 0
    %p75 = por %p73, %p74
    %p76 = scmp.ne.s32.totalorder %s62, %s63
    %p77 = scmp.eq.s32.totalorder %s15, 1
    %p78 = por %p76, %p77
    %p80 = scmp.ne.s32.totalorder %s63, %s79
    %p81 = scmp.eq.s32.totalorder %s15, 0
    %p82 = por %p80, %p81
    %s83 = ssub.s32 %s16, %s28
    %p84 = scmp.eq.s32.totalorder %s83, 0
    %s86 = sadd.s32 %s85, 1
    %s87 = scalar_select %p84, %s85, %s86
    %p90 = pneg %p84
    %p91 = scmp.eq.s32.totalorder %s9, 1
    %p92 = por %p90, %p91
    %p93 = scmp.ne.s32.totalorder %s85, %s88
    %p94 = scmp.eq.s32.totalorder %s9, 0
    %p95 = por %p93, %p94
    %p96 = scmp.ne.s32.totalorder %s85, %s88
    %p97 = scmp.eq.s32.totalorder %s14, 1
    %p98 = por %p96, %p97
    %p99 = scmp.ne.s32.totalorder %s88, %s89
    %p100 = scmp.eq.s32.totalorder %s14, 0
    %p101 = por %p99, %p100
    %p102 = scmp.ne.s32.totalorder %s88, %s89
    %p103 = scmp.eq.s32.totalorder %s15, 1
    %p104 = por %p102, %p103
    %p106 = scmp.ne.s32.totalorder %s89, %s105
    %p107 = scmp.eq.s32.totalorder %s15, 0
    %p108 = por %p106, %p107
    %s109 = ssub.s32 %s16, %s28
    %s110 = ssub.s32 %s17, %s24
    %s111 = sor.u32 %s109, %s110
    %p112 = scmp.eq.s32.totalorder %s111, 0
    %s114 = sadd.s32 %s113, 1
    %s115 = scalar_select %p112, %s113, %s114
    %p118 = pneg %p112
    %p119 = scmp.eq.s32.totalorder %s9, 1
    %p120 = por %p118, %p119
    %p121 = scmp.ne.s32.totalorder %s113, %s116
    %p122 = scmp.eq.s32.totalorder %s9, 0
    %p123 = por %p121, %p122
    %p124 = scmp.ne.s32.totalorder %s113, %s116
    %p125 = scmp.eq.s32.totalorder %s14, 1
    %p126 = por %p124, %p125
    %p127 = scmp.ne.s32.totalorder %s116, %s117
    %p128 = scmp.eq.s32.totalorder %s14, 0
    %p129 = por %p127, %p128
    %p130 = scmp.ne.s32.totalorder %s116, %s117
    %p131 = scmp.eq.s32.totalorder %s15, 1
    %p132 = por %p130, %p131
    %p134 = scmp.ne.s32.totalorder %s117, %s133
    %p135 = scmp.eq.s32.totalorder %s15, 0
    %p136 = por %p134, %p135
    %p137 = scmp.le.s32.totalorder 1, %s9
    %p138 = scmp.lt.s32.totalorder %s9, 3
    %p139 = pnand %p137, %p138
    %p140 = pneg %p139
    // Predicated region
    $region9: #{cnnl4_forward.6} parent=5 // pred_check
      _
    $region10: #{cnnl4_forward.6} parent=5 // pred_check_branch
      %142 = sbr.rel (%p139) target = $region12
    $region11: #{cnnl4_forward.6} parent=5 // pred_region
      %s143 = ssub.s32 %s9, 1
    $region12: #{cnnl4_forward.6} parent=5 // pred_fallthru
      _
    %p144 = scmp.lt.s32.totalorder %s9, 2
    // Predicated region
    $region13: #{cnnl4_forward.6} parent=5 // pred_check
      %p145 = pneg %p144
    $region14: #{cnnl4_forward.6} parent=5 // pred_check_branch
      %147 = sbr.rel (%p145) target = $region16
    $region15: #{cnnl4_forward.6} parent=5 // pred_region
      // Predicated region
      $region17: #{cnnl4_forward.6} parent=15 // pred_check
        %p148 = pneg %p43
      $region18: #{cnnl4_forward.6} parent=15 // pred_check_branch
        %150 = sbr.rel (%p148) target = $region20
      $region19: #{cnnl4_forward.6} parent=15 // pred_region
        %s151 = smul.u32 7, %s17
        %p152 = scmp.lt.s32.totalorder %s16, 1
        %s153 = scalar_select %p152, %s16, 1
        %p154 = scmp.lt.s32.totalorder %s151, 6
        %s155 = scalar_select %p154, %s151, 6
        %s156 = smul.addr %s155, 9
        %s157 = smul.addr %s153, 63
        %s158 = sadd.s32 %s156, %s157
        %s159 = smul.addr %s158, 4
        %s160 = scalar_lea.vmem %s0, %s159
        %s161 = smul.u32 7, %s17
      $region20: #{cnnl4_forward.6} parent=15 // pred_fallthru
        _
      // Predicated region
      $region21: #{cnnl4_forward.6} parent=15 // pred_check
        %p162 = pneg %p69
      $region22: #{cnnl4_forward.6} parent=15 // pred_check_branch
        %164 = sbr.rel (%p162) target = $region24
      $region23: #{cnnl4_forward.6} parent=15 // pred_region
        %p165 = scmp.lt.s32.totalorder %s16, 1
        %s166 = scalar_select %p165, %s16, 1
        %s167 = smul.addr %s166, 288
        %s168 = smul.addr %s167, 4
        %s169 = scalar_lea.vmem %s1, %s168
      $region24: #{cnnl4_forward.6} parent=15 // pred_fallthru
        _
      // Predicated region
      $region25: #{cnnl4_forward.6} parent=15 // pred_check
        %p170 = pneg %p95
      $region26: #{cnnl4_forward.6} parent=15 // pred_check_branch
        %172 = sbr.rel (%p170) target = $region28
      $region27: #{cnnl4_forward.6} parent=15 // pred_region
        %p173 = scmp.lt.s32.totalorder %s16, 1
        %s174 = scalar_select %p173, %s16, 1
        %s175 = smul.addr %s174, 2
        %s176 = scalar_lea.vmem %s2, %s175
      $region28: #{cnnl4_forward.6} parent=15 // pred_fallthru
        _
    $region16: #{cnnl4_forward.6} parent=5 // pred_fallthru
      _
    %p177 = scmp.le.s32.totalorder 1, %s9
    %p178 = scmp.lt.s32.totalorder %s9, 3
    %p179 = pnand %p177, %p178
    %p180 = pneg %p179
    // Predicated region
    $region29: #{cnnl4_forward.6} parent=5 // pred_check
      _
    $region30: #{cnnl4_forward.6} parent=5 // pred_check_branch
      %182 = sbr.rel (%p179) target = $region32
    $region31: #{cnnl4_forward.6} parent=5 // pred_region
      %s183 = ssub.s32 %s9, 1
      %s184 = smul.u32 7, %s19
      %p185 = scmp.lt.s32.totalorder %s18, 1
      %s186 = scalar_select %p185, %s18, 1
      %p187 = scmp.lt.s32.totalorder %s184, 6
      %s188 = scalar_select %p187, %s184, 6
      %s189 = smul.addr %s188, 9
      %s190 = smul.addr %s186, 63
      %s191 = sadd.s32 %s189, %s190
      %s192 = smul.addr %s191, 4
      %s193 = scalar_lea.vmem %s0, %s192
      %p194 = pneg %p49
      %p195 = pneg %p46
      %p196 = scmp.lt.s32.totalorder %s18, 1
      %s197 = scalar_select %p196, %s18, 1
      %s198 = smul.addr %s197, 288
      %s199 = smul.addr %s198, 4
      %s200 = scalar_lea.vmem %s1, %s199
      %p201 = pneg %p75
      %p202 = pneg %p72
      %p203 = scmp.lt.s32.totalorder %s18, 1
      %s204 = scalar_select %p203, %s18, 1
      %s205 = smul.addr %s204, 2
      %s206 = scalar_lea.vmem %s2, %s205
      %p207 = pneg %p101
      %p208 = pneg %p98
      %p209 = pneg %p129
      %p210 = pneg %p126
      %s211 = smul.u32 7, %s19
      %p212 = scmp.lt.s32.totalorder %s18, 1
      %s213 = scalar_select %p212, %s18, 1
      %p214 = scmp.lt.s32.totalorder %s211, 6
      %s215 = scalar_select %p214, %s211, 6
      %s216 = smul.addr %s215, 2
      %s217 = smul.addr %s213, 14
      %s218 = sadd.s32 %s216, %s217
      %s219 = smul.addr %s218, 8
      %s220 = scalar_lea.vmem %s3, %s219
      %s221 = smul.u32 7, %s19
      %p222 = scmp.lt.s32.totalorder %s18, 1
      %s223 = scalar_select %p222, %s18, 1
      %p224 = scmp.lt.s32.totalorder %s221, 6
      %s225 = scalar_select %p224, %s221, 6
      %s226 = smul.addr %s225, 9
      %s227 = smul.addr %s223, 63
      %s228 = sadd.s32 %s226, %s227
      %s229 = smul.addr %s228, 4
      %s230 = scalar_lea.vmem %s0, %s229
      %s231 = smul.u32 7, %s19
      %p232 = scmp.lt.s32.totalorder %s18, 1
      %s233 = scalar_select %p232, %s18, 1
      %s234 = smul.addr %s233, 288
      %s235 = smul.addr %s234, 4
      %s236 = scalar_lea.vmem %s1, %s235
      %p237 = scmp.lt.s32.totalorder %s18, 1
      %s238 = scalar_select %p237, %s18, 1
      %s239 = smul.addr %s238, 2
      %s240 = scalar_lea.vmem %s2, %s239
      %s241 = smul.u32 7, %s19
      %p242 = scmp.lt.s32.totalorder %s18, 1
      %s243 = scalar_select %p242, %s18, 1
      %p244 = scmp.lt.s32.totalorder %s241, 6
      %s245 = scalar_select %p244, %s241, 6
      %s246 = smul.addr %s245, 2
      %s247 = smul.addr %s243, 14
      %s248 = sadd.s32 %s246, %s247
      %s249 = smul.addr %s248, 8
      %s250 = scalar_lea.vmem %s3, %s249
      %s251 = smul.u32 7, %s19
      %v253 = vld [vmem:[%s230] sm:$0xff]
      %v254 = vld [vmem:[%s230 + $0x8] sm:$0xff]
      %v255 = vld [vmem:[%s230 + $0x10] sm:$0xff]
      %v256 = vld [vmem:[%s230 + $0x18] sm:$0xff]
      %v257 = vld [vmem:[%s230 + $0x20] sm:$0xf]
      %v258 = vld [vmem:[%s230 + $0x24] sm:$0xff]
      %v259 = vld [vmem:[%s230 + $0x2c] sm:$0xff]
      %v260 = vld [vmem:[%s230 + $0x34] sm:$0xff]
      %v261 = vld [vmem:[%s230 + $0x3c] sm:$0xff]
      %v262 = vld [vmem:[%s230 + $0x44] sm:$0xf]
      %v263 = vld [vmem:[%s230 + $0x48] sm:$0xff]
      %v264 = vld [vmem:[%s230 + $0x50] sm:$0xff]
      %v265 = vld [vmem:[%s230 + $0x58] sm:$0xff]
      %v266 = vld [vmem:[%s230 + $0x60] sm:$0xff]
      %v267 = vld [vmem:[%s230 + $0x68] sm:$0xf]
      %v268 = vld [vmem:[%s230 + $0x6c] sm:$0xff]
      %v269 = vld [vmem:[%s230 + $0x74] sm:$0xff]
      %v270 = vld [vmem:[%s230 + $0x7c] sm:$0xff]
      %v271 = vld [vmem:[%s230 + $0x84] sm:$0xff]
      %v272 = vld [vmem:[%s230 + $0x8c] sm:$0xf]
      %v273 = vld [vmem:[%s230 + $0x90] sm:$0xff]
      %v274 = vld [vmem:[%s230 + $0x98] sm:$0xff]
      %v275 = vld [vmem:[%s230 + $0xa0] sm:$0xff]
      %v276 = vld [vmem:[%s230 + $0xa8] sm:$0xff]
      %v277 = vld [vmem:[%s230 + $0xb0] sm:$0xf]
      %v278 = vld [vmem:[%s230 + $0xb4] sm:$0xff]
      %v279 = vld [vmem:[%s230 + $0xbc] sm:$0xff]
      %v280 = vld [vmem:[%s230 + $0xc4] sm:$0xff]
      %v281 = vld [vmem:[%s230 + $0xcc] sm:$0xff]
      %v282 = vld [vmem:[%s230 + $0xd4] sm:$0xf]
      %v283 = vld [vmem:[%s230 + $0xd8] sm:$0x11]
      %v284 = vld [vmem:[%s230 + $0xe0] sm:$0x11]
      %v285 = vld [vmem:[%s230 + $0xe8] sm:$0x11]
      %v286 = vld [vmem:[%s230 + $0xf0] sm:$0x11]
      %v287 = vld [vmem:[%s230 + $0xf8] sm:$0x1]
      %v288 = vld [vmem:[%s236] sm:$0xff]
      %v289 = vld [vmem:[%s236 + $0x8] sm:$0xff]
      %v290 = vld [vmem:[%s236 + $0x10] sm:$0xff]
      %v291 = vld [vmem:[%s236 + $0x18] sm:$0xff]
      %v292 = vld [vmem:[%s236 + $0x20] sm:$0xff]
      %v293 = vld [vmem:[%s236 + $0x28] sm:$0xff]
      %v294 = vld [vmem:[%s236 + $0x30] sm:$0xff]
      %v295 = vld [vmem:[%s236 + $0x38] sm:$0xff]
      %v296 = vld [vmem:[%s236 + $0x40] sm:$0xff]
      %v297 = vld [vmem:[%s236 + $0x48] sm:$0xff]
      %v298 = vld [vmem:[%s236 + $0x50] sm:$0xff]
      %v299 = vld [vmem:[%s236 + $0x58] sm:$0xff]
      %v300 = vld [vmem:[%s236 + $0x60] sm:$0xff]
      %v301 = vld [vmem:[%s236 + $0x68] sm:$0xff]
      %v302 = vld [vmem:[%s236 + $0x70] sm:$0xff]
      %v303 = vld [vmem:[%s236 + $0x78] sm:$0xff]
      %v304 = vld [vmem:[%s236 + $0x80] sm:$0xff]
      %v305 = vld [vmem:[%s236 + $0x88] sm:$0xff]
      %v306 = vld [vmem:[%s236 + $0x90] sm:$0xff]
      %v307 = vld [vmem:[%s236 + $0x98] sm:$0xff]
      %v308 = vld [vmem:[%s236 + $0xa0] sm:$0xff]
      %v309 = vld [vmem:[%s236 + $0xa8] sm:$0xff]
      %v310 = vld [vmem:[%s236 + $0xb0] sm:$0xff]
      %v311 = vld [vmem:[%s236 + $0xb8] sm:$0xff]
      %v312 = vld [vmem:[%s236 + $0xc0] sm:$0xff]
      %v313 = vld [vmem:[%s236 + $0xc8] sm:$0xff]
      %v314 = vld [vmem:[%s236 + $0xd0] sm:$0xff]
      %v315 = vld [vmem:[%s236 + $0xd8] sm:$0xff]
      %v316 = vld [vmem:[%s236 + $0xe0] sm:$0xff]
      %v317 = vld [vmem:[%s236 + $0xe8] sm:$0xff]
      %v318 = vld [vmem:[%s236 + $0xf0] sm:$0xff]
      %v319 = vld [vmem:[%s236 + $0xf8] sm:$0xff]
      %v320 = vld [vmem:[%s236 + $0x100] sm:$0xff]
      %v321 = vld [vmem:[%s236 + $0x108] sm:$0xff]
      %v322 = vld [vmem:[%s236 + $0x110] sm:$0xff]
      %v323 = vld [vmem:[%s236 + $0x118] sm:$0xff]
      %v324 = vld [vmem:[%s236 + $0x120] sm:$0xff]
      %v325 = vld [vmem:[%s236 + $0x128] sm:$0xff]
      %v326 = vld [vmem:[%s236 + $0x130] sm:$0xff]
      %v327 = vld [vmem:[%s236 + $0x138] sm:$0xff]
      %v328 = vld [vmem:[%s236 + $0x140] sm:$0xff]
      %v329 = vld [vmem:[%s236 + $0x148] sm:$0xff]
      %v330 = vld [vmem:[%s236 + $0x150] sm:$0xff]
      %v331 = vld [vmem:[%s236 + $0x158] sm:$0xff]
      %v332 = vld [vmem:[%s236 + $0x160] sm:$0xff]
      %v333 = vld [vmem:[%s236 + $0x168] sm:$0xff]
      %v334 = vld [vmem:[%s236 + $0x170] sm:$0xff]
      %v335 = vld [vmem:[%s236 + $0x178] sm:$0xff]
      %v336 = vld [vmem:[%s236 + $0x180] sm:$0xff]
      %v337 = vld [vmem:[%s236 + $0x188] sm:$0xff]
      %v338 = vld [vmem:[%s236 + $0x190] sm:$0xff]
      %v339 = vld [vmem:[%s236 + $0x198] sm:$0xff]
      %v340 = vld [vmem:[%s236 + $0x1a0] sm:$0xff]
      %v341 = vld [vmem:[%s236 + $0x1a8] sm:$0xff]
      %v342 = vld [vmem:[%s236 + $0x1b0] sm:$0xff]
      %v343 = vld [vmem:[%s236 + $0x1b8] sm:$0xff]
      %v344 = vld [vmem:[%s236 + $0x1c0] sm:$0xff]
      %v345 = vld [vmem:[%s236 + $0x1c8] sm:$0xff]
      %v346 = vld [vmem:[%s236 + $0x1d0] sm:$0xff]
      %v347 = vld [vmem:[%s236 + $0x1d8] sm:$0xff]
      %v348 = vld [vmem:[%s236 + $0x1e0] sm:$0xff]
      %v349 = vld [vmem:[%s236 + $0x1e8] sm:$0xff]
      %v350 = vld [vmem:[%s236 + $0x1f0] sm:$0xff]
      %v351 = vld [vmem:[%s236 + $0x1f8] sm:$0xff]
      %v352 = vld [vmem:[%s236 + $0x200] sm:$0xff]
      %v353 = vld [vmem:[%s236 + $0x208] sm:$0xff]
      %v354 = vld [vmem:[%s236 + $0x210] sm:$0xff]
      %v355 = vld [vmem:[%s236 + $0x218] sm:$0xff]
      %v356 = vld [vmem:[%s236 + $0x220] sm:$0xff]
      %v357 = vld [vmem:[%s236 + $0x228] sm:$0xff]
      %v358 = vld [vmem:[%s236 + $0x230] sm:$0xff]
      %v359 = vld [vmem:[%s236 + $0x238] sm:$0xff]
      %v360 = vld [vmem:[%s236 + $0x240] sm:$0xff]
      %v361 = vld [vmem:[%s236 + $0x248] sm:$0xff]
      %v362 = vld [vmem:[%s236 + $0x250] sm:$0xff]
      %v363 = vld [vmem:[%s236 + $0x258] sm:$0xff]
      %v364 = vld [vmem:[%s236 + $0x260] sm:$0xff]
      %v365 = vld [vmem:[%s236 + $0x268] sm:$0xff]
      %v366 = vld [vmem:[%s236 + $0x270] sm:$0xff]
      %v367 = vld [vmem:[%s236 + $0x278] sm:$0xff]
      %v368 = vld [vmem:[%s236 + $0x280] sm:$0xff]
      %v369 = vld [vmem:[%s236 + $0x288] sm:$0xff]
      %v370 = vld [vmem:[%s236 + $0x290] sm:$0xff]
      %v371 = vld [vmem:[%s236 + $0x298] sm:$0xff]
      %v372 = vld [vmem:[%s236 + $0x2a0] sm:$0xff]
      %v373 = vld [vmem:[%s236 + $0x2a8] sm:$0xff]
      %v374 = vld [vmem:[%s236 + $0x2b0] sm:$0xff]
      %v375 = vld [vmem:[%s236 + $0x2b8] sm:$0xff]
      %v376 = vld [vmem:[%s236 + $0x2c0] sm:$0xff]
      %v377 = vld [vmem:[%s236 + $0x2c8] sm:$0xff]
      %v378 = vld [vmem:[%s236 + $0x2d0] sm:$0xff]
      %v379 = vld [vmem:[%s236 + $0x2d8] sm:$0xff]
      %v380 = vld [vmem:[%s236 + $0x2e0] sm:$0xff]
      %v381 = vld [vmem:[%s236 + $0x2e8] sm:$0xff]
      %v382 = vld [vmem:[%s236 + $0x2f0] sm:$0xff]
      %v383 = vld [vmem:[%s236 + $0x2f8] sm:$0xff]
      %v384 = vld [vmem:[%s236 + $0x300] sm:$0xff]
      %v385 = vld [vmem:[%s236 + $0x308] sm:$0xff]
      %v386 = vld [vmem:[%s236 + $0x310] sm:$0xff]
      %v387 = vld [vmem:[%s236 + $0x318] sm:$0xff]
      %v388 = vld [vmem:[%s236 + $0x320] sm:$0xff]
      %v389 = vld [vmem:[%s236 + $0x328] sm:$0xff]
      %v390 = vld [vmem:[%s236 + $0x330] sm:$0xff]
      %v391 = vld [vmem:[%s236 + $0x338] sm:$0xff]
      %v392 = vld [vmem:[%s236 + $0x340] sm:$0xff]
      %v393 = vld [vmem:[%s236 + $0x348] sm:$0xff]
      %v394 = vld [vmem:[%s236 + $0x350] sm:$0xff]
      %v395 = vld [vmem:[%s236 + $0x358] sm:$0xff]
      %v396 = vld [vmem:[%s236 + $0x360] sm:$0xff]
      %v397 = vld [vmem:[%s236 + $0x368] sm:$0xff]
      %v398 = vld [vmem:[%s236 + $0x370] sm:$0xff]
      %v399 = vld [vmem:[%s236 + $0x378] sm:$0xff]
      %v400 = vld [vmem:[%s236 + $0x380] sm:$0xff]
      %v401 = vld [vmem:[%s236 + $0x388] sm:$0xff]
      %v402 = vld [vmem:[%s236 + $0x390] sm:$0xff]
      %v403 = vld [vmem:[%s236 + $0x398] sm:$0xff]
      %v404 = vld [vmem:[%s236 + $0x3a0] sm:$0xff]
      %v405 = vld [vmem:[%s236 + $0x3a8] sm:$0xff]
      %v406 = vld [vmem:[%s236 + $0x3b0] sm:$0xff]
      %v407 = vld [vmem:[%s236 + $0x3b8] sm:$0xff]
      %v408 = vld [vmem:[%s236 + $0x3c0] sm:$0xff]
      %v409 = vld [vmem:[%s236 + $0x3c8] sm:$0xff]
      %v410 = vld [vmem:[%s236 + $0x3d0] sm:$0xff]
      %v411 = vld [vmem:[%s236 + $0x3d8] sm:$0xff]
      %v412 = vld [vmem:[%s236 + $0x3e0] sm:$0xff]
      %v413 = vld [vmem:[%s236 + $0x3e8] sm:$0xff]
      %v414 = vld [vmem:[%s236 + $0x3f0] sm:$0xff]
      %v415 = vld [vmem:[%s236 + $0x3f8] sm:$0xff]
      %v416 = vld [vmem:[%s236 + $0x400] sm:$0xff]
      %v417 = vld [vmem:[%s236 + $0x408] sm:$0xff]
      %v418 = vld [vmem:[%s236 + $0x410] sm:$0xff]
      %v419 = vld [vmem:[%s236 + $0x418] sm:$0xff]
      %v420 = vld [vmem:[%s236 + $0x420] sm:$0xff]
      %v421 = vld [vmem:[%s236 + $0x428] sm:$0xff]
      %v422 = vld [vmem:[%s236 + $0x430] sm:$0xff]
      %v423 = vld [vmem:[%s236 + $0x438] sm:$0xff]
      %v424 = vld [vmem:[%s236 + $0x440] sm:$0xff]
      %v425 = vld [vmem:[%s236 + $0x448] sm:$0xff]
      %v426 = vld [vmem:[%s236 + $0x450] sm:$0xff]
      %v427 = vld [vmem:[%s236 + $0x458] sm:$0xff]
      %v428 = vld [vmem:[%s236 + $0x460] sm:$0xff]
      %v429 = vld [vmem:[%s236 + $0x468] sm:$0xff]
      %v430 = vld [vmem:[%s236 + $0x470] sm:$0xff]
      %v431 = vld [vmem:[%s236 + $0x478] sm:$0xff]
      %v432 = vld [vmem:[%s240] sm:$0x3]
      %v434 = vlaneseq
      %v435 = vshrl.u32 %v434, 7
      %v436 = vsub.s32 0, %v435
      %v437 = vrot.slane %v432, %v436
      %v438 = vlaneseq
      %v439 = vshrl.u32 %v438, 7
      %v440 = vsub.s32 1, %v439
      %v441 = vrot.slane %v432, %v440
      %v479 = vunpack.c.l.b16 %v253
      %v480 = vunpack.c.h.b16 %v253
      %v481 = vunpack.c.l.b16 %v254
      %v482 = vunpack.c.h.b16 %v254
      %v483 = vunpack.c.l.b16 %v255
      %v484 = vunpack.c.h.b16 %v255
      %v485 = vunpack.c.l.b16 %v256
      %v486 = vunpack.c.h.b16 %v256
      %v487 = vunpack.c.l.b16 %v257
      %v488 = vunpack.c.l.b16 %v258
      %v489 = vunpack.c.h.b16 %v258
      %v490 = vunpack.c.l.b16 %v259
      %v491 = vunpack.c.h.b16 %v259
      %v492 = vunpack.c.l.b16 %v260
      %v493 = vunpack.c.h.b16 %v260
      %v494 = vunpack.c.l.b16 %v261
      %v495 = vunpack.c.h.b16 %v261
      %v496 = vunpack.c.l.b16 %v262
      %v497 = vunpack.c.l.b16 %v263
      %v498 = vunpack.c.h.b16 %v263
      %v499 = vunpack.c.l.b16 %v264
      %v500 = vunpack.c.h.b16 %v264
      %v501 = vunpack.c.l.b16 %v265
      %v502 = vunpack.c.h.b16 %v265
      %v503 = vunpack.c.l.b16 %v266
      %v504 = vunpack.c.h.b16 %v266
      %v505 = vunpack.c.l.b16 %v267
      %v506 = vunpack.c.l.b16 %v268
      %v507 = vunpack.c.h.b16 %v268
      %v508 = vunpack.c.l.b16 %v269
      %v509 = vunpack.c.h.b16 %v269
      %v510 = vunpack.c.l.b16 %v270
      %v511 = vunpack.c.h.b16 %v270
      %v512 = vunpack.c.l.b16 %v271
      %v513 = vunpack.c.h.b16 %v271
      %v514 = vunpack.c.l.b16 %v272
      %v515 = vunpack.c.l.b16 %v273
      %v516 = vunpack.c.h.b16 %v273
      %v517 = vunpack.c.l.b16 %v274
      %v518 = vunpack.c.h.b16 %v274
      %v519 = vunpack.c.l.b16 %v275
      %v520 = vunpack.c.h.b16 %v275
      %v521 = vunpack.c.l.b16 %v276
      %v522 = vunpack.c.h.b16 %v276
      %v523 = vunpack.c.l.b16 %v277
      %v524 = vunpack.c.l.b16 %v278
      %v525 = vunpack.c.h.b16 %v278
      %v526 = vunpack.c.l.b16 %v279
      %v527 = vunpack.c.h.b16 %v279
      %v528 = vunpack.c.l.b16 %v280
      %v529 = vunpack.c.h.b16 %v280
      %v530 = vunpack.c.l.b16 %v281
      %v531 = vunpack.c.h.b16 %v281
      %v532 = vunpack.c.l.b16 %v282
      %v533 = vunpack.c.l.b16 %v283
      %v534 = vunpack.c.h.b16 %v283
      %v535 = vunpack.c.l.b16 %v284
      %v536 = vunpack.c.h.b16 %v284
      %v537 = vunpack.c.l.b16 %v285
      %v538 = vunpack.c.h.b16 %v285
      %v539 = vunpack.c.l.b16 %v286
      %v540 = vunpack.c.h.b16 %v286
      %v541 = vunpack.c.l.b16 %v287
      %v542 = vpack.c.b16 %v488, %v479
      %v543 = vpack.c.b16 %v489, %v480
      %v544 = vpack.c.b16 %v490, %v481
      %v545 = vpack.c.b16 %v491, %v482
      %v546 = vpack.c.b16 %v492, %v483
      %v547 = vpack.c.b16 %v493, %v484
      %v548 = vpack.c.b16 %v494, %v485
      %v549 = vpack.c.b16 %v495, %v486
      %v550 = vpack.c.b16 %v496, %v487
      %v551 = vpack.c.b16 %v506, %v497
      %v552 = vpack.c.b16 %v507, %v498
      %v553 = vpack.c.b16 %v508, %v499
      %v554 = vpack.c.b16 %v509, %v500
      %v555 = vpack.c.b16 %v510, %v501
      %v556 = vpack.c.b16 %v511, %v502
      %v557 = vpack.c.b16 %v512, %v503
      %v558 = vpack.c.b16 %v513, %v504
      %v559 = vpack.c.b16 %v514, %v505
      %v560 = vpack.c.b16 %v524, %v515
      %v561 = vpack.c.b16 %v525, %v516
      %v562 = vpack.c.b16 %v526, %v517
      %v563 = vpack.c.b16 %v527, %v518
      %v564 = vpack.c.b16 %v528, %v519
      %v565 = vpack.c.b16 %v529, %v520
      %v566 = vpack.c.b16 %v530, %v521
      %v567 = vpack.c.b16 %v531, %v522
      %v568 = vpack.c.b16 %v532, %v523
      %v569 = vpack.c.b16 %v533, %v533
      %v570 = vpack.c.b16 %v534, %v534
      %v571 = vpack.c.b16 %v535, %v535
      %v572 = vpack.c.b16 %v536, %v536
      %v573 = vpack.c.b16 %v537, %v537
      %v574 = vpack.c.b16 %v538, %v538
      %v575 = vpack.c.b16 %v539, %v539
      %v576 = vpack.c.b16 %v540, %v540
      %v577 = vpack.c.b16 %v541, %v541
      %v758 = vunpack.c.l.b16 %v288
      %v759 = vunpack.c.h.b16 %v288
      %v760 = vunpack.c.l.b16 %v289
      %v761 = vunpack.c.h.b16 %v289
      %v762 = vunpack.c.l.b16 %v290
      %v763 = vunpack.c.h.b16 %v290
      %v764 = vunpack.c.l.b16 %v291
      %v765 = vunpack.c.h.b16 %v291
      %v766 = vunpack.c.l.b16 %v292
      %v767 = vunpack.c.h.b16 %v292
      %v768 = vunpack.c.l.b16 %v293
      %v769 = vunpack.c.h.b16 %v293
      %v770 = vunpack.c.l.b16 %v294
      %v771 = vunpack.c.h.b16 %v294
      %v772 = vunpack.c.l.b16 %v295
      %v773 = vunpack.c.h.b16 %v295
      %v774 = vunpack.c.l.b16 %v296
      %v775 = vunpack.c.h.b16 %v296
      %v776 = vunpack.c.l.b16 %v297
      %v777 = vunpack.c.h.b16 %v297
      %v778 = vunpack.c.l.b16 %v298
      %v779 = vunpack.c.h.b16 %v298
      %v780 = vunpack.c.l.b16 %v299
      %v781 = vunpack.c.h.b16 %v299
      %v782 = vunpack.c.l.b16 %v300
      %v783 = vunpack.c.h.b16 %v300
      %v784 = vunpack.c.l.b16 %v301
      %v785 = vunpack.c.h.b16 %v301
      %v786 = vunpack.c.l.b16 %v302
      %v787 = vunpack.c.h.b16 %v302
      %v788 = vunpack.c.l.b16 %v303
      %v789 = vunpack.c.h.b16 %v303
      %v790 = vunpack.c.l.b16 %v304
      %v791 = vunpack.c.h.b16 %v304
      %v792 = vunpack.c.l.b16 %v305
      %v793 = vunpack.c.h.b16 %v305
      %v794 = vunpack.c.l.b16 %v306
      %v795 = vunpack.c.h.b16 %v306
      %v796 = vunpack.c.l.b16 %v307
      %v797 = vunpack.c.h.b16 %v307
      %v798 = vunpack.c.l.b16 %v308
      %v799 = vunpack.c.h.b16 %v308
      %v800 = vunpack.c.l.b16 %v309
      %v801 = vunpack.c.h.b16 %v309
      %v802 = vunpack.c.l.b16 %v310
      %v803 = vunpack.c.h.b16 %v310
      %v804 = vunpack.c.l.b16 %v311
      %v805 = vunpack.c.h.b16 %v311
      %v806 = vunpack.c.l.b16 %v312
      %v807 = vunpack.c.h.b16 %v312
      %v808 = vunpack.c.l.b16 %v313
      %v809 = vunpack.c.h.b16 %v313
      %v810 = vunpack.c.l.b16 %v314
      %v811 = vunpack.c.h.b16 %v314
      %v812 = vunpack.c.l.b16 %v315
      %v813 = vunpack.c.h.b16 %v315
      %v814 = vunpack.c.l.b16 %v316
      %v815 = vunpack.c.h.b16 %v316
      %v816 = vunpack.c.l.b16 %v317
      %v817 = vunpack.c.h.b16 %v317
      %v818 = vunpack.c.l.b16 %v318
      %v819 = vunpack.c.h.b16 %v318
      %v820 = vunpack.c.l.b16 %v319
      %v821 = vunpack.c.h.b16 %v319
      %v822 = vunpack.c.l.b16 %v320
      %v823 = vunpack.c.h.b16 %v320
      %v824 = vunpack.c.l.b16 %v321
      %v825 = vunpack.c.h.b16 %v321
      %v826 = vunpack.c.l.b16 %v322
      %v827 = vunpack.c.h.b16 %v322
      %v828 = vunpack.c.l.b16 %v323
      %v829 = vunpack.c.h.b16 %v323
      %v830 = vunpack.c.l.b16 %v324
      %v831 = vunpack.c.h.b16 %v324
      %v832 = vunpack.c.l.b16 %v325
      %v833 = vunpack.c.h.b16 %v325
      %v834 = vunpack.c.l.b16 %v326
      %v835 = vunpack.c.h.b16 %v326
      %v836 = vunpack.c.l.b16 %v327
      %v837 = vunpack.c.h.b16 %v327
      %v838 = vunpack.c.l.b16 %v328
      %v839 = vunpack.c.h.b16 %v328
      %v840 = vunpack.c.l.b16 %v329
      %v841 = vunpack.c.h.b16 %v329
      %v842 = vunpack.c.l.b16 %v330
      %v843 = vunpack.c.h.b16 %v330
      %v844 = vunpack.c.l.b16 %v331
      %v845 = vunpack.c.h.b16 %v331
      %v846 = vunpack.c.l.b16 %v332
      %v847 = vunpack.c.h.b16 %v332
      %v848 = vunpack.c.l.b16 %v333
      %v849 = vunpack.c.h.b16 %v333
      %v850 = vunpack.c.l.b16 %v334
      %v851 = vunpack.c.h.b16 %v334
      %v852 = vunpack.c.l.b16 %v335
      %v853 = vunpack.c.h.b16 %v335
      %v854 = vunpack.c.l.b16 %v336
      %v855 = vunpack.c.h.b16 %v336
      %v856 = vunpack.c.l.b16 %v337
      %v857 = vunpack.c.h.b16 %v337
      %v858 = vunpack.c.l.b16 %v338
      %v859 = vunpack.c.h.b16 %v338
      %v860 = vunpack.c.l.b16 %v339
      %v861 = vunpack.c.h.b16 %v339
      %v862 = vunpack.c.l.b16 %v340
      %v863 = vunpack.c.h.b16 %v340
      %v864 = vunpack.c.l.b16 %v341
      %v865 = vunpack.c.h.b16 %v341
      %v866 = vunpack.c.l.b16 %v342
      %v867 = vunpack.c.h.b16 %v342
      %v868 = vunpack.c.l.b16 %v343
      %v869 = vunpack.c.h.b16 %v343
      %v870 = vunpack.c.l.b16 %v344
      %v871 = vunpack.c.h.b16 %v344
      %v872 = vunpack.c.l.b16 %v345
      %v873 = vunpack.c.h.b16 %v345
      %v874 = vunpack.c.l.b16 %v346
      %v875 = vunpack.c.h.b16 %v346
      %v876 = vunpack.c.l.b16 %v347
      %v877 = vunpack.c.h.b16 %v347
      %v878 = vunpack.c.l.b16 %v348
      %v879 = vunpack.c.h.b16 %v348
      %v880 = vunpack.c.l.b16 %v349
      %v881 = vunpack.c.h.b16 %v349
      %v882 = vunpack.c.l.b16 %v350
      %v883 = vunpack.c.h.b16 %v350
      %v884 = vunpack.c.l.b16 %v351
      %v885 = vunpack.c.h.b16 %v351
      %v886 = vunpack.c.l.b16 %v352
      %v887 = vunpack.c.h.b16 %v352
      %v888 = vunpack.c.l.b16 %v353
      %v889 = vunpack.c.h.b16 %v353
      %v890 = vunpack.c.l.b16 %v354
      %v891 = vunpack.c.h.b16 %v354
      %v892 = vunpack.c.l.b16 %v355
      %v893 = vunpack.c.h.b16 %v355
      %v894 = vunpack.c.l.b16 %v356
      %v895 = vunpack.c.h.b16 %v356
      %v896 = vunpack.c.l.b16 %v357
      %v897 = vunpack.c.h.b16 %v357
      %v898 = vunpack.c.l.b16 %v358
      %v899 = vunpack.c.h.b16 %v358
      %v900 = vunpack.c.l.b16 %v359
      %v901 = vunpack.c.h.b16 %v359
      %v902 = vunpack.c.l.b16 %v360
      %v903 = vunpack.c.h.b16 %v360
      %v904 = vunpack.c.l.b16 %v361
      %v905 = vunpack.c.h.b16 %v361
      %v906 = vunpack.c.l.b16 %v362
      %v907 = vunpack.c.h.b16 %v362
      %v908 = vunpack.c.l.b16 %v363
      %v909 = vunpack.c.h.b16 %v363
      %v910 = vunpack.c.l.b16 %v364
      %v911 = vunpack.c.h.b16 %v364
      %v912 = vunpack.c.l.b16 %v365
      %v913 = vunpack.c.h.b16 %v365
      %v914 = vunpack.c.l.b16 %v366
      %v915 = vunpack.c.h.b16 %v366
      %v916 = vunpack.c.l.b16 %v367
      %v917 = vunpack.c.h.b16 %v367
      %v918 = vunpack.c.l.b16 %v368
      %v919 = vunpack.c.h.b16 %v368
      %v920 = vunpack.c.l.b16 %v369
      %v921 = vunpack.c.h.b16 %v369
      %v922 = vunpack.c.l.b16 %v370
      %v923 = vunpack.c.h.b16 %v370
      %v924 = vunpack.c.l.b16 %v371
      %v925 = vunpack.c.h.b16 %v371
      %v926 = vunpack.c.l.b16 %v372
      %v927 = vunpack.c.h.b16 %v372
      %v928 = vunpack.c.l.b16 %v373
      %v929 = vunpack.c.h.b16 %v373
      %v930 = vunpack.c.l.b16 %v374
      %v931 = vunpack.c.h.b16 %v374
      %v932 = vunpack.c.l.b16 %v375
      %v933 = vunpack.c.h.b16 %v375
      %v934 = vunpack.c.l.b16 %v376
      %v935 = vunpack.c.h.b16 %v376
      %v936 = vunpack.c.l.b16 %v377
      %v937 = vunpack.c.h.b16 %v377
      %v938 = vunpack.c.l.b16 %v378
      %v939 = vunpack.c.h.b16 %v378
      %v940 = vunpack.c.l.b16 %v379
      %v941 = vunpack.c.h.b16 %v379
      %v942 = vunpack.c.l.b16 %v380
      %v943 = vunpack.c.h.b16 %v380
      %v944 = vunpack.c.l.b16 %v381
      %v945 = vunpack.c.h.b16 %v381
      %v946 = vunpack.c.l.b16 %v382
      %v947 = vunpack.c.h.b16 %v382
      %v948 = vunpack.c.l.b16 %v383
      %v949 = vunpack.c.h.b16 %v383
      %v950 = vunpack.c.l.b16 %v384
      %v951 = vunpack.c.h.b16 %v384
      %v952 = vunpack.c.l.b16 %v385
      %v953 = vunpack.c.h.b16 %v385
      %v954 = vunpack.c.l.b16 %v386
      %v955 = vunpack.c.h.b16 %v386
      %v956 = vunpack.c.l.b16 %v387
      %v957 = vunpack.c.h.b16 %v387
      %v958 = vunpack.c.l.b16 %v388
      %v959 = vunpack.c.h.b16 %v388
      %v960 = vunpack.c.l.b16 %v389
      %v961 = vunpack.c.h.b16 %v389
      %v962 = vunpack.c.l.b16 %v390
      %v963 = vunpack.c.h.b16 %v390
      %v964 = vunpack.c.l.b16 %v391
      %v965 = vunpack.c.h.b16 %v391
      %v966 = vunpack.c.l.b16 %v392
      %v967 = vunpack.c.h.b16 %v392
      %v968 = vunpack.c.l.b16 %v393
      %v969 = vunpack.c.h.b16 %v393
      %v970 = vunpack.c.l.b16 %v394
      %v971 = vunpack.c.h.b16 %v394
      %v972 = vunpack.c.l.b16 %v395
      %v973 = vunpack.c.h.b16 %v395
      %v974 = vunpack.c.l.b16 %v396
      %v975 = vunpack.c.h.b16 %v396
      %v976 = vunpack.c.l.b16 %v397
      %v977 = vunpack.c.h.b16 %v397
      %v978 = vunpack.c.l.b16 %v398
      %v979 = vunpack.c.h.b16 %v398
      %v980 = vunpack.c.l.b16 %v399
      %v981 = vunpack.c.h.b16 %v399
      %v982 = vunpack.c.l.b16 %v400
      %v983 = vunpack.c.h.b16 %v400
      %v984 = vunpack.c.l.b16 %v401
      %v985 = vunpack.c.h.b16 %v401
      %v986 = vunpack.c.l.b16 %v402
      %v987 = vunpack.c.h.b16 %v402
      %v988 = vunpack.c.l.b16 %v403
      %v989 = vunpack.c.h.b16 %v403
      %v990 = vunpack.c.l.b16 %v404
      %v991 = vunpack.c.h.b16 %v404
      %v992 = vunpack.c.l.b16 %v405
      %v993 = vunpack.c.h.b16 %v405
      %v994 = vunpack.c.l.b16 %v406
      %v995 = vunpack.c.h.b16 %v406
      %v996 = vunpack.c.l.b16 %v407
      %v997 = vunpack.c.h.b16 %v407
      %v998 = vunpack.c.l.b16 %v408
      %v999 = vunpack.c.h.b16 %v408
      %v1000 = vunpack.c.l.b16 %v409
      %v1001 = vunpack.c.h.b16 %v409
      %v1002 = vunpack.c.l.b16 %v410
      %v1003 = vunpack.c.h.b16 %v410
      %v1004 = vunpack.c.l.b16 %v411
      %v1005 = vunpack.c.h.b16 %v411
      %v1006 = vunpack.c.l.b16 %v412
      %v1007 = vunpack.c.h.b16 %v412
      %v1008 = vunpack.c.l.b16 %v413
      %v1009 = vunpack.c.h.b16 %v413
      %v1010 = vunpack.c.l.b16 %v414
      %v1011 = vunpack.c.h.b16 %v414
      %v1012 = vunpack.c.l.b16 %v415
      %v1013 = vunpack.c.h.b16 %v415
      %v1014 = vunpack.c.l.b16 %v416
      %v1015 = vunpack.c.h.b16 %v416
      %v1016 = vunpack.c.l.b16 %v417
      %v1017 = vunpack.c.h.b16 %v417
      %v1018 = vunpack.c.l.b16 %v418
      %v1019 = vunpack.c.h.b16 %v418
      %v1020 = vunpack.c.l.b16 %v419
      %v1021 = vunpack.c.h.b16 %v419
      %v1022 = vunpack.c.l.b16 %v420
      %v1023 = vunpack.c.h.b16 %v420
      %v1024 = vunpack.c.l.b16 %v421
      %v1025 = vunpack.c.h.b16 %v421
      %v1026 = vunpack.c.l.b16 %v422
      %v1027 = vunpack.c.h.b16 %v422
      %v1028 = vunpack.c.l.b16 %v423
      %v1029 = vunpack.c.h.b16 %v423
      %v1030 = vunpack.c.l.b16 %v424
      %v1031 = vunpack.c.h.b16 %v424
      %v1032 = vunpack.c.l.b16 %v425
      %v1033 = vunpack.c.h.b16 %v425
      %v1034 = vunpack.c.l.b16 %v426
      %v1035 = vunpack.c.h.b16 %v426
      %v1036 = vunpack.c.l.b16 %v427
      %v1037 = vunpack.c.h.b16 %v427
      %v1038 = vunpack.c.l.b16 %v428
      %v1039 = vunpack.c.h.b16 %v428
      %v1040 = vunpack.c.l.b16 %v429
      %v1041 = vunpack.c.h.b16 %v429
      %v1042 = vunpack.c.l.b16 %v430
      %v1043 = vunpack.c.h.b16 %v430
      %v1044 = vunpack.c.l.b16 %v431
      %v1045 = vunpack.c.h.b16 %v431
      %v1046 = vpack.c.b16 %v760, %v758
      %v1047 = vpack.c.b16 %v761, %v759
      %v1048 = vpack.c.b16 %v764, %v762
      %v1049 = vpack.c.b16 %v765, %v763
      %v1050 = vpack.c.b16 %v768, %v766
      %v1051 = vpack.c.b16 %v769, %v767
      %v1052 = vpack.c.b16 %v772, %v770
      %v1053 = vpack.c.b16 %v773, %v771
      %v1054 = vpack.c.b16 %v776, %v774
      %v1055 = vpack.c.b16 %v777, %v775
      %v1056 = vpack.c.b16 %v780, %v778
      %v1057 = vpack.c.b16 %v781, %v779
      %v1058 = vpack.c.b16 %v784, %v782
      %v1059 = vpack.c.b16 %v785, %v783
      %v1060 = vpack.c.b16 %v788, %v786
      %v1061 = vpack.c.b16 %v789, %v787
      %v1062 = vpack.c.b16 %v792, %v790
      %v1063 = vpack.c.b16 %v793, %v791
      %v1064 = vpack.c.b16 %v796, %v794
      %v1065 = vpack.c.b16 %v797, %v795
      %v1066 = vpack.c.b16 %v800, %v798
      %v1067 = vpack.c.b16 %v801, %v799
      %v1068 = vpack.c.b16 %v804, %v802
      %v1069 = vpack.c.b16 %v805, %v803
      %v1070 = vpack.c.b16 %v808, %v806
      %v1071 = vpack.c.b16 %v809, %v807
      %v1072 = vpack.c.b16 %v812, %v810
      %v1073 = vpack.c.b16 %v813, %v811
      %v1074 = vpack.c.b16 %v816, %v814
      %v1075 = vpack.c.b16 %v817, %v815
      %v1076 = vpack.c.b16 %v820, %v818
      %v1077 = vpack.c.b16 %v821, %v819
      %v1078 = vpack.c.b16 %v824, %v822
      %v1079 = vpack.c.b16 %v825, %v823
      %v1080 = vpack.c.b16 %v828, %v826
      %v1081 = vpack.c.b16 %v829, %v827
      %v1082 = vpack.c.b16 %v832, %v830
      %v1083 = vpack.c.b16 %v833, %v831
      %v1084 = vpack.c.b16 %v836, %v834
      %v1085 = vpack.c.b16 %v837, %v835
      %v1086 = vpack.c.b16 %v840, %v838
      %v1087 = vpack.c.b16 %v841, %v839
      %v1088 = vpack.c.b16 %v844, %v842
      %v1089 = vpack.c.b16 %v845, %v843
      %v1090 = vpack.c.b16 %v848, %v846
      %v1091 = vpack.c.b16 %v849, %v847
      %v1092 = vpack.c.b16 %v852, %v850
      %v1093 = vpack.c.b16 %v853, %v851
      %v1094 = vpack.c.b16 %v856, %v854
      %v1095 = vpack.c.b16 %v857, %v855
      %v1096 = vpack.c.b16 %v860, %v858
      %v1097 = vpack.c.b16 %v861, %v859
      %v1098 = vpack.c.b16 %v864, %v862
      %v1099 = vpack.c.b16 %v865, %v863
      %v1100 = vpack.c.b16 %v868, %v866
      %v1101 = vpack.c.b16 %v869, %v867
      %v1102 = vpack.c.b16 %v872, %v870
      %v1103 = vpack.c.b16 %v873, %v871
      %v1104 = vpack.c.b16 %v876, %v874
      %v1105 = vpack.c.b16 %v877, %v875
      %v1106 = vpack.c.b16 %v880, %v878
      %v1107 = vpack.c.b16 %v881, %v879
      %v1108 = vpack.c.b16 %v884, %v882
      %v1109 = vpack.c.b16 %v885, %v883
      %v1110 = vpack.c.b16 %v888, %v886
      %v1111 = vpack.c.b16 %v889, %v887
      %v1112 = vpack.c.b16 %v892, %v890
      %v1113 = vpack.c.b16 %v893, %v891
      %v1114 = vpack.c.b16 %v896, %v894
      %v1115 = vpack.c.b16 %v897, %v895
      %v1116 = vpack.c.b16 %v900, %v898
      %v1117 = vpack.c.b16 %v901, %v899
      %v1118 = vpack.c.b16 %v904, %v902
      %v1119 = vpack.c.b16 %v905, %v903
      %v1120 = vpack.c.b16 %v908, %v906
      %v1121 = vpack.c.b16 %v909, %v907
      %v1122 = vpack.c.b16 %v912, %v910
      %v1123 = vpack.c.b16 %v913, %v911
      %v1124 = vpack.c.b16 %v916, %v914
      %v1125 = vpack.c.b16 %v917, %v915
      %v1126 = vpack.c.b16 %v920, %v918
      %v1127 = vpack.c.b16 %v921, %v919
      %v1128 = vpack.c.b16 %v924, %v922
      %v1129 = vpack.c.b16 %v925, %v923
      %v1130 = vpack.c.b16 %v928, %v926
      %v1131 = vpack.c.b16 %v929, %v927
      %v1132 = vpack.c.b16 %v932, %v930
      %v1133 = vpack.c.b16 %v933, %v931
      %v1134 = vpack.c.b16 %v936, %v934
      %v1135 = vpack.c.b16 %v937, %v935
      %v1136 = vpack.c.b16 %v940, %v938
      %v1137 = vpack.c.b16 %v941, %v939
      %v1138 = vpack.c.b16 %v944, %v942
      %v1139 = vpack.c.b16 %v945, %v943
      %v1140 = vpack.c.b16 %v948, %v946
      %v1141 = vpack.c.b16 %v949, %v947
      %v1142 = vpack.c.b16 %v952, %v950
      %v1143 = vpack.c.b16 %v953, %v951
      %v1144 = vpack.c.b16 %v956, %v954
      %v1145 = vpack.c.b16 %v957, %v955
      %v1146 = vpack.c.b16 %v960, %v958
      %v1147 = vpack.c.b16 %v961, %v959
      %v1148 = vpack.c.b16 %v964, %v962
      %v1149 = vpack.c.b16 %v965, %v963
      %v1150 = vpack.c.b16 %v968, %v966
      %v1151 = vpack.c.b16 %v969, %v967
      %v1152 = vpack.c.b16 %v972, %v970
      %v1153 = vpack.c.b16 %v973, %v971
      %v1154 = vpack.c.b16 %v976, %v974
      %v1155 = vpack.c.b16 %v977, %v975
      %v1156 = vpack.c.b16 %v980, %v978
      %v1157 = vpack.c.b16 %v981, %v979
      %v1158 = vpack.c.b16 %v984, %v982
      %v1159 = vpack.c.b16 %v985, %v983
      %v1160 = vpack.c.b16 %v988, %v986
      %v1161 = vpack.c.b16 %v989, %v987
      %v1162 = vpack.c.b16 %v992, %v990
      %v1163 = vpack.c.b16 %v993, %v991
      %v1164 = vpack.c.b16 %v996, %v994
      %v1165 = vpack.c.b16 %v997, %v995
      %v1166 = vpack.c.b16 %v1000, %v998
      %v1167 = vpack.c.b16 %v1001, %v999
      %v1168 = vpack.c.b16 %v1004, %v1002
      %v1169 = vpack.c.b16 %v1005, %v1003
      %v1170 = vpack.c.b16 %v1008, %v1006
      %v1171 = vpack.c.b16 %v1009, %v1007
      %v1172 = vpack.c.b16 %v1012, %v1010
      %v1173 = vpack.c.b16 %v1013, %v1011
      %v1174 = vpack.c.b16 %v1016, %v1014
      %v1175 = vpack.c.b16 %v1017, %v1015
      %v1176 = vpack.c.b16 %v1020, %v1018
      %v1177 = vpack.c.b16 %v1021, %v1019
      %v1178 = vpack.c.b16 %v1024, %v1022
      %v1179 = vpack.c.b16 %v1025, %v1023
      %v1180 = vpack.c.b16 %v1028, %v1026
      %v1181 = vpack.c.b16 %v1029, %v1027
      %v1182 = vpack.c.b16 %v1032, %v1030
      %v1183 = vpack.c.b16 %v1033, %v1031
      %v1184 = vpack.c.b16 %v1036, %v1034
      %v1185 = vpack.c.b16 %v1037, %v1035
      %v1186 = vpack.c.b16 %v1040, %v1038
      %v1187 = vpack.c.b16 %v1041, %v1039
      %v1188 = vpack.c.b16 %v1044, %v1042
      %v1189 = vpack.c.b16 %v1045, %v1043
      %1334 = vmatprep.subr.bf16.mxu0 %v1061
      %1335 = vmatpush1.bf16.msra.mxu0 %v1060
      %1336 = vmatprep.subr.bf16.mxu0 %v1059
      %1337 = vmatpush1.bf16.msra.mxu0 %v1058
      %1338 = vmatprep.subr.bf16.mxu0 %v1057
      %1339 = vmatpush1.bf16.msra.mxu0 %v1056
      %1340 = vmatprep.subr.bf16.mxu0 %v1055
      %1341 = vmatpush1.bf16.msra.mxu0 %v1054
      %1342 = vmatprep.subr.bf16.mxu0 %v1053
      %1343 = vmatpush1.bf16.msra.mxu0 %v1052
      %1344 = vmatprep.subr.bf16.mxu0 %v1051
      %1345 = vmatpush1.bf16.msra.mxu0 %v1050
      %1346 = vmatprep.subr.bf16.mxu0 %v1049
      %1347 = vmatpush1.bf16.msra.mxu0 %v1048
      %1348 = vmatprep.subr.bf16.mxu0 %v1047
      %1349 = vmatpush1.bf16.msra.mxu0 %v1046
      %1350 = vmatprep.subr.bf16.mxu0 %v1077
      %1351 = vmatpush2.bf16.msra.mxu0 %v1076
      %1352 = vmatprep.subr.bf16.mxu0 %v1075
      %1353 = vmatpush2.bf16.msra.mxu0 %v1074
      %1354 = vmatprep.subr.bf16.mxu0 %v1073
      %1355 = vmatpush2.bf16.msra.mxu0 %v1072
      %1356 = vmatprep.subr.bf16.mxu0 %v1071
      %1357 = vmatpush2.bf16.msra.mxu0 %v1070
      %1358 = vmatprep.subr.bf16.mxu0 %v1069
      %1359 = vmatpush2.bf16.msra.mxu0 %v1068
      %1360 = vmatprep.subr.bf16.mxu0 %v1067
      %1361 = vmatpush2.bf16.msra.mxu0 %v1066
      %1362 = vmatprep.subr.bf16.mxu0 %v1065
      %1363 = vmatpush2.bf16.msra.mxu0 %v1064
      %1364 = vmatprep.subr.bf16.mxu0 %v1063
      %1365 = vmatpush2.bf16.msra.mxu0 %v1062
      %1366 = vmatprep.mubr.bf16.mxu0 %v543
      %1367 = vmatmul.mubr.bf16.gmra.mxu0 %v542
      %v1368 = vpop.f32.mrf.mxu0
      %v1369 = vadd.f32 %v437, %v1368
      %v1370 = vpop.f32.mrf.mxu0
      %v1371 = vadd.f32 %v441, %v1370
      %v1372 = vpop.f32.mrf.mxu0
      %v1373 = vadd.f32 %v437, %v1372
      %v1374 = vpop.f32.mrf.mxu0
      %v1375 = vadd.f32 %v441, %v1374
      %1376 = vmatprep.mubr.bf16.mxu0 %v552
      %1377 = vmatmul.mubr.bf16.gmra.mxu0 %v551
      %v1378 = vpop.f32.mrf.mxu0
      %v1379 = vadd.f32 %v437, %v1378
      %v1380 = vpop.f32.mrf.mxu0
      %v1381 = vadd.f32 %v441, %v1380
      %v1382 = vpop.f32.mrf.mxu0
      %v1383 = vadd.f32 %v437, %v1382
      %v1384 = vpop.f32.mrf.mxu0
      %v1385 = vadd.f32 %v441, %v1384
      %1386 = vmatprep.mubr.bf16.mxu0 %v561
      %1387 = vmatmul.mubr.bf16.gmra.mxu0 %v560
      %v1388 = vpop.f32.mrf.mxu0
      %v1389 = vadd.f32 %v437, %v1388
      %v1390 = vpop.f32.mrf.mxu0
      %v1391 = vadd.f32 %v441, %v1390
      %v1392 = vpop.f32.mrf.mxu0
      %v1393 = vadd.f32 %v437, %v1392
      %v1394 = vpop.f32.mrf.mxu0
      %v1395 = vadd.f32 %v441, %v1394
      %1396 = vmatprep.mubr.bf16.mxu0 %v570
      %1397 = vmatmul.mubr.bf16.gmra.mxu0 %v569
      %v1398 = vpop.f32.mrf.mxu0
      %v1399 = vadd.f32 %v437, %v1398
      %v1400 = vpop.f32.mrf.mxu0
      %v1401 = vadd.f32 %v441, %v1400
      %v1402 = vpop.f32.mrf.mxu0
      %v1403 = vpop.f32.mrf.mxu0
      %1404 = vdwg.mxu0
      %1405 = vmatprep.subr.bf16.mxu0 %v1093
      %1406 = vmatpush1.bf16.msra.mxu0 %v1092
      %1407 = vmatprep.subr.bf16.mxu0 %v1091
      %1408 = vmatpush1.bf16.msra.mxu0 %v1090
      %1409 = vmatprep.subr.bf16.mxu0 %v1089
      %1410 = vmatpush1.bf16.msra.mxu0 %v1088
      %1411 = vmatprep.subr.bf16.mxu0 %v1087
      %1412 = vmatpush1.bf16.msra.mxu0 %v1086
      %1413 = vmatprep.subr.bf16.mxu0 %v1085
      %1414 = vmatpush1.bf16.msra.mxu0 %v1084
      %1415 = vmatprep.subr.bf16.mxu0 %v1083
      %1416 = vmatpush1.bf16.msra.mxu0 %v1082
      %1417 = vmatprep.subr.bf16.mxu0 %v1081
      %1418 = vmatpush1.bf16.msra.mxu0 %v1080
      %1419 = vmatprep.subr.bf16.mxu0 %v1079
      %1420 = vmatpush1.bf16.msra.mxu0 %v1078
      %1421 = vmatprep.subr.bf16.mxu0 %v1109
      %1422 = vmatpush2.bf16.msra.mxu0 %v1108
      %1423 = vmatprep.subr.bf16.mxu0 %v1107
      %1424 = vmatpush2.bf16.msra.mxu0 %v1106
      %1425 = vmatprep.subr.bf16.mxu0 %v1105
      %1426 = vmatpush2.bf16.msra.mxu0 %v1104
      %1427 = vmatprep.subr.bf16.mxu0 %v1103
      %1428 = vmatpush2.bf16.msra.mxu0 %v1102
      %1429 = vmatprep.subr.bf16.mxu0 %v1101
      %1430 = vmatpush2.bf16.msra.mxu0 %v1100
      %1431 = vmatprep.subr.bf16.mxu0 %v1099
      %1432 = vmatpush2.bf16.msra.mxu0 %v1098
      %1433 = vmatprep.subr.bf16.mxu0 %v1097
      %1434 = vmatpush2.bf16.msra.mxu0 %v1096
      %1435 = vmatprep.subr.bf16.mxu0 %v1095
      %1436 = vmatpush2.bf16.msra.mxu0 %v1094
      %1437 = vmatprep.mubr.bf16.mxu0 %v545
      %1438 = vmatmul.mubr.bf16.gmra.mxu0 %v544
      %v1439 = vpop.f32.mrf.mxu0
      %v1440 = vadd.f32 %v1369, %v1439
      %v1441 = vpop.f32.mrf.mxu0
      %v1442 = vadd.f32 %v1371, %v1441
      %v1443 = vpop.f32.mrf.mxu0
      %v1444 = vadd.f32 %v1373, %v1443
      %v1445 = vpop.f32.mrf.mxu0
      %v1446 = vadd.f32 %v1375, %v1445
      %1447 = vmatprep.mubr.bf16.mxu0 %v554
      %1448 = vmatmul.mubr.bf16.gmra.mxu0 %v553
      %v1449 = vpop.f32.mrf.mxu0
      %v1450 = vadd.f32 %v1379, %v1449
      %v1451 = vpop.f32.mrf.mxu0
      %v1452 = vadd.f32 %v1381, %v1451
      %v1453 = vpop.f32.mrf.mxu0
      %v1454 = vadd.f32 %v1383, %v1453
      %v1455 = vpop.f32.mrf.mxu0
      %v1456 = vadd.f32 %v1385, %v1455
      %1457 = vmatprep.mubr.bf16.mxu0 %v563
      %1458 = vmatmul.mubr.bf16.gmra.mxu0 %v562
      %v1459 = vpop.f32.mrf.mxu0
      %v1460 = vadd.f32 %v1389, %v1459
      %v1461 = vpop.f32.mrf.mxu0
      %v1462 = vadd.f32 %v1391, %v1461
      %v1463 = vpop.f32.mrf.mxu0
      %v1464 = vadd.f32 %v1393, %v1463
      %v1465 = vpop.f32.mrf.mxu0
      %v1466 = vadd.f32 %v1395, %v1465
      %1467 = vmatprep.mubr.bf16.mxu0 %v572
      %1468 = vmatmul.mubr.bf16.gmra.mxu0 %v571
      %v1469 = vpop.f32.mrf.mxu0
      %v1470 = vadd.f32 %v1399, %v1469
      %v1471 = vpop.f32.mrf.mxu0
      %v1472 = vadd.f32 %v1401, %v1471
      %v1473 = vpop.f32.mrf.mxu0
      %v1474 = vpop.f32.mrf.mxu0
      %1475 = vdwg.mxu0
      %1476 = vmatprep.subr.bf16.mxu0 %v1125
      %1477 = vmatpush1.bf16.msra.mxu0 %v1124
      %1478 = vmatprep.subr.bf16.mxu0 %v1123
      %1479 = vmatpush1.bf16.msra.mxu0 %v1122
      %1480 = vmatprep.subr.bf16.mxu0 %v1121
      %1481 = vmatpush1.bf16.msra.mxu0 %v1120
      %1482 = vmatprep.subr.bf16.mxu0 %v1119
      %1483 = vmatpush1.bf16.msra.mxu0 %v1118
      %1484 = vmatprep.subr.bf16.mxu0 %v1117
      %1485 = vmatpush1.bf16.msra.mxu0 %v1116
      %1486 = vmatprep.subr.bf16.mxu0 %v1115
      %1487 = vmatpush1.bf16.msra.mxu0 %v1114
      %1488 = vmatprep.subr.bf16.mxu0 %v1113
      %1489 = vmatpush1.bf16.msra.mxu0 %v1112
      %1490 = vmatprep.subr.bf16.mxu0 %v1111
      %1491 = vmatpush1.bf16.msra.mxu0 %v1110
      %1492 = vmatprep.subr.bf16.mxu0 %v1141
      %1493 = vmatpush2.bf16.msra.mxu0 %v1140
      %1494 = vmatprep.subr.bf16.mxu0 %v1139
      %1495 = vmatpush2.bf16.msra.mxu0 %v1138
      %1496 = vmatprep.subr.bf16.mxu0 %v1137
      %1497 = vmatpush2.bf16.msra.mxu0 %v1136
      %1498 = vmatprep.subr.bf16.mxu0 %v1135
      %1499 = vmatpush2.bf16.msra.mxu0 %v1134
      %1500 = vmatprep.subr.bf16.mxu0 %v1133
      %1501 = vmatpush2.bf16.msra.mxu0 %v1132
      %1502 = vmatprep.subr.bf16.mxu0 %v1131
      %1503 = vmatpush2.bf16.msra.mxu0 %v1130
      %1504 = vmatprep.subr.bf16.mxu0 %v1129
      %1505 = vmatpush2.bf16.msra.mxu0 %v1128
      %1506 = vmatprep.subr.bf16.mxu0 %v1127
      %1507 = vmatpush2.bf16.msra.mxu0 %v1126
      %1508 = vmatprep.mubr.bf16.mxu0 %v547
      %1509 = vmatmul.mubr.bf16.gmra.mxu0 %v546
      %v1510 = vpop.f32.mrf.mxu0
      %v1511 = vadd.f32 %v1440, %v1510
      %v1512 = vpop.f32.mrf.mxu0
      %v1513 = vadd.f32 %v1442, %v1512
      %v1514 = vpop.f32.mrf.mxu0
      %v1515 = vadd.f32 %v1444, %v1514
      %v1516 = vpop.f32.mrf.mxu0
      %v1517 = vadd.f32 %v1446, %v1516
      %1518 = vmatprep.mubr.bf16.mxu0 %v556
      %1519 = vmatmul.mubr.bf16.gmra.mxu0 %v555
      %v1520 = vpop.f32.mrf.mxu0
      %v1521 = vadd.f32 %v1450, %v1520
      %v1522 = vpop.f32.mrf.mxu0
      %v1523 = vadd.f32 %v1452, %v1522
      %v1524 = vpop.f32.mrf.mxu0
      %v1525 = vadd.f32 %v1454, %v1524
      %v1526 = vpop.f32.mrf.mxu0
      %v1527 = vadd.f32 %v1456, %v1526
      %1528 = vmatprep.mubr.bf16.mxu0 %v565
      %1529 = vmatmul.mubr.bf16.gmra.mxu0 %v564
      %v1530 = vpop.f32.mrf.mxu0
      %v1531 = vadd.f32 %v1460, %v1530
      %v1532 = vpop.f32.mrf.mxu0
      %v1533 = vadd.f32 %v1462, %v1532
      %v1534 = vpop.f32.mrf.mxu0
      %v1535 = vadd.f32 %v1464, %v1534
      %v1536 = vpop.f32.mrf.mxu0
      %v1537 = vadd.f32 %v1466, %v1536
      %1538 = vmatprep.mubr.bf16.mxu0 %v574
      %1539 = vmatmul.mubr.bf16.gmra.mxu0 %v573
      %v1540 = vpop.f32.mrf.mxu0
      %v1541 = vadd.f32 %v1470, %v1540
      %v1542 = vpop.f32.mrf.mxu0
      %v1543 = vadd.f32 %v1472, %v1542
      %v1544 = vpop.f32.mrf.mxu0
      %v1545 = vpop.f32.mrf.mxu0
      %1546 = vdwg.mxu0
      %1547 = vmatprep.subr.bf16.mxu0 %v1157
      %1548 = vmatpush1.bf16.msra.mxu0 %v1156
      %1549 = vmatprep.subr.bf16.mxu0 %v1155
      %1550 = vmatpush1.bf16.msra.mxu0 %v1154
      %1551 = vmatprep.subr.bf16.mxu0 %v1153
      %1552 = vmatpush1.bf16.msra.mxu0 %v1152
      %1553 = vmatprep.subr.bf16.mxu0 %v1151
      %1554 = vmatpush1.bf16.msra.mxu0 %v1150
      %1555 = vmatprep.subr.bf16.mxu0 %v1149
      %1556 = vmatpush1.bf16.msra.mxu0 %v1148
      %1557 = vmatprep.subr.bf16.mxu0 %v1147
      %1558 = vmatpush1.bf16.msra.mxu0 %v1146
      %1559 = vmatprep.subr.bf16.mxu0 %v1145
      %1560 = vmatpush1.bf16.msra.mxu0 %v1144
      %1561 = vmatprep.subr.bf16.mxu0 %v1143
      %1562 = vmatpush1.bf16.msra.mxu0 %v1142
      %1563 = vmatprep.subr.bf16.mxu0 %v1173
      %1564 = vmatpush2.bf16.msra.mxu0 %v1172
      %1565 = vmatprep.subr.bf16.mxu0 %v1171
      %1566 = vmatpush2.bf16.msra.mxu0 %v1170
      %1567 = vmatprep.subr.bf16.mxu0 %v1169
      %1568 = vmatpush2.bf16.msra.mxu0 %v1168
      %1569 = vmatprep.subr.bf16.mxu0 %v1167
      %1570 = vmatpush2.bf16.msra.mxu0 %v1166
      %1571 = vmatprep.subr.bf16.mxu0 %v1165
      %1572 = vmatpush2.bf16.msra.mxu0 %v1164
      %1573 = vmatprep.subr.bf16.mxu0 %v1163
      %1574 = vmatpush2.bf16.msra.mxu0 %v1162
      %1575 = vmatprep.subr.bf16.mxu0 %v1161
      %1576 = vmatpush2.bf16.msra.mxu0 %v1160
      %1577 = vmatprep.subr.bf16.mxu0 %v1159
      %1578 = vmatpush2.bf16.msra.mxu0 %v1158
      %1579 = vmatprep.mubr.bf16.mxu0 %v549
      %1580 = vmatmul.mubr.bf16.gmra.mxu0 %v548
      %v1581 = vpop.f32.mrf.mxu0
      %v1582 = vadd.f32 %v1511, %v1581
      %v1583 = vpop.f32.mrf.mxu0
      %v1584 = vadd.f32 %v1513, %v1583
      %v1585 = vpop.f32.mrf.mxu0
      %v1586 = vadd.f32 %v1515, %v1585
      %v1587 = vpop.f32.mrf.mxu0
      %v1588 = vadd.f32 %v1517, %v1587
      %1589 = vmatprep.mubr.bf16.mxu0 %v558
      %1590 = vmatmul.mubr.bf16.gmra.mxu0 %v557
      %v1591 = vpop.f32.mrf.mxu0
      %v1592 = vadd.f32 %v1521, %v1591
      %v1593 = vpop.f32.mrf.mxu0
      %v1594 = vadd.f32 %v1523, %v1593
      %v1595 = vpop.f32.mrf.mxu0
      %v1596 = vadd.f32 %v1525, %v1595
      %v1597 = vpop.f32.mrf.mxu0
      %v1598 = vadd.f32 %v1527, %v1597
      %1599 = vmatprep.mubr.bf16.mxu0 %v567
      %1600 = vmatmul.mubr.bf16.gmra.mxu0 %v566
      %v1601 = vpop.f32.mrf.mxu0
      %v1602 = vadd.f32 %v1531, %v1601
      %v1603 = vpop.f32.mrf.mxu0
      %v1604 = vadd.f32 %v1533, %v1603
      %v1605 = vpop.f32.mrf.mxu0
      %v1606 = vadd.f32 %v1535, %v1605
      %v1607 = vpop.f32.mrf.mxu0
      %v1608 = vadd.f32 %v1537, %v1607
      %1609 = vmatprep.mubr.bf16.mxu0 %v576
      %1610 = vmatmul.mubr.bf16.gmra.mxu0 %v575
      %v1611 = vpop.f32.mrf.mxu0
      %v1612 = vadd.f32 %v1541, %v1611
      %v1613 = vpop.f32.mrf.mxu0
      %v1614 = vadd.f32 %v1543, %v1613
      %v1615 = vpop.f32.mrf.mxu0
      %v1616 = vpop.f32.mrf.mxu0
      %1617 = vdwg.mxu0
      %1618 = vmatprep.subr.bf16.mxu0 %v1189
      %1619 = vmatpush1.bf16.msra.mxu0 %v1188
      %1620 = vmatprep.subr.bf16.mxu0 %v1187
      %1621 = vmatpush1.bf16.msra.mxu0 %v1186
      %1622 = vmatprep.subr.bf16.mxu0 %v1185
      %1623 = vmatpush1.bf16.msra.mxu0 %v1184
      %1624 = vmatprep.subr.bf16.mxu0 %v1183
      %1625 = vmatpush1.bf16.msra.mxu0 %v1182
      %1626 = vmatprep.subr.bf16.mxu0 %v1181
      %1627 = vmatpush1.bf16.msra.mxu0 %v1180
      %1628 = vmatprep.subr.bf16.mxu0 %v1179
      %1629 = vmatpush1.bf16.msra.mxu0 %v1178
      %1630 = vmatprep.subr.bf16.mxu0 %v1177
      %1631 = vmatpush1.bf16.msra.mxu0 %v1176
      %1632 = vmatprep.subr.bf16.mxu0 %v1175
      %1633 = vmatpush1.bf16.msra.mxu0 %v1174
      %1634 = vmatprep.subr.bf16.mxu0 0
      %1635 = vmatpush2.bf16.msra.mxu0 0
      %1636 = vmatprep.subr.bf16.mxu0 0
      %1637 = vmatpush2.bf16.msra.mxu0 0
      %1638 = vmatprep.subr.bf16.mxu0 0
      %1639 = vmatpush2.bf16.msra.mxu0 0
      %1640 = vmatprep.subr.bf16.mxu0 0
      %1641 = vmatpush2.bf16.msra.mxu0 0
      %1642 = vmatprep.subr.bf16.mxu0 0
      %1643 = vmatpush2.bf16.msra.mxu0 0
      %1644 = vmatprep.subr.bf16.mxu0 0
      %1645 = vmatpush2.bf16.msra.mxu0 0
      %1646 = vmatprep.subr.bf16.mxu0 0
      %1647 = vmatpush2.bf16.msra.mxu0 0
      %1648 = vmatprep.subr.bf16.mxu0 0
      %1649 = vmatpush2.bf16.msra.mxu0 0
      %1650 = vmatprep.mubr.bf16.mxu0 0
      %1651 = vmatmul.mubr.bf16.gmra.mxu0 %v550
      %v1652 = vpop.f32.mrf.mxu0
      %v1653 = vadd.f32 %v1582, %v1652
      %v1654 = vpop.f32.mrf.mxu0
      %v1655 = vadd.f32 %v1584, %v1654
      %v1656 = vpop.f32.mrf.mxu0
      %v1657 = vadd.f32 %v1586, %v1656
      %v1658 = vpop.f32.mrf.mxu0
      %v1659 = vadd.f32 %v1588, %v1658
      %1660 = vmatprep.mubr.bf16.mxu0 0
      %1661 = vmatmul.mubr.bf16.gmra.mxu0 %v559
      %v1662 = vpop.f32.mrf.mxu0
      %v1663 = vadd.f32 %v1592, %v1662
      %v1664 = vpop.f32.mrf.mxu0
      %v1665 = vadd.f32 %v1594, %v1664
      %v1666 = vpop.f32.mrf.mxu0
      %v1667 = vadd.f32 %v1596, %v1666
      %v1668 = vpop.f32.mrf.mxu0
      %v1669 = vadd.f32 %v1598, %v1668
      %1670 = vmatprep.mubr.bf16.mxu0 0
      %1671 = vmatmul.mubr.bf16.gmra.mxu0 %v568
      %v1672 = vpop.f32.mrf.mxu0
      %v1673 = vadd.f32 %v1602, %v1672
      %v1674 = vpop.f32.mrf.mxu0
      %v1675 = vadd.f32 %v1604, %v1674
      %v1676 = vpop.f32.mrf.mxu0
      %v1677 = vadd.f32 %v1606, %v1676
      %v1678 = vpop.f32.mrf.mxu0
      %v1679 = vadd.f32 %v1608, %v1678
      %1680 = vmatprep.mubr.bf16.mxu0 0
      %1681 = vmatmul.mubr.bf16.gmra.mxu0 %v577
      %v1682 = vpop.f32.mrf.mxu0
      %v1683 = vadd.f32 %v1612, %v1682
      %v1684 = vpop.f32.mrf.mxu0
      %v1685 = vadd.f32 %v1614, %v1684
      %v1686 = vpop.f32.mrf.mxu0
      %v1687 = vpop.f32.mrf.mxu0
      %1688 = vdwg.mxu0
      %v1689 = vmax.f32 %v1653, 0.0
      %v1690 = vmax.f32 %v1655, 0.0
      %v1691 = vmax.f32 %v1657, 0.0
      %v1692 = vmax.f32 %v1659, 0.0
      %v1693 = vmax.f32 %v1663, 0.0
      %v1694 = vmax.f32 %v1665, 0.0
      %v1695 = vmax.f32 %v1667, 0.0
      %v1696 = vmax.f32 %v1669, 0.0
      %v1697 = vmax.f32 %v1673, 0.0
      %v1698 = vmax.f32 %v1675, 0.0
      %v1699 = vmax.f32 %v1677, 0.0
      %v1700 = vmax.f32 %v1679, 0.0
      %v1701 = vmax.f32 %v1683, 0.0
      %v1702 = vmax.f32 %v1685, 0.0
      %1703 = vst [vmem:[%s250] sm:$0xff] %v1689
      %1704 = vst [vmem:[%s250 + $0x8] sm:$0xff] %v1690
      %1705 = vst [vmem:[%s250 + $0x10] sm:$0xff] %v1691
      %1706 = vst [vmem:[%s250 + $0x18] sm:$0xff] %v1692
      %1707 = vst [vmem:[%s250 + $0x20] sm:$0xff] %v1693
      %1708 = vst [vmem:[%s250 + $0x28] sm:$0xff] %v1694
      %1709 = vst [vmem:[%s250 + $0x30] sm:$0xff] %v1695
      %1710 = vst [vmem:[%s250 + $0x38] sm:$0xff] %v1696
      %1711 = vst [vmem:[%s250 + $0x40] sm:$0xff] %v1697
      %1712 = vst [vmem:[%s250 + $0x48] sm:$0xff] %v1698
      %1713 = vst [vmem:[%s250 + $0x50] sm:$0xff] %v1699
      %1714 = vst [vmem:[%s250 + $0x58] sm:$0xff] %v1700
      %1715 = vst [vmem:[%s250 + $0x60] sm:$0x3] %v1701
      %1716 = vst [vmem:[%s250 + $0x68] sm:$0x3] %v1702
      %s1717 = smul.u32 7, %s19
      %p1718 = scmp.lt.s32.totalorder %s18, 1
      %s1719 = scalar_select %p1718, %s18, 1
      %p1720 = scmp.lt.s32.totalorder %s1717, 6
      %s1721 = scalar_select %p1720, %s1717, 6
      %s1722 = smul.addr %s1721, 2
      %s1723 = smul.addr %s1719, 14
      %s1724 = sadd.s32 %s1722, %s1723
      %s1725 = smul.addr %s1724, 8
      %s1726 = scalar_lea.vmem %s3, %s1725
      // Predicated region
      $region33: #{cnnl4_forward.6} parent=31 // pred_check
        %p1727 = pneg %p126
      $region34: #{cnnl4_forward.6} parent=31 // pred_check_branch
        %1729 = sbr.rel (%p1727) target = $region36
      $region35: #{cnnl4_forward.6} parent=31 // pred_region
        %s1730 = smul.u32 7, %s19
      $region36: #{cnnl4_forward.6} parent=31 // pred_fallthru
        _
    $region32: #{cnnl4_forward.6} parent=5 // pred_fallthru
      _
    %p1731 = scmp.le.s32.totalorder 2, %s9
    // Predicated region
    $region37: #{cnnl4_forward.6} parent=5 // pred_check
      %p1732 = pneg %p1731
    $region38: #{cnnl4_forward.6} parent=5 // pred_check_branch
      %1734 = sbr.rel (%p1732) target = $region40
    $region39: #{cnnl4_forward.6} parent=5 // pred_region
      %s1735 = ssub.s32 %s9, 2
      // Predicated region
      $region41: #{cnnl4_forward.6} parent=39 // pred_check
        %p1736 = pneg %p132
      $region42: #{cnnl4_forward.6} parent=39 // pred_check_branch
        %1738 = sbr.rel (%p1736) target = $region44
      $region43: #{cnnl4_forward.6} parent=39 // pred_region
        %s1739 = smul.u32 7, %s21
        %p1740 = scmp.lt.s32.totalorder %s20, 1
        %s1741 = scalar_select %p1740, %s20, 1
        %p1742 = scmp.lt.s32.totalorder %s1739, 6
        %s1743 = scalar_select %p1742, %s1739, 6
        %s1744 = smul.addr %s1743, 2
        %s1745 = smul.addr %s1741, 14
        %s1746 = sadd.s32 %s1744, %s1745
        %s1747 = smul.addr %s1746, 8
        %s1748 = scalar_lea.vmem %s3, %s1747
      $region44: #{cnnl4_forward.6} parent=39 // pred_fallthru
        _
    $region40: #{cnnl4_forward.6} parent=5 // pred_fallthru
      _
  $region6: #{cnnl4_forward.6} parent=0 // loop_footer
    %s13 = sadd.s32 1, %s9
  $region7: #{cnnl4_forward.6} parent=0 // loop_footer_branch
    %8 = sbr.rel target = $region3
  $region8: #{cnnl4_forward.6} parent=0 // loop_exit
    _

// kernel: cnnl4_forward.7
$region0: #{cnnl4_forward.7}
  #allocation0 [shape = 'u32[]', space=smem, size = 0x4, offset = 0x4, fixed_abs, tag = 'smem constant byte address 0x4 - core index']
  #allocation1 [shape = 'u32[144,128]{1,0:T(1,128)}', space=vmem, size = 0x12000, scoped, tag = 'internal scratch']
  %s0 = inlined_call_operand.vmem [shape: bf16[2,18,2304], index: 0, kind: input, shape index: {}]
  %s1 = inlined_call_operand.vmem [shape: bf16[2,2304,128], index: 1, kind: input, shape index: {}]
  %s2 = inlined_call_operand.vmem [shape: f32[2,1,128], index: 2, kind: input, shape index: {}]
  %s3 = inlined_call_operand.vmem [shape: f32[2,18,128], index: 3, kind: output, shape index: {}]
  %s4 = sld [smem:[#allocation0]]
  $region45: #{cnnl4_forward.7} parent=0
    _
  %s6 = ssub.s32 1, %s4
  %s7 = scalar_select 0, %s6, %s4
  loop: start=0, step=1, limit=4
  $region2: #{cnnl4_forward.7} parent=0 // loop_pre_header
    _
  $region3: #{cnnl4_forward.7} parent=0 // loop_header
    %s9 = sphi 0, %s13
    %p10 = scmp.ge.s32.totalorder %s9, 4
    %s16 = sphi 0, %s28
    %s17 = sphi 0, %s24
    %s18 = sphi 0, %s16
    %s19 = sphi 0, %s17
    %s20 = sphi 0, %s18
    %s21 = sphi 0, %s19
    %s33 = sphi 0, %s35
    %s36 = sphi 0, %s33
    %s37 = sphi 0, %s36
    %s53 = sphi 0, %s37
    %s59 = sphi 0, %s61
    %s62 = sphi 0, %s59
    %s63 = sphi 0, %s62
    %s79 = sphi 0, %s63
    %s85 = sphi 0, %s87
    %s88 = sphi 0, %s85
    %s89 = sphi 0, %s88
    %s105 = sphi 0, %s89
    %s113 = sphi 0, %s115
    %s116 = sphi 0, %s113
    %s117 = sphi 0, %s116
    %s133 = sphi 0, %s117
  $region4: #{cnnl4_forward.7} parent=0 // loop_header_branch
    %12 = sbr.rel (%p10) target = $region8
  $region5: #{cnnl4_forward.7} parent=0 // loop_body
    %s14 = ssub.s32 %s9, 1
    %s15 = ssub.s32 %s9, 2
    %s22 = sadd.s32 1, %s17
    %p23 = scmp.ge.s32.totalorder %s22, 1
    %s24 = scalar_select %p23, 0, %s22
    %s25 = sadd.s32 1, %s16
    %s26 = scalar_select %p23, %s25, %s16
    %p27 = scmp.ge.s32.totalorder %s26, 2
    %s28 = scalar_select %p27, 0, %s26
    %s29 = ssub.s32 %s16, %s28
    %s30 = ssub.s32 %s17, %s24
    %s31 = sor.u32 %s29, %s30
    %p32 = scmp.eq.s32.totalorder %s31, 0
    %s34 = sadd.s32 %s33, 1
    %s35 = scalar_select %p32, %s33, %s34
    %p38 = pneg %p32
    %p39 = scmp.eq.s32.totalorder %s9, 1
    %p40 = por %p38, %p39
    %p41 = scmp.ne.s32.totalorder %s33, %s36
    %p42 = scmp.eq.s32.totalorder %s9, 0
    %p43 = por %p41, %p42
    %p44 = scmp.ne.s32.totalorder %s33, %s36
    %p45 = scmp.eq.s32.totalorder %s14, 1
    %p46 = por %p44, %p45
    %p47 = scmp.ne.s32.totalorder %s36, %s37
    %p48 = scmp.eq.s32.totalorder %s14, 0
    %p49 = por %p47, %p48
    %p50 = scmp.ne.s32.totalorder %s36, %s37
    %p51 = scmp.eq.s32.totalorder %s15, 1
    %p52 = por %p50, %p51
    %p54 = scmp.ne.s32.totalorder %s37, %s53
    %p55 = scmp.eq.s32.totalorder %s15, 0
    %p56 = por %p54, %p55
    %s57 = ssub.s32 %s16, %s28
    %p58 = scmp.eq.s32.totalorder %s57, 0
    %s60 = sadd.s32 %s59, 1
    %s61 = scalar_select %p58, %s59, %s60
    %p64 = pneg %p58
    %p65 = scmp.eq.s32.totalorder %s9, 1
    %p66 = por %p64, %p65
    %p67 = scmp.ne.s32.totalorder %s59, %s62
    %p68 = scmp.eq.s32.totalorder %s9, 0
    %p69 = por %p67, %p68
    %p70 = scmp.ne.s32.totalorder %s59, %s62
    %p71 = scmp.eq.s32.totalorder %s14, 1
    %p72 = por %p70, %p71
    %p73 = scmp.ne.s32.totalorder %s62, %s63
    %p74 = scmp.eq.s32.totalorder %s14, 0
    %p75 = por %p73, %p74
    %p76 = scmp.ne.s32.totalorder %s62, %s63
    %p77 = scmp.eq.s32.totalorder %s15, 1
    %p78 = por %p76, %p77
    %p80 = scmp.ne.s32.totalorder %s63, %s79
    %p81 = scmp.eq.s32.totalorder %s15, 0
    %p82 = por %p80, %p81
    %s83 = ssub.s32 %s16, %s28
    %p84 = scmp.eq.s32.totalorder %s83, 0
    %s86 = sadd.s32 %s85, 1
    %s87 = scalar_select %p84, %s85, %s86
    %p90 = pneg %p84
    %p91 = scmp.eq.s32.totalorder %s9, 1
    %p92 = por %p90, %p91
    %p93 = scmp.ne.s32.totalorder %s85, %s88
    %p94 = scmp.eq.s32.totalorder %s9, 0
    %p95 = por %p93, %p94
    %p96 = scmp.ne.s32.totalorder %s85, %s88
    %p97 = scmp.eq.s32.totalorder %s14, 1
    %p98 = por %p96, %p97
    %p99 = scmp.ne.s32.totalorder %s88, %s89
    %p100 = scmp.eq.s32.totalorder %s14, 0
    %p101 = por %p99, %p100
    %p102 = scmp.ne.s32.totalorder %s88, %s89
    %p103 = scmp.eq.s32.totalorder %s15, 1
    %p104 = por %p102, %p103
    %p106 = scmp.ne.s32.totalorder %s89, %s105
    %p107 = scmp.eq.s32.totalorder %s15, 0
    %p108 = por %p106, %p107
    %s109 = ssub.s32 %s16, %s28
    %s110 = ssub.s32 %s17, %s24
    %s111 = sor.u32 %s109, %s110
    %p112 = scmp.eq.s32.totalorder %s111, 0
    %s114 = sadd.s32 %s113, 1
    %s115 = scalar_select %p112, %s113, %s114
    %p118 = pneg %p112
    %p119 = scmp.eq.s32.totalorder %s9, 1
    %p120 = por %p118, %p119
    %p121 = scmp.ne.s32.totalorder %s113, %s116
    %p122 = scmp.eq.s32.totalorder %s9, 0
    %p123 = por %p121, %p122
    %p124 = scmp.ne.s32.totalorder %s113, %s116
    %p125 = scmp.eq.s32.totalorder %s14, 1
    %p126 = por %p124, %p125
    %p127 = scmp.ne.s32.totalorder %s116, %s117
    %p128 = scmp.eq.s32.totalorder %s14, 0
    %p129 = por %p127, %p128
    %p130 = scmp.ne.s32.totalorder %s116, %s117
    %p131 = scmp.eq.s32.totalorder %s15, 1
    %p132 = por %p130, %p131
    %p134 = scmp.ne.s32.totalorder %s117, %s133
    %p135 = scmp.eq.s32.totalorder %s15, 0
    %p136 = por %p134, %p135
    %p137 = scmp.le.s32.totalorder 1, %s9
    %p138 = scmp.lt.s32.totalorder %s9, 3
    %p139 = pnand %p137, %p138
    %p140 = pneg %p139
    // Predicated region
    $region9: #{cnnl4_forward.7} parent=5 // pred_check
      _
    $region10: #{cnnl4_forward.7} parent=5 // pred_check_branch
      %142 = sbr.rel (%p139) target = $region12
    $region11: #{cnnl4_forward.7} parent=5 // pred_region
      %s143 = ssub.s32 %s9, 1
    $region12: #{cnnl4_forward.7} parent=5 // pred_fallthru
      _
    %p144 = scmp.lt.s32.totalorder %s9, 2
    // Predicated region
    $region13: #{cnnl4_forward.7} parent=5 // pred_check
      %p145 = pneg %p144
    $region14: #{cnnl4_forward.7} parent=5 // pred_check_branch
      %147 = sbr.rel (%p145) target = $region16
    $region15: #{cnnl4_forward.7} parent=5 // pred_region
      // Predicated region
      $region17: #{cnnl4_forward.7} parent=15 // pred_check
        %p148 = pneg %p43
      $region18: #{cnnl4_forward.7} parent=15 // pred_check_branch
        %150 = sbr.rel (%p148) target = $region20
      $region19: #{cnnl4_forward.7} parent=15 // pred_region
        %s151 = smul.u32 3, %s17
        %p152 = scmp.lt.s32.totalorder %s16, 1
        %s153 = scalar_select %p152, %s16, 1
        %p154 = scmp.lt.s32.totalorder %s151, 2
        %s155 = scalar_select %p154, %s151, 2
        %s156 = smul.addr %s155, 18
        %s157 = smul.addr %s153, 54
        %s158 = sadd.s32 %s156, %s157
        %s159 = smul.addr %s158, 4
        %s160 = scalar_lea.vmem %s0, %s159
        %s161 = smul.u32 3, %s17
      $region20: #{cnnl4_forward.7} parent=15 // pred_fallthru
        _
      // Predicated region
      $region21: #{cnnl4_forward.7} parent=15 // pred_check
        %p162 = pneg %p69
      $region22: #{cnnl4_forward.7} parent=15 // pred_check_branch
        %164 = sbr.rel (%p162) target = $region24
      $region23: #{cnnl4_forward.7} parent=15 // pred_region
        %p165 = scmp.lt.s32.totalorder %s16, 1
        %s166 = scalar_select %p165, %s16, 1
        %s167 = smul.addr %s166, 288
        %s168 = smul.addr %s167, 4
        %s169 = scalar_lea.vmem %s1, %s168
      $region24: #{cnnl4_forward.7} parent=15 // pred_fallthru
        _
      // Predicated region
      $region25: #{cnnl4_forward.7} parent=15 // pred_check
        %p170 = pneg %p95
      $region26: #{cnnl4_forward.7} parent=15 // pred_check_branch
        %172 = sbr.rel (%p170) target = $region28
      $region27: #{cnnl4_forward.7} parent=15 // pred_region
        %p173 = scmp.lt.s32.totalorder %s16, 1
        %s174 = scalar_select %p173, %s16, 1
        %s175 = scalar_lea.vmem %s2, %s174
      $region28: #{cnnl4_forward.7} parent=15 // pred_fallthru
        _
    $region16: #{cnnl4_forward.7} parent=5 // pred_fallthru
      _
    %p176 = scmp.le.s32.totalorder 1, %s9
    %p177 = scmp.lt.s32.totalorder %s9, 3
    %p178 = pnand %p176, %p177
    %p179 = pneg %p178
    // Predicated region
    $region29: #{cnnl4_forward.7} parent=5 // pred_check
      _
    $region30: #{cnnl4_forward.7} parent=5 // pred_check_branch
      %181 = sbr.rel (%p178) target = $region32
    $region31: #{cnnl4_forward.7} parent=5 // pred_region
      %s182 = ssub.s32 %s9, 1
      %s183 = smul.u32 3, %s19
      %p184 = scmp.lt.s32.totalorder %s18, 1
      %s185 = scalar_select %p184, %s18, 1
      %p186 = scmp.lt.s32.totalorder %s183, 2
      %s187 = scalar_select %p186, %s183, 2
      %s188 = smul.addr %s187, 18
      %s189 = smul.addr %s185, 54
      %s190 = sadd.s32 %s188, %s189
      %s191 = smul.addr %s190, 4
      %s192 = scalar_lea.vmem %s0, %s191
      %p193 = pneg %p49
      %p194 = pneg %p46
      %p195 = scmp.lt.s32.totalorder %s18, 1
      %s196 = scalar_select %p195, %s18, 1
      %s197 = smul.addr %s196, 288
      %s198 = smul.addr %s197, 4
      %s199 = scalar_lea.vmem %s1, %s198
      %p200 = pneg %p75
      %p201 = pneg %p72
      %p202 = scmp.lt.s32.totalorder %s18, 1
      %s203 = scalar_select %p202, %s18, 1
      %s204 = scalar_lea.vmem %s2, %s203
      %p205 = pneg %p101
      %p206 = pneg %p98
      %p207 = pneg %p129
      %p208 = pneg %p126
      %s209 = smul.u32 3, %s19
      %p210 = scmp.lt.s32.totalorder %s18, 1
      %s211 = scalar_select %p210, %s18, 1
      %p212 = scmp.lt.s32.totalorder %s209, 2
      %s213 = scalar_select %p212, %s209, 2
      %s214 = smul.addr %s211, 3
      %s215 = sadd.s32 %s213, %s214
      %s216 = smul.addr %s215, 8
      %s217 = scalar_lea.vmem %s3, %s216
      %s218 = smul.u32 3, %s19
      %p219 = scmp.lt.s32.totalorder %s18, 1
      %s220 = scalar_select %p219, %s18, 1
      %p221 = scmp.lt.s32.totalorder %s218, 2
      %s222 = scalar_select %p221, %s218, 2
      %s223 = smul.addr %s222, 18
      %s224 = smul.addr %s220, 54
      %s225 = sadd.s32 %s223, %s224
      %s226 = smul.addr %s225, 4
      %s227 = scalar_lea.vmem %s0, %s226
      %s228 = smul.u32 3, %s19
      %p229 = scmp.lt.s32.totalorder %s18, 1
      %s230 = scalar_select %p229, %s18, 1
      %s231 = smul.addr %s230, 288
      %s232 = smul.addr %s231, 4
      %s233 = scalar_lea.vmem %s1, %s232
      %p234 = scmp.lt.s32.totalorder %s18, 1
      %s235 = scalar_select %p234, %s18, 1
      %s236 = scalar_lea.vmem %s2, %s235
      %s237 = smul.u32 3, %s19
      %p238 = scmp.lt.s32.totalorder %s18, 1
      %s239 = scalar_select %p238, %s18, 1
      %p240 = scmp.lt.s32.totalorder %s237, 2
      %s241 = scalar_select %p240, %s237, 2
      %s242 = smul.addr %s239, 3
      %s243 = sadd.s32 %s241, %s242
      %s244 = smul.addr %s243, 8
      %s245 = scalar_lea.vmem %s3, %s244
      %s246 = smul.u32 3, %s19
      %v248 = vld [vmem:[%s227] sm:$0xff]
      %v249 = vld [vmem:[%s227 + $0x8] sm:$0xff]
      %v250 = vld [vmem:[%s227 + $0x10] sm:$0xff]
      %v251 = vld [vmem:[%s227 + $0x18] sm:$0xff]
      %v252 = vld [vmem:[%s227 + $0x20] sm:$0xff]
      %v253 = vld [vmem:[%s227 + $0x28] sm:$0xff]
      %v254 = vld [vmem:[%s227 + $0x30] sm:$0xff]
      %v255 = vld [vmem:[%s227 + $0x38] sm:$0xff]
      %v256 = vld [vmem:[%s227 + $0x40] sm:$0xff]
      %v257 = vld [vmem:[%s227 + $0x48] sm:$0xff]
      %v258 = vld [vmem:[%s227 + $0x50] sm:$0xff]
      %v259 = vld [vmem:[%s227 + $0x58] sm:$0xff]
      %v260 = vld [vmem:[%s227 + $0x60] sm:$0xff]
      %v261 = vld [vmem:[%s227 + $0x68] sm:$0xff]
      %v262 = vld [vmem:[%s227 + $0x70] sm:$0xff]
      %v263 = vld [vmem:[%s227 + $0x78] sm:$0xff]
      %v264 = vld [vmem:[%s227 + $0x80] sm:$0xff]
      %v265 = vld [vmem:[%s227 + $0x88] sm:$0xff]
      %v266 = vld [vmem:[%s227 + $0x90] sm:$0x11]
      %v267 = vld [vmem:[%s227 + $0x98] sm:$0x11]
      %v268 = vld [vmem:[%s227 + $0xa0] sm:$0x11]
      %v269 = vld [vmem:[%s227 + $0xa8] sm:$0x11]
      %v270 = vld [vmem:[%s227 + $0xb0] sm:$0x11]
      %v271 = vld [vmem:[%s227 + $0xb8] sm:$0x11]
      %v272 = vld [vmem:[%s227 + $0xc0] sm:$0x11]
      %v273 = vld [vmem:[%s227 + $0xc8] sm:$0x11]
      %v274 = vld [vmem:[%s227 + $0xd0] sm:$0x11]
      %v275 = vld [vmem:[%s233] sm:$0xf]
      %v276 = vld [vmem:[%s233 + $0x4] sm:$0xf]
      %v277 = vld [vmem:[%s233 + $0x8] sm:$0xf]
      %v278 = vld [vmem:[%s233 + $0xc] sm:$0xf]
      %v279 = vld [vmem:[%s233 + $0x10] sm:$0xf]
      %v280 = vld [vmem:[%s233 + $0x14] sm:$0xf]
      %v281 = vld [vmem:[%s233 + $0x18] sm:$0xf]
      %v282 = vld [vmem:[%s233 + $0x1c] sm:$0xf]
      %v283 = vld [vmem:[%s233 + $0x20] sm:$0xf]
      %v284 = vld [vmem:[%s233 + $0x24] sm:$0xf]
      %v285 = vld [vmem:[%s233 + $0x28] sm:$0xf]
      %v286 = vld [vmem:[%s233 + $0x2c] sm:$0xf]
      %v287 = vld [vmem:[%s233 + $0x30] sm:$0xf]
      %v288 = vld [vmem:[%s233 + $0x34] sm:$0xf]
      %v289 = vld [vmem:[%s233 + $0x38] sm:$0xf]
      %v290 = vld [vmem:[%s233 + $0x3c] sm:$0xf]
      %v291 = vld [vmem:[%s233 + $0x40] sm:$0xf]
      %v292 = vld [vmem:[%s233 + $0x44] sm:$0xf]
      %v293 = vld [vmem:[%s233 + $0x48] sm:$0xf]
      %v294 = vld [vmem:[%s233 + $0x4c] sm:$0xf]
      %v295 = vld [vmem:[%s233 + $0x50] sm:$0xf]
      %v296 = vld [vmem:[%s233 + $0x54] sm:$0xf]
      %v297 = vld [vmem:[%s233 + $0x58] sm:$0xf]
      %v298 = vld [vmem:[%s233 + $0x5c] sm:$0xf]
      %v299 = vld [vmem:[%s233 + $0x60] sm:$0xf]
      %v300 = vld [vmem:[%s233 + $0x64] sm:$0xf]
      %v301 = vld [vmem:[%s233 + $0x68] sm:$0xf]
      %v302 = vld [vmem:[%s233 + $0x6c] sm:$0xf]
      %v303 = vld [vmem:[%s233 + $0x70] sm:$0xf]
      %v304 = vld [vmem:[%s233 + $0x74] sm:$0xf]
      %v305 = vld [vmem:[%s233 + $0x78] sm:$0xf]
      %v306 = vld [vmem:[%s233 + $0x7c] sm:$0xf]
      %v307 = vld [vmem:[%s233 + $0x80] sm:$0xf]
      %v308 = vld [vmem:[%s233 + $0x84] sm:$0xf]
      %v309 = vld [vmem:[%s233 + $0x88] sm:$0xf]
      %v310 = vld [vmem:[%s233 + $0x8c] sm:$0xf]
      %v311 = vld [vmem:[%s233 + $0x90] sm:$0xf]
      %v312 = vld [vmem:[%s233 + $0x94] sm:$0xf]
      %v313 = vld [vmem:[%s233 + $0x98] sm:$0xf]
      %v314 = vld [vmem:[%s233 + $0x9c] sm:$0xf]
      %v315 = vld [vmem:[%s233 + $0xa0] sm:$0xf]
      %v316 = vld [vmem:[%s233 + $0xa4] sm:$0xf]
      %v317 = vld [vmem:[%s233 + $0xa8] sm:$0xf]
      %v318 = vld [vmem:[%s233 + $0xac] sm:$0xf]
      %v319 = vld [vmem:[%s233 + $0xb0] sm:$0xf]
      %v320 = vld [vmem:[%s233 + $0xb4] sm:$0xf]
      %v321 = vld [vmem:[%s233 + $0xb8] sm:$0xf]
      %v322 = vld [vmem:[%s233 + $0xbc] sm:$0xf]
      %v323 = vld [vmem:[%s233 + $0xc0] sm:$0xf]
      %v324 = vld [vmem:[%s233 + $0xc4] sm:$0xf]
      %v325 = vld [vmem:[%s233 + $0xc8] sm:$0xf]
      %v326 = vld [vmem:[%s233 + $0xcc] sm:$0xf]
      %v327 = vld [vmem:[%s233 + $0xd0] sm:$0xf]
      %v328 = vld [vmem:[%s233 + $0xd4] sm:$0xf]
      %v329 = vld [vmem:[%s233 + $0xd8] sm:$0xf]
      %v330 = vld [vmem:[%s233 + $0xdc] sm:$0xf]
      %v331 = vld [vmem:[%s233 + $0xe0] sm:$0xf]
      %v332 = vld [vmem:[%s233 + $0xe4] sm:$0xf]
      %v333 = vld [vmem:[%s233 + $0xe8] sm:$0xf]
      %v334 = vld [vmem:[%s233 + $0xec] sm:$0xf]
      %v335 = vld [vmem:[%s233 + $0xf0] sm:$0xf]
      %v336 = vld [vmem:[%s233 + $0xf4] sm:$0xf]
      %v337 = vld [vmem:[%s233 + $0xf8] sm:$0xf]
      %v338 = vld [vmem:[%s233 + $0xfc] sm:$0xf]
      %v339 = vld [vmem:[%s233 + $0x100] sm:$0xf]
      %v340 = vld [vmem:[%s233 + $0x104] sm:$0xf]
      %v341 = vld [vmem:[%s233 + $0x108] sm:$0xf]
      %v342 = vld [vmem:[%s233 + $0x10c] sm:$0xf]
      %v343 = vld [vmem:[%s233 + $0x110] sm:$0xf]
      %v344 = vld [vmem:[%s233 + $0x114] sm:$0xf]
      %v345 = vld [vmem:[%s233 + $0x118] sm:$0xf]
      %v346 = vld [vmem:[%s233 + $0x11c] sm:$0xf]
      %v347 = vld [vmem:[%s233 + $0x120] sm:$0xf]
      %v348 = vld [vmem:[%s233 + $0x124] sm:$0xf]
      %v349 = vld [vmem:[%s233 + $0x128] sm:$0xf]
      %v350 = vld [vmem:[%s233 + $0x12c] sm:$0xf]
      %v351 = vld [vmem:[%s233 + $0x130] sm:$0xf]
      %v352 = vld [vmem:[%s233 + $0x134] sm:$0xf]
      %v353 = vld [vmem:[%s233 + $0x138] sm:$0xf]
      %v354 = vld [vmem:[%s233 + $0x13c] sm:$0xf]
      %v355 = vld [vmem:[%s233 + $0x140] sm:$0xf]
      %v356 = vld [vmem:[%s233 + $0x144] sm:$0xf]
      %v357 = vld [vmem:[%s233 + $0x148] sm:$0xf]
      %v358 = vld [vmem:[%s233 + $0x14c] sm:$0xf]
      %v359 = vld [vmem:[%s233 + $0x150] sm:$0xf]
      %v360 = vld [vmem:[%s233 + $0x154] sm:$0xf]
      %v361 = vld [vmem:[%s233 + $0x158] sm:$0xf]
      %v362 = vld [vmem:[%s233 + $0x15c] sm:$0xf]
      %v363 = vld [vmem:[%s233 + $0x160] sm:$0xf]
      %v364 = vld [vmem:[%s233 + $0x164] sm:$0xf]
      %v365 = vld [vmem:[%s233 + $0x168] sm:$0xf]
      %v366 = vld [vmem:[%s233 + $0x16c] sm:$0xf]
      %v367 = vld [vmem:[%s233 + $0x170] sm:$0xf]
      %v368 = vld [vmem:[%s233 + $0x174] sm:$0xf]
      %v369 = vld [vmem:[%s233 + $0x178] sm:$0xf]
      %v370 = vld [vmem:[%s233 + $0x17c] sm:$0xf]
      %v371 = vld [vmem:[%s233 + $0x180] sm:$0xf]
      %v372 = vld [vmem:[%s233 + $0x184] sm:$0xf]
      %v373 = vld [vmem:[%s233 + $0x188] sm:$0xf]
      %v374 = vld [vmem:[%s233 + $0x18c] sm:$0xf]
      %v375 = vld [vmem:[%s233 + $0x190] sm:$0xf]
      %v376 = vld [vmem:[%s233 + $0x194] sm:$0xf]
      %v377 = vld [vmem:[%s233 + $0x198] sm:$0xf]
      %v378 = vld [vmem:[%s233 + $0x19c] sm:$0xf]
      %v379 = vld [vmem:[%s233 + $0x1a0] sm:$0xf]
      %v380 = vld [vmem:[%s233 + $0x1a4] sm:$0xf]
      %v381 = vld [vmem:[%s233 + $0x1a8] sm:$0xf]
      %v382 = vld [vmem:[%s233 + $0x1ac] sm:$0xf]
      %v383 = vld [vmem:[%s233 + $0x1b0] sm:$0xf]
      %v384 = vld [vmem:[%s233 + $0x1b4] sm:$0xf]
      %v385 = vld [vmem:[%s233 + $0x1b8] sm:$0xf]
      %v386 = vld [vmem:[%s233 + $0x1bc] sm:$0xf]
      %v387 = vld [vmem:[%s233 + $0x1c0] sm:$0xf]
      %v388 = vld [vmem:[%s233 + $0x1c4] sm:$0xf]
      %v389 = vld [vmem:[%s233 + $0x1c8] sm:$0xf]
      %v390 = vld [vmem:[%s233 + $0x1cc] sm:$0xf]
      %v391 = vld [vmem:[%s233 + $0x1d0] sm:$0xf]
      %v392 = vld [vmem:[%s233 + $0x1d4] sm:$0xf]
      %v393 = vld [vmem:[%s233 + $0x1d8] sm:$0xf]
      %v394 = vld [vmem:[%s233 + $0x1dc] sm:$0xf]
      %v395 = vld [vmem:[%s233 + $0x1e0] sm:$0xf]
      %v396 = vld [vmem:[%s233 + $0x1e4] sm:$0xf]
      %v397 = vld [vmem:[%s233 + $0x1e8] sm:$0xf]
      %v398 = vld [vmem:[%s233 + $0x1ec] sm:$0xf]
      %v399 = vld [vmem:[%s233 + $0x1f0] sm:$0xf]
      %v400 = vld [vmem:[%s233 + $0x1f4] sm:$0xf]
      %v401 = vld [vmem:[%s233 + $0x1f8] sm:$0xf]
      %v402 = vld [vmem:[%s233 + $0x1fc] sm:$0xf]
      %v403 = vld [vmem:[%s233 + $0x200] sm:$0xf]
      %v404 = vld [vmem:[%s233 + $0x204] sm:$0xf]
      %v405 = vld [vmem:[%s233 + $0x208] sm:$0xf]
      %v406 = vld [vmem:[%s233 + $0x20c] sm:$0xf]
      %v407 = vld [vmem:[%s233 + $0x210] sm:$0xf]
      %v408 = vld [vmem:[%s233 + $0x214] sm:$0xf]
      %v409 = vld [vmem:[%s233 + $0x218] sm:$0xf]
      %v410 = vld [vmem:[%s233 + $0x21c] sm:$0xf]
      %v411 = vld [vmem:[%s233 + $0x220] sm:$0xf]
      %v412 = vld [vmem:[%s233 + $0x224] sm:$0xf]
      %v413 = vld [vmem:[%s233 + $0x228] sm:$0xf]
      %v414 = vld [vmem:[%s233 + $0x22c] sm:$0xf]
      %v415 = vld [vmem:[%s233 + $0x230] sm:$0xf]
      %v416 = vld [vmem:[%s233 + $0x234] sm:$0xf]
      %v417 = vld [vmem:[%s233 + $0x238] sm:$0xf]
      %v418 = vld [vmem:[%s233 + $0x23c] sm:$0xf]
      %v419 = vld [vmem:[%s233 + $0x240] sm:$0xf]
      %v420 = vld [vmem:[%s233 + $0x244] sm:$0xf]
      %v421 = vld [vmem:[%s233 + $0x248] sm:$0xf]
      %v422 = vld [vmem:[%s233 + $0x24c] sm:$0xf]
      %v423 = vld [vmem:[%s233 + $0x250] sm:$0xf]
      %v424 = vld [vmem:[%s233 + $0x254] sm:$0xf]
      %v425 = vld [vmem:[%s233 + $0x258] sm:$0xf]
      %v426 = vld [vmem:[%s233 + $0x25c] sm:$0xf]
      %v427 = vld [vmem:[%s233 + $0x260] sm:$0xf]
      %v428 = vld [vmem:[%s233 + $0x264] sm:$0xf]
      %v429 = vld [vmem:[%s233 + $0x268] sm:$0xf]
      %v430 = vld [vmem:[%s233 + $0x26c] sm:$0xf]
      %v431 = vld [vmem:[%s233 + $0x270] sm:$0xf]
      %v432 = vld [vmem:[%s233 + $0x274] sm:$0xf]
      %v433 = vld [vmem:[%s233 + $0x278] sm:$0xf]
      %v434 = vld [vmem:[%s233 + $0x27c] sm:$0xf]
      %v435 = vld [vmem:[%s233 + $0x280] sm:$0xf]
      %v436 = vld [vmem:[%s233 + $0x284] sm:$0xf]
      %v437 = vld [vmem:[%s233 + $0x288] sm:$0xf]
      %v438 = vld [vmem:[%s233 + $0x28c] sm:$0xf]
      %v439 = vld [vmem:[%s233 + $0x290] sm:$0xf]
      %v440 = vld [vmem:[%s233 + $0x294] sm:$0xf]
      %v441 = vld [vmem:[%s233 + $0x298] sm:$0xf]
      %v442 = vld [vmem:[%s233 + $0x29c] sm:$0xf]
      %v443 = vld [vmem:[%s233 + $0x2a0] sm:$0xf]
      %v444 = vld [vmem:[%s233 + $0x2a4] sm:$0xf]
      %v445 = vld [vmem:[%s233 + $0x2a8] sm:$0xf]
      %v446 = vld [vmem:[%s233 + $0x2ac] sm:$0xf]
      %v447 = vld [vmem:[%s233 + $0x2b0] sm:$0xf]
      %v448 = vld [vmem:[%s233 + $0x2b4] sm:$0xf]
      %v449 = vld [vmem:[%s233 + $0x2b8] sm:$0xf]
      %v450 = vld [vmem:[%s233 + $0x2bc] sm:$0xf]
      %v451 = vld [vmem:[%s233 + $0x2c0] sm:$0xf]
      %v452 = vld [vmem:[%s233 + $0x2c4] sm:$0xf]
      %v453 = vld [vmem:[%s233 + $0x2c8] sm:$0xf]
      %v454 = vld [vmem:[%s233 + $0x2cc] sm:$0xf]
      %v455 = vld [vmem:[%s233 + $0x2d0] sm:$0xf]
      %v456 = vld [vmem:[%s233 + $0x2d4] sm:$0xf]
      %v457 = vld [vmem:[%s233 + $0x2d8] sm:$0xf]
      %v458 = vld [vmem:[%s233 + $0x2dc] sm:$0xf]
      %v459 = vld [vmem:[%s233 + $0x2e0] sm:$0xf]
      %v460 = vld [vmem:[%s233 + $0x2e4] sm:$0xf]
      %v461 = vld [vmem:[%s233 + $0x2e8] sm:$0xf]
      %v462 = vld [vmem:[%s233 + $0x2ec] sm:$0xf]
      %v463 = vld [vmem:[%s233 + $0x2f0] sm:$0xf]
      %v464 = vld [vmem:[%s233 + $0x2f4] sm:$0xf]
      %v465 = vld [vmem:[%s233 + $0x2f8] sm:$0xf]
      %v466 = vld [vmem:[%s233 + $0x2fc] sm:$0xf]
      %v467 = vld [vmem:[%s233 + $0x300] sm:$0xf]
      %v468 = vld [vmem:[%s233 + $0x304] sm:$0xf]
      %v469 = vld [vmem:[%s233 + $0x308] sm:$0xf]
      %v470 = vld [vmem:[%s233 + $0x30c] sm:$0xf]
      %v471 = vld [vmem:[%s233 + $0x310] sm:$0xf]
      %v472 = vld [vmem:[%s233 + $0x314] sm:$0xf]
      %v473 = vld [vmem:[%s233 + $0x318] sm:$0xf]
      %v474 = vld [vmem:[%s233 + $0x31c] sm:$0xf]
      %v475 = vld [vmem:[%s233 + $0x320] sm:$0xf]
      %v476 = vld [vmem:[%s233 + $0x324] sm:$0xf]
      %v477 = vld [vmem:[%s233 + $0x328] sm:$0xf]
      %v478 = vld [vmem:[%s233 + $0x32c] sm:$0xf]
      %v479 = vld [vmem:[%s233 + $0x330] sm:$0xf]
      %v480 = vld [vmem:[%s233 + $0x334] sm:$0xf]
      %v481 = vld [vmem:[%s233 + $0x338] sm:$0xf]
      %v482 = vld [vmem:[%s233 + $0x33c] sm:$0xf]
      %v483 = vld [vmem:[%s233 + $0x340] sm:$0xf]
      %v484 = vld [vmem:[%s233 + $0x344] sm:$0xf]
      %v485 = vld [vmem:[%s233 + $0x348] sm:$0xf]
      %v486 = vld [vmem:[%s233 + $0x34c] sm:$0xf]
      %v487 = vld [vmem:[%s233 + $0x350] sm:$0xf]
      %v488 = vld [vmem:[%s233 + $0x354] sm:$0xf]
      %v489 = vld [vmem:[%s233 + $0x358] sm:$0xf]
      %v490 = vld [vmem:[%s233 + $0x35c] sm:$0xf]
      %v491 = vld [vmem:[%s233 + $0x360] sm:$0xf]
      %v492 = vld [vmem:[%s233 + $0x364] sm:$0xf]
      %v493 = vld [vmem:[%s233 + $0x368] sm:$0xf]
      %v494 = vld [vmem:[%s233 + $0x36c] sm:$0xf]
      %v495 = vld [vmem:[%s233 + $0x370] sm:$0xf]
      %v496 = vld [vmem:[%s233 + $0x374] sm:$0xf]
      %v497 = vld [vmem:[%s233 + $0x378] sm:$0xf]
      %v498 = vld [vmem:[%s233 + $0x37c] sm:$0xf]
      %v499 = vld [vmem:[%s233 + $0x380] sm:$0xf]
      %v500 = vld [vmem:[%s233 + $0x384] sm:$0xf]
      %v501 = vld [vmem:[%s233 + $0x388] sm:$0xf]
      %v502 = vld [vmem:[%s233 + $0x38c] sm:$0xf]
      %v503 = vld [vmem:[%s233 + $0x390] sm:$0xf]
      %v504 = vld [vmem:[%s233 + $0x394] sm:$0xf]
      %v505 = vld [vmem:[%s233 + $0x398] sm:$0xf]
      %v506 = vld [vmem:[%s233 + $0x39c] sm:$0xf]
      %v507 = vld [vmem:[%s233 + $0x3a0] sm:$0xf]
      %v508 = vld [vmem:[%s233 + $0x3a4] sm:$0xf]
      %v509 = vld [vmem:[%s233 + $0x3a8] sm:$0xf]
      %v510 = vld [vmem:[%s233 + $0x3ac] sm:$0xf]
      %v511 = vld [vmem:[%s233 + $0x3b0] sm:$0xf]
      %v512 = vld [vmem:[%s233 + $0x3b4] sm:$0xf]
      %v513 = vld [vmem:[%s233 + $0x3b8] sm:$0xf]
      %v514 = vld [vmem:[%s233 + $0x3bc] sm:$0xf]
      %v515 = vld [vmem:[%s233 + $0x3c0] sm:$0xf]
      %v516 = vld [vmem:[%s233 + $0x3c4] sm:$0xf]
      %v517 = vld [vmem:[%s233 + $0x3c8] sm:$0xf]
      %v518 = vld [vmem:[%s233 + $0x3cc] sm:$0xf]
      %v519 = vld [vmem:[%s233 + $0x3d0] sm:$0xf]
      %v520 = vld [vmem:[%s233 + $0x3d4] sm:$0xf]
      %v521 = vld [vmem:[%s233 + $0x3d8] sm:$0xf]
      %v522 = vld [vmem:[%s233 + $0x3dc] sm:$0xf]
      %v523 = vld [vmem:[%s233 + $0x3e0] sm:$0xf]
      %v524 = vld [vmem:[%s233 + $0x3e4] sm:$0xf]
      %v525 = vld [vmem:[%s233 + $0x3e8] sm:$0xf]
      %v526 = vld [vmem:[%s233 + $0x3ec] sm:$0xf]
      %v527 = vld [vmem:[%s233 + $0x3f0] sm:$0xf]
      %v528 = vld [vmem:[%s233 + $0x3f4] sm:$0xf]
      %v529 = vld [vmem:[%s233 + $0x3f8] sm:$0xf]
      %v530 = vld [vmem:[%s233 + $0x3fc] sm:$0xf]
      %v531 = vld [vmem:[%s233 + $0x400] sm:$0xf]
      %v532 = vld [vmem:[%s233 + $0x404] sm:$0xf]
      %v533 = vld [vmem:[%s233 + $0x408] sm:$0xf]
      %v534 = vld [vmem:[%s233 + $0x40c] sm:$0xf]
      %v535 = vld [vmem:[%s233 + $0x410] sm:$0xf]
      %v536 = vld [vmem:[%s233 + $0x414] sm:$0xf]
      %v537 = vld [vmem:[%s233 + $0x418] sm:$0xf]
      %v538 = vld [vmem:[%s233 + $0x41c] sm:$0xf]
      %v539 = vld [vmem:[%s233 + $0x420] sm:$0xf]
      %v540 = vld [vmem:[%s233 + $0x424] sm:$0xf]
      %v541 = vld [vmem:[%s233 + $0x428] sm:$0xf]
      %v542 = vld [vmem:[%s233 + $0x42c] sm:$0xf]
      %v543 = vld [vmem:[%s233 + $0x430] sm:$0xf]
      %v544 = vld [vmem:[%s233 + $0x434] sm:$0xf]
      %v545 = vld [vmem:[%s233 + $0x438] sm:$0xf]
      %v546 = vld [vmem:[%s233 + $0x43c] sm:$0xf]
      %v547 = vld [vmem:[%s233 + $0x440] sm:$0xf]
      %v548 = vld [vmem:[%s233 + $0x444] sm:$0xf]
      %v549 = vld [vmem:[%s233 + $0x448] sm:$0xf]
      %v550 = vld [vmem:[%s233 + $0x44c] sm:$0xf]
      %v551 = vld [vmem:[%s233 + $0x450] sm:$0xf]
      %v552 = vld [vmem:[%s233 + $0x454] sm:$0xf]
      %v553 = vld [vmem:[%s233 + $0x458] sm:$0xf]
      %v554 = vld [vmem:[%s233 + $0x45c] sm:$0xf]
      %v555 = vld [vmem:[%s233 + $0x460] sm:$0xf]
      %v556 = vld [vmem:[%s233 + $0x464] sm:$0xf]
      %v557 = vld [vmem:[%s233 + $0x468] sm:$0xf]
      %v558 = vld [vmem:[%s233 + $0x46c] sm:$0xf]
      %v559 = vld [vmem:[%s233 + $0x470] sm:$0xf]
      %v560 = vld [vmem:[%s233 + $0x474] sm:$0xf]
      %v561 = vld [vmem:[%s233 + $0x478] sm:$0xf]
      %v562 = vld [vmem:[%s233 + $0x47c] sm:$0xf]
      %v563 = vld [vmem:[%s236] sm:$0x1]
      %v565 = vlaneseq
      %v566 = vshrl.u32 %v565, 7
      %v567 = vsub.s32 0, %v566
      %v568 = vrot.slane %v563, %v567
      %v597 = vunpack.c.l.b16 %v248
      %v598 = vunpack.c.h.b16 %v248
      %v599 = vunpack.c.l.b16 %v249
      %v600 = vunpack.c.h.b16 %v249
      %v601 = vunpack.c.l.b16 %v250
      %v602 = vunpack.c.h.b16 %v250
      %v603 = vunpack.c.l.b16 %v251
      %v604 = vunpack.c.h.b16 %v251
      %v605 = vunpack.c.l.b16 %v252
      %v606 = vunpack.c.h.b16 %v252
      %v607 = vunpack.c.l.b16 %v253
      %v608 = vunpack.c.h.b16 %v253
      %v609 = vunpack.c.l.b16 %v254
      %v610 = vunpack.c.h.b16 %v254
      %v611 = vunpack.c.l.b16 %v255
      %v612 = vunpack.c.h.b16 %v255
      %v613 = vunpack.c.l.b16 %v256
      %v614 = vunpack.c.h.b16 %v256
      %v615 = vunpack.c.l.b16 %v257
      %v616 = vunpack.c.h.b16 %v257
      %v617 = vunpack.c.l.b16 %v258
      %v618 = vunpack.c.h.b16 %v258
      %v619 = vunpack.c.l.b16 %v259
      %v620 = vunpack.c.h.b16 %v259
      %v621 = vunpack.c.l.b16 %v260
      %v622 = vunpack.c.h.b16 %v260
      %v623 = vunpack.c.l.b16 %v261
      %v624 = vunpack.c.h.b16 %v261
      %v625 = vunpack.c.l.b16 %v262
      %v626 = vunpack.c.h.b16 %v262
      %v627 = vunpack.c.l.b16 %v263
      %v628 = vunpack.c.h.b16 %v263
      %v629 = vunpack.c.l.b16 %v264
      %v630 = vunpack.c.h.b16 %v264
      %v631 = vunpack.c.l.b16 %v265
      %v632 = vunpack.c.h.b16 %v265
      %v633 = vunpack.c.l.b16 %v266
      %v634 = vunpack.c.h.b16 %v266
      %v635 = vunpack.c.l.b16 %v267
      %v636 = vunpack.c.h.b16 %v267
      %v637 = vunpack.c.l.b16 %v268
      %v638 = vunpack.c.h.b16 %v268
      %v639 = vunpack.c.l.b16 %v269
      %v640 = vunpack.c.h.b16 %v269
      %v641 = vunpack.c.l.b16 %v270
      %v642 = vunpack.c.h.b16 %v270
      %v643 = vunpack.c.l.b16 %v271
      %v644 = vunpack.c.h.b16 %v271
      %v645 = vunpack.c.l.b16 %v272
      %v646 = vunpack.c.h.b16 %v272
      %v647 = vunpack.c.l.b16 %v273
      %v648 = vunpack.c.h.b16 %v273
      %v649 = vunpack.c.l.b16 %v274
      %v650 = vunpack.c.h.b16 %v274
      %v651 = vpack.c.b16 %v615, %v597
      %v652 = vpack.c.b16 %v616, %v598
      %v653 = vpack.c.b16 %v617, %v599
      %v654 = vpack.c.b16 %v618, %v600
      %v655 = vpack.c.b16 %v619, %v601
      %v656 = vpack.c.b16 %v620, %v602
      %v657 = vpack.c.b16 %v621, %v603
      %v658 = vpack.c.b16 %v622, %v604
      %v659 = vpack.c.b16 %v623, %v605
      %v660 = vpack.c.b16 %v624, %v606
      %v661 = vpack.c.b16 %v625, %v607
      %v662 = vpack.c.b16 %v626, %v608
      %v663 = vpack.c.b16 %v627, %v609
      %v664 = vpack.c.b16 %v628, %v610
      %v665 = vpack.c.b16 %v629, %v611
      %v666 = vpack.c.b16 %v630, %v612
      %v667 = vpack.c.b16 %v631, %v613
      %v668 = vpack.c.b16 %v632, %v614
      %v669 = vpack.c.b16 %v633, %v633
      %v670 = vpack.c.b16 %v634, %v634
      %v671 = vpack.c.b16 %v635, %v635
      %v672 = vpack.c.b16 %v636, %v636
      %v673 = vpack.c.b16 %v637, %v637
      %v674 = vpack.c.b16 %v638, %v638
      %v675 = vpack.c.b16 %v639, %v639
      %v676 = vpack.c.b16 %v640, %v640
      %v677 = vpack.c.b16 %v641, %v641
      %v678 = vpack.c.b16 %v642, %v642
      %v679 = vpack.c.b16 %v643, %v643
      %v680 = vpack.c.b16 %v644, %v644
      %v681 = vpack.c.b16 %v645, %v645
      %v682 = vpack.c.b16 %v646, %v646
      %v683 = vpack.c.b16 %v647, %v647
      %v684 = vpack.c.b16 %v648, %v648
      %v685 = vpack.c.b16 %v649, %v649
      %v686 = vpack.c.b16 %v650, %v650
      %v1011 = vunpack.c.l.b16 %v275
      %v1012 = vunpack.c.l.b16 %v276
      %v1013 = vunpack.c.l.b16 %v277
      %v1014 = vunpack.c.l.b16 %v278
      %v1015 = vunpack.c.l.b16 %v279
      %v1016 = vunpack.c.l.b16 %v280
      %v1017 = vunpack.c.l.b16 %v281
      %v1018 = vunpack.c.l.b16 %v282
      %v1019 = vunpack.c.l.b16 %v283
      %v1020 = vunpack.c.l.b16 %v284
      %v1021 = vunpack.c.l.b16 %v285
      %v1022 = vunpack.c.l.b16 %v286
      %v1023 = vunpack.c.l.b16 %v287
      %v1024 = vunpack.c.l.b16 %v288
      %v1025 = vunpack.c.l.b16 %v289
      %v1026 = vunpack.c.l.b16 %v290
      %v1027 = vunpack.c.l.b16 %v291
      %v1028 = vunpack.c.l.b16 %v292
      %v1029 = vunpack.c.l.b16 %v293
      %v1030 = vunpack.c.l.b16 %v294
      %v1031 = vunpack.c.l.b16 %v295
      %v1032 = vunpack.c.l.b16 %v296
      %v1033 = vunpack.c.l.b16 %v297
      %v1034 = vunpack.c.l.b16 %v298
      %v1035 = vunpack.c.l.b16 %v299
      %v1036 = vunpack.c.l.b16 %v300
      %v1037 = vunpack.c.l.b16 %v301
      %v1038 = vunpack.c.l.b16 %v302
      %v1039 = vunpack.c.l.b16 %v303
      %v1040 = vunpack.c.l.b16 %v304
      %v1041 = vunpack.c.l.b16 %v305
      %v1042 = vunpack.c.l.b16 %v306
      %v1043 = vunpack.c.l.b16 %v307
      %v1044 = vunpack.c.l.b16 %v308
      %v1045 = vunpack.c.l.b16 %v309
      %v1046 = vunpack.c.l.b16 %v310
      %v1047 = vunpack.c.l.b16 %v311
      %v1048 = vunpack.c.l.b16 %v312
      %v1049 = vunpack.c.l.b16 %v313
      %v1050 = vunpack.c.l.b16 %v314
      %v1051 = vunpack.c.l.b16 %v315
      %v1052 = vunpack.c.l.b16 %v316
      %v1053 = vunpack.c.l.b16 %v317
      %v1054 = vunpack.c.l.b16 %v318
      %v1055 = vunpack.c.l.b16 %v319
      %v1056 = vunpack.c.l.b16 %v320
      %v1057 = vunpack.c.l.b16 %v321
      %v1058 = vunpack.c.l.b16 %v322
      %v1059 = vunpack.c.l.b16 %v323
      %v1060 = vunpack.c.l.b16 %v324
      %v1061 = vunpack.c.l.b16 %v325
      %v1062 = vunpack.c.l.b16 %v326
      %v1063 = vunpack.c.l.b16 %v327
      %v1064 = vunpack.c.l.b16 %v328
      %v1065 = vunpack.c.l.b16 %v329
      %v1066 = vunpack.c.l.b16 %v330
      %v1067 = vunpack.c.l.b16 %v331
      %v1068 = vunpack.c.l.b16 %v332
      %v1069 = vunpack.c.l.b16 %v333
      %v1070 = vunpack.c.l.b16 %v334
      %v1071 = vunpack.c.l.b16 %v335
      %v1072 = vunpack.c.l.b16 %v336
      %v1073 = vunpack.c.l.b16 %v337
      %v1074 = vunpack.c.l.b16 %v338
      %v1075 = vunpack.c.l.b16 %v339
      %v1076 = vunpack.c.l.b16 %v340
      %v1077 = vunpack.c.l.b16 %v341
      %v1078 = vunpack.c.l.b16 %v342
      %v1079 = vunpack.c.l.b16 %v343
      %v1080 = vunpack.c.l.b16 %v344
      %v1081 = vunpack.c.l.b16 %v345
      %v1082 = vunpack.c.l.b16 %v346
      %v1083 = vunpack.c.l.b16 %v347
      %v1084 = vunpack.c.l.b16 %v348
      %v1085 = vunpack.c.l.b16 %v349
      %v1086 = vunpack.c.l.b16 %v350
      %v1087 = vunpack.c.l.b16 %v351
      %v1088 = vunpack.c.l.b16 %v352
      %v1089 = vunpack.c.l.b16 %v353
      %v1090 = vunpack.c.l.b16 %v354
      %v1091 = vunpack.c.l.b16 %v355
      %v1092 = vunpack.c.l.b16 %v356
      %v1093 = vunpack.c.l.b16 %v357
      %v1094 = vunpack.c.l.b16 %v358
      %v1095 = vunpack.c.l.b16 %v359
      %v1096 = vunpack.c.l.b16 %v360
      %v1097 = vunpack.c.l.b16 %v361
      %v1098 = vunpack.c.l.b16 %v362
      %v1099 = vunpack.c.l.b16 %v363
      %v1100 = vunpack.c.l.b16 %v364
      %v1101 = vunpack.c.l.b16 %v365
      %v1102 = vunpack.c.l.b16 %v366
      %v1103 = vunpack.c.l.b16 %v367
      %v1104 = vunpack.c.l.b16 %v368
      %v1105 = vunpack.c.l.b16 %v369
      %v1106 = vunpack.c.l.b16 %v370
      %v1107 = vunpack.c.l.b16 %v371
      %v1108 = vunpack.c.l.b16 %v372
      %v1109 = vunpack.c.l.b16 %v373
      %v1110 = vunpack.c.l.b16 %v374
      %v1111 = vunpack.c.l.b16 %v375
      %v1112 = vunpack.c.l.b16 %v376
      %v1113 = vunpack.c.l.b16 %v377
      %v1114 = vunpack.c.l.b16 %v378
      %v1115 = vunpack.c.l.b16 %v379
      %v1116 = vunpack.c.l.b16 %v380
      %v1117 = vunpack.c.l.b16 %v381
      %v1118 = vunpack.c.l.b16 %v382
      %v1119 = vunpack.c.l.b16 %v383
      %v1120 = vunpack.c.l.b16 %v384
      %v1121 = vunpack.c.l.b16 %v385
      %v1122 = vunpack.c.l.b16 %v386
      %v1123 = vunpack.c.l.b16 %v387
      %v1124 = vunpack.c.l.b16 %v388
      %v1125 = vunpack.c.l.b16 %v389
      %v1126 = vunpack.c.l.b16 %v390
      %v1127 = vunpack.c.l.b16 %v391
      %v1128 = vunpack.c.l.b16 %v392
      %v1129 = vunpack.c.l.b16 %v393
      %v1130 = vunpack.c.l.b16 %v394
      %v1131 = vunpack.c.l.b16 %v395
      %v1132 = vunpack.c.l.b16 %v396
      %v1133 = vunpack.c.l.b16 %v397
      %v1134 = vunpack.c.l.b16 %v398
      %v1135 = vunpack.c.l.b16 %v399
      %v1136 = vunpack.c.l.b16 %v400
      %v1137 = vunpack.c.l.b16 %v401
      %v1138 = vunpack.c.l.b16 %v402
      %v1139 = vunpack.c.l.b16 %v403
      %v1140 = vunpack.c.l.b16 %v404
      %v1141 = vunpack.c.l.b16 %v405
      %v1142 = vunpack.c.l.b16 %v406
      %v1143 = vunpack.c.l.b16 %v407
      %v1144 = vunpack.c.l.b16 %v408
      %v1145 = vunpack.c.l.b16 %v409
      %v1146 = vunpack.c.l.b16 %v410
      %v1147 = vunpack.c.l.b16 %v411
      %v1148 = vunpack.c.l.b16 %v412
      %v1149 = vunpack.c.l.b16 %v413
      %v1150 = vunpack.c.l.b16 %v414
      %v1151 = vunpack.c.l.b16 %v415
      %v1152 = vunpack.c.l.b16 %v416
      %v1153 = vunpack.c.l.b16 %v417
      %v1154 = vunpack.c.l.b16 %v418
      %v1155 = vunpack.c.l.b16 %v419
      %v1156 = vunpack.c.l.b16 %v420
      %v1157 = vunpack.c.l.b16 %v421
      %v1158 = vunpack.c.l.b16 %v422
      %v1159 = vunpack.c.l.b16 %v423
      %v1160 = vunpack.c.l.b16 %v424
      %v1161 = vunpack.c.l.b16 %v425
      %v1162 = vunpack.c.l.b16 %v426
      %v1163 = vunpack.c.l.b16 %v427
      %v1164 = vunpack.c.l.b16 %v428
      %v1165 = vunpack.c.l.b16 %v429
      %v1166 = vunpack.c.l.b16 %v430
      %v1167 = vunpack.c.l.b16 %v431
      %v1168 = vunpack.c.l.b16 %v432
      %v1169 = vunpack.c.l.b16 %v433
      %v1170 = vunpack.c.l.b16 %v434
      %v1171 = vunpack.c.l.b16 %v435
      %v1172 = vunpack.c.l.b16 %v436
      %v1173 = vunpack.c.l.b16 %v437
      %v1174 = vunpack.c.l.b16 %v438
      %v1175 = vunpack.c.l.b16 %v439
      %v1176 = vunpack.c.l.b16 %v440
      %v1177 = vunpack.c.l.b16 %v441
      %v1178 = vunpack.c.l.b16 %v442
      %v1179 = vunpack.c.l.b16 %v443
      %v1180 = vunpack.c.l.b16 %v444
      %v1181 = vunpack.c.l.b16 %v445
      %v1182 = vunpack.c.l.b16 %v446
      %v1183 = vunpack.c.l.b16 %v447
      %v1184 = vunpack.c.l.b16 %v448
      %v1185 = vunpack.c.l.b16 %v449
      %v1186 = vunpack.c.l.b16 %v450
      %v1187 = vunpack.c.l.b16 %v451
      %v1188 = vunpack.c.l.b16 %v452
      %v1189 = vunpack.c.l.b16 %v453
      %v1190 = vunpack.c.l.b16 %v454
      %v1191 = vunpack.c.l.b16 %v455
      %v1192 = vunpack.c.l.b16 %v456
      %v1193 = vunpack.c.l.b16 %v457
      %v1194 = vunpack.c.l.b16 %v458
      %v1195 = vunpack.c.l.b16 %v459
      %v1196 = vunpack.c.l.b16 %v460
      %v1197 = vunpack.c.l.b16 %v461
      %v1198 = vunpack.c.l.b16 %v462
      %v1199 = vunpack.c.l.b16 %v463
      %v1200 = vunpack.c.l.b16 %v464
      %v1201 = vunpack.c.l.b16 %v465
      %v1202 = vunpack.c.l.b16 %v466
      %v1203 = vunpack.c.l.b16 %v467
      %v1204 = vunpack.c.l.b16 %v468
      %v1205 = vunpack.c.l.b16 %v469
      %v1206 = vunpack.c.l.b16 %v470
      %v1207 = vunpack.c.l.b16 %v471
      %v1208 = vunpack.c.l.b16 %v472
      %v1209 = vunpack.c.l.b16 %v473
      %v1210 = vunpack.c.l.b16 %v474
      %v1211 = vunpack.c.l.b16 %v475
      %v1212 = vunpack.c.l.b16 %v476
      %v1213 = vunpack.c.l.b16 %v477
      %v1214 = vunpack.c.l.b16 %v478
      %v1215 = vunpack.c.l.b16 %v479
      %v1216 = vunpack.c.l.b16 %v480
      %v1217 = vunpack.c.l.b16 %v481
      %v1218 = vunpack.c.l.b16 %v482
      %v1219 = vunpack.c.l.b16 %v483
      %v1220 = vunpack.c.l.b16 %v484
      %v1221 = vunpack.c.l.b16 %v485
      %v1222 = vunpack.c.l.b16 %v486
      %v1223 = vunpack.c.l.b16 %v487
      %v1224 = vunpack.c.l.b16 %v488
      %v1225 = vunpack.c.l.b16 %v489
      %v1226 = vunpack.c.l.b16 %v490
      %v1227 = vunpack.c.l.b16 %v491
      %v1228 = vunpack.c.l.b16 %v492
      %v1229 = vunpack.c.l.b16 %v493
      %v1230 = vunpack.c.l.b16 %v494
      %v1231 = vunpack.c.l.b16 %v495
      %v1232 = vunpack.c.l.b16 %v496
      %v1233 = vunpack.c.l.b16 %v497
      %v1234 = vunpack.c.l.b16 %v498
      %v1235 = vunpack.c.l.b16 %v499
      %v1236 = vunpack.c.l.b16 %v500
      %v1237 = vunpack.c.l.b16 %v501
      %v1238 = vunpack.c.l.b16 %v502
      %v1239 = vunpack.c.l.b16 %v503
      %v1240 = vunpack.c.l.b16 %v504
      %v1241 = vunpack.c.l.b16 %v505
      %v1242 = vunpack.c.l.b16 %v506
      %v1243 = vunpack.c.l.b16 %v507
      %v1244 = vunpack.c.l.b16 %v508
      %v1245 = vunpack.c.l.b16 %v509
      %v1246 = vunpack.c.l.b16 %v510
      %v1247 = vunpack.c.l.b16 %v511
      %v1248 = vunpack.c.l.b16 %v512
      %v1249 = vunpack.c.l.b16 %v513
      %v1250 = vunpack.c.l.b16 %v514
      %v1251 = vunpack.c.l.b16 %v515
      %v1252 = vunpack.c.l.b16 %v516
      %v1253 = vunpack.c.l.b16 %v517
      %v1254 = vunpack.c.l.b16 %v518
      %v1255 = vunpack.c.l.b16 %v519
      %v1256 = vunpack.c.l.b16 %v520
      %v1257 = vunpack.c.l.b16 %v521
      %v1258 = vunpack.c.l.b16 %v522
      %v1259 = vunpack.c.l.b16 %v523
      %v1260 = vunpack.c.l.b16 %v524
      %v1261 = vunpack.c.l.b16 %v525
      %v1262 = vunpack.c.l.b16 %v526
      %v1263 = vunpack.c.l.b16 %v527
      %v1264 = vunpack.c.l.b16 %v528
      %v1265 = vunpack.c.l.b16 %v529
      %v1266 = vunpack.c.l.b16 %v530
      %v1267 = vunpack.c.l.b16 %v531
      %v1268 = vunpack.c.l.b16 %v532
      %v1269 = vunpack.c.l.b16 %v533
      %v1270 = vunpack.c.l.b16 %v534
      %v1271 = vunpack.c.l.b16 %v535
      %v1272 = vunpack.c.l.b16 %v536
      %v1273 = vunpack.c.l.b16 %v537
      %v1274 = vunpack.c.l.b16 %v538
      %v1275 = vunpack.c.l.b16 %v539
      %v1276 = vunpack.c.l.b16 %v540
      %v1277 = vunpack.c.l.b16 %v541
      %v1278 = vunpack.c.l.b16 %v542
      %v1279 = vunpack.c.l.b16 %v543
      %v1280 = vunpack.c.l.b16 %v544
      %v1281 = vunpack.c.l.b16 %v545
      %v1282 = vunpack.c.l.b16 %v546
      %v1283 = vunpack.c.l.b16 %v547
      %v1284 = vunpack.c.l.b16 %v548
      %v1285 = vunpack.c.l.b16 %v549
      %v1286 = vunpack.c.l.b16 %v550
      %v1287 = vunpack.c.l.b16 %v551
      %v1288 = vunpack.c.l.b16 %v552
      %v1289 = vunpack.c.l.b16 %v553
      %v1290 = vunpack.c.l.b16 %v554
      %v1291 = vunpack.c.l.b16 %v555
      %v1292 = vunpack.c.l.b16 %v556
      %v1293 = vunpack.c.l.b16 %v557
      %v1294 = vunpack.c.l.b16 %v558
      %v1295 = vunpack.c.l.b16 %v559
      %v1296 = vunpack.c.l.b16 %v560
      %v1297 = vunpack.c.l.b16 %v561
      %v1298 = vunpack.c.l.b16 %v562
      %v1299 = vpack.c.b16 %v1012, %v1011
      %v1300 = vpack.c.b16 %v1014, %v1013
      %v1301 = vpack.c.b16 %v1016, %v1015
      %v1302 = vpack.c.b16 %v1018, %v1017
      %v1303 = vpack.c.b16 %v1020, %v1019
      %v1304 = vpack.c.b16 %v1022, %v1021
      %v1305 = vpack.c.b16 %v1024, %v1023
      %v1306 = vpack.c.b16 %v1026, %v1025
      %v1307 = vpack.c.b16 %v1028, %v1027
      %v1308 = vpack.c.b16 %v1030, %v1029
      %v1309 = vpack.c.b16 %v1032, %v1031
      %v1310 = vpack.c.b16 %v1034, %v1033
      %v1311 = vpack.c.b16 %v1036, %v1035
      %v1312 = vpack.c.b16 %v1038, %v1037
      %v1313 = vpack.c.b16 %v1040, %v1039
      %v1314 = vpack.c.b16 %v1042, %v1041
      %v1315 = vpack.c.b16 %v1044, %v1043
      %v1316 = vpack.c.b16 %v1046, %v1045
      %v1317 = vpack.c.b16 %v1048, %v1047
      %v1318 = vpack.c.b16 %v1050, %v1049
      %v1319 = vpack.c.b16 %v1052, %v1051
      %v1320 = vpack.c.b16 %v1054, %v1053
      %v1321 = vpack.c.b16 %v1056, %v1055
      %v1322 = vpack.c.b16 %v1058, %v1057
      %v1323 = vpack.c.b16 %v1060, %v1059
      %v1324 = vpack.c.b16 %v1062, %v1061
      %v1325 = vpack.c.b16 %v1064, %v1063
      %v1326 = vpack.c.b16 %v1066, %v1065
      %v1327 = vpack.c.b16 %v1068, %v1067
      %v1328 = vpack.c.b16 %v1070, %v1069
      %v1329 = vpack.c.b16 %v1072, %v1071
      %v1330 = vpack.c.b16 %v1074, %v1073
      %v1331 = vpack.c.b16 %v1076, %v1075
      %v1332 = vpack.c.b16 %v1078, %v1077
      %v1333 = vpack.c.b16 %v1080, %v1079
      %v1334 = vpack.c.b16 %v1082, %v1081
      %v1335 = vpack.c.b16 %v1084, %v1083
      %v1336 = vpack.c.b16 %v1086, %v1085
      %v1337 = vpack.c.b16 %v1088, %v1087
      %v1338 = vpack.c.b16 %v1090, %v1089
      %v1339 = vpack.c.b16 %v1092, %v1091
      %v1340 = vpack.c.b16 %v1094, %v1093
      %v1341 = vpack.c.b16 %v1096, %v1095
      %v1342 = vpack.c.b16 %v1098, %v1097
      %v1343 = vpack.c.b16 %v1100, %v1099
      %v1344 = vpack.c.b16 %v1102, %v1101
      %v1345 = vpack.c.b16 %v1104, %v1103
      %v1346 = vpack.c.b16 %v1106, %v1105
      %v1347 = vpack.c.b16 %v1108, %v1107
      %v1348 = vpack.c.b16 %v1110, %v1109
      %v1349 = vpack.c.b16 %v1112, %v1111
      %v1350 = vpack.c.b16 %v1114, %v1113
      %v1351 = vpack.c.b16 %v1116, %v1115
      %v1352 = vpack.c.b16 %v1118, %v1117
      %v1353 = vpack.c.b16 %v1120, %v1119
      %v1354 = vpack.c.b16 %v1122, %v1121
      %v1355 = vpack.c.b16 %v1124, %v1123
      %v1356 = vpack.c.b16 %v1126, %v1125
      %v1357 = vpack.c.b16 %v1128, %v1127
      %v1358 = vpack.c.b16 %v1130, %v1129
      %v1359 = vpack.c.b16 %v1132, %v1131
      %v1360 = vpack.c.b16 %v1134, %v1133
      %v1361 = vpack.c.b16 %v1136, %v1135
      %v1362 = vpack.c.b16 %v1138, %v1137
      %v1363 = vpack.c.b16 %v1140, %v1139
      %v1364 = vpack.c.b16 %v1142, %v1141
      %v1365 = vpack.c.b16 %v1144, %v1143
      %v1366 = vpack.c.b16 %v1146, %v1145
      %v1367 = vpack.c.b16 %v1148, %v1147
      %v1368 = vpack.c.b16 %v1150, %v1149
      %v1369 = vpack.c.b16 %v1152, %v1151
      %v1370 = vpack.c.b16 %v1154, %v1153
      %v1371 = vpack.c.b16 %v1156, %v1155
      %v1372 = vpack.c.b16 %v1158, %v1157
      %v1373 = vpack.c.b16 %v1160, %v1159
      %v1374 = vpack.c.b16 %v1162, %v1161
      %v1375 = vpack.c.b16 %v1164, %v1163
      %v1376 = vpack.c.b16 %v1166, %v1165
      %v1377 = vpack.c.b16 %v1168, %v1167
      %v1378 = vpack.c.b16 %v1170, %v1169
      %v1379 = vpack.c.b16 %v1172, %v1171
      %v1380 = vpack.c.b16 %v1174, %v1173
      %v1381 = vpack.c.b16 %v1176, %v1175
      %v1382 = vpack.c.b16 %v1178, %v1177
      %v1383 = vpack.c.b16 %v1180, %v1179
      %v1384 = vpack.c.b16 %v1182, %v1181
      %v1385 = vpack.c.b16 %v1184, %v1183
      %v1386 = vpack.c.b16 %v1186, %v1185
      %v1387 = vpack.c.b16 %v1188, %v1187
      %v1388 = vpack.c.b16 %v1190, %v1189
      %v1389 = vpack.c.b16 %v1192, %v1191
      %v1390 = vpack.c.b16 %v1194, %v1193
      %v1391 = vpack.c.b16 %v1196, %v1195
      %v1392 = vpack.c.b16 %v1198, %v1197
      %v1393 = vpack.c.b16 %v1200, %v1199
      %v1394 = vpack.c.b16 %v1202, %v1201
      %v1395 = vpack.c.b16 %v1204, %v1203
      %v1396 = vpack.c.b16 %v1206, %v1205
      %v1397 = vpack.c.b16 %v1208, %v1207
      %v1398 = vpack.c.b16 %v1210, %v1209
      %v1399 = vpack.c.b16 %v1212, %v1211
      %v1400 = vpack.c.b16 %v1214, %v1213
      %v1401 = vpack.c.b16 %v1216, %v1215
      %v1402 = vpack.c.b16 %v1218, %v1217
      %v1403 = vpack.c.b16 %v1220, %v1219
      %v1404 = vpack.c.b16 %v1222, %v1221
      %v1405 = vpack.c.b16 %v1224, %v1223
      %v1406 = vpack.c.b16 %v1226, %v1225
      %v1407 = vpack.c.b16 %v1228, %v1227
      %v1408 = vpack.c.b16 %v1230, %v1229
      %v1409 = vpack.c.b16 %v1232, %v1231
      %v1410 = vpack.c.b16 %v1234, %v1233
      %v1411 = vpack.c.b16 %v1236, %v1235
      %v1412 = vpack.c.b16 %v1238, %v1237
      %v1413 = vpack.c.b16 %v1240, %v1239
      %v1414 = vpack.c.b16 %v1242, %v1241
      %v1415 = vpack.c.b16 %v1244, %v1243
      %v1416 = vpack.c.b16 %v1246, %v1245
      %v1417 = vpack.c.b16 %v1248, %v1247
      %v1418 = vpack.c.b16 %v1250, %v1249
      %v1419 = vpack.c.b16 %v1252, %v1251
      %v1420 = vpack.c.b16 %v1254, %v1253
      %v1421 = vpack.c.b16 %v1256, %v1255
      %v1422 = vpack.c.b16 %v1258, %v1257
      %v1423 = vpack.c.b16 %v1260, %v1259
      %v1424 = vpack.c.b16 %v1262, %v1261
      %v1425 = vpack.c.b16 %v1264, %v1263
      %v1426 = vpack.c.b16 %v1266, %v1265
      %v1427 = vpack.c.b16 %v1268, %v1267
      %v1428 = vpack.c.b16 %v1270, %v1269
      %v1429 = vpack.c.b16 %v1272, %v1271
      %v1430 = vpack.c.b16 %v1274, %v1273
      %v1431 = vpack.c.b16 %v1276, %v1275
      %v1432 = vpack.c.b16 %v1278, %v1277
      %v1433 = vpack.c.b16 %v1280, %v1279
      %v1434 = vpack.c.b16 %v1282, %v1281
      %v1435 = vpack.c.b16 %v1284, %v1283
      %v1436 = vpack.c.b16 %v1286, %v1285
      %v1437 = vpack.c.b16 %v1288, %v1287
      %v1438 = vpack.c.b16 %v1290, %v1289
      %v1439 = vpack.c.b16 %v1292, %v1291
      %v1440 = vpack.c.b16 %v1294, %v1293
      %v1441 = vpack.c.b16 %v1296, %v1295
      %v1442 = vpack.c.b16 %v1298, %v1297
      %1587 = vmatprep.subr.bf16.mxu0 0
      %1588 = vmatpush1.bf16.msra.mxu0 %v1306
      %1589 = vmatprep.subr.bf16.mxu0 0
      %1590 = vmatpush1.bf16.msra.mxu0 %v1305
      %1591 = vmatprep.subr.bf16.mxu0 0
      %1592 = vmatpush1.bf16.msra.mxu0 %v1304
      %1593 = vmatprep.subr.bf16.mxu0 0
      %1594 = vmatpush1.bf16.msra.mxu0 %v1303
      %1595 = vmatprep.subr.bf16.mxu0 0
      %1596 = vmatpush1.bf16.msra.mxu0 %v1302
      %1597 = vmatprep.subr.bf16.mxu0 0
      %1598 = vmatpush1.bf16.msra.mxu0 %v1301
      %1599 = vmatprep.subr.bf16.mxu0 0
      %1600 = vmatpush1.bf16.msra.mxu0 %v1300
      %1601 = vmatprep.subr.bf16.mxu0 0
      %1602 = vmatpush1.bf16.msra.mxu0 %v1299
      %1603 = vmatprep.subr.bf16.mxu0 0
      %1604 = vmatpush2.bf16.msra.mxu0 %v1314
      %1605 = vmatprep.subr.bf16.mxu0 0
      %1606 = vmatpush2.bf16.msra.mxu0 %v1313
      %1607 = vmatprep.subr.bf16.mxu0 0
      %1608 = vmatpush2.bf16.msra.mxu0 %v1312
      %1609 = vmatprep.subr.bf16.mxu0 0
      %1610 = vmatpush2.bf16.msra.mxu0 %v1311
      %1611 = vmatprep.subr.bf16.mxu0 0
      %1612 = vmatpush2.bf16.msra.mxu0 %v1310
      %1613 = vmatprep.subr.bf16.mxu0 0
      %1614 = vmatpush2.bf16.msra.mxu0 %v1309
      %1615 = vmatprep.subr.bf16.mxu0 0
      %1616 = vmatpush2.bf16.msra.mxu0 %v1308
      %1617 = vmatprep.subr.bf16.mxu0 0
      %1618 = vmatpush2.bf16.msra.mxu0 %v1307
      %1619 = vmatprep.mubr.bf16.mxu0 %v652
      %1620 = vmatmul.mubr.bf16.gmra.mxu0 %v651
      %v1621 = vpop.f32.mrf.mxu0
      %v1622 = vadd.f32 %v568, %v1621
      %v1623 = vpop.f32.mrf.mxu0
      %v1624 = vpop.f32.mrf.mxu0
      %v1625 = vadd.f32 %v568, %v1624
      %v1626 = vpop.f32.mrf.mxu0
      %1627 = vmatprep.mubr.bf16.mxu0 %v670
      %1628 = vmatmul.mubr.bf16.gmra.mxu0 %v669
      %v1629 = vpop.f32.mrf.mxu0
      %v1630 = vadd.f32 %v568, %v1629
      %v1631 = vpop.f32.mrf.mxu0
      %v1632 = vpop.f32.mrf.mxu0
      %v1633 = vpop.f32.mrf.mxu0
      %1634 = vdwg.mxu0
      %1635 = vmatprep.subr.bf16.mxu0 0
      %1636 = vmatpush1.bf16.msra.mxu0 %v1322
      %1637 = vmatprep.subr.bf16.mxu0 0
      %1638 = vmatpush1.bf16.msra.mxu0 %v1321
      %1639 = vmatprep.subr.bf16.mxu0 0
      %1640 = vmatpush1.bf16.msra.mxu0 %v1320
      %1641 = vmatprep.subr.bf16.mxu0 0
      %1642 = vmatpush1.bf16.msra.mxu0 %v1319
      %1643 = vmatprep.subr.bf16.mxu0 0
      %1644 = vmatpush1.bf16.msra.mxu0 %v1318
      %1645 = vmatprep.subr.bf16.mxu0 0
      %1646 = vmatpush1.bf16.msra.mxu0 %v1317
      %1647 = vmatprep.subr.bf16.mxu0 0
      %1648 = vmatpush1.bf16.msra.mxu0 %v1316
      %1649 = vmatprep.subr.bf16.mxu0 0
      %1650 = vmatpush1.bf16.msra.mxu0 %v1315
      %1651 = vmatprep.subr.bf16.mxu0 0
      %1652 = vmatpush2.bf16.msra.mxu0 %v1330
      %1653 = vmatprep.subr.bf16.mxu0 0
      %1654 = vmatpush2.bf16.msra.mxu0 %v1329
      %1655 = vmatprep.subr.bf16.mxu0 0
      %1656 = vmatpush2.bf16.msra.mxu0 %v1328
      %1657 = vmatprep.subr.bf16.mxu0 0
      %1658 = vmatpush2.bf16.msra.mxu0 %v1327
      %1659 = vmatprep.subr.bf16.mxu0 0
      %1660 = vmatpush2.bf16.msra.mxu0 %v1326
      %1661 = vmatprep.subr.bf16.mxu0 0
      %1662 = vmatpush2.bf16.msra.mxu0 %v1325
      %1663 = vmatprep.subr.bf16.mxu0 0
      %1664 = vmatpush2.bf16.msra.mxu0 %v1324
      %1665 = vmatprep.subr.bf16.mxu0 0
      %1666 = vmatpush2.bf16.msra.mxu0 %v1323
      %1667 = vmatprep.mubr.bf16.mxu0 %v654
      %1668 = vmatmul.mubr.bf16.gmra.mxu0 %v653
      %v1669 = vpop.f32.mrf.mxu0
      %v1670 = vadd.f32 %v1622, %v1669
      %v1671 = vpop.f32.mrf.mxu0
      %v1672 = vpop.f32.mrf.mxu0
      %v1673 = vadd.f32 %v1625, %v1672
      %v1674 = vpop.f32.mrf.mxu0
      %1675 = vmatprep.mubr.bf16.mxu0 %v672
      %1676 = vmatmul.mubr.bf16.gmra.mxu0 %v671
      %v1677 = vpop.f32.mrf.mxu0
      %v1678 = vadd.f32 %v1630, %v1677
      %v1679 = vpop.f32.mrf.mxu0
      %v1680 = vpop.f32.mrf.mxu0
      %v1681 = vpop.f32.mrf.mxu0
      %1682 = vdwg.mxu0
      %1683 = vmatprep.subr.bf16.mxu0 0
      %1684 = vmatpush1.bf16.msra.mxu0 %v1338
      %1685 = vmatprep.subr.bf16.mxu0 0
      %1686 = vmatpush1.bf16.msra.mxu0 %v1337
      %1687 = vmatprep.subr.bf16.mxu0 0
      %1688 = vmatpush1.bf16.msra.mxu0 %v1336
      %1689 = vmatprep.subr.bf16.mxu0 0
      %1690 = vmatpush1.bf16.msra.mxu0 %v1335
      %1691 = vmatprep.subr.bf16.mxu0 0
      %1692 = vmatpush1.bf16.msra.mxu0 %v1334
      %1693 = vmatprep.subr.bf16.mxu0 0
      %1694 = vmatpush1.bf16.msra.mxu0 %v1333
      %1695 = vmatprep.subr.bf16.mxu0 0
      %1696 = vmatpush1.bf16.msra.mxu0 %v1332
      %1697 = vmatprep.subr.bf16.mxu0 0
      %1698 = vmatpush1.bf16.msra.mxu0 %v1331
      %1699 = vmatprep.subr.bf16.mxu0 0
      %1700 = vmatpush2.bf16.msra.mxu0 %v1346
      %1701 = vmatprep.subr.bf16.mxu0 0
      %1702 = vmatpush2.bf16.msra.mxu0 %v1345
      %1703 = vmatprep.subr.bf16.mxu0 0
      %1704 = vmatpush2.bf16.msra.mxu0 %v1344
      %1705 = vmatprep.subr.bf16.mxu0 0
      %1706 = vmatpush2.bf16.msra.mxu0 %v1343
      %1707 = vmatprep.subr.bf16.mxu0 0
      %1708 = vmatpush2.bf16.msra.mxu0 %v1342
      %1709 = vmatprep.subr.bf16.mxu0 0
      %1710 = vmatpush2.bf16.msra.mxu0 %v1341
      %1711 = vmatprep.subr.bf16.mxu0 0
      %1712 = vmatpush2.bf16.msra.mxu0 %v1340
      %1713 = vmatprep.subr.bf16.mxu0 0
      %1714 = vmatpush2.bf16.msra.mxu0 %v1339
      %1715 = vmatprep.mubr.bf16.mxu0 %v656
      %1716 = vmatmul.mubr.bf16.gmra.mxu0 %v655
      %v1717 = vpop.f32.mrf.mxu0
      %v1718 = vadd.f32 %v1670, %v1717
      %v1719 = vpop.f32.mrf.mxu0
      %v1720 = vpop.f32.mrf.mxu0
      %v1721 = vadd.f32 %v1673, %v1720
      %v1722 = vpop.f32.mrf.mxu0
      %1723 = vmatprep.mubr.bf16.mxu0 %v674
      %1724 = vmatmul.mubr.bf16.gmra.mxu0 %v673
      %v1725 = vpop.f32.mrf.mxu0
      %v1726 = vadd.f32 %v1678, %v1725
      %v1727 = vpop.f32.mrf.mxu0
      %v1728 = vpop.f32.mrf.mxu0
      %v1729 = vpop.f32.mrf.mxu0
      %1730 = vdwg.mxu0
      %1731 = vmatprep.subr.bf16.mxu0 0
      %1732 = vmatpush1.bf16.msra.mxu0 %v1354
      %1733 = vmatprep.subr.bf16.mxu0 0
      %1734 = vmatpush1.bf16.msra.mxu0 %v1353
      %1735 = vmatprep.subr.bf16.mxu0 0
      %1736 = vmatpush1.bf16.msra.mxu0 %v1352
      %1737 = vmatprep.subr.bf16.mxu0 0
      %1738 = vmatpush1.bf16.msra.mxu0 %v1351
      %1739 = vmatprep.subr.bf16.mxu0 0
      %1740 = vmatpush1.bf16.msra.mxu0 %v1350
      %1741 = vmatprep.subr.bf16.mxu0 0
      %1742 = vmatpush1.bf16.msra.mxu0 %v1349
      %1743 = vmatprep.subr.bf16.mxu0 0
      %1744 = vmatpush1.bf16.msra.mxu0 %v1348
      %1745 = vmatprep.subr.bf16.mxu0 0
      %1746 = vmatpush1.bf16.msra.mxu0 %v1347
      %1747 = vmatprep.subr.bf16.mxu0 0
      %1748 = vmatpush2.bf16.msra.mxu0 %v1362
      %1749 = vmatprep.subr.bf16.mxu0 0
      %1750 = vmatpush2.bf16.msra.mxu0 %v1361
      %1751 = vmatprep.subr.bf16.mxu0 0
      %1752 = vmatpush2.bf16.msra.mxu0 %v1360
      %1753 = vmatprep.subr.bf16.mxu0 0
      %1754 = vmatpush2.bf16.msra.mxu0 %v1359
      %1755 = vmatprep.subr.bf16.mxu0 0
      %1756 = vmatpush2.bf16.msra.mxu0 %v1358
      %1757 = vmatprep.subr.bf16.mxu0 0
      %1758 = vmatpush2.bf16.msra.mxu0 %v1357
      %1759 = vmatprep.subr.bf16.mxu0 0
      %1760 = vmatpush2.bf16.msra.mxu0 %v1356
      %1761 = vmatprep.subr.bf16.mxu0 0
      %1762 = vmatpush2.bf16.msra.mxu0 %v1355
      %1763 = vmatprep.mubr.bf16.mxu0 %v658
      %1764 = vmatmul.mubr.bf16.gmra.mxu0 %v657
      %v1765 = vpop.f32.mrf.mxu0
      %v1766 = vadd.f32 %v1718, %v1765
      %v1767 = vpop.f32.mrf.mxu0
      %v1768 = vpop.f32.mrf.mxu0
      %v1769 = vadd.f32 %v1721, %v1768
      %v1770 = vpop.f32.mrf.mxu0
      %1771 = vmatprep.mubr.bf16.mxu0 %v676
      %1772 = vmatmul.mubr.bf16.gmra.mxu0 %v675
      %v1773 = vpop.f32.mrf.mxu0
      %v1774 = vadd.f32 %v1726, %v1773
      %v1775 = vpop.f32.mrf.mxu0
      %v1776 = vpop.f32.mrf.mxu0
      %v1777 = vpop.f32.mrf.mxu0
      %1778 = vdwg.mxu0
      %1779 = vmatprep.subr.bf16.mxu0 0
      %1780 = vmatpush1.bf16.msra.mxu0 %v1370
      %1781 = vmatprep.subr.bf16.mxu0 0
      %1782 = vmatpush1.bf16.msra.mxu0 %v1369
      %1783 = vmatprep.subr.bf16.mxu0 0
      %1784 = vmatpush1.bf16.msra.mxu0 %v1368
      %1785 = vmatprep.subr.bf16.mxu0 0
      %1786 = vmatpush1.bf16.msra.mxu0 %v1367
      %1787 = vmatprep.subr.bf16.mxu0 0
      %1788 = vmatpush1.bf16.msra.mxu0 %v1366
      %1789 = vmatprep.subr.bf16.mxu0 0
      %1790 = vmatpush1.bf16.msra.mxu0 %v1365
      %1791 = vmatprep.subr.bf16.mxu0 0
      %1792 = vmatpush1.bf16.msra.mxu0 %v1364
      %1793 = vmatprep.subr.bf16.mxu0 0
      %1794 = vmatpush1.bf16.msra.mxu0 %v1363
      %1795 = vmatprep.subr.bf16.mxu0 0
      %1796 = vmatpush2.bf16.msra.mxu0 %v1378
      %1797 = vmatprep.subr.bf16.mxu0 0
      %1798 = vmatpush2.bf16.msra.mxu0 %v1377
      %1799 = vmatprep.subr.bf16.mxu0 0
      %1800 = vmatpush2.bf16.msra.mxu0 %v1376
      %1801 = vmatprep.subr.bf16.mxu0 0
      %1802 = vmatpush2.bf16.msra.mxu0 %v1375
      %1803 = vmatprep.subr.bf16.mxu0 0
      %1804 = vmatpush2.bf16.msra.mxu0 %v1374
      %1805 = vmatprep.subr.bf16.mxu0 0
      %1806 = vmatpush2.bf16.msra.mxu0 %v1373
      %1807 = vmatprep.subr.bf16.mxu0 0
      %1808 = vmatpush2.bf16.msra.mxu0 %v1372
      %1809 = vmatprep.subr.bf16.mxu0 0
      %1810 = vmatpush2.bf16.msra.mxu0 %v1371
      %1811 = vmatprep.mubr.bf16.mxu0 %v660
      %1812 = vmatmul.mubr.bf16.gmra.mxu0 %v659
      %v1813 = vpop.f32.mrf.mxu0
      %v1814 = vadd.f32 %v1766, %v1813
      %v1815 = vpop.f32.mrf.mxu0
      %v1816 = vpop.f32.mrf.mxu0
      %v1817 = vadd.f32 %v1769, %v1816
      %v1818 = vpop.f32.mrf.mxu0
      %1819 = vmatprep.mubr.bf16.mxu0 %v678
      %1820 = vmatmul.mubr.bf16.gmra.mxu0 %v677
      %v1821 = vpop.f32.mrf.mxu0
      %v1822 = vadd.f32 %v1774, %v1821
      %v1823 = vpop.f32.mrf.mxu0
      %v1824 = vpop.f32.mrf.mxu0
      %v1825 = vpop.f32.mrf.mxu0
      %1826 = vdwg.mxu0
      %1827 = vmatprep.subr.bf16.mxu0 0
      %1828 = vmatpush1.bf16.msra.mxu0 %v1386
      %1829 = vmatprep.subr.bf16.mxu0 0
      %1830 = vmatpush1.bf16.msra.mxu0 %v1385
      %1831 = vmatprep.subr.bf16.mxu0 0
      %1832 = vmatpush1.bf16.msra.mxu0 %v1384
      %1833 = vmatprep.subr.bf16.mxu0 0
      %1834 = vmatpush1.bf16.msra.mxu0 %v1383
      %1835 = vmatprep.subr.bf16.mxu0 0
      %1836 = vmatpush1.bf16.msra.mxu0 %v1382
      %1837 = vmatprep.subr.bf16.mxu0 0
      %1838 = vmatpush1.bf16.msra.mxu0 %v1381
      %1839 = vmatprep.subr.bf16.mxu0 0
      %1840 = vmatpush1.bf16.msra.mxu0 %v1380
      %1841 = vmatprep.subr.bf16.mxu0 0
      %1842 = vmatpush1.bf16.msra.mxu0 %v1379
      %1843 = vmatprep.subr.bf16.mxu0 0
      %1844 = vmatpush2.bf16.msra.mxu0 %v1394
      %1845 = vmatprep.subr.bf16.mxu0 0
      %1846 = vmatpush2.bf16.msra.mxu0 %v1393
      %1847 = vmatprep.subr.bf16.mxu0 0
      %1848 = vmatpush2.bf16.msra.mxu0 %v1392
      %1849 = vmatprep.subr.bf16.mxu0 0
      %1850 = vmatpush2.bf16.msra.mxu0 %v1391
      %1851 = vmatprep.subr.bf16.mxu0 0
      %1852 = vmatpush2.bf16.msra.mxu0 %v1390
      %1853 = vmatprep.subr.bf16.mxu0 0
      %1854 = vmatpush2.bf16.msra.mxu0 %v1389
      %1855 = vmatprep.subr.bf16.mxu0 0
      %1856 = vmatpush2.bf16.msra.mxu0 %v1388
      %1857 = vmatprep.subr.bf16.mxu0 0
      %1858 = vmatpush2.bf16.msra.mxu0 %v1387
      %1859 = vmatprep.mubr.bf16.mxu0 %v662
      %1860 = vmatmul.mubr.bf16.gmra.mxu0 %v661
      %v1861 = vpop.f32.mrf.mxu0
      %v1862 = vadd.f32 %v1814, %v1861
      %v1863 = vpop.f32.mrf.mxu0
      %v1864 = vpop.f32.mrf.mxu0
      %v1865 = vadd.f32 %v1817, %v1864
      %v1866 = vpop.f32.mrf.mxu0
      %1867 = vmatprep.mubr.bf16.mxu0 %v680
      %1868 = vmatmul.mubr.bf16.gmra.mxu0 %v679
      %v1869 = vpop.f32.mrf.mxu0
      %v1870 = vadd.f32 %v1822, %v1869
      %v1871 = vpop.f32.mrf.mxu0
      %v1872 = vpop.f32.mrf.mxu0
      %v1873 = vpop.f32.mrf.mxu0
      %1874 = vdwg.mxu0
      %1875 = vmatprep.subr.bf16.mxu0 0
      %1876 = vmatpush1.bf16.msra.mxu0 %v1402
      %1877 = vmatprep.subr.bf16.mxu0 0
      %1878 = vmatpush1.bf16.msra.mxu0 %v1401
      %1879 = vmatprep.subr.bf16.mxu0 0
      %1880 = vmatpush1.bf16.msra.mxu0 %v1400
      %1881 = vmatprep.subr.bf16.mxu0 0
      %1882 = vmatpush1.bf16.msra.mxu0 %v1399
      %1883 = vmatprep.subr.bf16.mxu0 0
      %1884 = vmatpush1.bf16.msra.mxu0 %v1398
      %1885 = vmatprep.subr.bf16.mxu0 0
      %1886 = vmatpush1.bf16.msra.mxu0 %v1397
      %1887 = vmatprep.subr.bf16.mxu0 0
      %1888 = vmatpush1.bf16.msra.mxu0 %v1396
      %1889 = vmatprep.subr.bf16.mxu0 0
      %1890 = vmatpush1.bf16.msra.mxu0 %v1395
      %1891 = vmatprep.subr.bf16.mxu0 0
      %1892 = vmatpush2.bf16.msra.mxu0 %v1410
      %1893 = vmatprep.subr.bf16.mxu0 0
      %1894 = vmatpush2.bf16.msra.mxu0 %v1409
      %1895 = vmatprep.subr.bf16.mxu0 0
      %1896 = vmatpush2.bf16.msra.mxu0 %v1408
      %1897 = vmatprep.subr.bf16.mxu0 0
      %1898 = vmatpush2.bf16.msra.mxu0 %v1407
      %1899 = vmatprep.subr.bf16.mxu0 0
      %1900 = vmatpush2.bf16.msra.mxu0 %v1406
      %1901 = vmatprep.subr.bf16.mxu0 0
      %1902 = vmatpush2.bf16.msra.mxu0 %v1405
      %1903 = vmatprep.subr.bf16.mxu0 0
      %1904 = vmatpush2.bf16.msra.mxu0 %v1404
      %1905 = vmatprep.subr.bf16.mxu0 0
      %1906 = vmatpush2.bf16.msra.mxu0 %v1403
      %1907 = vmatprep.mubr.bf16.mxu0 %v664
      %1908 = vmatmul.mubr.bf16.gmra.mxu0 %v663
      %v1909 = vpop.f32.mrf.mxu0
      %v1910 = vadd.f32 %v1862, %v1909
      %v1911 = vpop.f32.mrf.mxu0
      %v1912 = vpop.f32.mrf.mxu0
      %v1913 = vadd.f32 %v1865, %v1912
      %v1914 = vpop.f32.mrf.mxu0
      %1915 = vmatprep.mubr.bf16.mxu0 %v682
      %1916 = vmatmul.mubr.bf16.gmra.mxu0 %v681
      %v1917 = vpop.f32.mrf.mxu0
      %v1918 = vadd.f32 %v1870, %v1917
      %v1919 = vpop.f32.mrf.mxu0
      %v1920 = vpop.f32.mrf.mxu0
      %v1921 = vpop.f32.mrf.mxu0
      %1922 = vdwg.mxu0
      %1923 = vmatprep.subr.bf16.mxu0 0
      %1924 = vmatpush1.bf16.msra.mxu0 %v1418
      %1925 = vmatprep.subr.bf16.mxu0 0
      %1926 = vmatpush1.bf16.msra.mxu0 %v1417
      %1927 = vmatprep.subr.bf16.mxu0 0
      %1928 = vmatpush1.bf16.msra.mxu0 %v1416
      %1929 = vmatprep.subr.bf16.mxu0 0
      %1930 = vmatpush1.bf16.msra.mxu0 %v1415
      %1931 = vmatprep.subr.bf16.mxu0 0
      %1932 = vmatpush1.bf16.msra.mxu0 %v1414
      %1933 = vmatprep.subr.bf16.mxu0 0
      %1934 = vmatpush1.bf16.msra.mxu0 %v1413
      %1935 = vmatprep.subr.bf16.mxu0 0
      %1936 = vmatpush1.bf16.msra.mxu0 %v1412
      %1937 = vmatprep.subr.bf16.mxu0 0
      %1938 = vmatpush1.bf16.msra.mxu0 %v1411
      %1939 = vmatprep.subr.bf16.mxu0 0
      %1940 = vmatpush2.bf16.msra.mxu0 %v1426
      %1941 = vmatprep.subr.bf16.mxu0 0
      %1942 = vmatpush2.bf16.msra.mxu0 %v1425
      %1943 = vmatprep.subr.bf16.mxu0 0
      %1944 = vmatpush2.bf16.msra.mxu0 %v1424
      %1945 = vmatprep.subr.bf16.mxu0 0
      %1946 = vmatpush2.bf16.msra.mxu0 %v1423
      %1947 = vmatprep.subr.bf16.mxu0 0
      %1948 = vmatpush2.bf16.msra.mxu0 %v1422
      %1949 = vmatprep.subr.bf16.mxu0 0
      %1950 = vmatpush2.bf16.msra.mxu0 %v1421
      %1951 = vmatprep.subr.bf16.mxu0 0
      %1952 = vmatpush2.bf16.msra.mxu0 %v1420
      %1953 = vmatprep.subr.bf16.mxu0 0
      %1954 = vmatpush2.bf16.msra.mxu0 %v1419
      %1955 = vmatprep.mubr.bf16.mxu0 %v666
      %1956 = vmatmul.mubr.bf16.gmra.mxu0 %v665
      %v1957 = vpop.f32.mrf.mxu0
      %v1958 = vadd.f32 %v1910, %v1957
      %v1959 = vpop.f32.mrf.mxu0
      %v1960 = vpop.f32.mrf.mxu0
      %v1961 = vadd.f32 %v1913, %v1960
      %v1962 = vpop.f32.mrf.mxu0
      %1963 = vmatprep.mubr.bf16.mxu0 %v684
      %1964 = vmatmul.mubr.bf16.gmra.mxu0 %v683
      %v1965 = vpop.f32.mrf.mxu0
      %v1966 = vadd.f32 %v1918, %v1965
      %v1967 = vpop.f32.mrf.mxu0
      %v1968 = vpop.f32.mrf.mxu0
      %v1969 = vpop.f32.mrf.mxu0
      %1970 = vdwg.mxu0
      %1971 = vmatprep.subr.bf16.mxu0 0
      %1972 = vmatpush1.bf16.msra.mxu0 %v1434
      %1973 = vmatprep.subr.bf16.mxu0 0
      %1974 = vmatpush1.bf16.msra.mxu0 %v1433
      %1975 = vmatprep.subr.bf16.mxu0 0
      %1976 = vmatpush1.bf16.msra.mxu0 %v1432
      %1977 = vmatprep.subr.bf16.mxu0 0
      %1978 = vmatpush1.bf16.msra.mxu0 %v1431
      %1979 = vmatprep.subr.bf16.mxu0 0
      %1980 = vmatpush1.bf16.msra.mxu0 %v1430
      %1981 = vmatprep.subr.bf16.mxu0 0
      %1982 = vmatpush1.bf16.msra.mxu0 %v1429
      %1983 = vmatprep.subr.bf16.mxu0 0
      %1984 = vmatpush1.bf16.msra.mxu0 %v1428
      %1985 = vmatprep.subr.bf16.mxu0 0
      %1986 = vmatpush1.bf16.msra.mxu0 %v1427
      %1987 = vmatprep.subr.bf16.mxu0 0
      %1988 = vmatpush2.bf16.msra.mxu0 %v1442
      %1989 = vmatprep.subr.bf16.mxu0 0
      %1990 = vmatpush2.bf16.msra.mxu0 %v1441
      %1991 = vmatprep.subr.bf16.mxu0 0
      %1992 = vmatpush2.bf16.msra.mxu0 %v1440
      %1993 = vmatprep.subr.bf16.mxu0 0
      %1994 = vmatpush2.bf16.msra.mxu0 %v1439
      %1995 = vmatprep.subr.bf16.mxu0 0
      %1996 = vmatpush2.bf16.msra.mxu0 %v1438
      %1997 = vmatprep.subr.bf16.mxu0 0
      %1998 = vmatpush2.bf16.msra.mxu0 %v1437
      %1999 = vmatprep.subr.bf16.mxu0 0
      %2000 = vmatpush2.bf16.msra.mxu0 %v1436
      %2001 = vmatprep.subr.bf16.mxu0 0
      %2002 = vmatpush2.bf16.msra.mxu0 %v1435
      %2003 = vmatprep.mubr.bf16.mxu0 %v668
      %2004 = vmatmul.mubr.bf16.gmra.mxu0 %v667
      %v2005 = vpop.f32.mrf.mxu0
      %v2006 = vadd.f32 %v1958, %v2005
      %v2007 = vpop.f32.mrf.mxu0
      %v2008 = vpop.f32.mrf.mxu0
      %v2009 = vadd.f32 %v1961, %v2008
      %v2010 = vpop.f32.mrf.mxu0
      %2011 = vmatprep.mubr.bf16.mxu0 %v686
      %2012 = vmatmul.mubr.bf16.gmra.mxu0 %v685
      %v2013 = vpop.f32.mrf.mxu0
      %v2014 = vadd.f32 %v1966, %v2013
      %v2015 = vpop.f32.mrf.mxu0
      %v2016 = vpop.f32.mrf.mxu0
      %v2017 = vpop.f32.mrf.mxu0
      %2018 = vdwg.mxu0
      %2019 = vst [vmem:[%s245] sm:$0xff] %v2006
      %2020 = vst [vmem:[%s245 + $0x8] sm:$0xff] %v2009
      %2021 = vst [vmem:[%s245 + $0x10] sm:$0x3] %v2014
      %s2022 = smul.u32 3, %s19
      %p2023 = scmp.lt.s32.totalorder %s18, 1
      %s2024 = scalar_select %p2023, %s18, 1
      %p2025 = scmp.lt.s32.totalorder %s2022, 2
      %s2026 = scalar_select %p2025, %s2022, 2
      %s2027 = smul.addr %s2024, 3
      %s2028 = sadd.s32 %s2026, %s2027
      %s2029 = smul.addr %s2028, 8
      %s2030 = scalar_lea.vmem %s3, %s2029
      // Predicated region
      $region33: #{cnnl4_forward.7} parent=31 // pred_check
        %p2031 = pneg %p126
      $region34: #{cnnl4_forward.7} parent=31 // pred_check_branch
        %2033 = sbr.rel (%p2031) target = $region36
      $region35: #{cnnl4_forward.7} parent=31 // pred_region
        %s2034 = smul.u32 3, %s19
      $region36: #{cnnl4_forward.7} parent=31 // pred_fallthru
        _
    $region32: #{cnnl4_forward.7} parent=5 // pred_fallthru
      _
    %p2035 = scmp.le.s32.totalorder 2, %s9
    // Predicated region
    $region37: #{cnnl4_forward.7} parent=5 // pred_check
      %p2036 = pneg %p2035
    $region38: #{cnnl4_forward.7} parent=5 // pred_check_branch
      %2038 = sbr.rel (%p2036) target = $region40
    $region39: #{cnnl4_forward.7} parent=5 // pred_region
      %s2039 = ssub.s32 %s9, 2
      // Predicated region
      $region41: #{cnnl4_forward.7} parent=39 // pred_check
        %p2040 = pneg %p132
      $region42: #{cnnl4_forward.7} parent=39 // pred_check_branch
        %2042 = sbr.rel (%p2040) target = $region44
      $region43: #{cnnl4_forward.7} parent=39 // pred_region
        %s2043 = smul.u32 3, %s21
        %p2044 = scmp.lt.s32.totalorder %s20, 1
        %s2045 = scalar_select %p2044, %s20, 1
        %p2046 = scmp.lt.s32.totalorder %s2043, 2
        %s2047 = scalar_select %p2046, %s2043, 2
        %s2048 = smul.addr %s2045, 3
        %s2049 = sadd.s32 %s2047, %s2048
        %s2050 = smul.addr %s2049, 8
        %s2051 = scalar_lea.vmem %s3, %s2050
      $region44: #{cnnl4_forward.7} parent=39 // pred_fallthru
        _
    $region40: #{cnnl4_forward.7} parent=5 // pred_fallthru
      _
  $region6: #{cnnl4_forward.7} parent=0 // loop_footer
    %s13 = sadd.s32 1, %s9
  $region7: #{cnnl4_forward.7} parent=0 // loop_footer_branch
    %8 = sbr.rel target = $region3
  $region8: #{cnnl4_forward.7} parent=0 // loop_exit
    _

</llo_original>
